<compile_context>
chip_gen: v6e
topology: v6e:2x2x1
jax: 0.10.0
libtpu: 0.0.40
codegen_flags: <defaults>
</compile_context>

<pallas_src>
import math

import jax
import jax.numpy as jnp
import numpy as np
from jax.experimental import pallas as pl
from jax.experimental.pallas import tpu as pltpu

# ----------------- small synthetic BERT config -----------------
B = 2            # batch
S = 8            # sequence length == max_seq_len
H = 32           # hidden size
NH = 4           # attention heads
DH = H // NH     # head dim
FF = 64          # intermediate size
L = 4            # num hidden layers ('last_four_sum' sums all of them here)
W = 5            # number of selected word positions (start_pos length)
VOCAB = 100
MAX_SEQ_LEN = S
LN_EPS = 1e-12

# Batch blocking: BB rows of the batch per grid step.  BB == B -> single grid
# step (fastest at toy size).  Set BB < B at real batch sizes so the leading
# "parallel" axis shards the encoder across v7x's two TensorCores.
BB = B
GRID_B = B // BB

# TODO(synk): at real scale keep H/FF multiples of 128 (BERT-base already is);
#             the toy H=32 layout runs lane-sparse (masked vst) by construction.


def gelu_tanh(x):
    # TODO(synk): HF BERT uses erf-gelu; tanh approximation used for a clean EUP lowering.
    return 0.5 * x * (1.0 + jnp.tanh(0.7978845608028654 * (x + 0.044715 * x * x * x)))


def layer_norm(x, g, b):
    mu = jnp.mean(x, axis=-1, keepdims=True)
    var = jnp.mean((x - mu) ** 2, axis=-1, keepdims=True)
    return (x - mu) * jax.lax.rsqrt(var + LN_EPS) * g + b


# ----------------- Kernel: full BERT encoder stack + fused word-select -----------------
def bert_encoder_kernel(x_ref, mask_ref, sp_ref,
                        wqkv_ref, bqkv_ref, wo_ref, bo_ref, g1_ref, be1_ref,
                        wi_ref, bi_ref, wf_ref, bf_ref, g2_ref, be2_ref,
                        out_ref):
    # ---- layer-invariant tensors, hoisted once (JAX does not CSE broadcasts) ----
    mask = mask_ref[...]                                            # (BB, 1, S), 1.0 = valid token
    bias_full = jnp.broadcast_to((1.0 - mask) * -1e9, (BB, S, S))   # additive attention bias

    # word-select matrix: one-hot(start_pos) * word-pad validity * token-pad mask,
    # built with one broadcasted iota compare (no scalar loops / concatenates).
    sp = sp_ref[...]                                                # (BB, W, 1) int32
    col = jax.lax.broadcasted_iota(jnp.int32, (BB, W, S), 2)
    onehot = (col == sp).astype(jnp.float32)                        # (BB, W, S)
    wvalid = (sp != MAX_SEQ_LEN - 1).astype(jnp.float32)            # (BB, W, 1) word-pad scale
    sel = onehot * wvalid * mask                                    # (BB, W, S)

    def layer_body(l, carry):
        hid, acc = carry                                            # (BB,S,H) f32, (BB,W,H) f32
        h2d = hid.reshape(BB * S, H)
        h_bf = h2d.astype(jnp.bfloat16)

        # fused QKV projection: bf16 MXU operands, f32 accumulation.
        # 1/sqrt(DH) is pre-folded into the Q block of wqkv/bqkv at init time.
        qkv = jnp.dot(h_bf, wqkv_ref[l],
                      preferred_element_type=jnp.float32) + bqkv_ref[l]     # (BB*S, 3H)
        q_bf = qkv[:, 0:H].reshape(BB, S, H).astype(jnp.bfloat16)
        k_bf = qkv[:, H:2 * H].reshape(BB, S, H).astype(jnp.bfloat16)
        v_bf = qkv[:, 2 * H:3 * H].reshape(BB, S, H).astype(jnp.bfloat16)

        # attention: static head loop (NH=4); each head's context is folded
        # straight into the output projection (no lane-axis concatenate).
        wo = wo_ref[l]                                              # (H, H) bf16
        attn_out = jnp.zeros((BB * S, H), jnp.float32)
        for hd in range(NH):
            sl = slice(hd * DH, (hd + 1) * DH)
            s = jnp.einsum('bqd,bkd->bqk', q_bf[:, :, sl], k_bf[:, :, sl],
                           preferred_element_type=jnp.float32) + bias_full
            s = s - jnp.max(s, axis=-1, keepdims=True)
            p = jnp.exp(s)
            p = p * pl.reciprocal(jnp.sum(p, axis=-1, keepdims=True), approx=True)
            ctx = jnp.einsum('bqk,bkd->bqd', p.astype(jnp.bfloat16), v_bf[:, :, sl],
                             preferred_element_type=jnp.float32)            # (BB, S, DH)
            attn_out = attn_out + jnp.dot(
                ctx.reshape(BB * S, DH).astype(jnp.bfloat16), wo[sl, :],
                preferred_element_type=jnp.float32)
        attn_out = attn_out + bo_ref[l]

        h1 = layer_norm(h2d + attn_out, g1_ref[l], be1_ref[l])             # f32
        inter = gelu_tanh(jnp.dot(h1.astype(jnp.bfloat16), wi_ref[l],
                                  preferred_element_type=jnp.float32) + bi_ref[l])
        ffn = jnp.dot(inter.astype(jnp.bfloat16), wf_ref[l],
                      preferred_element_type=jnp.float32) + bf_ref[l]
        h2 = layer_norm(h1 + ffn, g2_ref[l], be2_ref[l]).reshape(BB, S, H)

        # 'last_four_sum' fused with the word-select one-hot matmul: (B,W,H) accumulator.
        gate = jnp.where(l >= L - 4, 1.0, 0.0)
        acc = acc + gate * jnp.einsum('bws,bsh->bwh', sel, h2,
                                      preferred_element_type=jnp.float32)
        return h2, acc

    hid0 = x_ref[...]                                               # (BB, S, H) embeddings
    acc0 = jnp.zeros((BB, W, H), jnp.float32)
    _, acc = jax.lax.fori_loop(0, L, layer_body, (hid0, acc0), unroll=True)
    out_ref[...] = acc                                              # written exactly once


def bertology_encoder_forward(p, input_ids, token_type_ids, attention_mask, start_pos):
    # bertology_output_mode='last_four_sum', word_select_mode='s', after_encoder=None.
    # TODO(synk): nn.Dropout is identity at inference; stochastic dropout not implemented.
    x_emb = embed(p, input_ids, token_type_ids)
    mask_f32 = attention_mask.astype(jnp.float32)[:, None, :]       # (B, 1, S)
    sp_col = start_pos.astype(jnp.int32)[:, :, None]                # (B, W, 1)

    stacked = [p['wqkv'], p['bqkv'], p['wo'], p['bo'], p['g1'], p['be1'],
               p['wi'], p['bi'], p['wf'], p['bf'], p['g2'], p['be2']]
    in_specs = [pl.BlockSpec((BB, S, H), lambda b: (b, 0, 0)),       # embeddings
                pl.BlockSpec((BB, 1, S), lambda b: (b, 0, 0)),       # attention mask (f32)
                pl.BlockSpec((BB, W, 1), lambda b: (b, 0, 0))]       # start_pos column (int32)
    # full (L, ...) weight stacks resident in VMEM (~60 KB total at this size)
    in_specs += [pl.BlockSpec(a.shape, lambda b: (0, 0, 0)) for a in stacked]

    return pl.pallas_call(
        bert_encoder_kernel,
        out_shape=jax.ShapeDtypeStruct((B, W, H), jnp.float32),
        grid_spec=pltpu.PrefetchScalarGridSpec(
            num_scalar_prefetch=0,
            grid=(GRID_B,),
            in_specs=in_specs,
            out_specs=pl.BlockSpec((BB, W, H), lambda b: (b, 0, 0))),
        compiler_params=pltpu.CompilerParams(
            dimension_semantics=("parallel",)),      # batch blocks are independent
    )(x_emb, mask_f32, sp_col, *stacked)


# ----------------- glue: params + embeddings -----------------
def init_params(key):
    ks = jax.random.split(key, 20)

    def nrm(k, shape):
        return (0.02 * jax.random.normal(k, shape)).astype(jnp.float32)

    scale = 1.0 / math.sqrt(DH)
    p = {}
    p['word_emb'] = nrm(ks[0], (VOCAB, H))
    p['pos_emb'] = nrm(ks[1], (S, H))
    p['type_emb'] = nrm(ks[2], (2, H))
    p['emb_g'] = 1.0 + nrm(ks[3], (H,))
    p['emb_b'] = nrm(ks[4], (H,))
    # MXU weights stored in bf16 (operand dtype); biases / LN params stay f32.
    # The 1/sqrt(DH) softmax scale is folded into the Q block of wqkv/bqkv here
    # (in f32, before the bf16 cast) -> mathematically identical to scaling the scores.
    wqkv = nrm(ks[5], (L, H, 3 * H))
    p['wqkv'] = wqkv.at[:, :, 0:H].multiply(scale).astype(jnp.bfloat16)     # fused Wq|Wk|Wv
    bqkv = nrm(ks[6], (L, 1, 3 * H))
    p['bqkv'] = bqkv.at[:, :, 0:H].multiply(scale)
    p['wo'] = nrm(ks[7], (L, H, H)).astype(jnp.bfloat16)
    p['bo'] = nrm(ks[8], (L, 1, H))
    p['g1'] = 1.0 + nrm(ks[9], (L, 1, H))
    p['be1'] = nrm(ks[10], (L, 1, H))
    p['wi'] = nrm(ks[11], (L, H, FF)).astype(jnp.bfloat16)
    p['bi'] = nrm(ks[12], (L, 1, FF))
    p['wf'] = nrm(ks[13], (L, FF, H)).astype(jnp.bfloat16)
    p['bf'] = nrm(ks[14], (L, 1, H))
    p['g2'] = 1.0 + nrm(ks[15], (L, 1, H))
    p['be2'] = nrm(ks[16], (L, 1, H))
    return p


def embed(p, input_ids, token_type_ids):
    pos = jnp.arange(S)
    e = p['word_emb'][input_ids] + p['pos_emb'][pos][None, :, :] + p['type_emb'][token_type_ids]
    return layer_norm(e, p['emb_g'], p['emb_b'])


# ----------------- pure-JAX reference (f32 math on the same bf16-rounded weights) -----------------
def ref_forward(p, input_ids, token_type_ids, attention_mask, start_pos):
    h = embed(p, input_ids, token_type_ids)
    bias = ((1.0 - attention_mask.astype(jnp.float32)) * -1e9)[:, None, None, :]
    layer_outs = []
    for l in range(L):
        wqkv = p['wqkv'][l].astype(jnp.float32)
        qkv = jnp.einsum('bsh,hd->bsd', h, wqkv) + p['bqkv'][l]
        q = qkv[..., 0:H].reshape(B, S, NH, DH)
        k = qkv[..., H:2 * H].reshape(B, S, NH, DH)
        v = qkv[..., 2 * H:3 * H].reshape(B, S, NH, DH)
        # 1/sqrt(DH) is already folded into the Q projection parameters.
        s = jnp.einsum('bqnd,bknd->bnqk', q, k) + bias
        att = jax.nn.softmax(s, axis=-1)
        ctx = jnp.einsum('bnqk,bknd->bqnd', att, v).reshape(B, S, H)
        attn_out = jnp.einsum('bsh,hd->bsd', ctx, p['wo'][l].astype(jnp.float32)) + p['bo'][l]
        h1 = layer_norm(h + attn_out, p['g1'][l], p['be1'][l])
        inter = gelu_tanh(jnp.einsum('bsh,hi->bsi', h1, p['wi'][l].astype(jnp.float32)) + p['bi'][l])
        ffn = jnp.einsum('bsi,ih->bsh', inter, p['wf'][l].astype(jnp.float32)) + p['bf'][l]
        h = layer_norm(h1 + ffn, p['g2'][l], p['be2'][l])
        layer_outs.append(h)
    enc = sum(layer_outs[-4:])
    enc = enc * (attention_mask != 0)[:, :, None].astype(jnp.float32)
    idx = jnp.broadcast_to(start_pos[:, :, None], (B, W, H))
    gathered = jnp.take_along_axis(enc, idx, axis=1)
    wpad = (start_pos == MAX_SEQ_LEN - 1).astype(jnp.float32)[:, :, None]
    return gathered * (1.0 - wpad)


if __name__ == "__main__":
    key = jax.random.PRNGKey(0)
    pkey, ikey = jax.random.split(key)
    params = init_params(pkey)

    input_ids = jax.random.randint(ikey, (B, S), 0, VOCAB, dtype=jnp.int32)
    token_type_ids = jnp.zeros((B, S), dtype=jnp.int32)
    attention_mask = jnp.array([[1, 1, 1, 1, 1, 1, 1, 1],
                                [1, 1, 1, 1, 1, 1, 0, 0]], dtype=jnp.int32)
    start_pos = jnp.array([[0, 1, 3, 7, 7],
                           [0, 2, 4, 5, 7]], dtype=jnp.int32)

    out = bertology_encoder_forward(params, input_ids, token_type_ids,
                                    attention_mask, start_pos)
    out = jax.block_until_ready(out)

    ref = ref_forward(params, input_ids, token_type_ids, attention_mask, start_pos)
    np.testing.assert_allclose(np.asarray(out), np.asarray(ref), rtol=2e-2, atol=2e-2)
    print("KERNEL_OK")
</pallas_src>

<mosaic_0001>
module attributes {stable_mosaic.version = 11 : i64} {
  func.func @bert_encoder_kernel(%arg0: i32, %arg1: memref<2x8x32xf32, #tpu.memory_space<vmem>>, %arg2: memref<2x1x8xf32, #tpu.memory_space<vmem>>, %arg3: memref<2x5x1xi32, #tpu.memory_space<vmem>>, %arg4: memref<4x32x96xbf16, #tpu.memory_space<vmem>>, %arg5: memref<4x1x96xf32, #tpu.memory_space<vmem>>, %arg6: memref<4x32x32xbf16, #tpu.memory_space<vmem>>, %arg7: memref<4x1x32xf32, #tpu.memory_space<vmem>>, %arg8: memref<4x1x32xf32, #tpu.memory_space<vmem>>, %arg9: memref<4x1x32xf32, #tpu.memory_space<vmem>>, %arg10: memref<4x32x64xbf16, #tpu.memory_space<vmem>>, %arg11: memref<4x1x64xf32, #tpu.memory_space<vmem>>, %arg12: memref<4x64x32xbf16, #tpu.memory_space<vmem>>, %arg13: memref<4x1x32xf32, #tpu.memory_space<vmem>>, %arg14: memref<4x1x32xf32, #tpu.memory_space<vmem>>, %arg15: memref<4x1x32xf32, #tpu.memory_space<vmem>>, %arg16: memref<2x5x32xf32, #tpu.memory_space<vmem>>) attributes {dimension_semantics = [#tpu.dimension_semantics<parallel>], iteration_bounds = array<i64: 1>, scalar_prefetch = 0 : i64, scratch_operands = 0 : i64, tpu.core_type = #tpu.core_type<tc>, window_params = [{transform_indices = @transform_0, window_bounds = array<i64: 2, 8, 32>}, {transform_indices = @transform_1, window_bounds = array<i64: 2, 1, 8>}, {transform_indices = @transform_2, window_bounds = array<i64: 2, 5, 1>}, {pipeline_mode = #tpu.pipeline_mode<synchronous>, transform_indices = @transform_3, window_bounds = array<i64: 4, 32, 96>}, {pipeline_mode = #tpu.pipeline_mode<synchronous>, transform_indices = @transform_4, window_bounds = array<i64: 4, 1, 96>}, {pipeline_mode = #tpu.pipeline_mode<synchronous>, transform_indices = @transform_5, window_bounds = array<i64: 4, 32, 32>}, {pipeline_mode = #tpu.pipeline_mode<synchronous>, transform_indices = @transform_6, window_bounds = array<i64: 4, 1, 32>}, {pipeline_mode = #tpu.pipeline_mode<synchronous>, transform_indices = @transform_7, window_bounds = array<i64: 4, 1, 32>}, {pipeline_mode = #tpu.pipeline_mode<synchronous>, transform_indices = @transform_8, window_bounds = array<i64: 4, 1, 32>}, {pipeline_mode = #tpu.pipeline_mode<synchronous>, transform_indices = @transform_9, window_bounds = array<i64: 4, 32, 64>}, {pipeline_mode = #tpu.pipeline_mode<synchronous>, transform_indices = @transform_10, window_bounds = array<i64: 4, 1, 64>}, {pipeline_mode = #tpu.pipeline_mode<synchronous>, transform_indices = @transform_11, window_bounds = array<i64: 4, 64, 32>}, {pipeline_mode = #tpu.pipeline_mode<synchronous>, transform_indices = @transform_12, window_bounds = array<i64: 4, 1, 32>}, {pipeline_mode = #tpu.pipeline_mode<synchronous>, transform_indices = @transform_13, window_bounds = array<i64: 4, 1, 32>}, {pipeline_mode = #tpu.pipeline_mode<synchronous>, transform_indices = @transform_14, window_bounds = array<i64: 4, 1, 32>}, {transform_indices = @transform_15, window_bounds = array<i64: 2, 5, 32>}]} {
    %c0 = arith.constant 0 : index
    %c0_0 = arith.constant 0 : index
    %c0_1 = arith.constant 0 : index
    %0 = vector.load %arg2[%c0, %c0_0, %c0_1] : memref<2x1x8xf32, #tpu.memory_space<vmem>>, vector<2x1x8xf32>
    %cst = arith.constant 1.000000e+00 : f32
    %1 = vector.broadcast %cst : f32 to vector<2x1x8xf32>
    %2 = arith.subf %1, %0 : vector<2x1x8xf32>
    %cst_2 = arith.constant -1.000000e+09 : f32
    %3 = vector.broadcast %cst_2 : f32 to vector<2x1x8xf32>
    %4 = arith.mulf %2, %3 : vector<2x1x8xf32>
    %5 = vector.shape_cast %4 : vector<2x1x8xf32> to vector<2x1x8xf32>
    %6 = vector.broadcast %5 : vector<2x1x8xf32> to vector<2x8x8xf32>
    %c0_3 = arith.constant 0 : index
    %c0_4 = arith.constant 0 : index
    %c0_5 = arith.constant 0 : index
    %7 = vector.load %arg3[%c0_3, %c0_4, %c0_5] : memref<2x5x1xi32, #tpu.memory_space<vmem>>, vector<2x5x1xi32>
    %8 = tpu.iota {dimensions = array<i32: 2>} : vector<2x5x8xi32>
    %9 = vector.broadcast %7 : vector<2x5x1xi32> to vector<2x5x8xi32>
    %10 = arith.cmpi eq, %8, %9 : vector<2x5x8xi32>
    %11 = arith.extui %10 : vector<2x5x8xi1> to vector<2x5x8xi32>
    %12 = arith.sitofp %11 : vector<2x5x8xi32> to vector<2x5x8xf32>
    %c7_i32 = arith.constant 7 : i32
    %13 = vector.broadcast %c7_i32 : i32 to vector<2x5x1xi32>
    %14 = arith.cmpi ne, %7, %13 : vector<2x5x1xi32>
    %15 = arith.extui %14 : vector<2x5x1xi1> to vector<2x5x1xi32>
    %16 = arith.sitofp %15 : vector<2x5x1xi32> to vector<2x5x1xf32>
    %17 = vector.broadcast %16 : vector<2x5x1xf32> to vector<2x5x8xf32>
    %18 = arith.mulf %12, %17 : vector<2x5x8xf32>
    %19 = vector.broadcast %0 : vector<2x1x8xf32> to vector<2x5x8xf32>
    %20 = arith.mulf %18, %19 : vector<2x5x8xf32>
    %c0_6 = arith.constant 0 : index
    %c0_7 = arith.constant 0 : index
    %c0_8 = arith.constant 0 : index
    %21 = vector.load %arg1[%c0_6, %c0_7, %c0_8] : memref<2x8x32xf32, #tpu.memory_space<vmem>>, vector<2x8x32xf32>
    %cst_9 = arith.constant 0.000000e+00 : f32
    %22 = vector.broadcast %cst_9 : f32 to vector<2x5x32xf32>
    %c0_i32 = arith.constant 0 : i32
    %23 = vector.shape_cast %21 : vector<2x8x32xf32> to vector<16x32xf32>
    %24 = arith.truncf %23 : vector<16x32xf32> to vector<16x32xbf16>
    %25 = arith.index_cast %c0_i32 : i32 to index
    %c0_10 = arith.constant 0 : index
    %c0_11 = arith.constant 0 : index
    %26 = vector.load %arg4[%25, %c0_10, %c0_11] : memref<4x32x96xbf16, #tpu.memory_space<vmem>>, vector<1x32x96xbf16>
    %27 = vector.shape_cast %26 : vector<1x32x96xbf16> to vector<32x96xbf16>
    %cst_12 = arith.constant dense<0.000000e+00> : vector<16x96xf32>
    %28 = tpu.matmul %24, %27, %cst_12 {dimension_numbers = #tpu.dot_dimension_numbers<[1], [0], [0], [1], [0, 0, 1, 1], [], []>} : vector<16x32xbf16>, vector<32x96xbf16>, vector<16x96xf32> -> vector<16x96xf32>
    %29 = arith.index_cast %c0_i32 : i32 to index
    %c0_13 = arith.constant 0 : index
    %c0_14 = arith.constant 0 : index
    %30 = vector.load %arg5[%29, %c0_13, %c0_14] : memref<4x1x96xf32, #tpu.memory_space<vmem>>, vector<1x1x96xf32>
    %31 = vector.shape_cast %30 : vector<1x1x96xf32> to vector<1x96xf32>
    %32 = vector.broadcast %31 : vector<1x96xf32> to vector<16x96xf32>
    %33 = arith.addf %28, %32 : vector<16x96xf32>
    %34 = vector.extract_strided_slice %33 {offsets = [0, 0], sizes = [16, 32], strides = [1, 1]} : vector<16x96xf32> to vector<16x32xf32>
    %35 = vector.shape_cast %34 : vector<16x32xf32> to vector<2x8x32xf32>
    %36 = arith.truncf %35 : vector<2x8x32xf32> to vector<2x8x32xbf16>
    %37 = vector.extract_strided_slice %33 {offsets = [0, 32], sizes = [16, 32], strides = [1, 1]} : vector<16x96xf32> to vector<16x32xf32>
    %38 = vector.shape_cast %37 : vector<16x32xf32> to vector<2x8x32xf32>
    %39 = arith.truncf %38 : vector<2x8x32xf32> to vector<2x8x32xbf16>
    %40 = vector.extract_strided_slice %33 {offsets = [0, 64], sizes = [16, 32], strides = [1, 1]} : vector<16x96xf32> to vector<16x32xf32>
    %41 = vector.shape_cast %40 : vector<16x32xf32> to vector<2x8x32xf32>
    %42 = arith.truncf %41 : vector<2x8x32xf32> to vector<2x8x32xbf16>
    %43 = arith.index_cast %c0_i32 : i32 to index
    %c0_15 = arith.constant 0 : index
    %c0_16 = arith.constant 0 : index
    %44 = vector.load %arg6[%43, %c0_15, %c0_16] : memref<4x32x32xbf16, #tpu.memory_space<vmem>>, vector<1x32x32xbf16>
    %45 = vector.shape_cast %44 : vector<1x32x32xbf16> to vector<32x32xbf16>
    %cst_17 = arith.constant 0.000000e+00 : f32
    %46 = vector.broadcast %cst_17 : f32 to vector<16x32xf32>
    %47 = vector.extract_strided_slice %36 {offsets = [0, 0, 0], sizes = [2, 8, 8], strides = [1, 1, 1]} : vector<2x8x32xbf16> to vector<2x8x8xbf16>
    %48 = vector.extract_strided_slice %39 {offsets = [0, 0, 0], sizes = [2, 8, 8], strides = [1, 1, 1]} : vector<2x8x32xbf16> to vector<2x8x8xbf16>
    "tpu.trace_start"() <{level = 10 : i32, message = "bqd,bkd->bqk"}> : () -> ()
    %cst_18 = arith.constant dense<0.000000e+00> : vector<2x8x8xf32>
    %49 = tpu.matmul %47, %48, %cst_18 {dimension_numbers = #tpu.dot_dimension_numbers<[2], [2], [1], [1], [0, 0, 0, 1, 1, 1], [0], [0]>} : vector<2x8x8xbf16>, vector<2x8x8xbf16>, vector<2x8x8xf32> -> vector<2x8x8xf32>
    "tpu.trace_stop"() : () -> ()
    %50 = arith.addf %49, %6 : vector<2x8x8xf32>
    %cst_19 = arith.constant dense<0xFF800000> : vector<2x8xf32>
    %51 = vector.multi_reduction <maximumf>, %50, %cst_19 [2] : vector<2x8x8xf32> to vector<2x8xf32>
    %52 = vector.shape_cast %51 : vector<2x8xf32> to vector<2x8x1xf32>
    %53 = vector.broadcast %52 : vector<2x8x1xf32> to vector<2x8x8xf32>
    %54 = arith.subf %50, %53 : vector<2x8x8xf32>
    %55 = math.exp %54 : vector<2x8x8xf32>
    %cst_20 = arith.constant dense<0.000000e+00> : vector<2x8xf32>
    %56 = vector.multi_reduction <add>, %55, %cst_20 [2] : vector<2x8x8xf32> to vector<2x8xf32>
    %57 = vector.shape_cast %56 : vector<2x8xf32> to vector<2x8x1xf32>
    %58 = tpu.reciprocal %57 {approx = true} : vector<2x8x1xf32> -> vector<2x8x1xf32>
    %59 = vector.broadcast %58 : vector<2x8x1xf32> to vector<2x8x8xf32>
    %60 = arith.mulf %55, %59 : vector<2x8x8xf32>
    %61 = arith.truncf %60 : vector<2x8x8xf32> to vector<2x8x8xbf16>
    %62 = vector.extract_strided_slice %42 {offsets = [0, 0, 0], sizes = [2, 8, 8], strides = [1, 1, 1]} : vector<2x8x32xbf16> to vector<2x8x8xbf16>
    "tpu.trace_start"() <{level = 10 : i32, message = "bqk,bkd->bqd"}> : () -> ()
    %cst_21 = arith.constant dense<0.000000e+00> : vector<2x8x8xf32>
    %63 = tpu.matmul %61, %62, %cst_21 {dimension_numbers = #tpu.dot_dimension_numbers<[2], [1], [1], [2], [0, 0, 0, 1, 1, 2], [0], [0]>} : vector<2x8x8xbf16>, vector<2x8x8xbf16>, vector<2x8x8xf32> -> vector<2x8x8xf32>
    "tpu.trace_stop"() : () -> ()
    %64 = vector.shape_cast %63 : vector<2x8x8xf32> to vector<16x8xf32>
    %65 = arith.truncf %64 : vector<16x8xf32> to vector<16x8xbf16>
    %66 = vector.extract_strided_slice %45 {offsets = [0, 0], sizes = [8, 32], strides = [1, 1]} : vector<32x32xbf16> to vector<8x32xbf16>
    %cst_22 = arith.constant dense<0.000000e+00> : vector<16x32xf32>
    %67 = tpu.matmul %65, %66, %cst_22 {dimension_numbers = #tpu.dot_dimension_numbers<[1], [0], [0], [1], [0, 0, 1, 1], [], []>} : vector<16x8xbf16>, vector<8x32xbf16>, vector<16x32xf32> -> vector<16x32xf32>
    %68 = arith.addf %46, %67 : vector<16x32xf32>
    %69 = vector.extract_strided_slice %36 {offsets = [0, 0, 8], sizes = [2, 8, 8], strides = [1, 1, 1]} : vector<2x8x32xbf16> to vector<2x8x8xbf16>
    %70 = vector.extract_strided_slice %39 {offsets = [0, 0, 8], sizes = [2, 8, 8], strides = [1, 1, 1]} : vector<2x8x32xbf16> to vector<2x8x8xbf16>
    "tpu.trace_start"() <{level = 10 : i32, message = "bqd,bkd->bqk"}> : () -> ()
    %cst_23 = arith.constant dense<0.000000e+00> : vector<2x8x8xf32>
    %71 = tpu.matmul %69, %70, %cst_23 {dimension_numbers = #tpu.dot_dimension_numbers<[2], [2], [1], [1], [0, 0, 0, 1, 1, 1], [0], [0]>} : vector<2x8x8xbf16>, vector<2x8x8xbf16>, vector<2x8x8xf32> -> vector<2x8x8xf32>
    "tpu.trace_stop"() : () -> ()
    %72 = arith.addf %71, %6 : vector<2x8x8xf32>
    %cst_24 = arith.constant dense<0xFF800000> : vector<2x8xf32>
    %73 = vector.multi_reduction <maximumf>, %72, %cst_24 [2] : vector<2x8x8xf32> to vector<2x8xf32>
    %74 = vector.shape_cast %73 : vector<2x8xf32> to vector<2x8x1xf32>
    %75 = vector.broadcast %74 : vector<2x8x1xf32> to vector<2x8x8xf32>
    %76 = arith.subf %72, %75 : vector<2x8x8xf32>
    %77 = math.exp %76 : vector<2x8x8xf32>
    %cst_25 = arith.constant dense<0.000000e+00> : vector<2x8xf32>
    %78 = vector.multi_reduction <add>, %77, %cst_25 [2] : vector<2x8x8xf32> to vector<2x8xf32>
    %79 = vector.shape_cast %78 : vector<2x8xf32> to vector<2x8x1xf32>
    %80 = tpu.reciprocal %79 {approx = true} : vector<2x8x1xf32> -> vector<2x8x1xf32>
    %81 = vector.broadcast %80 : vector<2x8x1xf32> to vector<2x8x8xf32>
    %82 = arith.mulf %77, %81 : vector<2x8x8xf32>
    %83 = arith.truncf %82 : vector<2x8x8xf32> to vector<2x8x8xbf16>
    %84 = vector.extract_strided_slice %42 {offsets = [0, 0, 8], sizes = [2, 8, 8], strides = [1, 1, 1]} : vector<2x8x32xbf16> to vector<2x8x8xbf16>
    "tpu.trace_start"() <{level = 10 : i32, message = "bqk,bkd->bqd"}> : () -> ()
    %cst_26 = arith.constant dense<0.000000e+00> : vector<2x8x8xf32>
    %85 = tpu.matmul %83, %84, %cst_26 {dimension_numbers = #tpu.dot_dimension_numbers<[2], [1], [1], [2], [0, 0, 0, 1, 1, 2], [0], [0]>} : vector<2x8x8xbf16>, vector<2x8x8xbf16>, vector<2x8x8xf32> -> vector<2x8x8xf32>
    "tpu.trace_stop"() : () -> ()
    %86 = vector.shape_cast %85 : vector<2x8x8xf32> to vector<16x8xf32>
    %87 = arith.truncf %86 : vector<16x8xf32> to vector<16x8xbf16>
    %88 = vector.extract_strided_slice %45 {offsets = [8, 0], sizes = [8, 32], strides = [1, 1]} : vector<32x32xbf16> to vector<8x32xbf16>
    %cst_27 = arith.constant dense<0.000000e+00> : vector<16x32xf32>
    %89 = tpu.matmul %87, %88, %cst_27 {dimension_numbers = #tpu.dot_dimension_numbers<[1], [0], [0], [1], [0, 0, 1, 1], [], []>} : vector<16x8xbf16>, vector<8x32xbf16>, vector<16x32xf32> -> vector<16x32xf32>
    %90 = arith.addf %68, %89 : vector<16x32xf32>
    %91 = vector.extract_strided_slice %36 {offsets = [0, 0, 16], sizes = [2, 8, 8], strides = [1, 1, 1]} : vector<2x8x32xbf16> to vector<2x8x8xbf16>
    %92 = vector.extract_strided_slice %39 {offsets = [0, 0, 16], sizes = [2, 8, 8], strides = [1, 1, 1]} : vector<2x8x32xbf16> to vector<2x8x8xbf16>
    "tpu.trace_start"() <{level = 10 : i32, message = "bqd,bkd->bqk"}> : () -> ()
    %cst_28 = arith.constant dense<0.000000e+00> : vector<2x8x8xf32>
    %93 = tpu.matmul %91, %92, %cst_28 {dimension_numbers = #tpu.dot_dimension_numbers<[2], [2], [1], [1], [0, 0, 0, 1, 1, 1], [0], [0]>} : vector<2x8x8xbf16>, vector<2x8x8xbf16>, vector<2x8x8xf32> -> vector<2x8x8xf32>
    "tpu.trace_stop"() : () -> ()
    %94 = arith.addf %93, %6 : vector<2x8x8xf32>
    %cst_29 = arith.constant dense<0xFF800000> : vector<2x8xf32>
    %95 = vector.multi_reduction <maximumf>, %94, %cst_29 [2] : vector<2x8x8xf32> to vector<2x8xf32>
    %96 = vector.shape_cast %95 : vector<2x8xf32> to vector<2x8x1xf32>
    %97 = vector.broadcast %96 : vector<2x8x1xf32> to vector<2x8x8xf32>
    %98 = arith.subf %94, %97 : vector<2x8x8xf32>
    %99 = math.exp %98 : vector<2x8x8xf32>
    %cst_30 = arith.constant dense<0.000000e+00> : vector<2x8xf32>
    %100 = vector.multi_reduction <add>, %99, %cst_30 [2] : vector<2x8x8xf32> to vector<2x8xf32>
    %101 = vector.shape_cast %100 : vector<2x8xf32> to vector<2x8x1xf32>
    %102 = tpu.reciprocal %101 {approx = true} : vector<2x8x1xf32> -> vector<2x8x1xf32>
    %103 = vector.broadcast %102 : vector<2x8x1xf32> to vector<2x8x8xf32>
    %104 = arith.mulf %99, %103 : vector<2x8x8xf32>
    %105 = arith.truncf %104 : vector<2x8x8xf32> to vector<2x8x8xbf16>
    %106 = vector.extract_strided_slice %42 {offsets = [0, 0, 16], sizes = [2, 8, 8], strides = [1, 1, 1]} : vector<2x8x32xbf16> to vector<2x8x8xbf16>
    "tpu.trace_start"() <{level = 10 : i32, message = "bqk,bkd->bqd"}> : () -> ()
    %cst_31 = arith.constant dense<0.000000e+00> : vector<2x8x8xf32>
    %107 = tpu.matmul %105, %106, %cst_31 {dimension_numbers = #tpu.dot_dimension_numbers<[2], [1], [1], [2], [0, 0, 0, 1, 1, 2], [0], [0]>} : vector<2x8x8xbf16>, vector<2x8x8xbf16>, vector<2x8x8xf32> -> vector<2x8x8xf32>
    "tpu.trace_stop"() : () -> ()
    %108 = vector.shape_cast %107 : vector<2x8x8xf32> to vector<16x8xf32>
    %109 = arith.truncf %108 : vector<16x8xf32> to vector<16x8xbf16>
    %110 = vector.extract_strided_slice %45 {offsets = [16, 0], sizes = [8, 32], strides = [1, 1]} : vector<32x32xbf16> to vector<8x32xbf16>
    %cst_32 = arith.constant dense<0.000000e+00> : vector<16x32xf32>
    %111 = tpu.matmul %109, %110, %cst_32 {dimension_numbers = #tpu.dot_dimension_numbers<[1], [0], [0], [1], [0, 0, 1, 1], [], []>} : vector<16x8xbf16>, vector<8x32xbf16>, vector<16x32xf32> -> vector<16x32xf32>
    %112 = arith.addf %90, %111 : vector<16x32xf32>
    %113 = vector.extract_strided_slice %36 {offsets = [0, 0, 24], sizes = [2, 8, 8], strides = [1, 1, 1]} : vector<2x8x32xbf16> to vector<2x8x8xbf16>
    %114 = vector.extract_strided_slice %39 {offsets = [0, 0, 24], sizes = [2, 8, 8], strides = [1, 1, 1]} : vector<2x8x32xbf16> to vector<2x8x8xbf16>
    "tpu.trace_start"() <{level = 10 : i32, message = "bqd,bkd->bqk"}> : () -> ()
    %cst_33 = arith.constant dense<0.000000e+00> : vector<2x8x8xf32>
    %115 = tpu.matmul %113, %114, %cst_33 {dimension_numbers = #tpu.dot_dimension_numbers<[2], [2], [1], [1], [0, 0, 0, 1, 1, 1], [0], [0]>} : vector<2x8x8xbf16>, vector<2x8x8xbf16>, vector<2x8x8xf32> -> vector<2x8x8xf32>
    "tpu.trace_stop"() : () -> ()
    %116 = arith.addf %115, %6 : vector<2x8x8xf32>
    %cst_34 = arith.constant dense<0xFF800000> : vector<2x8xf32>
    %117 = vector.multi_reduction <maximumf>, %116, %cst_34 [2] : vector<2x8x8xf32> to vector<2x8xf32>
    %118 = vector.shape_cast %117 : vector<2x8xf32> to vector<2x8x1xf32>
    %119 = vector.broadcast %118 : vector<2x8x1xf32> to vector<2x8x8xf32>
    %120 = arith.subf %116, %119 : vector<2x8x8xf32>
    %121 = math.exp %120 : vector<2x8x8xf32>
    %cst_35 = arith.constant dense<0.000000e+00> : vector<2x8xf32>
    %122 = vector.multi_reduction <add>, %121, %cst_35 [2] : vector<2x8x8xf32> to vector<2x8xf32>
    %123 = vector.shape_cast %122 : vector<2x8xf32> to vector<2x8x1xf32>
    %124 = tpu.reciprocal %123 {approx = true} : vector<2x8x1xf32> -> vector<2x8x1xf32>
    %125 = vector.broadcast %124 : vector<2x8x1xf32> to vector<2x8x8xf32>
    %126 = arith.mulf %121, %125 : vector<2x8x8xf32>
    %127 = arith.truncf %126 : vector<2x8x8xf32> to vector<2x8x8xbf16>
    %128 = vector.extract_strided_slice %42 {offsets = [0, 0, 24], sizes = [2, 8, 8], strides = [1, 1, 1]} : vector<2x8x32xbf16> to vector<2x8x8xbf16>
    "tpu.trace_start"() <{level = 10 : i32, message = "bqk,bkd->bqd"}> : () -> ()
    %cst_36 = arith.constant dense<0.000000e+00> : vector<2x8x8xf32>
    %129 = tpu.matmul %127, %128, %cst_36 {dimension_numbers = #tpu.dot_dimension_numbers<[2], [1], [1], [2], [0, 0, 0, 1, 1, 2], [0], [0]>} : vector<2x8x8xbf16>, vector<2x8x8xbf16>, vector<2x8x8xf32> -> vector<2x8x8xf32>
    "tpu.trace_stop"() : () -> ()
    %130 = vector.shape_cast %129 : vector<2x8x8xf32> to vector<16x8xf32>
    %131 = arith.truncf %130 : vector<16x8xf32> to vector<16x8xbf16>
    %132 = vector.extract_strided_slice %45 {offsets = [24, 0], sizes = [8, 32], strides = [1, 1]} : vector<32x32xbf16> to vector<8x32xbf16>
    %cst_37 = arith.constant dense<0.000000e+00> : vector<16x32xf32>
    %133 = tpu.matmul %131, %132, %cst_37 {dimension_numbers = #tpu.dot_dimension_numbers<[1], [0], [0], [1], [0, 0, 1, 1], [], []>} : vector<16x8xbf16>, vector<8x32xbf16>, vector<16x32xf32> -> vector<16x32xf32>
    %134 = arith.addf %112, %133 : vector<16x32xf32>
    %135 = arith.index_cast %c0_i32 : i32 to index
    %c0_38 = arith.constant 0 : index
    %c0_39 = arith.constant 0 : index
    %136 = vector.load %arg7[%135, %c0_38, %c0_39] : memref<4x1x32xf32, #tpu.memory_space<vmem>>, vector<1x1x32xf32>
    %137 = vector.shape_cast %136 : vector<1x1x32xf32> to vector<1x32xf32>
    %138 = vector.broadcast %137 : vector<1x32xf32> to vector<16x32xf32>
    %139 = arith.addf %134, %138 : vector<16x32xf32>
    %140 = arith.addf %23, %139 : vector<16x32xf32>
    %141 = arith.index_cast %c0_i32 : i32 to index
    %c0_40 = arith.constant 0 : index
    %c0_41 = arith.constant 0 : index
    %142 = vector.load %arg8[%141, %c0_40, %c0_41] : memref<4x1x32xf32, #tpu.memory_space<vmem>>, vector<1x1x32xf32>
    %143 = vector.shape_cast %142 : vector<1x1x32xf32> to vector<1x32xf32>
    %144 = arith.index_cast %c0_i32 : i32 to index
    %c0_42 = arith.constant 0 : index
    %c0_43 = arith.constant 0 : index
    %145 = vector.load %arg9[%144, %c0_42, %c0_43] : memref<4x1x32xf32, #tpu.memory_space<vmem>>, vector<1x1x32xf32>
    %146 = vector.shape_cast %145 : vector<1x1x32xf32> to vector<1x32xf32>
    %cst_44 = arith.constant dense<0.000000e+00> : vector<16xf32>
    %147 = vector.multi_reduction <add>, %140, %cst_44 [1] : vector<16x32xf32> to vector<16xf32>
    %148 = vector.shape_cast %147 : vector<16xf32> to vector<16x1xf32>
    %cst_45 = arith.constant 3.200000e+01 : f32
    %149 = vector.broadcast %cst_45 : f32 to vector<16x1xf32>
    %150 = arith.divf %148, %149 : vector<16x1xf32>
    %151 = vector.broadcast %150 : vector<16x1xf32> to vector<16x32xf32>
    %152 = arith.subf %140, %151 : vector<16x32xf32>
    %153 = arith.mulf %152, %152 : vector<16x32xf32>
    %cst_46 = arith.constant dense<0.000000e+00> : vector<16xf32>
    %154 = vector.multi_reduction <add>, %153, %cst_46 [1] : vector<16x32xf32> to vector<16xf32>
    %155 = vector.shape_cast %154 : vector<16xf32> to vector<16x1xf32>
    %cst_47 = arith.constant 3.200000e+01 : f32
    %156 = vector.broadcast %cst_47 : f32 to vector<16x1xf32>
    %157 = arith.divf %155, %156 : vector<16x1xf32>
    %158 = vector.broadcast %150 : vector<16x1xf32> to vector<16x32xf32>
    %159 = arith.subf %140, %158 : vector<16x32xf32>
    %cst_48 = arith.constant 9.99999996E-13 : f32
    %160 = vector.broadcast %cst_48 : f32 to vector<16x1xf32>
    %161 = arith.addf %157, %160 : vector<16x1xf32>
    %162 = math.rsqrt %161 : vector<16x1xf32>
    %163 = vector.broadcast %162 : vector<16x1xf32> to vector<16x32xf32>
    %164 = arith.mulf %159, %163 : vector<16x32xf32>
    %165 = vector.broadcast %143 : vector<1x32xf32> to vector<16x32xf32>
    %166 = arith.mulf %164, %165 : vector<16x32xf32>
    %167 = vector.broadcast %146 : vector<1x32xf32> to vector<16x32xf32>
    %168 = arith.addf %166, %167 : vector<16x32xf32>
    %169 = arith.truncf %168 : vector<16x32xf32> to vector<16x32xbf16>
    %170 = arith.index_cast %c0_i32 : i32 to index
    %c0_49 = arith.constant 0 : index
    %c0_50 = arith.constant 0 : index
    %171 = vector.load %arg10[%170, %c0_49, %c0_50] : memref<4x32x64xbf16, #tpu.memory_space<vmem>>, vector<1x32x64xbf16>
    %172 = vector.shape_cast %171 : vector<1x32x64xbf16> to vector<32x64xbf16>
    %cst_51 = arith.constant dense<0.000000e+00> : vector<16x64xf32>
    %173 = tpu.matmul %169, %172, %cst_51 {dimension_numbers = #tpu.dot_dimension_numbers<[1], [0], [0], [1], [0, 0, 1, 1], [], []>} : vector<16x32xbf16>, vector<32x64xbf16>, vector<16x64xf32> -> vector<16x64xf32>
    %174 = arith.index_cast %c0_i32 : i32 to index
    %c0_52 = arith.constant 0 : index
    %c0_53 = arith.constant 0 : index
    %175 = vector.load %arg11[%174, %c0_52, %c0_53] : memref<4x1x64xf32, #tpu.memory_space<vmem>>, vector<1x1x64xf32>
    %176 = vector.shape_cast %175 : vector<1x1x64xf32> to vector<1x64xf32>
    %177 = vector.broadcast %176 : vector<1x64xf32> to vector<16x64xf32>
    %178 = arith.addf %173, %177 : vector<16x64xf32>
    %cst_54 = arith.constant 5.000000e-01 : f32
    %179 = vector.broadcast %cst_54 : f32 to vector<16x64xf32>
    %180 = arith.mulf %179, %178 : vector<16x64xf32>
    %cst_55 = arith.constant 4.471500e-02 : f32
    %181 = vector.broadcast %cst_55 : f32 to vector<16x64xf32>
    %182 = arith.mulf %181, %178 : vector<16x64xf32>
    %183 = arith.mulf %182, %178 : vector<16x64xf32>
    %184 = arith.mulf %183, %178 : vector<16x64xf32>
    %185 = arith.addf %178, %184 : vector<16x64xf32>
    %cst_56 = arith.constant 0.797884583 : f32
    %186 = vector.broadcast %cst_56 : f32 to vector<16x64xf32>
    %187 = arith.mulf %186, %185 : vector<16x64xf32>
    %188 = math.tanh %187 : vector<16x64xf32>
    %cst_57 = arith.constant 1.000000e+00 : f32
    %189 = vector.broadcast %cst_57 : f32 to vector<16x64xf32>
    %190 = arith.addf %189, %188 : vector<16x64xf32>
    %191 = arith.mulf %180, %190 : vector<16x64xf32>
    %192 = arith.truncf %191 : vector<16x64xf32> to vector<16x64xbf16>
    %193 = arith.index_cast %c0_i32 : i32 to index
    %c0_58 = arith.constant 0 : index
    %c0_59 = arith.constant 0 : index
    %194 = vector.load %arg12[%193, %c0_58, %c0_59] : memref<4x64x32xbf16, #tpu.memory_space<vmem>>, vector<1x64x32xbf16>
    %195 = vector.shape_cast %194 : vector<1x64x32xbf16> to vector<64x32xbf16>
    %cst_60 = arith.constant dense<0.000000e+00> : vector<16x32xf32>
    %196 = tpu.matmul %192, %195, %cst_60 {dimension_numbers = #tpu.dot_dimension_numbers<[1], [0], [0], [1], [0, 0, 1, 1], [], []>} : vector<16x64xbf16>, vector<64x32xbf16>, vector<16x32xf32> -> vector<16x32xf32>
    %197 = arith.index_cast %c0_i32 : i32 to index
    %c0_61 = arith.constant 0 : index
    %c0_62 = arith.constant 0 : index
    %198 = vector.load %arg13[%197, %c0_61, %c0_62] : memref<4x1x32xf32, #tpu.memory_space<vmem>>, vector<1x1x32xf32>
    %199 = vector.shape_cast %198 : vector<1x1x32xf32> to vector<1x32xf32>
    %200 = vector.broadcast %199 : vector<1x32xf32> to vector<16x32xf32>
    %201 = arith.addf %196, %200 : vector<16x32xf32>
    %202 = arith.addf %168, %201 : vector<16x32xf32>
    %203 = arith.index_cast %c0_i32 : i32 to index
    %c0_63 = arith.constant 0 : index
    %c0_64 = arith.constant 0 : index
    %204 = vector.load %arg14[%203, %c0_63, %c0_64] : memref<4x1x32xf32, #tpu.memory_space<vmem>>, vector<1x1x32xf32>
    %205 = vector.shape_cast %204 : vector<1x1x32xf32> to vector<1x32xf32>
    %206 = arith.index_cast %c0_i32 : i32 to index
    %c0_65 = arith.constant 0 : index
    %c0_66 = arith.constant 0 : index
    %207 = vector.load %arg15[%206, %c0_65, %c0_66] : memref<4x1x32xf32, #tpu.memory_space<vmem>>, vector<1x1x32xf32>
    %208 = vector.shape_cast %207 : vector<1x1x32xf32> to vector<1x32xf32>
    %cst_67 = arith.constant dense<0.000000e+00> : vector<16xf32>
    %209 = vector.multi_reduction <add>, %202, %cst_67 [1] : vector<16x32xf32> to vector<16xf32>
    %210 = vector.shape_cast %209 : vector<16xf32> to vector<16x1xf32>
    %cst_68 = arith.constant 3.200000e+01 : f32
    %211 = vector.broadcast %cst_68 : f32 to vector<16x1xf32>
    %212 = arith.divf %210, %211 : vector<16x1xf32>
    %213 = vector.broadcast %212 : vector<16x1xf32> to vector<16x32xf32>
    %214 = arith.subf %202, %213 : vector<16x32xf32>
    %215 = arith.mulf %214, %214 : vector<16x32xf32>
    %cst_69 = arith.constant dense<0.000000e+00> : vector<16xf32>
    %216 = vector.multi_reduction <add>, %215, %cst_69 [1] : vector<16x32xf32> to vector<16xf32>
    %217 = vector.shape_cast %216 : vector<16xf32> to vector<16x1xf32>
    %cst_70 = arith.constant 3.200000e+01 : f32
    %218 = vector.broadcast %cst_70 : f32 to vector<16x1xf32>
    %219 = arith.divf %217, %218 : vector<16x1xf32>
    %220 = vector.broadcast %212 : vector<16x1xf32> to vector<16x32xf32>
    %221 = arith.subf %202, %220 : vector<16x32xf32>
    %cst_71 = arith.constant 9.99999996E-13 : f32
    %222 = vector.broadcast %cst_71 : f32 to vector<16x1xf32>
    %223 = arith.addf %219, %222 : vector<16x1xf32>
    %224 = math.rsqrt %223 : vector<16x1xf32>
    %225 = vector.broadcast %224 : vector<16x1xf32> to vector<16x32xf32>
    %226 = arith.mulf %221, %225 : vector<16x32xf32>
    %227 = vector.broadcast %205 : vector<1x32xf32> to vector<16x32xf32>
    %228 = arith.mulf %226, %227 : vector<16x32xf32>
    %229 = vector.broadcast %208 : vector<1x32xf32> to vector<16x32xf32>
    %230 = arith.addf %228, %229 : vector<16x32xf32>
    %231 = vector.shape_cast %230 : vector<16x32xf32> to vector<2x8x32xf32>
    %c0_i32_72 = arith.constant 0 : i32
    %232 = arith.cmpi sge, %c0_i32, %c0_i32_72 : i32
    %cst_73 = arith.constant 1.000000e+00 : f32
    %cst_74 = arith.constant 0.000000e+00 : f32
    %233 = arith.select %232, %cst_73, %cst_74 : f32
    "tpu.trace_start"() <{level = 10 : i32, message = "bws,bsh->bwh"}> : () -> ()
    %cst_75 = arith.constant dense<0.000000e+00> : vector<2x5x32xf32>
    %234 = tpu.matmul %20, %231, %cst_75 {dimension_numbers = #tpu.dot_dimension_numbers<[2], [1], [1], [2], [0, 0, 0, 1, 1, 2], [0], [0]>} : vector<2x5x8xf32>, vector<2x8x32xf32>, vector<2x5x32xf32> -> vector<2x5x32xf32>
    "tpu.trace_stop"() : () -> ()
    %235 = vector.broadcast %233 : f32 to vector<2x5x32xf32>
    %236 = arith.mulf %235, %234 : vector<2x5x32xf32>
    %237 = arith.addf %22, %236 : vector<2x5x32xf32>
    %c1_i32 = arith.constant 1 : i32
    %238 = vector.shape_cast %231 : vector<2x8x32xf32> to vector<16x32xf32>
    %239 = arith.truncf %238 : vector<16x32xf32> to vector<16x32xbf16>
    %240 = arith.index_cast %c1_i32 : i32 to index
    %c0_76 = arith.constant 0 : index
    %c0_77 = arith.constant 0 : index
    %241 = vector.load %arg4[%240, %c0_76, %c0_77] : memref<4x32x96xbf16, #tpu.memory_space<vmem>>, vector<1x32x96xbf16>
    %242 = vector.shape_cast %241 : vector<1x32x96xbf16> to vector<32x96xbf16>
    %cst_78 = arith.constant dense<0.000000e+00> : vector<16x96xf32>
    %243 = tpu.matmul %239, %242, %cst_78 {dimension_numbers = #tpu.dot_dimension_numbers<[1], [0], [0], [1], [0, 0, 1, 1], [], []>} : vector<16x32xbf16>, vector<32x96xbf16>, vector<16x96xf32> -> vector<16x96xf32>
    %244 = arith.index_cast %c1_i32 : i32 to index
    %c0_79 = arith.constant 0 : index
    %c0_80 = arith.constant 0 : index
    %245 = vector.load %arg5[%244, %c0_79, %c0_80] : memref<4x1x96xf32, #tpu.memory_space<vmem>>, vector<1x1x96xf32>
    %246 = vector.shape_cast %245 : vector<1x1x96xf32> to vector<1x96xf32>
    %247 = vector.broadcast %246 : vector<1x96xf32> to vector<16x96xf32>
    %248 = arith.addf %243, %247 : vector<16x96xf32>
    %249 = vector.extract_strided_slice %248 {offsets = [0, 0], sizes = [16, 32], strides = [1, 1]} : vector<16x96xf32> to vector<16x32xf32>
    %250 = vector.shape_cast %249 : vector<16x32xf32> to vector<2x8x32xf32>
    %251 = arith.truncf %250 : vector<2x8x32xf32> to vector<2x8x32xbf16>
    %252 = vector.extract_strided_slice %248 {offsets = [0, 32], sizes = [16, 32], strides = [1, 1]} : vector<16x96xf32> to vector<16x32xf32>
    %253 = vector.shape_cast %252 : vector<16x32xf32> to vector<2x8x32xf32>
    %254 = arith.truncf %253 : vector<2x8x32xf32> to vector<2x8x32xbf16>
    %255 = vector.extract_strided_slice %248 {offsets = [0, 64], sizes = [16, 32], strides = [1, 1]} : vector<16x96xf32> to vector<16x32xf32>
    %256 = vector.shape_cast %255 : vector<16x32xf32> to vector<2x8x32xf32>
    %257 = arith.truncf %256 : vector<2x8x32xf32> to vector<2x8x32xbf16>
    %258 = arith.index_cast %c1_i32 : i32 to index
    %c0_81 = arith.constant 0 : index
    %c0_82 = arith.constant 0 : index
    %259 = vector.load %arg6[%258, %c0_81, %c0_82] : memref<4x32x32xbf16, #tpu.memory_space<vmem>>, vector<1x32x32xbf16>
    %260 = vector.shape_cast %259 : vector<1x32x32xbf16> to vector<32x32xbf16>
    %cst_83 = arith.constant 0.000000e+00 : f32
    %261 = vector.broadcast %cst_83 : f32 to vector<16x32xf32>
    %262 = vector.extract_strided_slice %251 {offsets = [0, 0, 0], sizes = [2, 8, 8], strides = [1, 1, 1]} : vector<2x8x32xbf16> to vector<2x8x8xbf16>
    %263 = vector.extract_strided_slice %254 {offsets = [0, 0, 0], sizes = [2, 8, 8], strides = [1, 1, 1]} : vector<2x8x32xbf16> to vector<2x8x8xbf16>
    "tpu.trace_start"() <{level = 10 : i32, message = "bqd,bkd->bqk"}> : () -> ()
    %cst_84 = arith.constant dense<0.000000e+00> : vector<2x8x8xf32>
    %264 = tpu.matmul %262, %263, %cst_84 {dimension_numbers = #tpu.dot_dimension_numbers<[2], [2], [1], [1], [0, 0, 0, 1, 1, 1], [0], [0]>} : vector<2x8x8xbf16>, vector<2x8x8xbf16>, vector<2x8x8xf32> -> vector<2x8x8xf32>
    "tpu.trace_stop"() : () -> ()
    %265 = arith.addf %264, %6 : vector<2x8x8xf32>
    %cst_85 = arith.constant dense<0xFF800000> : vector<2x8xf32>
    %266 = vector.multi_reduction <maximumf>, %265, %cst_85 [2] : vector<2x8x8xf32> to vector<2x8xf32>
    %267 = vector.shape_cast %266 : vector<2x8xf32> to vector<2x8x1xf32>
    %268 = vector.broadcast %267 : vector<2x8x1xf32> to vector<2x8x8xf32>
    %269 = arith.subf %265, %268 : vector<2x8x8xf32>
    %270 = math.exp %269 : vector<2x8x8xf32>
    %cst_86 = arith.constant dense<0.000000e+00> : vector<2x8xf32>
    %271 = vector.multi_reduction <add>, %270, %cst_86 [2] : vector<2x8x8xf32> to vector<2x8xf32>
    %272 = vector.shape_cast %271 : vector<2x8xf32> to vector<2x8x1xf32>
    %273 = tpu.reciprocal %272 {approx = true} : vector<2x8x1xf32> -> vector<2x8x1xf32>
    %274 = vector.broadcast %273 : vector<2x8x1xf32> to vector<2x8x8xf32>
    %275 = arith.mulf %270, %274 : vector<2x8x8xf32>
    %276 = arith.truncf %275 : vector<2x8x8xf32> to vector<2x8x8xbf16>
    %277 = vector.extract_strided_slice %257 {offsets = [0, 0, 0], sizes = [2, 8, 8], strides = [1, 1, 1]} : vector<2x8x32xbf16> to vector<2x8x8xbf16>
    "tpu.trace_start"() <{level = 10 : i32, message = "bqk,bkd->bqd"}> : () -> ()
    %cst_87 = arith.constant dense<0.000000e+00> : vector<2x8x8xf32>
    %278 = tpu.matmul %276, %277, %cst_87 {dimension_numbers = #tpu.dot_dimension_numbers<[2], [1], [1], [2], [0, 0, 0, 1, 1, 2], [0], [0]>} : vector<2x8x8xbf16>, vector<2x8x8xbf16>, vector<2x8x8xf32> -> vector<2x8x8xf32>
    "tpu.trace_stop"() : () -> ()
    %279 = vector.shape_cast %278 : vector<2x8x8xf32> to vector<16x8xf32>
    %280 = arith.truncf %279 : vector<16x8xf32> to vector<16x8xbf16>
    %281 = vector.extract_strided_slice %260 {offsets = [0, 0], sizes = [8, 32], strides = [1, 1]} : vector<32x32xbf16> to vector<8x32xbf16>
    %cst_88 = arith.constant dense<0.000000e+00> : vector<16x32xf32>
    %282 = tpu.matmul %280, %281, %cst_88 {dimension_numbers = #tpu.dot_dimension_numbers<[1], [0], [0], [1], [0, 0, 1, 1], [], []>} : vector<16x8xbf16>, vector<8x32xbf16>, vector<16x32xf32> -> vector<16x32xf32>
    %283 = arith.addf %261, %282 : vector<16x32xf32>
    %284 = vector.extract_strided_slice %251 {offsets = [0, 0, 8], sizes = [2, 8, 8], strides = [1, 1, 1]} : vector<2x8x32xbf16> to vector<2x8x8xbf16>
    %285 = vector.extract_strided_slice %254 {offsets = [0, 0, 8], sizes = [2, 8, 8], strides = [1, 1, 1]} : vector<2x8x32xbf16> to vector<2x8x8xbf16>
    "tpu.trace_start"() <{level = 10 : i32, message = "bqd,bkd->bqk"}> : () -> ()
    %cst_89 = arith.constant dense<0.000000e+00> : vector<2x8x8xf32>
    %286 = tpu.matmul %284, %285, %cst_89 {dimension_numbers = #tpu.dot_dimension_numbers<[2], [2], [1], [1], [0, 0, 0, 1, 1, 1], [0], [0]>} : vector<2x8x8xbf16>, vector<2x8x8xbf16>, vector<2x8x8xf32> -> vector<2x8x8xf32>
    "tpu.trace_stop"() : () -> ()
    %287 = arith.addf %286, %6 : vector<2x8x8xf32>
    %cst_90 = arith.constant dense<0xFF800000> : vector<2x8xf32>
    %288 = vector.multi_reduction <maximumf>, %287, %cst_90 [2] : vector<2x8x8xf32> to vector<2x8xf32>
    %289 = vector.shape_cast %288 : vector<2x8xf32> to vector<2x8x1xf32>
    %290 = vector.broadcast %289 : vector<2x8x1xf32> to vector<2x8x8xf32>
    %291 = arith.subf %287, %290 : vector<2x8x8xf32>
    %292 = math.exp %291 : vector<2x8x8xf32>
    %cst_91 = arith.constant dense<0.000000e+00> : vector<2x8xf32>
    %293 = vector.multi_reduction <add>, %292, %cst_91 [2] : vector<2x8x8xf32> to vector<2x8xf32>
    %294 = vector.shape_cast %293 : vector<2x8xf32> to vector<2x8x1xf32>
    %295 = tpu.reciprocal %294 {approx = true} : vector<2x8x1xf32> -> vector<2x8x1xf32>
    %296 = vector.broadcast %295 : vector<2x8x1xf32> to vector<2x8x8xf32>
    %297 = arith.mulf %292, %296 : vector<2x8x8xf32>
    %298 = arith.truncf %297 : vector<2x8x8xf32> to vector<2x8x8xbf16>
    %299 = vector.extract_strided_slice %257 {offsets = [0, 0, 8], sizes = [2, 8, 8], strides = [1, 1, 1]} : vector<2x8x32xbf16> to vector<2x8x8xbf16>
    "tpu.trace_start"() <{level = 10 : i32, message = "bqk,bkd->bqd"}> : () -> ()
    %cst_92 = arith.constant dense<0.000000e+00> : vector<2x8x8xf32>
    %300 = tpu.matmul %298, %299, %cst_92 {dimension_numbers = #tpu.dot_dimension_numbers<[2], [1], [1], [2], [0, 0, 0, 1, 1, 2], [0], [0]>} : vector<2x8x8xbf16>, vector<2x8x8xbf16>, vector<2x8x8xf32> -> vector<2x8x8xf32>
    "tpu.trace_stop"() : () -> ()
    %301 = vector.shape_cast %300 : vector<2x8x8xf32> to vector<16x8xf32>
    %302 = arith.truncf %301 : vector<16x8xf32> to vector<16x8xbf16>
    %303 = vector.extract_strided_slice %260 {offsets = [8, 0], sizes = [8, 32], strides = [1, 1]} : vector<32x32xbf16> to vector<8x32xbf16>
    %cst_93 = arith.constant dense<0.000000e+00> : vector<16x32xf32>
    %304 = tpu.matmul %302, %303, %cst_93 {dimension_numbers = #tpu.dot_dimension_numbers<[1], [0], [0], [1], [0, 0, 1, 1], [], []>} : vector<16x8xbf16>, vector<8x32xbf16>, vector<16x32xf32> -> vector<16x32xf32>
    %305 = arith.addf %283, %304 : vector<16x32xf32>
    %306 = vector.extract_strided_slice %251 {offsets = [0, 0, 16], sizes = [2, 8, 8], strides = [1, 1, 1]} : vector<2x8x32xbf16> to vector<2x8x8xbf16>
    %307 = vector.extract_strided_slice %254 {offsets = [0, 0, 16], sizes = [2, 8, 8], strides = [1, 1, 1]} : vector<2x8x32xbf16> to vector<2x8x8xbf16>
    "tpu.trace_start"() <{level = 10 : i32, message = "bqd,bkd->bqk"}> : () -> ()
    %cst_94 = arith.constant dense<0.000000e+00> : vector<2x8x8xf32>
    %308 = tpu.matmul %306, %307, %cst_94 {dimension_numbers = #tpu.dot_dimension_numbers<[2], [2], [1], [1], [0, 0, 0, 1, 1, 1], [0], [0]>} : vector<2x8x8xbf16>, vector<2x8x8xbf16>, vector<2x8x8xf32> -> vector<2x8x8xf32>
    "tpu.trace_stop"() : () -> ()
    %309 = arith.addf %308, %6 : vector<2x8x8xf32>
    %cst_95 = arith.constant dense<0xFF800000> : vector<2x8xf32>
    %310 = vector.multi_reduction <maximumf>, %309, %cst_95 [2] : vector<2x8x8xf32> to vector<2x8xf32>
    %311 = vector.shape_cast %310 : vector<2x8xf32> to vector<2x8x1xf32>
    %312 = vector.broadcast %311 : vector<2x8x1xf32> to vector<2x8x8xf32>
    %313 = arith.subf %309, %312 : vector<2x8x8xf32>
    %314 = math.exp %313 : vector<2x8x8xf32>
    %cst_96 = arith.constant dense<0.000000e+00> : vector<2x8xf32>
    %315 = vector.multi_reduction <add>, %314, %cst_96 [2] : vector<2x8x8xf32> to vector<2x8xf32>
    %316 = vector.shape_cast %315 : vector<2x8xf32> to vector<2x8x1xf32>
    %317 = tpu.reciprocal %316 {approx = true} : vector<2x8x1xf32> -> vector<2x8x1xf32>
    %318 = vector.broadcast %317 : vector<2x8x1xf32> to vector<2x8x8xf32>
    %319 = arith.mulf %314, %318 : vector<2x8x8xf32>
    %320 = arith.truncf %319 : vector<2x8x8xf32> to vector<2x8x8xbf16>
    %321 = vector.extract_strided_slice %257 {offsets = [0, 0, 16], sizes = [2, 8, 8], strides = [1, 1, 1]} : vector<2x8x32xbf16> to vector<2x8x8xbf16>
    "tpu.trace_start"() <{level = 10 : i32, message = "bqk,bkd->bqd"}> : () -> ()
    %cst_97 = arith.constant dense<0.000000e+00> : vector<2x8x8xf32>
    %322 = tpu.matmul %320, %321, %cst_97 {dimension_numbers = #tpu.dot_dimension_numbers<[2], [1], [1], [2], [0, 0, 0, 1, 1, 2], [0], [0]>} : vector<2x8x8xbf16>, vector<2x8x8xbf16>, vector<2x8x8xf32> -> vector<2x8x8xf32>
    "tpu.trace_stop"() : () -> ()
    %323 = vector.shape_cast %322 : vector<2x8x8xf32> to vector<16x8xf32>
    %324 = arith.truncf %323 : vector<16x8xf32> to vector<16x8xbf16>
    %325 = vector.extract_strided_slice %260 {offsets = [16, 0], sizes = [8, 32], strides = [1, 1]} : vector<32x32xbf16> to vector<8x32xbf16>
    %cst_98 = arith.constant dense<0.000000e+00> : vector<16x32xf32>
    %326 = tpu.matmul %324, %325, %cst_98 {dimension_numbers = #tpu.dot_dimension_numbers<[1], [0], [0], [1], [0, 0, 1, 1], [], []>} : vector<16x8xbf16>, vector<8x32xbf16>, vector<16x32xf32> -> vector<16x32xf32>
    %327 = arith.addf %305, %326 : vector<16x32xf32>
    %328 = vector.extract_strided_slice %251 {offsets = [0, 0, 24], sizes = [2, 8, 8], strides = [1, 1, 1]} : vector<2x8x32xbf16> to vector<2x8x8xbf16>
    %329 = vector.extract_strided_slice %254 {offsets = [0, 0, 24], sizes = [2, 8, 8], strides = [1, 1, 1]} : vector<2x8x32xbf16> to vector<2x8x8xbf16>
    "tpu.trace_start"() <{level = 10 : i32, message = "bqd,bkd->bqk"}> : () -> ()
    %cst_99 = arith.constant dense<0.000000e+00> : vector<2x8x8xf32>
    %330 = tpu.matmul %328, %329, %cst_99 {dimension_numbers = #tpu.dot_dimension_numbers<[2], [2], [1], [1], [0, 0, 0, 1, 1, 1], [0], [0]>} : vector<2x8x8xbf16>, vector<2x8x8xbf16>, vector<2x8x8xf32> -> vector<2x8x8xf32>
    "tpu.trace_stop"() : () -> ()
    %331 = arith.addf %330, %6 : vector<2x8x8xf32>
    %cst_100 = arith.constant dense<0xFF800000> : vector<2x8xf32>
    %332 = vector.multi_reduction <maximumf>, %331, %cst_100 [2] : vector<2x8x8xf32> to vector<2x8xf32>
    %333 = vector.shape_cast %332 : vector<2x8xf32> to vector<2x8x1xf32>
    %334 = vector.broadcast %333 : vector<2x8x1xf32> to vector<2x8x8xf32>
    %335 = arith.subf %331, %334 : vector<2x8x8xf32>
    %336 = math.exp %335 : vector<2x8x8xf32>
    %cst_101 = arith.constant dense<0.000000e+00> : vector<2x8xf32>
    %337 = vector.multi_reduction <add>, %336, %cst_101 [2] : vector<2x8x8xf32> to vector<2x8xf32>
    %338 = vector.shape_cast %337 : vector<2x8xf32> to vector<2x8x1xf32>
    %339 = tpu.reciprocal %338 {approx = true} : vector<2x8x1xf32> -> vector<2x8x1xf32>
    %340 = vector.broadcast %339 : vector<2x8x1xf32> to vector<2x8x8xf32>
    %341 = arith.mulf %336, %340 : vector<2x8x8xf32>
    %342 = arith.truncf %341 : vector<2x8x8xf32> to vector<2x8x8xbf16>
    %343 = vector.extract_strided_slice %257 {offsets = [0, 0, 24], sizes = [2, 8, 8], strides = [1, 1, 1]} : vector<2x8x32xbf16> to vector<2x8x8xbf16>
    "tpu.trace_start"() <{level = 10 : i32, message = "bqk,bkd->bqd"}> : () -> ()
    %cst_102 = arith.constant dense<0.000000e+00> : vector<2x8x8xf32>
    %344 = tpu.matmul %342, %343, %cst_102 {dimension_numbers = #tpu.dot_dimension_numbers<[2], [1], [1], [2], [0, 0, 0, 1, 1, 2], [0], [0]>} : vector<2x8x8xbf16>, vector<2x8x8xbf16>, vector<2x8x8xf32> -> vector<2x8x8xf32>
    "tpu.trace_stop"() : () -> ()
    %345 = vector.shape_cast %344 : vector<2x8x8xf32> to vector<16x8xf32>
    %346 = arith.truncf %345 : vector<16x8xf32> to vector<16x8xbf16>
    %347 = vector.extract_strided_slice %260 {offsets = [24, 0], sizes = [8, 32], strides = [1, 1]} : vector<32x32xbf16> to vector<8x32xbf16>
    %cst_103 = arith.constant dense<0.000000e+00> : vector<16x32xf32>
    %348 = tpu.matmul %346, %347, %cst_103 {dimension_numbers = #tpu.dot_dimension_numbers<[1], [0], [0], [1], [0, 0, 1, 1], [], []>} : vector<16x8xbf16>, vector<8x32xbf16>, vector<16x32xf32> -> vector<16x32xf32>
    %349 = arith.addf %327, %348 : vector<16x32xf32>
    %350 = arith.index_cast %c1_i32 : i32 to index
    %c0_104 = arith.constant 0 : index
    %c0_105 = arith.constant 0 : index
    %351 = vector.load %arg7[%350, %c0_104, %c0_105] : memref<4x1x32xf32, #tpu.memory_space<vmem>>, vector<1x1x32xf32>
    %352 = vector.shape_cast %351 : vector<1x1x32xf32> to vector<1x32xf32>
    %353 = vector.broadcast %352 : vector<1x32xf32> to vector<16x32xf32>
    %354 = arith.addf %349, %353 : vector<16x32xf32>
    %355 = arith.addf %238, %354 : vector<16x32xf32>
    %356 = arith.index_cast %c1_i32 : i32 to index
    %c0_106 = arith.constant 0 : index
    %c0_107 = arith.constant 0 : index
    %357 = vector.load %arg8[%356, %c0_106, %c0_107] : memref<4x1x32xf32, #tpu.memory_space<vmem>>, vector<1x1x32xf32>
    %358 = vector.shape_cast %357 : vector<1x1x32xf32> to vector<1x32xf32>
    %359 = arith.index_cast %c1_i32 : i32 to index
    %c0_108 = arith.constant 0 : index
    %c0_109 = arith.constant 0 : index
    %360 = vector.load %arg9[%359, %c0_108, %c0_109] : memref<4x1x32xf32, #tpu.memory_space<vmem>>, vector<1x1x32xf32>
    %361 = vector.shape_cast %360 : vector<1x1x32xf32> to vector<1x32xf32>
    %cst_110 = arith.constant dense<0.000000e+00> : vector<16xf32>
    %362 = vector.multi_reduction <add>, %355, %cst_110 [1] : vector<16x32xf32> to vector<16xf32>
    %363 = vector.shape_cast %362 : vector<16xf32> to vector<16x1xf32>
    %cst_111 = arith.constant 3.200000e+01 : f32
    %364 = vector.broadcast %cst_111 : f32 to vector<16x1xf32>
    %365 = arith.divf %363, %364 : vector<16x1xf32>
    %366 = vector.broadcast %365 : vector<16x1xf32> to vector<16x32xf32>
    %367 = arith.subf %355, %366 : vector<16x32xf32>
    %368 = arith.mulf %367, %367 : vector<16x32xf32>
    %cst_112 = arith.constant dense<0.000000e+00> : vector<16xf32>
    %369 = vector.multi_reduction <add>, %368, %cst_112 [1] : vector<16x32xf32> to vector<16xf32>
    %370 = vector.shape_cast %369 : vector<16xf32> to vector<16x1xf32>
    %cst_113 = arith.constant 3.200000e+01 : f32
    %371 = vector.broadcast %cst_113 : f32 to vector<16x1xf32>
    %372 = arith.divf %370, %371 : vector<16x1xf32>
    %373 = vector.broadcast %365 : vector<16x1xf32> to vector<16x32xf32>
    %374 = arith.subf %355, %373 : vector<16x32xf32>
    %cst_114 = arith.constant 9.99999996E-13 : f32
    %375 = vector.broadcast %cst_114 : f32 to vector<16x1xf32>
    %376 = arith.addf %372, %375 : vector<16x1xf32>
    %377 = math.rsqrt %376 : vector<16x1xf32>
    %378 = vector.broadcast %377 : vector<16x1xf32> to vector<16x32xf32>
    %379 = arith.mulf %374, %378 : vector<16x32xf32>
    %380 = vector.broadcast %358 : vector<1x32xf32> to vector<16x32xf32>
    %381 = arith.mulf %379, %380 : vector<16x32xf32>
    %382 = vector.broadcast %361 : vector<1x32xf32> to vector<16x32xf32>
    %383 = arith.addf %381, %382 : vector<16x32xf32>
    %384 = arith.truncf %383 : vector<16x32xf32> to vector<16x32xbf16>
    %385 = arith.index_cast %c1_i32 : i32 to index
    %c0_115 = arith.constant 0 : index
    %c0_116 = arith.constant 0 : index
    %386 = vector.load %arg10[%385, %c0_115, %c0_116] : memref<4x32x64xbf16, #tpu.memory_space<vmem>>, vector<1x32x64xbf16>
    %387 = vector.shape_cast %386 : vector<1x32x64xbf16> to vector<32x64xbf16>
    %cst_117 = arith.constant dense<0.000000e+00> : vector<16x64xf32>
    %388 = tpu.matmul %384, %387, %cst_117 {dimension_numbers = #tpu.dot_dimension_numbers<[1], [0], [0], [1], [0, 0, 1, 1], [], []>} : vector<16x32xbf16>, vector<32x64xbf16>, vector<16x64xf32> -> vector<16x64xf32>
    %389 = arith.index_cast %c1_i32 : i32 to index
    %c0_118 = arith.constant 0 : index
    %c0_119 = arith.constant 0 : index
    %390 = vector.load %arg11[%389, %c0_118, %c0_119] : memref<4x1x64xf32, #tpu.memory_space<vmem>>, vector<1x1x64xf32>
    %391 = vector.shape_cast %390 : vector<1x1x64xf32> to vector<1x64xf32>
    %392 = vector.broadcast %391 : vector<1x64xf32> to vector<16x64xf32>
    %393 = arith.addf %388, %392 : vector<16x64xf32>
    %cst_120 = arith.constant 5.000000e-01 : f32
    %394 = vector.broadcast %cst_120 : f32 to vector<16x64xf32>
    %395 = arith.mulf %394, %393 : vector<16x64xf32>
    %cst_121 = arith.constant 4.471500e-02 : f32
    %396 = vector.broadcast %cst_121 : f32 to vector<16x64xf32>
    %397 = arith.mulf %396, %393 : vector<16x64xf32>
    %398 = arith.mulf %397, %393 : vector<16x64xf32>
    %399 = arith.mulf %398, %393 : vector<16x64xf32>
    %400 = arith.addf %393, %399 : vector<16x64xf32>
    %cst_122 = arith.constant 0.797884583 : f32
    %401 = vector.broadcast %cst_122 : f32 to vector<16x64xf32>
    %402 = arith.mulf %401, %400 : vector<16x64xf32>
    %403 = math.tanh %402 : vector<16x64xf32>
    %cst_123 = arith.constant 1.000000e+00 : f32
    %404 = vector.broadcast %cst_123 : f32 to vector<16x64xf32>
    %405 = arith.addf %404, %403 : vector<16x64xf32>
    %406 = arith.mulf %395, %405 : vector<16x64xf32>
    %407 = arith.truncf %406 : vector<16x64xf32> to vector<16x64xbf16>
    %408 = arith.index_cast %c1_i32 : i32 to index
    %c0_124 = arith.constant 0 : index
    %c0_125 = arith.constant 0 : index
    %409 = vector.load %arg12[%408, %c0_124, %c0_125] : memref<4x64x32xbf16, #tpu.memory_space<vmem>>, vector<1x64x32xbf16>
    %410 = vector.shape_cast %409 : vector<1x64x32xbf16> to vector<64x32xbf16>
    %cst_126 = arith.constant dense<0.000000e+00> : vector<16x32xf32>
    %411 = tpu.matmul %407, %410, %cst_126 {dimension_numbers = #tpu.dot_dimension_numbers<[1], [0], [0], [1], [0, 0, 1, 1], [], []>} : vector<16x64xbf16>, vector<64x32xbf16>, vector<16x32xf32> -> vector<16x32xf32>
    %412 = arith.index_cast %c1_i32 : i32 to index
    %c0_127 = arith.constant 0 : index
    %c0_128 = arith.constant 0 : index
    %413 = vector.load %arg13[%412, %c0_127, %c0_128] : memref<4x1x32xf32, #tpu.memory_space<vmem>>, vector<1x1x32xf32>
    %414 = vector.shape_cast %413 : vector<1x1x32xf32> to vector<1x32xf32>
    %415 = vector.broadcast %414 : vector<1x32xf32> to vector<16x32xf32>
    %416 = arith.addf %411, %415 : vector<16x32xf32>
    %417 = arith.addf %383, %416 : vector<16x32xf32>
    %418 = arith.index_cast %c1_i32 : i32 to index
    %c0_129 = arith.constant 0 : index
    %c0_130 = arith.constant 0 : index
    %419 = vector.load %arg14[%418, %c0_129, %c0_130] : memref<4x1x32xf32, #tpu.memory_space<vmem>>, vector<1x1x32xf32>
    %420 = vector.shape_cast %419 : vector<1x1x32xf32> to vector<1x32xf32>
    %421 = arith.index_cast %c1_i32 : i32 to index
    %c0_131 = arith.constant 0 : index
    %c0_132 = arith.constant 0 : index
    %422 = vector.load %arg15[%421, %c0_131, %c0_132] : memref<4x1x32xf32, #tpu.memory_space<vmem>>, vector<1x1x32xf32>
    %423 = vector.shape_cast %422 : vector<1x1x32xf32> to vector<1x32xf32>
    %cst_133 = arith.constant dense<0.000000e+00> : vector<16xf32>
    %424 = vector.multi_reduction <add>, %417, %cst_133 [1] : vector<16x32xf32> to vector<16xf32>
    %425 = vector.shape_cast %424 : vector<16xf32> to vector<16x1xf32>
    %cst_134 = arith.constant 3.200000e+01 : f32
    %426 = vector.broadcast %cst_134 : f32 to vector<16x1xf32>
    %427 = arith.divf %425, %426 : vector<16x1xf32>
    %428 = vector.broadcast %427 : vector<16x1xf32> to vector<16x32xf32>
    %429 = arith.subf %417, %428 : vector<16x32xf32>
    %430 = arith.mulf %429, %429 : vector<16x32xf32>
    %cst_135 = arith.constant dense<0.000000e+00> : vector<16xf32>
    %431 = vector.multi_reduction <add>, %430, %cst_135 [1] : vector<16x32xf32> to vector<16xf32>
    %432 = vector.shape_cast %431 : vector<16xf32> to vector<16x1xf32>
    %cst_136 = arith.constant 3.200000e+01 : f32
    %433 = vector.broadcast %cst_136 : f32 to vector<16x1xf32>
    %434 = arith.divf %432, %433 : vector<16x1xf32>
    %435 = vector.broadcast %427 : vector<16x1xf32> to vector<16x32xf32>
    %436 = arith.subf %417, %435 : vector<16x32xf32>
    %cst_137 = arith.constant 9.99999996E-13 : f32
    %437 = vector.broadcast %cst_137 : f32 to vector<16x1xf32>
    %438 = arith.addf %434, %437 : vector<16x1xf32>
    %439 = math.rsqrt %438 : vector<16x1xf32>
    %440 = vector.broadcast %439 : vector<16x1xf32> to vector<16x32xf32>
    %441 = arith.mulf %436, %440 : vector<16x32xf32>
    %442 = vector.broadcast %420 : vector<1x32xf32> to vector<16x32xf32>
    %443 = arith.mulf %441, %442 : vector<16x32xf32>
    %444 = vector.broadcast %423 : vector<1x32xf32> to vector<16x32xf32>
    %445 = arith.addf %443, %444 : vector<16x32xf32>
    %446 = vector.shape_cast %445 : vector<16x32xf32> to vector<2x8x32xf32>
    %c0_i32_138 = arith.constant 0 : i32
    %447 = arith.cmpi sge, %c1_i32, %c0_i32_138 : i32
    %cst_139 = arith.constant 1.000000e+00 : f32
    %cst_140 = arith.constant 0.000000e+00 : f32
    %448 = arith.select %447, %cst_139, %cst_140 : f32
    "tpu.trace_start"() <{level = 10 : i32, message = "bws,bsh->bwh"}> : () -> ()
    %cst_141 = arith.constant dense<0.000000e+00> : vector<2x5x32xf32>
    %449 = tpu.matmul %20, %446, %cst_141 {dimension_numbers = #tpu.dot_dimension_numbers<[2], [1], [1], [2], [0, 0, 0, 1, 1, 2], [0], [0]>} : vector<2x5x8xf32>, vector<2x8x32xf32>, vector<2x5x32xf32> -> vector<2x5x32xf32>
    "tpu.trace_stop"() : () -> ()
    %450 = vector.broadcast %448 : f32 to vector<2x5x32xf32>
    %451 = arith.mulf %450, %449 : vector<2x5x32xf32>
    %452 = arith.addf %237, %451 : vector<2x5x32xf32>
    %c2_i32 = arith.constant 2 : i32
    %453 = vector.shape_cast %446 : vector<2x8x32xf32> to vector<16x32xf32>
    %454 = arith.truncf %453 : vector<16x32xf32> to vector<16x32xbf16>
    %455 = arith.index_cast %c2_i32 : i32 to index
    %c0_142 = arith.constant 0 : index
    %c0_143 = arith.constant 0 : index
    %456 = vector.load %arg4[%455, %c0_142, %c0_143] : memref<4x32x96xbf16, #tpu.memory_space<vmem>>, vector<1x32x96xbf16>
    %457 = vector.shape_cast %456 : vector<1x32x96xbf16> to vector<32x96xbf16>
    %cst_144 = arith.constant dense<0.000000e+00> : vector<16x96xf32>
    %458 = tpu.matmul %454, %457, %cst_144 {dimension_numbers = #tpu.dot_dimension_numbers<[1], [0], [0], [1], [0, 0, 1, 1], [], []>} : vector<16x32xbf16>, vector<32x96xbf16>, vector<16x96xf32> -> vector<16x96xf32>
    %459 = arith.index_cast %c2_i32 : i32 to index
    %c0_145 = arith.constant 0 : index
    %c0_146 = arith.constant 0 : index
    %460 = vector.load %arg5[%459, %c0_145, %c0_146] : memref<4x1x96xf32, #tpu.memory_space<vmem>>, vector<1x1x96xf32>
    %461 = vector.shape_cast %460 : vector<1x1x96xf32> to vector<1x96xf32>
    %462 = vector.broadcast %461 : vector<1x96xf32> to vector<16x96xf32>
    %463 = arith.addf %458, %462 : vector<16x96xf32>
    %464 = vector.extract_strided_slice %463 {offsets = [0, 0], sizes = [16, 32], strides = [1, 1]} : vector<16x96xf32> to vector<16x32xf32>
    %465 = vector.shape_cast %464 : vector<16x32xf32> to vector<2x8x32xf32>
    %466 = arith.truncf %465 : vector<2x8x32xf32> to vector<2x8x32xbf16>
    %467 = vector.extract_strided_slice %463 {offsets = [0, 32], sizes = [16, 32], strides = [1, 1]} : vector<16x96xf32> to vector<16x32xf32>
    %468 = vector.shape_cast %467 : vector<16x32xf32> to vector<2x8x32xf32>
    %469 = arith.truncf %468 : vector<2x8x32xf32> to vector<2x8x32xbf16>
    %470 = vector.extract_strided_slice %463 {offsets = [0, 64], sizes = [16, 32], strides = [1, 1]} : vector<16x96xf32> to vector<16x32xf32>
    %471 = vector.shape_cast %470 : vector<16x32xf32> to vector<2x8x32xf32>
    %472 = arith.truncf %471 : vector<2x8x32xf32> to vector<2x8x32xbf16>
    %473 = arith.index_cast %c2_i32 : i32 to index
    %c0_147 = arith.constant 0 : index
    %c0_148 = arith.constant 0 : index
    %474 = vector.load %arg6[%473, %c0_147, %c0_148] : memref<4x32x32xbf16, #tpu.memory_space<vmem>>, vector<1x32x32xbf16>
    %475 = vector.shape_cast %474 : vector<1x32x32xbf16> to vector<32x32xbf16>
    %cst_149 = arith.constant 0.000000e+00 : f32
    %476 = vector.broadcast %cst_149 : f32 to vector<16x32xf32>
    %477 = vector.extract_strided_slice %466 {offsets = [0, 0, 0], sizes = [2, 8, 8], strides = [1, 1, 1]} : vector<2x8x32xbf16> to vector<2x8x8xbf16>
    %478 = vector.extract_strided_slice %469 {offsets = [0, 0, 0], sizes = [2, 8, 8], strides = [1, 1, 1]} : vector<2x8x32xbf16> to vector<2x8x8xbf16>
    "tpu.trace_start"() <{level = 10 : i32, message = "bqd,bkd->bqk"}> : () -> ()
    %cst_150 = arith.constant dense<0.000000e+00> : vector<2x8x8xf32>
    %479 = tpu.matmul %477, %478, %cst_150 {dimension_numbers = #tpu.dot_dimension_numbers<[2], [2], [1], [1], [0, 0, 0, 1, 1, 1], [0], [0]>} : vector<2x8x8xbf16>, vector<2x8x8xbf16>, vector<2x8x8xf32> -> vector<2x8x8xf32>
    "tpu.trace_stop"() : () -> ()
    %480 = arith.addf %479, %6 : vector<2x8x8xf32>
    %cst_151 = arith.constant dense<0xFF800000> : vector<2x8xf32>
    %481 = vector.multi_reduction <maximumf>, %480, %cst_151 [2] : vector<2x8x8xf32> to vector<2x8xf32>
    %482 = vector.shape_cast %481 : vector<2x8xf32> to vector<2x8x1xf32>
    %483 = vector.broadcast %482 : vector<2x8x1xf32> to vector<2x8x8xf32>
    %484 = arith.subf %480, %483 : vector<2x8x8xf32>
    %485 = math.exp %484 : vector<2x8x8xf32>
    %cst_152 = arith.constant dense<0.000000e+00> : vector<2x8xf32>
    %486 = vector.multi_reduction <add>, %485, %cst_152 [2] : vector<2x8x8xf32> to vector<2x8xf32>
    %487 = vector.shape_cast %486 : vector<2x8xf32> to vector<2x8x1xf32>
    %488 = tpu.reciprocal %487 {approx = true} : vector<2x8x1xf32> -> vector<2x8x1xf32>
    %489 = vector.broadcast %488 : vector<2x8x1xf32> to vector<2x8x8xf32>
    %490 = arith.mulf %485, %489 : vector<2x8x8xf32>
    %491 = arith.truncf %490 : vector<2x8x8xf32> to vector<2x8x8xbf16>
    %492 = vector.extract_strided_slice %472 {offsets = [0, 0, 0], sizes = [2, 8, 8], strides = [1, 1, 1]} : vector<2x8x32xbf16> to vector<2x8x8xbf16>
    "tpu.trace_start"() <{level = 10 : i32, message = "bqk,bkd->bqd"}> : () -> ()
    %cst_153 = arith.constant dense<0.000000e+00> : vector<2x8x8xf32>
    %493 = tpu.matmul %491, %492, %cst_153 {dimension_numbers = #tpu.dot_dimension_numbers<[2], [1], [1], [2], [0, 0, 0, 1, 1, 2], [0], [0]>} : vector<2x8x8xbf16>, vector<2x8x8xbf16>, vector<2x8x8xf32> -> vector<2x8x8xf32>
    "tpu.trace_stop"() : () -> ()
    %494 = vector.shape_cast %493 : vector<2x8x8xf32> to vector<16x8xf32>
    %495 = arith.truncf %494 : vector<16x8xf32> to vector<16x8xbf16>
    %496 = vector.extract_strided_slice %475 {offsets = [0, 0], sizes = [8, 32], strides = [1, 1]} : vector<32x32xbf16> to vector<8x32xbf16>
    %cst_154 = arith.constant dense<0.000000e+00> : vector<16x32xf32>
    %497 = tpu.matmul %495, %496, %cst_154 {dimension_numbers = #tpu.dot_dimension_numbers<[1], [0], [0], [1], [0, 0, 1, 1], [], []>} : vector<16x8xbf16>, vector<8x32xbf16>, vector<16x32xf32> -> vector<16x32xf32>
    %498 = arith.addf %476, %497 : vector<16x32xf32>
    %499 = vector.extract_strided_slice %466 {offsets = [0, 0, 8], sizes = [2, 8, 8], strides = [1, 1, 1]} : vector<2x8x32xbf16> to vector<2x8x8xbf16>
    %500 = vector.extract_strided_slice %469 {offsets = [0, 0, 8], sizes = [2, 8, 8], strides = [1, 1, 1]} : vector<2x8x32xbf16> to vector<2x8x8xbf16>
    "tpu.trace_start"() <{level = 10 : i32, message = "bqd,bkd->bqk"}> : () -> ()
    %cst_155 = arith.constant dense<0.000000e+00> : vector<2x8x8xf32>
    %501 = tpu.matmul %499, %500, %cst_155 {dimension_numbers = #tpu.dot_dimension_numbers<[2], [2], [1], [1], [0, 0, 0, 1, 1, 1], [0], [0]>} : vector<2x8x8xbf16>, vector<2x8x8xbf16>, vector<2x8x8xf32> -> vector<2x8x8xf32>
    "tpu.trace_stop"() : () -> ()
    %502 = arith.addf %501, %6 : vector<2x8x8xf32>
    %cst_156 = arith.constant dense<0xFF800000> : vector<2x8xf32>
    %503 = vector.multi_reduction <maximumf>, %502, %cst_156 [2] : vector<2x8x8xf32> to vector<2x8xf32>
    %504 = vector.shape_cast %503 : vector<2x8xf32> to vector<2x8x1xf32>
    %505 = vector.broadcast %504 : vector<2x8x1xf32> to vector<2x8x8xf32>
    %506 = arith.subf %502, %505 : vector<2x8x8xf32>
    %507 = math.exp %506 : vector<2x8x8xf32>
    %cst_157 = arith.constant dense<0.000000e+00> : vector<2x8xf32>
    %508 = vector.multi_reduction <add>, %507, %cst_157 [2] : vector<2x8x8xf32> to vector<2x8xf32>
    %509 = vector.shape_cast %508 : vector<2x8xf32> to vector<2x8x1xf32>
    %510 = tpu.reciprocal %509 {approx = true} : vector<2x8x1xf32> -> vector<2x8x1xf32>
    %511 = vector.broadcast %510 : vector<2x8x1xf32> to vector<2x8x8xf32>
    %512 = arith.mulf %507, %511 : vector<2x8x8xf32>
    %513 = arith.truncf %512 : vector<2x8x8xf32> to vector<2x8x8xbf16>
    %514 = vector.extract_strided_slice %472 {offsets = [0, 0, 8], sizes = [2, 8, 8], strides = [1, 1, 1]} : vector<2x8x32xbf16> to vector<2x8x8xbf16>
    "tpu.trace_start"() <{level = 10 : i32, message = "bqk,bkd->bqd"}> : () -> ()
    %cst_158 = arith.constant dense<0.000000e+00> : vector<2x8x8xf32>
    %515 = tpu.matmul %513, %514, %cst_158 {dimension_numbers = #tpu.dot_dimension_numbers<[2], [1], [1], [2], [0, 0, 0, 1, 1, 2], [0], [0]>} : vector<2x8x8xbf16>, vector<2x8x8xbf16>, vector<2x8x8xf32> -> vector<2x8x8xf32>
    "tpu.trace_stop"() : () -> ()
    %516 = vector.shape_cast %515 : vector<2x8x8xf32> to vector<16x8xf32>
    %517 = arith.truncf %516 : vector<16x8xf32> to vector<16x8xbf16>
    %518 = vector.extract_strided_slice %475 {offsets = [8, 0], sizes = [8, 32], strides = [1, 1]} : vector<32x32xbf16> to vector<8x32xbf16>
    %cst_159 = arith.constant dense<0.000000e+00> : vector<16x32xf32>
    %519 = tpu.matmul %517, %518, %cst_159 {dimension_numbers = #tpu.dot_dimension_numbers<[1], [0], [0], [1], [0, 0, 1, 1], [], []>} : vector<16x8xbf16>, vector<8x32xbf16>, vector<16x32xf32> -> vector<16x32xf32>
    %520 = arith.addf %498, %519 : vector<16x32xf32>
    %521 = vector.extract_strided_slice %466 {offsets = [0, 0, 16], sizes = [2, 8, 8], strides = [1, 1, 1]} : vector<2x8x32xbf16> to vector<2x8x8xbf16>
    %522 = vector.extract_strided_slice %469 {offsets = [0, 0, 16], sizes = [2, 8, 8], strides = [1, 1, 1]} : vector<2x8x32xbf16> to vector<2x8x8xbf16>
    "tpu.trace_start"() <{level = 10 : i32, message = "bqd,bkd->bqk"}> : () -> ()
    %cst_160 = arith.constant dense<0.000000e+00> : vector<2x8x8xf32>
    %523 = tpu.matmul %521, %522, %cst_160 {dimension_numbers = #tpu.dot_dimension_numbers<[2], [2], [1], [1], [0, 0, 0, 1, 1, 1], [0], [0]>} : vector<2x8x8xbf16>, vector<2x8x8xbf16>, vector<2x8x8xf32> -> vector<2x8x8xf32>
    "tpu.trace_stop"() : () -> ()
    %524 = arith.addf %523, %6 : vector<2x8x8xf32>
    %cst_161 = arith.constant dense<0xFF800000> : vector<2x8xf32>
    %525 = vector.multi_reduction <maximumf>, %524, %cst_161 [2] : vector<2x8x8xf32> to vector<2x8xf32>
    %526 = vector.shape_cast %525 : vector<2x8xf32> to vector<2x8x1xf32>
    %527 = vector.broadcast %526 : vector<2x8x1xf32> to vector<2x8x8xf32>
    %528 = arith.subf %524, %527 : vector<2x8x8xf32>
    %529 = math.exp %528 : vector<2x8x8xf32>
    %cst_162 = arith.constant dense<0.000000e+00> : vector<2x8xf32>
    %530 = vector.multi_reduction <add>, %529, %cst_162 [2] : vector<2x8x8xf32> to vector<2x8xf32>
    %531 = vector.shape_cast %530 : vector<2x8xf32> to vector<2x8x1xf32>
    %532 = tpu.reciprocal %531 {approx = true} : vector<2x8x1xf32> -> vector<2x8x1xf32>
    %533 = vector.broadcast %532 : vector<2x8x1xf32> to vector<2x8x8xf32>
    %534 = arith.mulf %529, %533 : vector<2x8x8xf32>
    %535 = arith.truncf %534 : vector<2x8x8xf32> to vector<2x8x8xbf16>
    %536 = vector.extract_strided_slice %472 {offsets = [0, 0, 16], sizes = [2, 8, 8], strides = [1, 1, 1]} : vector<2x8x32xbf16> to vector<2x8x8xbf16>
    "tpu.trace_start"() <{level = 10 : i32, message = "bqk,bkd->bqd"}> : () -> ()
    %cst_163 = arith.constant dense<0.000000e+00> : vector<2x8x8xf32>
    %537 = tpu.matmul %535, %536, %cst_163 {dimension_numbers = #tpu.dot_dimension_numbers<[2], [1], [1], [2], [0, 0, 0, 1, 1, 2], [0], [0]>} : vector<2x8x8xbf16>, vector<2x8x8xbf16>, vector<2x8x8xf32> -> vector<2x8x8xf32>
    "tpu.trace_stop"() : () -> ()
    %538 = vector.shape_cast %537 : vector<2x8x8xf32> to vector<16x8xf32>
    %539 = arith.truncf %538 : vector<16x8xf32> to vector<16x8xbf16>
    %540 = vector.extract_strided_slice %475 {offsets = [16, 0], sizes = [8, 32], strides = [1, 1]} : vector<32x32xbf16> to vector<8x32xbf16>
    %cst_164 = arith.constant dense<0.000000e+00> : vector<16x32xf32>
    %541 = tpu.matmul %539, %540, %cst_164 {dimension_numbers = #tpu.dot_dimension_numbers<[1], [0], [0], [1], [0, 0, 1, 1], [], []>} : vector<16x8xbf16>, vector<8x32xbf16>, vector<16x32xf32> -> vector<16x32xf32>
    %542 = arith.addf %520, %541 : vector<16x32xf32>
    %543 = vector.extract_strided_slice %466 {offsets = [0, 0, 24], sizes = [2, 8, 8], strides = [1, 1, 1]} : vector<2x8x32xbf16> to vector<2x8x8xbf16>
    %544 = vector.extract_strided_slice %469 {offsets = [0, 0, 24], sizes = [2, 8, 8], strides = [1, 1, 1]} : vector<2x8x32xbf16> to vector<2x8x8xbf16>
    "tpu.trace_start"() <{level = 10 : i32, message = "bqd,bkd->bqk"}> : () -> ()
    %cst_165 = arith.constant dense<0.000000e+00> : vector<2x8x8xf32>
    %545 = tpu.matmul %543, %544, %cst_165 {dimension_numbers = #tpu.dot_dimension_numbers<[2], [2], [1], [1], [0, 0, 0, 1, 1, 1], [0], [0]>} : vector<2x8x8xbf16>, vector<2x8x8xbf16>, vector<2x8x8xf32> -> vector<2x8x8xf32>
    "tpu.trace_stop"() : () -> ()
    %546 = arith.addf %545, %6 : vector<2x8x8xf32>
    %cst_166 = arith.constant dense<0xFF800000> : vector<2x8xf32>
    %547 = vector.multi_reduction <maximumf>, %546, %cst_166 [2] : vector<2x8x8xf32> to vector<2x8xf32>
    %548 = vector.shape_cast %547 : vector<2x8xf32> to vector<2x8x1xf32>
    %549 = vector.broadcast %548 : vector<2x8x1xf32> to vector<2x8x8xf32>
    %550 = arith.subf %546, %549 : vector<2x8x8xf32>
    %551 = math.exp %550 : vector<2x8x8xf32>
    %cst_167 = arith.constant dense<0.000000e+00> : vector<2x8xf32>
    %552 = vector.multi_reduction <add>, %551, %cst_167 [2] : vector<2x8x8xf32> to vector<2x8xf32>
    %553 = vector.shape_cast %552 : vector<2x8xf32> to vector<2x8x1xf32>
    %554 = tpu.reciprocal %553 {approx = true} : vector<2x8x1xf32> -> vector<2x8x1xf32>
    %555 = vector.broadcast %554 : vector<2x8x1xf32> to vector<2x8x8xf32>
    %556 = arith.mulf %551, %555 : vector<2x8x8xf32>
    %557 = arith.truncf %556 : vector<2x8x8xf32> to vector<2x8x8xbf16>
    %558 = vector.extract_strided_slice %472 {offsets = [0, 0, 24], sizes = [2, 8, 8], strides = [1, 1, 1]} : vector<2x8x32xbf16> to vector<2x8x8xbf16>
    "tpu.trace_start"() <{level = 10 : i32, message = "bqk,bkd->bqd"}> : () -> ()
    %cst_168 = arith.constant dense<0.000000e+00> : vector<2x8x8xf32>
    %559 = tpu.matmul %557, %558, %cst_168 {dimension_numbers = #tpu.dot_dimension_numbers<[2], [1], [1], [2], [0, 0, 0, 1, 1, 2], [0], [0]>} : vector<2x8x8xbf16>, vector<2x8x8xbf16>, vector<2x8x8xf32> -> vector<2x8x8xf32>
    "tpu.trace_stop"() : () -> ()
    %560 = vector.shape_cast %559 : vector<2x8x8xf32> to vector<16x8xf32>
    %561 = arith.truncf %560 : vector<16x8xf32> to vector<16x8xbf16>
    %562 = vector.extract_strided_slice %475 {offsets = [24, 0], sizes = [8, 32], strides = [1, 1]} : vector<32x32xbf16> to vector<8x32xbf16>
    %cst_169 = arith.constant dense<0.000000e+00> : vector<16x32xf32>
    %563 = tpu.matmul %561, %562, %cst_169 {dimension_numbers = #tpu.dot_dimension_numbers<[1], [0], [0], [1], [0, 0, 1, 1], [], []>} : vector<16x8xbf16>, vector<8x32xbf16>, vector<16x32xf32> -> vector<16x32xf32>
    %564 = arith.addf %542, %563 : vector<16x32xf32>
    %565 = arith.index_cast %c2_i32 : i32 to index
    %c0_170 = arith.constant 0 : index
    %c0_171 = arith.constant 0 : index
    %566 = vector.load %arg7[%565, %c0_170, %c0_171] : memref<4x1x32xf32, #tpu.memory_space<vmem>>, vector<1x1x32xf32>
    %567 = vector.shape_cast %566 : vector<1x1x32xf32> to vector<1x32xf32>
    %568 = vector.broadcast %567 : vector<1x32xf32> to vector<16x32xf32>
    %569 = arith.addf %564, %568 : vector<16x32xf32>
    %570 = arith.addf %453, %569 : vector<16x32xf32>
    %571 = arith.index_cast %c2_i32 : i32 to index
    %c0_172 = arith.constant 0 : index
    %c0_173 = arith.constant 0 : index
    %572 = vector.load %arg8[%571, %c0_172, %c0_173] : memref<4x1x32xf32, #tpu.memory_space<vmem>>, vector<1x1x32xf32>
    %573 = vector.shape_cast %572 : vector<1x1x32xf32> to vector<1x32xf32>
    %574 = arith.index_cast %c2_i32 : i32 to index
    %c0_174 = arith.constant 0 : index
    %c0_175 = arith.constant 0 : index
    %575 = vector.load %arg9[%574, %c0_174, %c0_175] : memref<4x1x32xf32, #tpu.memory_space<vmem>>, vector<1x1x32xf32>
    %576 = vector.shape_cast %575 : vector<1x1x32xf32> to vector<1x32xf32>
    %cst_176 = arith.constant dense<0.000000e+00> : vector<16xf32>
    %577 = vector.multi_reduction <add>, %570, %cst_176 [1] : vector<16x32xf32> to vector<16xf32>
    %578 = vector.shape_cast %577 : vector<16xf32> to vector<16x1xf32>
    %cst_177 = arith.constant 3.200000e+01 : f32
    %579 = vector.broadcast %cst_177 : f32 to vector<16x1xf32>
    %580 = arith.divf %578, %579 : vector<16x1xf32>
    %581 = vector.broadcast %580 : vector<16x1xf32> to vector<16x32xf32>
    %582 = arith.subf %570, %581 : vector<16x32xf32>
    %583 = arith.mulf %582, %582 : vector<16x32xf32>
    %cst_178 = arith.constant dense<0.000000e+00> : vector<16xf32>
    %584 = vector.multi_reduction <add>, %583, %cst_178 [1] : vector<16x32xf32> to vector<16xf32>
    %585 = vector.shape_cast %584 : vector<16xf32> to vector<16x1xf32>
    %cst_179 = arith.constant 3.200000e+01 : f32
    %586 = vector.broadcast %cst_179 : f32 to vector<16x1xf32>
    %587 = arith.divf %585, %586 : vector<16x1xf32>
    %588 = vector.broadcast %580 : vector<16x1xf32> to vector<16x32xf32>
    %589 = arith.subf %570, %588 : vector<16x32xf32>
    %cst_180 = arith.constant 9.99999996E-13 : f32
    %590 = vector.broadcast %cst_180 : f32 to vector<16x1xf32>
    %591 = arith.addf %587, %590 : vector<16x1xf32>
    %592 = math.rsqrt %591 : vector<16x1xf32>
    %593 = vector.broadcast %592 : vector<16x1xf32> to vector<16x32xf32>
    %594 = arith.mulf %589, %593 : vector<16x32xf32>
    %595 = vector.broadcast %573 : vector<1x32xf32> to vector<16x32xf32>
    %596 = arith.mulf %594, %595 : vector<16x32xf32>
    %597 = vector.broadcast %576 : vector<1x32xf32> to vector<16x32xf32>
    %598 = arith.addf %596, %597 : vector<16x32xf32>
    %599 = arith.truncf %598 : vector<16x32xf32> to vector<16x32xbf16>
    %600 = arith.index_cast %c2_i32 : i32 to index
    %c0_181 = arith.constant 0 : index
    %c0_182 = arith.constant 0 : index
    %601 = vector.load %arg10[%600, %c0_181, %c0_182] : memref<4x32x64xbf16, #tpu.memory_space<vmem>>, vector<1x32x64xbf16>
    %602 = vector.shape_cast %601 : vector<1x32x64xbf16> to vector<32x64xbf16>
    %cst_183 = arith.constant dense<0.000000e+00> : vector<16x64xf32>
    %603 = tpu.matmul %599, %602, %cst_183 {dimension_numbers = #tpu.dot_dimension_numbers<[1], [0], [0], [1], [0, 0, 1, 1], [], []>} : vector<16x32xbf16>, vector<32x64xbf16>, vector<16x64xf32> -> vector<16x64xf32>
    %604 = arith.index_cast %c2_i32 : i32 to index
    %c0_184 = arith.constant 0 : index
    %c0_185 = arith.constant 0 : index
    %605 = vector.load %arg11[%604, %c0_184, %c0_185] : memref<4x1x64xf32, #tpu.memory_space<vmem>>, vector<1x1x64xf32>
    %606 = vector.shape_cast %605 : vector<1x1x64xf32> to vector<1x64xf32>
    %607 = vector.broadcast %606 : vector<1x64xf32> to vector<16x64xf32>
    %608 = arith.addf %603, %607 : vector<16x64xf32>
    %cst_186 = arith.constant 5.000000e-01 : f32
    %609 = vector.broadcast %cst_186 : f32 to vector<16x64xf32>
    %610 = arith.mulf %609, %608 : vector<16x64xf32>
    %cst_187 = arith.constant 4.471500e-02 : f32
    %611 = vector.broadcast %cst_187 : f32 to vector<16x64xf32>
    %612 = arith.mulf %611, %608 : vector<16x64xf32>
    %613 = arith.mulf %612, %608 : vector<16x64xf32>
    %614 = arith.mulf %613, %608 : vector<16x64xf32>
    %615 = arith.addf %608, %614 : vector<16x64xf32>
    %cst_188 = arith.constant 0.797884583 : f32
    %616 = vector.broadcast %cst_188 : f32 to vector<16x64xf32>
    %617 = arith.mulf %616, %615 : vector<16x64xf32>
    %618 = math.tanh %617 : vector<16x64xf32>
    %cst_189 = arith.constant 1.000000e+00 : f32
    %619 = vector.broadcast %cst_189 : f32 to vector<16x64xf32>
    %620 = arith.addf %619, %618 : vector<16x64xf32>
    %621 = arith.mulf %610, %620 : vector<16x64xf32>
    %622 = arith.truncf %621 : vector<16x64xf32> to vector<16x64xbf16>
    %623 = arith.index_cast %c2_i32 : i32 to index
    %c0_190 = arith.constant 0 : index
    %c0_191 = arith.constant 0 : index
    %624 = vector.load %arg12[%623, %c0_190, %c0_191] : memref<4x64x32xbf16, #tpu.memory_space<vmem>>, vector<1x64x32xbf16>
    %625 = vector.shape_cast %624 : vector<1x64x32xbf16> to vector<64x32xbf16>
    %cst_192 = arith.constant dense<0.000000e+00> : vector<16x32xf32>
    %626 = tpu.matmul %622, %625, %cst_192 {dimension_numbers = #tpu.dot_dimension_numbers<[1], [0], [0], [1], [0, 0, 1, 1], [], []>} : vector<16x64xbf16>, vector<64x32xbf16>, vector<16x32xf32> -> vector<16x32xf32>
    %627 = arith.index_cast %c2_i32 : i32 to index
    %c0_193 = arith.constant 0 : index
    %c0_194 = arith.constant 0 : index
    %628 = vector.load %arg13[%627, %c0_193, %c0_194] : memref<4x1x32xf32, #tpu.memory_space<vmem>>, vector<1x1x32xf32>
    %629 = vector.shape_cast %628 : vector<1x1x32xf32> to vector<1x32xf32>
    %630 = vector.broadcast %629 : vector<1x32xf32> to vector<16x32xf32>
    %631 = arith.addf %626, %630 : vector<16x32xf32>
    %632 = arith.addf %598, %631 : vector<16x32xf32>
    %633 = arith.index_cast %c2_i32 : i32 to index
    %c0_195 = arith.constant 0 : index
    %c0_196 = arith.constant 0 : index
    %634 = vector.load %arg14[%633, %c0_195, %c0_196] : memref<4x1x32xf32, #tpu.memory_space<vmem>>, vector<1x1x32xf32>
    %635 = vector.shape_cast %634 : vector<1x1x32xf32> to vector<1x32xf32>
    %636 = arith.index_cast %c2_i32 : i32 to index
    %c0_197 = arith.constant 0 : index
    %c0_198 = arith.constant 0 : index
    %637 = vector.load %arg15[%636, %c0_197, %c0_198] : memref<4x1x32xf32, #tpu.memory_space<vmem>>, vector<1x1x32xf32>
    %638 = vector.shape_cast %637 : vector<1x1x32xf32> to vector<1x32xf32>
    %cst_199 = arith.constant dense<0.000000e+00> : vector<16xf32>
    %639 = vector.multi_reduction <add>, %632, %cst_199 [1] : vector<16x32xf32> to vector<16xf32>
    %640 = vector.shape_cast %639 : vector<16xf32> to vector<16x1xf32>
    %cst_200 = arith.constant 3.200000e+01 : f32
    %641 = vector.broadcast %cst_200 : f32 to vector<16x1xf32>
    %642 = arith.divf %640, %641 : vector<16x1xf32>
    %643 = vector.broadcast %642 : vector<16x1xf32> to vector<16x32xf32>
    %644 = arith.subf %632, %643 : vector<16x32xf32>
    %645 = arith.mulf %644, %644 : vector<16x32xf32>
    %cst_201 = arith.constant dense<0.000000e+00> : vector<16xf32>
    %646 = vector.multi_reduction <add>, %645, %cst_201 [1] : vector<16x32xf32> to vector<16xf32>
    %647 = vector.shape_cast %646 : vector<16xf32> to vector<16x1xf32>
    %cst_202 = arith.constant 3.200000e+01 : f32
    %648 = vector.broadcast %cst_202 : f32 to vector<16x1xf32>
    %649 = arith.divf %647, %648 : vector<16x1xf32>
    %650 = vector.broadcast %642 : vector<16x1xf32> to vector<16x32xf32>
    %651 = arith.subf %632, %650 : vector<16x32xf32>
    %cst_203 = arith.constant 9.99999996E-13 : f32
    %652 = vector.broadcast %cst_203 : f32 to vector<16x1xf32>
    %653 = arith.addf %649, %652 : vector<16x1xf32>
    %654 = math.rsqrt %653 : vector<16x1xf32>
    %655 = vector.broadcast %654 : vector<16x1xf32> to vector<16x32xf32>
    %656 = arith.mulf %651, %655 : vector<16x32xf32>
    %657 = vector.broadcast %635 : vector<1x32xf32> to vector<16x32xf32>
    %658 = arith.mulf %656, %657 : vector<16x32xf32>
    %659 = vector.broadcast %638 : vector<1x32xf32> to vector<16x32xf32>
    %660 = arith.addf %658, %659 : vector<16x32xf32>
    %661 = vector.shape_cast %660 : vector<16x32xf32> to vector<2x8x32xf32>
    %c0_i32_204 = arith.constant 0 : i32
    %662 = arith.cmpi sge, %c2_i32, %c0_i32_204 : i32
    %cst_205 = arith.constant 1.000000e+00 : f32
    %cst_206 = arith.constant 0.000000e+00 : f32
    %663 = arith.select %662, %cst_205, %cst_206 : f32
    "tpu.trace_start"() <{level = 10 : i32, message = "bws,bsh->bwh"}> : () -> ()
    %cst_207 = arith.constant dense<0.000000e+00> : vector<2x5x32xf32>
    %664 = tpu.matmul %20, %661, %cst_207 {dimension_numbers = #tpu.dot_dimension_numbers<[2], [1], [1], [2], [0, 0, 0, 1, 1, 2], [0], [0]>} : vector<2x5x8xf32>, vector<2x8x32xf32>, vector<2x5x32xf32> -> vector<2x5x32xf32>
    "tpu.trace_stop"() : () -> ()
    %665 = vector.broadcast %663 : f32 to vector<2x5x32xf32>
    %666 = arith.mulf %665, %664 : vector<2x5x32xf32>
    %667 = arith.addf %452, %666 : vector<2x5x32xf32>
    %c3_i32 = arith.constant 3 : i32
    %668 = vector.shape_cast %661 : vector<2x8x32xf32> to vector<16x32xf32>
    %669 = arith.truncf %668 : vector<16x32xf32> to vector<16x32xbf16>
    %670 = arith.index_cast %c3_i32 : i32 to index
    %c0_208 = arith.constant 0 : index
    %c0_209 = arith.constant 0 : index
    %671 = vector.load %arg4[%670, %c0_208, %c0_209] : memref<4x32x96xbf16, #tpu.memory_space<vmem>>, vector<1x32x96xbf16>
    %672 = vector.shape_cast %671 : vector<1x32x96xbf16> to vector<32x96xbf16>
    %cst_210 = arith.constant dense<0.000000e+00> : vector<16x96xf32>
    %673 = tpu.matmul %669, %672, %cst_210 {dimension_numbers = #tpu.dot_dimension_numbers<[1], [0], [0], [1], [0, 0, 1, 1], [], []>} : vector<16x32xbf16>, vector<32x96xbf16>, vector<16x96xf32> -> vector<16x96xf32>
    %674 = arith.index_cast %c3_i32 : i32 to index
    %c0_211 = arith.constant 0 : index
    %c0_212 = arith.constant 0 : index
    %675 = vector.load %arg5[%674, %c0_211, %c0_212] : memref<4x1x96xf32, #tpu.memory_space<vmem>>, vector<1x1x96xf32>
    %676 = vector.shape_cast %675 : vector<1x1x96xf32> to vector<1x96xf32>
    %677 = vector.broadcast %676 : vector<1x96xf32> to vector<16x96xf32>
    %678 = arith.addf %673, %677 : vector<16x96xf32>
    %679 = vector.extract_strided_slice %678 {offsets = [0, 0], sizes = [16, 32], strides = [1, 1]} : vector<16x96xf32> to vector<16x32xf32>
    %680 = vector.shape_cast %679 : vector<16x32xf32> to vector<2x8x32xf32>
    %681 = arith.truncf %680 : vector<2x8x32xf32> to vector<2x8x32xbf16>
    %682 = vector.extract_strided_slice %678 {offsets = [0, 32], sizes = [16, 32], strides = [1, 1]} : vector<16x96xf32> to vector<16x32xf32>
    %683 = vector.shape_cast %682 : vector<16x32xf32> to vector<2x8x32xf32>
    %684 = arith.truncf %683 : vector<2x8x32xf32> to vector<2x8x32xbf16>
    %685 = vector.extract_strided_slice %678 {offsets = [0, 64], sizes = [16, 32], strides = [1, 1]} : vector<16x96xf32> to vector<16x32xf32>
    %686 = vector.shape_cast %685 : vector<16x32xf32> to vector<2x8x32xf32>
    %687 = arith.truncf %686 : vector<2x8x32xf32> to vector<2x8x32xbf16>
    %688 = arith.index_cast %c3_i32 : i32 to index
    %c0_213 = arith.constant 0 : index
    %c0_214 = arith.constant 0 : index
    %689 = vector.load %arg6[%688, %c0_213, %c0_214] : memref<4x32x32xbf16, #tpu.memory_space<vmem>>, vector<1x32x32xbf16>
    %690 = vector.shape_cast %689 : vector<1x32x32xbf16> to vector<32x32xbf16>
    %cst_215 = arith.constant 0.000000e+00 : f32
    %691 = vector.broadcast %cst_215 : f32 to vector<16x32xf32>
    %692 = vector.extract_strided_slice %681 {offsets = [0, 0, 0], sizes = [2, 8, 8], strides = [1, 1, 1]} : vector<2x8x32xbf16> to vector<2x8x8xbf16>
    %693 = vector.extract_strided_slice %684 {offsets = [0, 0, 0], sizes = [2, 8, 8], strides = [1, 1, 1]} : vector<2x8x32xbf16> to vector<2x8x8xbf16>
    "tpu.trace_start"() <{level = 10 : i32, message = "bqd,bkd->bqk"}> : () -> ()
    %cst_216 = arith.constant dense<0.000000e+00> : vector<2x8x8xf32>
    %694 = tpu.matmul %692, %693, %cst_216 {dimension_numbers = #tpu.dot_dimension_numbers<[2], [2], [1], [1], [0, 0, 0, 1, 1, 1], [0], [0]>} : vector<2x8x8xbf16>, vector<2x8x8xbf16>, vector<2x8x8xf32> -> vector<2x8x8xf32>
    "tpu.trace_stop"() : () -> ()
    %695 = arith.addf %694, %6 : vector<2x8x8xf32>
    %cst_217 = arith.constant dense<0xFF800000> : vector<2x8xf32>
    %696 = vector.multi_reduction <maximumf>, %695, %cst_217 [2] : vector<2x8x8xf32> to vector<2x8xf32>
    %697 = vector.shape_cast %696 : vector<2x8xf32> to vector<2x8x1xf32>
    %698 = vector.broadcast %697 : vector<2x8x1xf32> to vector<2x8x8xf32>
    %699 = arith.subf %695, %698 : vector<2x8x8xf32>
    %700 = math.exp %699 : vector<2x8x8xf32>
    %cst_218 = arith.constant dense<0.000000e+00> : vector<2x8xf32>
    %701 = vector.multi_reduction <add>, %700, %cst_218 [2] : vector<2x8x8xf32> to vector<2x8xf32>
    %702 = vector.shape_cast %701 : vector<2x8xf32> to vector<2x8x1xf32>
    %703 = tpu.reciprocal %702 {approx = true} : vector<2x8x1xf32> -> vector<2x8x1xf32>
    %704 = vector.broadcast %703 : vector<2x8x1xf32> to vector<2x8x8xf32>
    %705 = arith.mulf %700, %704 : vector<2x8x8xf32>
    %706 = arith.truncf %705 : vector<2x8x8xf32> to vector<2x8x8xbf16>
    %707 = vector.extract_strided_slice %687 {offsets = [0, 0, 0], sizes = [2, 8, 8], strides = [1, 1, 1]} : vector<2x8x32xbf16> to vector<2x8x8xbf16>
    "tpu.trace_start"() <{level = 10 : i32, message = "bqk,bkd->bqd"}> : () -> ()
    %cst_219 = arith.constant dense<0.000000e+00> : vector<2x8x8xf32>
    %708 = tpu.matmul %706, %707, %cst_219 {dimension_numbers = #tpu.dot_dimension_numbers<[2], [1], [1], [2], [0, 0, 0, 1, 1, 2], [0], [0]>} : vector<2x8x8xbf16>, vector<2x8x8xbf16>, vector<2x8x8xf32> -> vector<2x8x8xf32>
    "tpu.trace_stop"() : () -> ()
    %709 = vector.shape_cast %708 : vector<2x8x8xf32> to vector<16x8xf32>
    %710 = arith.truncf %709 : vector<16x8xf32> to vector<16x8xbf16>
    %711 = vector.extract_strided_slice %690 {offsets = [0, 0], sizes = [8, 32], strides = [1, 1]} : vector<32x32xbf16> to vector<8x32xbf16>
    %cst_220 = arith.constant dense<0.000000e+00> : vector<16x32xf32>
    %712 = tpu.matmul %710, %711, %cst_220 {dimension_numbers = #tpu.dot_dimension_numbers<[1], [0], [0], [1], [0, 0, 1, 1], [], []>} : vector<16x8xbf16>, vector<8x32xbf16>, vector<16x32xf32> -> vector<16x32xf32>
    %713 = arith.addf %691, %712 : vector<16x32xf32>
    %714 = vector.extract_strided_slice %681 {offsets = [0, 0, 8], sizes = [2, 8, 8], strides = [1, 1, 1]} : vector<2x8x32xbf16> to vector<2x8x8xbf16>
    %715 = vector.extract_strided_slice %684 {offsets = [0, 0, 8], sizes = [2, 8, 8], strides = [1, 1, 1]} : vector<2x8x32xbf16> to vector<2x8x8xbf16>
    "tpu.trace_start"() <{level = 10 : i32, message = "bqd,bkd->bqk"}> : () -> ()
    %cst_221 = arith.constant dense<0.000000e+00> : vector<2x8x8xf32>
    %716 = tpu.matmul %714, %715, %cst_221 {dimension_numbers = #tpu.dot_dimension_numbers<[2], [2], [1], [1], [0, 0, 0, 1, 1, 1], [0], [0]>} : vector<2x8x8xbf16>, vector<2x8x8xbf16>, vector<2x8x8xf32> -> vector<2x8x8xf32>
    "tpu.trace_stop"() : () -> ()
    %717 = arith.addf %716, %6 : vector<2x8x8xf32>
    %cst_222 = arith.constant dense<0xFF800000> : vector<2x8xf32>
    %718 = vector.multi_reduction <maximumf>, %717, %cst_222 [2] : vector<2x8x8xf32> to vector<2x8xf32>
    %719 = vector.shape_cast %718 : vector<2x8xf32> to vector<2x8x1xf32>
    %720 = vector.broadcast %719 : vector<2x8x1xf32> to vector<2x8x8xf32>
    %721 = arith.subf %717, %720 : vector<2x8x8xf32>
    %722 = math.exp %721 : vector<2x8x8xf32>
    %cst_223 = arith.constant dense<0.000000e+00> : vector<2x8xf32>
    %723 = vector.multi_reduction <add>, %722, %cst_223 [2] : vector<2x8x8xf32> to vector<2x8xf32>
    %724 = vector.shape_cast %723 : vector<2x8xf32> to vector<2x8x1xf32>
    %725 = tpu.reciprocal %724 {approx = true} : vector<2x8x1xf32> -> vector<2x8x1xf32>
    %726 = vector.broadcast %725 : vector<2x8x1xf32> to vector<2x8x8xf32>
    %727 = arith.mulf %722, %726 : vector<2x8x8xf32>
    %728 = arith.truncf %727 : vector<2x8x8xf32> to vector<2x8x8xbf16>
    %729 = vector.extract_strided_slice %687 {offsets = [0, 0, 8], sizes = [2, 8, 8], strides = [1, 1, 1]} : vector<2x8x32xbf16> to vector<2x8x8xbf16>
    "tpu.trace_start"() <{level = 10 : i32, message = "bqk,bkd->bqd"}> : () -> ()
    %cst_224 = arith.constant dense<0.000000e+00> : vector<2x8x8xf32>
    %730 = tpu.matmul %728, %729, %cst_224 {dimension_numbers = #tpu.dot_dimension_numbers<[2], [1], [1], [2], [0, 0, 0, 1, 1, 2], [0], [0]>} : vector<2x8x8xbf16>, vector<2x8x8xbf16>, vector<2x8x8xf32> -> vector<2x8x8xf32>
    "tpu.trace_stop"() : () -> ()
    %731 = vector.shape_cast %730 : vector<2x8x8xf32> to vector<16x8xf32>
    %732 = arith.truncf %731 : vector<16x8xf32> to vector<16x8xbf16>
    %733 = vector.extract_strided_slice %690 {offsets = [8, 0], sizes = [8, 32], strides = [1, 1]} : vector<32x32xbf16> to vector<8x32xbf16>
    %cst_225 = arith.constant dense<0.000000e+00> : vector<16x32xf32>
    %734 = tpu.matmul %732, %733, %cst_225 {dimension_numbers = #tpu.dot_dimension_numbers<[1], [0], [0], [1], [0, 0, 1, 1], [], []>} : vector<16x8xbf16>, vector<8x32xbf16>, vector<16x32xf32> -> vector<16x32xf32>
    %735 = arith.addf %713, %734 : vector<16x32xf32>
    %736 = vector.extract_strided_slice %681 {offsets = [0, 0, 16], sizes = [2, 8, 8], strides = [1, 1, 1]} : vector<2x8x32xbf16> to vector<2x8x8xbf16>
    %737 = vector.extract_strided_slice %684 {offsets = [0, 0, 16], sizes = [2, 8, 8], strides = [1, 1, 1]} : vector<2x8x32xbf16> to vector<2x8x8xbf16>
    "tpu.trace_start"() <{level = 10 : i32, message = "bqd,bkd->bqk"}> : () -> ()
    %cst_226 = arith.constant dense<0.000000e+00> : vector<2x8x8xf32>
    %738 = tpu.matmul %736, %737, %cst_226 {dimension_numbers = #tpu.dot_dimension_numbers<[2], [2], [1], [1], [0, 0, 0, 1, 1, 1], [0], [0]>} : vector<2x8x8xbf16>, vector<2x8x8xbf16>, vector<2x8x8xf32> -> vector<2x8x8xf32>
    "tpu.trace_stop"() : () -> ()
    %739 = arith.addf %738, %6 : vector<2x8x8xf32>
    %cst_227 = arith.constant dense<0xFF800000> : vector<2x8xf32>
    %740 = vector.multi_reduction <maximumf>, %739, %cst_227 [2] : vector<2x8x8xf32> to vector<2x8xf32>
    %741 = vector.shape_cast %740 : vector<2x8xf32> to vector<2x8x1xf32>
    %742 = vector.broadcast %741 : vector<2x8x1xf32> to vector<2x8x8xf32>
    %743 = arith.subf %739, %742 : vector<2x8x8xf32>
    %744 = math.exp %743 : vector<2x8x8xf32>
    %cst_228 = arith.constant dense<0.000000e+00> : vector<2x8xf32>
    %745 = vector.multi_reduction <add>, %744, %cst_228 [2] : vector<2x8x8xf32> to vector<2x8xf32>
    %746 = vector.shape_cast %745 : vector<2x8xf32> to vector<2x8x1xf32>
    %747 = tpu.reciprocal %746 {approx = true} : vector<2x8x1xf32> -> vector<2x8x1xf32>
    %748 = vector.broadcast %747 : vector<2x8x1xf32> to vector<2x8x8xf32>
    %749 = arith.mulf %744, %748 : vector<2x8x8xf32>
    %750 = arith.truncf %749 : vector<2x8x8xf32> to vector<2x8x8xbf16>
    %751 = vector.extract_strided_slice %687 {offsets = [0, 0, 16], sizes = [2, 8, 8], strides = [1, 1, 1]} : vector<2x8x32xbf16> to vector<2x8x8xbf16>
    "tpu.trace_start"() <{level = 10 : i32, message = "bqk,bkd->bqd"}> : () -> ()
    %cst_229 = arith.constant dense<0.000000e+00> : vector<2x8x8xf32>
    %752 = tpu.matmul %750, %751, %cst_229 {dimension_numbers = #tpu.dot_dimension_numbers<[2], [1], [1], [2], [0, 0, 0, 1, 1, 2], [0], [0]>} : vector<2x8x8xbf16>, vector<2x8x8xbf16>, vector<2x8x8xf32> -> vector<2x8x8xf32>
    "tpu.trace_stop"() : () -> ()
    %753 = vector.shape_cast %752 : vector<2x8x8xf32> to vector<16x8xf32>
    %754 = arith.truncf %753 : vector<16x8xf32> to vector<16x8xbf16>
    %755 = vector.extract_strided_slice %690 {offsets = [16, 0], sizes = [8, 32], strides = [1, 1]} : vector<32x32xbf16> to vector<8x32xbf16>
    %cst_230 = arith.constant dense<0.000000e+00> : vector<16x32xf32>
    %756 = tpu.matmul %754, %755, %cst_230 {dimension_numbers = #tpu.dot_dimension_numbers<[1], [0], [0], [1], [0, 0, 1, 1], [], []>} : vector<16x8xbf16>, vector<8x32xbf16>, vector<16x32xf32> -> vector<16x32xf32>
    %757 = arith.addf %735, %756 : vector<16x32xf32>
    %758 = vector.extract_strided_slice %681 {offsets = [0, 0, 24], sizes = [2, 8, 8], strides = [1, 1, 1]} : vector<2x8x32xbf16> to vector<2x8x8xbf16>
    %759 = vector.extract_strided_slice %684 {offsets = [0, 0, 24], sizes = [2, 8, 8], strides = [1, 1, 1]} : vector<2x8x32xbf16> to vector<2x8x8xbf16>
    "tpu.trace_start"() <{level = 10 : i32, message = "bqd,bkd->bqk"}> : () -> ()
    %cst_231 = arith.constant dense<0.000000e+00> : vector<2x8x8xf32>
    %760 = tpu.matmul %758, %759, %cst_231 {dimension_numbers = #tpu.dot_dimension_numbers<[2], [2], [1], [1], [0, 0, 0, 1, 1, 1], [0], [0]>} : vector<2x8x8xbf16>, vector<2x8x8xbf16>, vector<2x8x8xf32> -> vector<2x8x8xf32>
    "tpu.trace_stop"() : () -> ()
    %761 = arith.addf %760, %6 : vector<2x8x8xf32>
    %cst_232 = arith.constant dense<0xFF800000> : vector<2x8xf32>
    %762 = vector.multi_reduction <maximumf>, %761, %cst_232 [2] : vector<2x8x8xf32> to vector<2x8xf32>
    %763 = vector.shape_cast %762 : vector<2x8xf32> to vector<2x8x1xf32>
    %764 = vector.broadcast %763 : vector<2x8x1xf32> to vector<2x8x8xf32>
    %765 = arith.subf %761, %764 : vector<2x8x8xf32>
    %766 = math.exp %765 : vector<2x8x8xf32>
    %cst_233 = arith.constant dense<0.000000e+00> : vector<2x8xf32>
    %767 = vector.multi_reduction <add>, %766, %cst_233 [2] : vector<2x8x8xf32> to vector<2x8xf32>
    %768 = vector.shape_cast %767 : vector<2x8xf32> to vector<2x8x1xf32>
    %769 = tpu.reciprocal %768 {approx = true} : vector<2x8x1xf32> -> vector<2x8x1xf32>
    %770 = vector.broadcast %769 : vector<2x8x1xf32> to vector<2x8x8xf32>
    %771 = arith.mulf %766, %770 : vector<2x8x8xf32>
    %772 = arith.truncf %771 : vector<2x8x8xf32> to vector<2x8x8xbf16>
    %773 = vector.extract_strided_slice %687 {offsets = [0, 0, 24], sizes = [2, 8, 8], strides = [1, 1, 1]} : vector<2x8x32xbf16> to vector<2x8x8xbf16>
    "tpu.trace_start"() <{level = 10 : i32, message = "bqk,bkd->bqd"}> : () -> ()
    %cst_234 = arith.constant dense<0.000000e+00> : vector<2x8x8xf32>
    %774 = tpu.matmul %772, %773, %cst_234 {dimension_numbers = #tpu.dot_dimension_numbers<[2], [1], [1], [2], [0, 0, 0, 1, 1, 2], [0], [0]>} : vector<2x8x8xbf16>, vector<2x8x8xbf16>, vector<2x8x8xf32> -> vector<2x8x8xf32>
    "tpu.trace_stop"() : () -> ()
    %775 = vector.shape_cast %774 : vector<2x8x8xf32> to vector<16x8xf32>
    %776 = arith.truncf %775 : vector<16x8xf32> to vector<16x8xbf16>
    %777 = vector.extract_strided_slice %690 {offsets = [24, 0], sizes = [8, 32], strides = [1, 1]} : vector<32x32xbf16> to vector<8x32xbf16>
    %cst_235 = arith.constant dense<0.000000e+00> : vector<16x32xf32>
    %778 = tpu.matmul %776, %777, %cst_235 {dimension_numbers = #tpu.dot_dimension_numbers<[1], [0], [0], [1], [0, 0, 1, 1], [], []>} : vector<16x8xbf16>, vector<8x32xbf16>, vector<16x32xf32> -> vector<16x32xf32>
    %779 = arith.addf %757, %778 : vector<16x32xf32>
    %780 = arith.index_cast %c3_i32 : i32 to index
    %c0_236 = arith.constant 0 : index
    %c0_237 = arith.constant 0 : index
    %781 = vector.load %arg7[%780, %c0_236, %c0_237] : memref<4x1x32xf32, #tpu.memory_space<vmem>>, vector<1x1x32xf32>
    %782 = vector.shape_cast %781 : vector<1x1x32xf32> to vector<1x32xf32>
    %783 = vector.broadcast %782 : vector<1x32xf32> to vector<16x32xf32>
    %784 = arith.addf %779, %783 : vector<16x32xf32>
    %785 = arith.addf %668, %784 : vector<16x32xf32>
    %786 = arith.index_cast %c3_i32 : i32 to index
    %c0_238 = arith.constant 0 : index
    %c0_239 = arith.constant 0 : index
    %787 = vector.load %arg8[%786, %c0_238, %c0_239] : memref<4x1x32xf32, #tpu.memory_space<vmem>>, vector<1x1x32xf32>
    %788 = vector.shape_cast %787 : vector<1x1x32xf32> to vector<1x32xf32>
    %789 = arith.index_cast %c3_i32 : i32 to index
    %c0_240 = arith.constant 0 : index
    %c0_241 = arith.constant 0 : index
    %790 = vector.load %arg9[%789, %c0_240, %c0_241] : memref<4x1x32xf32, #tpu.memory_space<vmem>>, vector<1x1x32xf32>
    %791 = vector.shape_cast %790 : vector<1x1x32xf32> to vector<1x32xf32>
    %cst_242 = arith.constant dense<0.000000e+00> : vector<16xf32>
    %792 = vector.multi_reduction <add>, %785, %cst_242 [1] : vector<16x32xf32> to vector<16xf32>
    %793 = vector.shape_cast %792 : vector<16xf32> to vector<16x1xf32>
    %cst_243 = arith.constant 3.200000e+01 : f32
    %794 = vector.broadcast %cst_243 : f32 to vector<16x1xf32>
    %795 = arith.divf %793, %794 : vector<16x1xf32>
    %796 = vector.broadcast %795 : vector<16x1xf32> to vector<16x32xf32>
    %797 = arith.subf %785, %796 : vector<16x32xf32>
    %798 = arith.mulf %797, %797 : vector<16x32xf32>
    %cst_244 = arith.constant dense<0.000000e+00> : vector<16xf32>
    %799 = vector.multi_reduction <add>, %798, %cst_244 [1] : vector<16x32xf32> to vector<16xf32>
    %800 = vector.shape_cast %799 : vector<16xf32> to vector<16x1xf32>
    %cst_245 = arith.constant 3.200000e+01 : f32
    %801 = vector.broadcast %cst_245 : f32 to vector<16x1xf32>
    %802 = arith.divf %800, %801 : vector<16x1xf32>
    %803 = vector.broadcast %795 : vector<16x1xf32> to vector<16x32xf32>
    %804 = arith.subf %785, %803 : vector<16x32xf32>
    %cst_246 = arith.constant 9.99999996E-13 : f32
    %805 = vector.broadcast %cst_246 : f32 to vector<16x1xf32>
    %806 = arith.addf %802, %805 : vector<16x1xf32>
    %807 = math.rsqrt %806 : vector<16x1xf32>
    %808 = vector.broadcast %807 : vector<16x1xf32> to vector<16x32xf32>
    %809 = arith.mulf %804, %808 : vector<16x32xf32>
    %810 = vector.broadcast %788 : vector<1x32xf32> to vector<16x32xf32>
    %811 = arith.mulf %809, %810 : vector<16x32xf32>
    %812 = vector.broadcast %791 : vector<1x32xf32> to vector<16x32xf32>
    %813 = arith.addf %811, %812 : vector<16x32xf32>
    %814 = arith.truncf %813 : vector<16x32xf32> to vector<16x32xbf16>
    %815 = arith.index_cast %c3_i32 : i32 to index
    %c0_247 = arith.constant 0 : index
    %c0_248 = arith.constant 0 : index
    %816 = vector.load %arg10[%815, %c0_247, %c0_248] : memref<4x32x64xbf16, #tpu.memory_space<vmem>>, vector<1x32x64xbf16>
    %817 = vector.shape_cast %816 : vector<1x32x64xbf16> to vector<32x64xbf16>
    %cst_249 = arith.constant dense<0.000000e+00> : vector<16x64xf32>
    %818 = tpu.matmul %814, %817, %cst_249 {dimension_numbers = #tpu.dot_dimension_numbers<[1], [0], [0], [1], [0, 0, 1, 1], [], []>} : vector<16x32xbf16>, vector<32x64xbf16>, vector<16x64xf32> -> vector<16x64xf32>
    %819 = arith.index_cast %c3_i32 : i32 to index
    %c0_250 = arith.constant 0 : index
    %c0_251 = arith.constant 0 : index
    %820 = vector.load %arg11[%819, %c0_250, %c0_251] : memref<4x1x64xf32, #tpu.memory_space<vmem>>, vector<1x1x64xf32>
    %821 = vector.shape_cast %820 : vector<1x1x64xf32> to vector<1x64xf32>
    %822 = vector.broadcast %821 : vector<1x64xf32> to vector<16x64xf32>
    %823 = arith.addf %818, %822 : vector<16x64xf32>
    %cst_252 = arith.constant 5.000000e-01 : f32
    %824 = vector.broadcast %cst_252 : f32 to vector<16x64xf32>
    %825 = arith.mulf %824, %823 : vector<16x64xf32>
    %cst_253 = arith.constant 4.471500e-02 : f32
    %826 = vector.broadcast %cst_253 : f32 to vector<16x64xf32>
    %827 = arith.mulf %826, %823 : vector<16x64xf32>
    %828 = arith.mulf %827, %823 : vector<16x64xf32>
    %829 = arith.mulf %828, %823 : vector<16x64xf32>
    %830 = arith.addf %823, %829 : vector<16x64xf32>
    %cst_254 = arith.constant 0.797884583 : f32
    %831 = vector.broadcast %cst_254 : f32 to vector<16x64xf32>
    %832 = arith.mulf %831, %830 : vector<16x64xf32>
    %833 = math.tanh %832 : vector<16x64xf32>
    %cst_255 = arith.constant 1.000000e+00 : f32
    %834 = vector.broadcast %cst_255 : f32 to vector<16x64xf32>
    %835 = arith.addf %834, %833 : vector<16x64xf32>
    %836 = arith.mulf %825, %835 : vector<16x64xf32>
    %837 = arith.truncf %836 : vector<16x64xf32> to vector<16x64xbf16>
    %838 = arith.index_cast %c3_i32 : i32 to index
    %c0_256 = arith.constant 0 : index
    %c0_257 = arith.constant 0 : index
    %839 = vector.load %arg12[%838, %c0_256, %c0_257] : memref<4x64x32xbf16, #tpu.memory_space<vmem>>, vector<1x64x32xbf16>
    %840 = vector.shape_cast %839 : vector<1x64x32xbf16> to vector<64x32xbf16>
    %cst_258 = arith.constant dense<0.000000e+00> : vector<16x32xf32>
    %841 = tpu.matmul %837, %840, %cst_258 {dimension_numbers = #tpu.dot_dimension_numbers<[1], [0], [0], [1], [0, 0, 1, 1], [], []>} : vector<16x64xbf16>, vector<64x32xbf16>, vector<16x32xf32> -> vector<16x32xf32>
    %842 = arith.index_cast %c3_i32 : i32 to index
    %c0_259 = arith.constant 0 : index
    %c0_260 = arith.constant 0 : index
    %843 = vector.load %arg13[%842, %c0_259, %c0_260] : memref<4x1x32xf32, #tpu.memory_space<vmem>>, vector<1x1x32xf32>
    %844 = vector.shape_cast %843 : vector<1x1x32xf32> to vector<1x32xf32>
    %845 = vector.broadcast %844 : vector<1x32xf32> to vector<16x32xf32>
    %846 = arith.addf %841, %845 : vector<16x32xf32>
    %847 = arith.addf %813, %846 : vector<16x32xf32>
    %848 = arith.index_cast %c3_i32 : i32 to index
    %c0_261 = arith.constant 0 : index
    %c0_262 = arith.constant 0 : index
    %849 = vector.load %arg14[%848, %c0_261, %c0_262] : memref<4x1x32xf32, #tpu.memory_space<vmem>>, vector<1x1x32xf32>
    %850 = vector.shape_cast %849 : vector<1x1x32xf32> to vector<1x32xf32>
    %851 = arith.index_cast %c3_i32 : i32 to index
    %c0_263 = arith.constant 0 : index
    %c0_264 = arith.constant 0 : index
    %852 = vector.load %arg15[%851, %c0_263, %c0_264] : memref<4x1x32xf32, #tpu.memory_space<vmem>>, vector<1x1x32xf32>
    %853 = vector.shape_cast %852 : vector<1x1x32xf32> to vector<1x32xf32>
    %cst_265 = arith.constant dense<0.000000e+00> : vector<16xf32>
    %854 = vector.multi_reduction <add>, %847, %cst_265 [1] : vector<16x32xf32> to vector<16xf32>
    %855 = vector.shape_cast %854 : vector<16xf32> to vector<16x1xf32>
    %cst_266 = arith.constant 3.200000e+01 : f32
    %856 = vector.broadcast %cst_266 : f32 to vector<16x1xf32>
    %857 = arith.divf %855, %856 : vector<16x1xf32>
    %858 = vector.broadcast %857 : vector<16x1xf32> to vector<16x32xf32>
    %859 = arith.subf %847, %858 : vector<16x32xf32>
    %860 = arith.mulf %859, %859 : vector<16x32xf32>
    %cst_267 = arith.constant dense<0.000000e+00> : vector<16xf32>
    %861 = vector.multi_reduction <add>, %860, %cst_267 [1] : vector<16x32xf32> to vector<16xf32>
    %862 = vector.shape_cast %861 : vector<16xf32> to vector<16x1xf32>
    %cst_268 = arith.constant 3.200000e+01 : f32
    %863 = vector.broadcast %cst_268 : f32 to vector<16x1xf32>
    %864 = arith.divf %862, %863 : vector<16x1xf32>
    %865 = vector.broadcast %857 : vector<16x1xf32> to vector<16x32xf32>
    %866 = arith.subf %847, %865 : vector<16x32xf32>
    %cst_269 = arith.constant 9.99999996E-13 : f32
    %867 = vector.broadcast %cst_269 : f32 to vector<16x1xf32>
    %868 = arith.addf %864, %867 : vector<16x1xf32>
    %869 = math.rsqrt %868 : vector<16x1xf32>
    %870 = vector.broadcast %869 : vector<16x1xf32> to vector<16x32xf32>
    %871 = arith.mulf %866, %870 : vector<16x32xf32>
    %872 = vector.broadcast %850 : vector<1x32xf32> to vector<16x32xf32>
    %873 = arith.mulf %871, %872 : vector<16x32xf32>
    %874 = vector.broadcast %853 : vector<1x32xf32> to vector<16x32xf32>
    %875 = arith.addf %873, %874 : vector<16x32xf32>
    %876 = vector.shape_cast %875 : vector<16x32xf32> to vector<2x8x32xf32>
    %c0_i32_270 = arith.constant 0 : i32
    %877 = arith.cmpi sge, %c3_i32, %c0_i32_270 : i32
    %cst_271 = arith.constant 1.000000e+00 : f32
    %cst_272 = arith.constant 0.000000e+00 : f32
    %878 = arith.select %877, %cst_271, %cst_272 : f32
    "tpu.trace_start"() <{level = 10 : i32, message = "bws,bsh->bwh"}> : () -> ()
    %cst_273 = arith.constant dense<0.000000e+00> : vector<2x5x32xf32>
    %879 = tpu.matmul %20, %876, %cst_273 {dimension_numbers = #tpu.dot_dimension_numbers<[2], [1], [1], [2], [0, 0, 0, 1, 1, 2], [0], [0]>} : vector<2x5x8xf32>, vector<2x8x32xf32>, vector<2x5x32xf32> -> vector<2x5x32xf32>
    "tpu.trace_stop"() : () -> ()
    %880 = vector.broadcast %878 : f32 to vector<2x5x32xf32>
    %881 = arith.mulf %880, %879 : vector<2x5x32xf32>
    %882 = arith.addf %667, %881 : vector<2x5x32xf32>
    %c4_i32 = arith.constant 4 : i32
    %c0_274 = arith.constant 0 : index
    %c0_275 = arith.constant 0 : index
    %c0_276 = arith.constant 0 : index
    %883 = vector.load %arg16[%c0_274, %c0_275, %c0_276] : memref<2x5x32xf32, #tpu.memory_space<vmem>>, vector<2x5x32xf32>
    tpu.vector_store %arg16[%c0_274, %c0_275, %c0_276], %882 {strides = array<i32>} : memref<2x5x32xf32, #tpu.memory_space<vmem>>, vector<2x5x32xf32>,
    return
  }
  func.func @transform_0(%arg0: i32) -> (i32, i32, i32) {
    %c0_i32 = arith.constant 0 : i32
    %c0_i32_0 = arith.constant 0 : i32
    %c0_i32_1 = arith.constant 0 : i32
    return %arg0, %c0_i32, %c0_i32_0 : i32, i32, i32
  }
  func.func @transform_1(%arg0: i32) -> (i32, i32, i32) {
    %c0_i32 = arith.constant 0 : i32
    %c0_i32_0 = arith.constant 0 : i32
    %c0_i32_1 = arith.constant 0 : i32
    return %arg0, %c0_i32, %c0_i32_0 : i32, i32, i32
  }
  func.func @transform_2(%arg0: i32) -> (i32, i32, i32) {
    %c0_i32 = arith.constant 0 : i32
    %c0_i32_0 = arith.constant 0 : i32
    %c0_i32_1 = arith.constant 0 : i32
    return %arg0, %c0_i32, %c0_i32_0 : i32, i32, i32
  }
  func.func @transform_3(%arg0: i32) -> (i32, i32, i32) {
    %c0_i32 = arith.constant 0 : i32
    %c0_i32_0 = arith.constant 0 : i32
    %c0_i32_1 = arith.constant 0 : i32
    %c0_i32_2 = arith.constant 0 : i32
    return %c0_i32, %c0_i32_0, %c0_i32_1 : i32, i32, i32
  }
  func.func @transform_4(%arg0: i32) -> (i32, i32, i32) {
    %c0_i32 = arith.constant 0 : i32
    %c0_i32_0 = arith.constant 0 : i32
    %c0_i32_1 = arith.constant 0 : i32
    %c0_i32_2 = arith.constant 0 : i32
    return %c0_i32, %c0_i32_0, %c0_i32_1 : i32, i32, i32
  }
  func.func @transform_5(%arg0: i32) -> (i32, i32, i32) {
    %c0_i32 = arith.constant 0 : i32
    %c0_i32_0 = arith.constant 0 : i32
    %c0_i32_1 = arith.constant 0 : i32
    %c0_i32_2 = arith.constant 0 : i32
    return %c0_i32, %c0_i32_0, %c0_i32_1 : i32, i32, i32
  }
  func.func @transform_6(%arg0: i32) -> (i32, i32, i32) {
    %c0_i32 = arith.constant 0 : i32
    %c0_i32_0 = arith.constant 0 : i32
    %c0_i32_1 = arith.constant 0 : i32
    %c0_i32_2 = arith.constant 0 : i32
    return %c0_i32, %c0_i32_0, %c0_i32_1 : i32, i32, i32
  }
  func.func @transform_7(%arg0: i32) -> (i32, i32, i32) {
    %c0_i32 = arith.constant 0 : i32
    %c0_i32_0 = arith.constant 0 : i32
    %c0_i32_1 = arith.constant 0 : i32
    %c0_i32_2 = arith.constant 0 : i32
    return %c0_i32, %c0_i32_0, %c0_i32_1 : i32, i32, i32
  }
  func.func @transform_8(%arg0: i32) -> (i32, i32, i32) {
    %c0_i32 = arith.constant 0 : i32
    %c0_i32_0 = arith.constant 0 : i32
    %c0_i32_1 = arith.constant 0 : i32
    %c0_i32_2 = arith.constant 0 : i32
    return %c0_i32, %c0_i32_0, %c0_i32_1 : i32, i32, i32
  }
  func.func @transform_9(%arg0: i32) -> (i32, i32, i32) {
    %c0_i32 = arith.constant 0 : i32
    %c0_i32_0 = arith.constant 0 : i32
    %c0_i32_1 = arith.constant 0 : i32
    %c0_i32_2 = arith.constant 0 : i32
    return %c0_i32, %c0_i32_0, %c0_i32_1 : i32, i32, i32
  }
  func.func @transform_10(%arg0: i32) -> (i32, i32, i32) {
    %c0_i32 = arith.constant 0 : i32
    %c0_i32_0 = arith.constant 0 : i32
    %c0_i32_1 = arith.constant 0 : i32
    %c0_i32_2 = arith.constant 0 : i32
    return %c0_i32, %c0_i32_0, %c0_i32_1 : i32, i32, i32
  }
  func.func @transform_11(%arg0: i32) -> (i32, i32, i32) {
    %c0_i32 = arith.constant 0 : i32
    %c0_i32_0 = arith.constant 0 : i32
    %c0_i32_1 = arith.constant 0 : i32
    %c0_i32_2 = arith.constant 0 : i32
    return %c0_i32, %c0_i32_0, %c0_i32_1 : i32, i32, i32
  }
  func.func @transform_12(%arg0: i32) -> (i32, i32, i32) {
    %c0_i32 = arith.constant 0 : i32
    %c0_i32_0 = arith.constant 0 : i32
    %c0_i32_1 = arith.constant 0 : i32
    %c0_i32_2 = arith.constant 0 : i32
    return %c0_i32, %c0_i32_0, %c0_i32_1 : i32, i32, i32
  }
  func.func @transform_13(%arg0: i32) -> (i32, i32, i32) {
    %c0_i32 = arith.constant 0 : i32
    %c0_i32_0 = arith.constant 0 : i32
    %c0_i32_1 = arith.constant 0 : i32
    %c0_i32_2 = arith.constant 0 : i32
    return %c0_i32, %c0_i32_0, %c0_i32_1 : i32, i32, i32
  }
  func.func @transform_14(%arg0: i32) -> (i32, i32, i32) {
    %c0_i32 = arith.constant 0 : i32
    %c0_i32_0 = arith.constant 0 : i32
    %c0_i32_1 = arith.constant 0 : i32
    %c0_i32_2 = arith.constant 0 : i32
    return %c0_i32, %c0_i32_0, %c0_i32_1 : i32, i32, i32
  }
  func.func @transform_15(%arg0: i32) -> (i32, i32, i32) {
    %c0_i32 = arith.constant 0 : i32
    %c0_i32_0 = arith.constant 0 : i32
    %c0_i32_1 = arith.constant 0 : i32
    return %arg0, %c0_i32, %c0_i32_0 : i32, i32, i32
  }
}

</mosaic_0001>

<llo_original>
// kernel: tpu_custom_call.1
$region0: #{tpu_custom_call.1}
  #allocation0 [shape = 'u32[]', space=smem, size = 0x4, offset = 0x4, fixed_abs, tag = 'smem constant byte address 0x4 - core index']
  #allocation1 [shape = 'u32[144,128]{1,0:T(1,128)}', space=vmem, size = 0x12000, scoped, tag = 'internal scratch']
  %s0 = inlined_call_operand.vmem [shape: f32[2,8,32], index: 0, kind: input, shape index: {}]
  %s1 = inlined_call_operand.hbm [shape: f32[2,1,8], index: 1, kind: input, shape index: {}]
  %s2 = inlined_call_operand.vmem [shape: s32[2,5,1], index: 2, kind: input, shape index: {}]
  %s3 = inlined_call_operand.vmem [shape: bf16[4,32,96], index: 3, kind: input, shape index: {}]
  %s4 = inlined_call_operand.vmem [shape: f32[4,1,96], index: 4, kind: input, shape index: {}]
  %s5 = inlined_call_operand.vmem [shape: bf16[4,32,32], index: 5, kind: input, shape index: {}]
  %s6 = inlined_call_operand.vmem [shape: f32[4,1,32], index: 6, kind: input, shape index: {}]
  %s7 = inlined_call_operand.vmem [shape: f32[4,1,32], index: 7, kind: input, shape index: {}]
  %s8 = inlined_call_operand.vmem [shape: f32[4,1,32], index: 8, kind: input, shape index: {}]
  %s9 = inlined_call_operand.vmem [shape: bf16[4,32,64], index: 9, kind: input, shape index: {}]
  %s10 = inlined_call_operand.vmem [shape: f32[4,1,64], index: 10, kind: input, shape index: {}]
  %s11 = inlined_call_operand.vmem [shape: bf16[4,64,32], index: 11, kind: input, shape index: {}]
  %s12 = inlined_call_operand.hbm [shape: f32[4,1,32], index: 12, kind: input, shape index: {}]
  %s13 = inlined_call_operand.hbm [shape: f32[4,1,32], index: 13, kind: input, shape index: {}]
  %s14 = inlined_call_operand.vmem [shape: f32[4,1,32], index: 14, kind: input, shape index: {}]
  %s15 = inlined_call_operand.vmem [shape: f32[2,5,32], index: 15, kind: output, shape index: {}]
  %s16 = sld [smem:[#allocation0]]
  $region82: #{tpu_custom_call.1} parent=0
    _
  %s18 = ssub.s32 1, %s16
  %s19 = scalar_select 0, %s18, %s16
  $region1: #{tpu_custom_call.1} parent=0
    #allocation2 [shape = 'u8[1024]{0}', space=vmem, size = 0x400, scoped, tag = 'input window, operand 1, single buffered']
    #allocation3 [shape = 's32[1]{0}', space=sflag, size = 0x4, scoped, tag = 'scoped memory for tpu_custom_call.1']
    #allocation4 [shape = 'u8[2048]{0}', space=vmem, size = 0x800, scoped, tag = 'input window, operand 12, single buffered']
    #allocation5 [shape = 's32[1]{0}', space=sflag, size = 0x4, scoped, tag = 'scoped memory for tpu_custom_call.1']
    #allocation6 [shape = 'u8[2048]{0}', space=vmem, size = 0x800, scoped, tag = 'input window, operand 13, single buffered']
    %20 = vsyncpa [#allocation3], 0
    %21 = vsyncpa [#allocation5], 0
    // Predicated region
    $region2: #{tpu_custom_call.1} parent=1 // pred_check
      _
    $region3: #{tpu_custom_call.1} parent=1 // pred_check_branch
      %23 = sbr.rel (0) target = $region5
    $region4: #{tpu_custom_call.1} parent=1 // pred_region
      _
    $region5: #{tpu_custom_call.1} parent=1 // pred_fallthru
      _
    // Predicated region
    $region6: #{tpu_custom_call.1} parent=1 // pred_check
      _
    $region7: #{tpu_custom_call.1} parent=1 // pred_check_branch
      %25 = sbr.rel (0) target = $region9
    $region8: #{tpu_custom_call.1} parent=1 // pred_region
      %s27 = ssub.s32 32, 32
      %28 = vsyncadd [#allocation3], %s27
      %s29 = sshll.u32 [#allocation2], 4
      %s30 = int_to_ptr.vmem [resolvable:$true] %s29
      %35 = dma.hbm_to_vmem [thread:$0]  %s1, 32, %s30, [#allocation3], 16, 16, 1
    $region9: #{tpu_custom_call.1} parent=1 // pred_fallthru
      _
    // Predicated region
    $region10: #{tpu_custom_call.1} parent=1 // pred_check
      _
    $region11: #{tpu_custom_call.1} parent=1 // pred_check_branch
      %37 = sbr.rel (0) target = $region13
    $region12: #{tpu_custom_call.1} parent=1 // pred_region
      _
    $region13: #{tpu_custom_call.1} parent=1 // pred_fallthru
      _
    // Predicated region
    $region14: #{tpu_custom_call.1} parent=1 // pred_check
      _
    $region15: #{tpu_custom_call.1} parent=1 // pred_check_branch
      %39 = sbr.rel (0) target = $region17
    $region16: #{tpu_custom_call.1} parent=1 // pred_region
      _
    $region17: #{tpu_custom_call.1} parent=1 // pred_fallthru
      _
    // Predicated region
    $region18: #{tpu_custom_call.1} parent=1 // pred_check
      _
    $region19: #{tpu_custom_call.1} parent=1 // pred_check_branch
      %41 = sbr.rel (0) target = $region21
    $region20: #{tpu_custom_call.1} parent=1 // pred_region
      _
    $region21: #{tpu_custom_call.1} parent=1 // pred_fallthru
      _
    // Predicated region
    $region22: #{tpu_custom_call.1} parent=1 // pred_check
      _
    $region23: #{tpu_custom_call.1} parent=1 // pred_check_branch
      %43 = sbr.rel (0) target = $region25
    $region24: #{tpu_custom_call.1} parent=1 // pred_region
      _
    $region25: #{tpu_custom_call.1} parent=1 // pred_fallthru
      _
    // Predicated region
    $region26: #{tpu_custom_call.1} parent=1 // pred_check
      _
    $region27: #{tpu_custom_call.1} parent=1 // pred_check_branch
      %45 = sbr.rel (0) target = $region29
    $region28: #{tpu_custom_call.1} parent=1 // pred_region
      _
    $region29: #{tpu_custom_call.1} parent=1 // pred_fallthru
      _
    // Predicated region
    $region30: #{tpu_custom_call.1} parent=1 // pred_check
      _
    $region31: #{tpu_custom_call.1} parent=1 // pred_check_branch
      %47 = sbr.rel (0) target = $region33
    $region32: #{tpu_custom_call.1} parent=1 // pred_region
      _
    $region33: #{tpu_custom_call.1} parent=1 // pred_fallthru
      _
    // Predicated region
    $region34: #{tpu_custom_call.1} parent=1 // pred_check
      _
    $region35: #{tpu_custom_call.1} parent=1 // pred_check_branch
      %49 = sbr.rel (0) target = $region37
    $region36: #{tpu_custom_call.1} parent=1 // pred_region
      _
    $region37: #{tpu_custom_call.1} parent=1 // pred_fallthru
      _
    // Predicated region
    $region38: #{tpu_custom_call.1} parent=1 // pred_check
      _
    $region39: #{tpu_custom_call.1} parent=1 // pred_check_branch
      %51 = sbr.rel (0) target = $region41
    $region40: #{tpu_custom_call.1} parent=1 // pred_region
      _
    $region41: #{tpu_custom_call.1} parent=1 // pred_fallthru
      _
    // Predicated region
    $region42: #{tpu_custom_call.1} parent=1 // pred_check
      _
    $region43: #{tpu_custom_call.1} parent=1 // pred_check_branch
      %53 = sbr.rel (0) target = $region45
    $region44: #{tpu_custom_call.1} parent=1 // pred_region
      _
    $region45: #{tpu_custom_call.1} parent=1 // pred_fallthru
      _
    // Predicated region
    $region46: #{tpu_custom_call.1} parent=1 // pred_check
      _
    $region47: #{tpu_custom_call.1} parent=1 // pred_check_branch
      %55 = sbr.rel (0) target = $region49
    $region48: #{tpu_custom_call.1} parent=1 // pred_region
      _
    $region49: #{tpu_custom_call.1} parent=1 // pred_fallthru
      _
    // Predicated region
    $region50: #{tpu_custom_call.1} parent=1 // pred_check
      _
    $region51: #{tpu_custom_call.1} parent=1 // pred_check_branch
      %57 = sbr.rel (0) target = $region53
    $region52: #{tpu_custom_call.1} parent=1 // pred_region
      %s59 = ssub.s32 64, 64
      %60 = vsyncadd [#allocation5], %s59
      %s61 = sshll.u32 [#allocation4], 4
      %s62 = int_to_ptr.vmem [resolvable:$true] %s61
      %67 = dma.hbm_to_vmem [thread:$0]  %s12, 64, %s62, [#allocation5], 16, 16, 1
    $region53: #{tpu_custom_call.1} parent=1 // pred_fallthru
      _
    // Predicated region
    $region54: #{tpu_custom_call.1} parent=1 // pred_check
      _
    $region55: #{tpu_custom_call.1} parent=1 // pred_check_branch
      %69 = sbr.rel (0) target = $region57
    $region56: #{tpu_custom_call.1} parent=1 // pred_region
      %s71 = ssub.s32 64, 64
      %72 = vsyncadd [#allocation5], %s71
      %s73 = sshll.u32 [#allocation6], 4
      %s74 = int_to_ptr.vmem [resolvable:$true] %s73
      %79 = dma.hbm_to_vmem [thread:$0]  %s13, 64, %s74, [#allocation5], 16, 16, 1
    $region57: #{tpu_custom_call.1} parent=1 // pred_fallthru
      _
    // Predicated region
    $region58: #{tpu_custom_call.1} parent=1 // pred_check
      _
    $region59: #{tpu_custom_call.1} parent=1 // pred_check_branch
      %81 = sbr.rel (0) target = $region61
    $region60: #{tpu_custom_call.1} parent=1 // pred_region
      _
    $region61: #{tpu_custom_call.1} parent=1 // pred_fallthru
      _
    // Predicated region
    $region62: #{tpu_custom_call.1} parent=1 // pred_check
      _
    $region63: #{tpu_custom_call.1} parent=1 // pred_check_branch
      %83 = sbr.rel (0) target = $region65
    $region64: #{tpu_custom_call.1} parent=1 // pred_region
      %84 = dma.done [#allocation3], 32
    $region65: #{tpu_custom_call.1} parent=1 // pred_fallthru
      _
    // Predicated region
    $region66: #{tpu_custom_call.1} parent=1 // pred_check
      _
    $region67: #{tpu_custom_call.1} parent=1 // pred_check_branch
      %86 = sbr.rel (0) target = $region69
    $region68: #{tpu_custom_call.1} parent=1 // pred_region
      %87 = dma.done [#allocation5], 64
    $region69: #{tpu_custom_call.1} parent=1 // pred_fallthru
      _
    // Predicated region
    $region70: #{tpu_custom_call.1} parent=1 // pred_check
      _
    $region71: #{tpu_custom_call.1} parent=1 // pred_check_branch
      %89 = sbr.rel (0) target = $region73
    $region72: #{tpu_custom_call.1} parent=1 // pred_region
      %90 = dma.done [#allocation5], 64
    $region73: #{tpu_custom_call.1} parent=1 // pred_fallthru
      _
    %v92 = vld [vmem:[#allocation2] sm:$0x1]
    %v93 = vld [vmem:[#allocation2 + $0x1] sm:$0x1]
    %v94 = vsub.f32 1.0, %v92
    %v95 = vsub.f32 1.0, %v93
    %v96 = vmul.f32 %v94, -1e+09
    %v97 = vmul.f32 %v95, -1e+09
    %v100 = vlaneseq
    %v101 = vshrl.u32 %v100, 7
    %v102 = vsub.s32 0, %v101
    %v103 = vrot.slane %v96, %v102
    %v104 = vlaneseq
    %v105 = vshrl.u32 %v104, 7
    %v106 = vsub.s32 0, %v105
    %v107 = vrot.slane %v97, %v106
    %v110 = vld [vmem:[%s2] sm:$0x1f]
    %v111 = vld [vmem:[%s2 + $0x8] sm:$0x1f]
    %v112 = vlaneseq
    %v113 = vand.u32 %v112, 127
    %114 = vset.pattern.permute.xlu0 0
    %115 = vperm.xlu0 %114, %v110
    %v116 = vpop.permute.xlu0 %115
    %117 = vset.pattern.permute.xlu0 0
    %118 = vperm.xlu0 %117, %v111
    %v119 = vpop.permute.xlu0 %118
    %vm120 = vcmp.eq.s32.totalorder %v113, %v116
    %vm121 = vcmp.eq.s32.totalorder %v113, %v119
    %v122 = vsel %vm120, 1, 0
    %v123 = vsel %vm121, 1, 0
    %v124 = vcvt.s32.f32 %v122
    %v125 = vcvt.s32.f32 %v123
    %vm126 = vcmp.ne.s32.totalorder %v110, 7
    %vm127 = vcmp.ne.s32.totalorder %v111, 7
    %v128 = vsel %vm126, 1, 0
    %v129 = vsel %vm127, 1, 0
    %v130 = vcvt.s32.f32 %v128
    %v131 = vcvt.s32.f32 %v129
    %133 = vset.pattern.permute.xlu0 0
    %134 = vperm.xlu0 %133, %v130
    %v135 = vpop.permute.xlu0 %134
    %138 = vset.pattern.permute.xlu0 0
    %139 = vperm.xlu0 %138, %v131
    %v140 = vpop.permute.xlu0 %139
    %v142 = vmul.f32 %v124, %v135
    %v143 = vmul.f32 %v125, %v140
    %v146 = vlaneseq
    %v147 = vshrl.u32 %v146, 7
    %v148 = vsub.s32 0, %v147
    %v149 = vrot.slane %v92, %v148
    %v150 = vlaneseq
    %v151 = vshrl.u32 %v150, 7
    %v152 = vsub.s32 0, %v151
    %v153 = vrot.slane %v93, %v152
    %v156 = vmul.f32 %v142, %v149
    %v157 = vmul.f32 %v143, %v153
    %v158 = vld [vmem:[%s0] sm:$0xff]
    %v159 = vld [vmem:[%s0 + $0x8] sm:$0xff]
    %v160 = vpack.c.bf16 %v159, %v158
    %v161 = vld [vmem:[%s3] sm:$0xf]
    %v162 = vld [vmem:[%s3 + $0x4] sm:$0xf]
    %v163 = vld [vmem:[%s3 + $0x8] sm:$0xf]
    %v164 = vld [vmem:[%s3 + $0xc] sm:$0xf]
    %v165 = vld [vmem:[%s4] sm:$0x1]
    %v167 = vlaneseq
    %v168 = vshrl.u32 %v167, 7
    %v169 = vsub.s32 0, %v168
    %v170 = vrot.slane %v165, %v169
    %v176 = vunpack.c.l.b16 %v161
    %v177 = vunpack.c.l.b16 %v162
    %v178 = vunpack.c.l.b16 %v163
    %v179 = vunpack.c.l.b16 %v164
    %v180 = vpack.c.b16 %v177, %v176
    %v181 = vpack.c.b16 %v179, %v178
    %vm184 = vcmask 261120
    %v186 = vsel %vm184, %v160, 0
    %188 = vmatprep.subr.bf16.mxu0 0
    %189 = vmatpush1.bf16.msra.mxu0 0
    %190 = vmatprep.subr.bf16.mxu0 0
    %191 = vmatpush1.bf16.msra.mxu0 0
    %192 = vmatprep.subr.bf16.mxu0 0
    %193 = vmatpush1.bf16.msra.mxu0 0
    %194 = vmatprep.subr.bf16.mxu0 0
    %195 = vmatpush1.bf16.msra.mxu0 0
    %196 = vmatprep.subr.bf16.mxu0 0
    %197 = vmatpush1.bf16.msra.mxu0 0
    %198 = vmatprep.subr.bf16.mxu0 0
    %199 = vmatpush1.bf16.msra.mxu0 0
    %200 = vmatprep.subr.bf16.mxu0 0
    %201 = vmatpush1.bf16.msra.mxu0 %v181
    %202 = vmatprep.subr.bf16.mxu0 0
    %203 = vmatpush1.bf16.msra.mxu0 %v180
    %204 = vmatprep.subr.bf16.mxu0 0
    %205 = vmatpush2.bf16.msra.mxu0 0
    %206 = vmatprep.subr.bf16.mxu0 0
    %207 = vmatpush2.bf16.msra.mxu0 0
    %208 = vmatprep.subr.bf16.mxu0 0
    %209 = vmatpush2.bf16.msra.mxu0 0
    %210 = vmatprep.subr.bf16.mxu0 0
    %211 = vmatpush2.bf16.msra.mxu0 0
    %212 = vmatprep.subr.bf16.mxu0 0
    %213 = vmatpush2.bf16.msra.mxu0 0
    %214 = vmatprep.subr.bf16.mxu0 0
    %215 = vmatpush2.bf16.msra.mxu0 0
    %216 = vmatprep.subr.bf16.mxu0 0
    %217 = vmatpush2.bf16.msra.mxu0 0
    %218 = vmatprep.subr.bf16.mxu0 0
    %219 = vmatpush2.bf16.msra.mxu0 0
    %220 = vmatprep.mubr.bf16.mxu0 0
    %221 = vmatmul.mubr.bf16.gmra.mxu0 %v186
    %v222 = vpop.f32.mrf.mxu0
    %v223 = vadd.f32 %v170, %v222
    %v224 = vpop.f32.mrf.mxu0
    %v225 = vpop.f32.mrf.mxu0
    %v226 = vadd.f32 %v170, %v225
    %v227 = vpop.f32.mrf.mxu0
    %228 = vdwg.mxu0
    %v229 = vpack.c.bf16 %v223, %v223
    %v230 = vpack.c.bf16 %v226, %v226
    %v231 = vld [vmem:[%s5] sm:$0xf]
    %v232 = vld [vmem:[%s5 + $0x4] sm:$0xf]
    %v233 = vld [vmem:[%s5 + $0x8] sm:$0xf]
    %v234 = vld [vmem:[%s5 + $0xc] sm:$0xf]
    %236 = vrot.lane.b32.xlu0 %v229, 96
    %v237 = vpop.permute.xlu0 %236
    %vm238 = vcmask 64512
    %v240 = vsel %vm238, %v229, 0
    %v243 = vsel %vm238, %v237, 0
    %245 = vmatprep.subr.bf16.mxu0 0
    %246 = vmatpush1.bf16.xpose.msra.mxu0 0
    %247 = vmatprep.subr.bf16.mxu0 0
    %248 = vmatpush1.bf16.xpose.msra.mxu0 0
    %249 = vmatprep.subr.bf16.mxu0 0
    %250 = vmatpush1.bf16.xpose.msra.mxu0 0
    %251 = vmatprep.subr.bf16.mxu0 0
    %252 = vmatpush1.bf16.xpose.msra.mxu0 0
    %253 = vmatprep.subr.bf16.mxu0 0
    %254 = vmatpush1.bf16.xpose.msra.mxu0 0
    %255 = vmatprep.subr.bf16.mxu0 0
    %256 = vmatpush1.bf16.xpose.msra.mxu0 0
    %257 = vmatprep.subr.bf16.mxu0 0
    %258 = vmatpush1.bf16.xpose.msra.mxu0 0
    %259 = vmatprep.subr.bf16.mxu0 0
    %260 = vmatpush1.bf16.xpose.msra.mxu0 %v243
    %261 = vmatprep.subr.bf16.mxu0 0
    %262 = vmatpush2.bf16.xpose.msra.mxu0 0
    %263 = vmatprep.subr.bf16.mxu0 0
    %264 = vmatpush2.bf16.xpose.msra.mxu0 0
    %265 = vmatprep.subr.bf16.mxu0 0
    %266 = vmatpush2.bf16.xpose.msra.mxu0 0
    %267 = vmatprep.subr.bf16.mxu0 0
    %268 = vmatpush2.bf16.xpose.msra.mxu0 0
    %269 = vmatprep.subr.bf16.mxu0 0
    %270 = vmatpush2.bf16.xpose.msra.mxu0 0
    %271 = vmatprep.subr.bf16.mxu0 0
    %272 = vmatpush2.bf16.xpose.msra.mxu0 0
    %273 = vmatprep.subr.bf16.mxu0 0
    %274 = vmatpush2.bf16.xpose.msra.mxu0 0
    %275 = vmatprep.subr.bf16.mxu0 0
    %276 = vmatpush2.bf16.xpose.msra.mxu0 0
    %277 = vmatprep.mubr.bf16.mxu0 0
    %278 = vmatmul.mubr.bf16.gmra.mxu0 %v240
    %v279 = vpop.f32.mrf.mxu0
    %v280 = vadd.f32 %v103, %v279
    %v281 = vpop.f32.mrf.mxu0
    %v282 = vpop.f32.mrf.mxu0
    %v283 = vpop.f32.mrf.mxu0
    %284 = vdwg.mxu0
    %286 = vrot.lane.b32.xlu0 %v230, 96
    %v287 = vpop.permute.xlu0 %286
    %v289 = vsel %vm238, %v230, 0
    %v292 = vsel %vm238, %v287, 0
    %294 = vmatprep.subr.bf16.mxu0 0
    %295 = vmatpush1.bf16.xpose.msra.mxu0 0
    %296 = vmatprep.subr.bf16.mxu0 0
    %297 = vmatpush1.bf16.xpose.msra.mxu0 0
    %298 = vmatprep.subr.bf16.mxu0 0
    %299 = vmatpush1.bf16.xpose.msra.mxu0 0
    %300 = vmatprep.subr.bf16.mxu0 0
    %301 = vmatpush1.bf16.xpose.msra.mxu0 0
    %302 = vmatprep.subr.bf16.mxu0 0
    %303 = vmatpush1.bf16.xpose.msra.mxu0 0
    %304 = vmatprep.subr.bf16.mxu0 0
    %305 = vmatpush1.bf16.xpose.msra.mxu0 0
    %306 = vmatprep.subr.bf16.mxu0 0
    %307 = vmatpush1.bf16.xpose.msra.mxu0 0
    %308 = vmatprep.subr.bf16.mxu0 0
    %309 = vmatpush1.bf16.xpose.msra.mxu0 %v292
    %310 = vmatprep.subr.bf16.mxu0 0
    %311 = vmatpush2.bf16.xpose.msra.mxu0 0
    %312 = vmatprep.subr.bf16.mxu0 0
    %313 = vmatpush2.bf16.xpose.msra.mxu0 0
    %314 = vmatprep.subr.bf16.mxu0 0
    %315 = vmatpush2.bf16.xpose.msra.mxu0 0
    %316 = vmatprep.subr.bf16.mxu0 0
    %317 = vmatpush2.bf16.xpose.msra.mxu0 0
    %318 = vmatprep.subr.bf16.mxu0 0
    %319 = vmatpush2.bf16.xpose.msra.mxu0 0
    %320 = vmatprep.subr.bf16.mxu0 0
    %321 = vmatpush2.bf16.xpose.msra.mxu0 0
    %322 = vmatprep.subr.bf16.mxu0 0
    %323 = vmatpush2.bf16.xpose.msra.mxu0 0
    %324 = vmatprep.subr.bf16.mxu0 0
    %325 = vmatpush2.bf16.xpose.msra.mxu0 0
    %326 = vmatprep.mubr.bf16.mxu0 0
    %327 = vmatmul.mubr.bf16.gmra.mxu0 %v289
    %v328 = vpop.f32.mrf.mxu0
    %v329 = vadd.f32 %v107, %v328
    %v330 = vpop.f32.mrf.mxu0
    %v331 = vpop.f32.mrf.mxu0
    %v332 = vpop.f32.mrf.mxu0
    %333 = vdwg.mxu0
    %v334 = vsel %vm238, %v280, -inf
    %335 = vmax.xlane.f32.xlu0 %v334
    %v336 = vpop.xlane.xlu0 %335
    %v337 = vsel %vm238, %v329, -inf
    %338 = vmax.xlane.f32.xlu0 %v337
    %v339 = vpop.xlane.xlu0 %338
    %v340 = vsub.f32 %v280, %v336
    %v341 = vsub.f32 %v329, %v339
    %v342 = vmul.f32 %v340, 1.442695
    %v343 = vpow.pop %v342
    %v344 = vmul.f32 %v341, 1.442695
    %v345 = vpow.pop %v344
    %v346 = vsel %vm238, %v343, 0.0
    %347 = vadd.xlane.f32.xlu0 %v346
    %v348 = vpop.xlane.xlu0 %347
    %v349 = vsel %vm238, %v345, 0.0
    %350 = vadd.xlane.f32.xlu0 %v349
    %v351 = vpop.xlane.xlu0 %350
    %v352 = vrcp.pop %v348
    %v353 = vrcp.pop %v351
    %v354 = vmul.f32 %v343, %v352
    %v355 = vmul.f32 %v345, %v353
    %v356 = vpack.c.bf16 %v354, %v354
    %v357 = vpack.c.bf16 %v355, %v355
    %358 = vrot.lane.b32.xlu0 %v229, 64
    %v359 = vpop.permute.xlu0 %358
    %v361 = vsel %vm238, %v356, 0
    %vm363 = vcmask 1043456
    %v365 = vsel %vm363, %v359, 0
    %367 = vmatprep.subr.bf16.mxu0 0
    %368 = vmatpush1.bf16.msra.mxu0 0
    %369 = vmatprep.subr.bf16.mxu0 0
    %370 = vmatpush1.bf16.msra.mxu0 0
    %371 = vmatprep.subr.bf16.mxu0 0
    %372 = vmatpush1.bf16.msra.mxu0 0
    %373 = vmatprep.subr.bf16.mxu0 0
    %374 = vmatpush1.bf16.msra.mxu0 0
    %375 = vmatprep.subr.bf16.mxu0 0
    %376 = vmatpush1.bf16.msra.mxu0 0
    %377 = vmatprep.subr.bf16.mxu0 0
    %378 = vmatpush1.bf16.msra.mxu0 0
    %379 = vmatprep.subr.bf16.mxu0 0
    %380 = vmatpush1.bf16.msra.mxu0 0
    %381 = vmatprep.subr.bf16.mxu0 0
    %382 = vmatpush1.bf16.msra.mxu0 %v365
    %383 = vmatprep.subr.bf16.mxu0 0
    %384 = vmatpush2.bf16.msra.mxu0 0
    %385 = vmatprep.subr.bf16.mxu0 0
    %386 = vmatpush2.bf16.msra.mxu0 0
    %387 = vmatprep.subr.bf16.mxu0 0
    %388 = vmatpush2.bf16.msra.mxu0 0
    %389 = vmatprep.subr.bf16.mxu0 0
    %390 = vmatpush2.bf16.msra.mxu0 0
    %391 = vmatprep.subr.bf16.mxu0 0
    %392 = vmatpush2.bf16.msra.mxu0 0
    %393 = vmatprep.subr.bf16.mxu0 0
    %394 = vmatpush2.bf16.msra.mxu0 0
    %395 = vmatprep.subr.bf16.mxu0 0
    %396 = vmatpush2.bf16.msra.mxu0 0
    %397 = vmatprep.subr.bf16.mxu0 0
    %398 = vmatpush2.bf16.msra.mxu0 0
    %399 = vmatprep.mubr.bf16.mxu0 0
    %400 = vmatmul.mubr.bf16.gmra.mxu0 %v361
    %v401 = vpop.f32.mrf.mxu0
    %v402 = vadd.f32 0.0, %v401
    %v403 = vpop.f32.mrf.mxu0
    %v404 = vpop.f32.mrf.mxu0
    %v405 = vpop.f32.mrf.mxu0
    %406 = vdwg.mxu0
    %407 = vrot.lane.b32.xlu0 %v230, 64
    %v408 = vpop.permute.xlu0 %407
    %v410 = vsel %vm238, %v357, 0
    %v413 = vsel %vm363, %v408, 0
    %415 = vmatprep.subr.bf16.mxu0 0
    %416 = vmatpush1.bf16.msra.mxu0 0
    %417 = vmatprep.subr.bf16.mxu0 0
    %418 = vmatpush1.bf16.msra.mxu0 0
    %419 = vmatprep.subr.bf16.mxu0 0
    %420 = vmatpush1.bf16.msra.mxu0 0
    %421 = vmatprep.subr.bf16.mxu0 0
    %422 = vmatpush1.bf16.msra.mxu0 0
    %423 = vmatprep.subr.bf16.mxu0 0
    %424 = vmatpush1.bf16.msra.mxu0 0
    %425 = vmatprep.subr.bf16.mxu0 0
    %426 = vmatpush1.bf16.msra.mxu0 0
    %427 = vmatprep.subr.bf16.mxu0 0
    %428 = vmatpush1.bf16.msra.mxu0 0
    %429 = vmatprep.subr.bf16.mxu0 0
    %430 = vmatpush1.bf16.msra.mxu0 %v413
    %431 = vmatprep.subr.bf16.mxu0 0
    %432 = vmatpush2.bf16.msra.mxu0 0
    %433 = vmatprep.subr.bf16.mxu0 0
    %434 = vmatpush2.bf16.msra.mxu0 0
    %435 = vmatprep.subr.bf16.mxu0 0
    %436 = vmatpush2.bf16.msra.mxu0 0
    %437 = vmatprep.subr.bf16.mxu0 0
    %438 = vmatpush2.bf16.msra.mxu0 0
    %439 = vmatprep.subr.bf16.mxu0 0
    %440 = vmatpush2.bf16.msra.mxu0 0
    %441 = vmatprep.subr.bf16.mxu0 0
    %442 = vmatpush2.bf16.msra.mxu0 0
    %443 = vmatprep.subr.bf16.mxu0 0
    %444 = vmatpush2.bf16.msra.mxu0 0
    %445 = vmatprep.subr.bf16.mxu0 0
    %446 = vmatpush2.bf16.msra.mxu0 0
    %447 = vmatprep.mubr.bf16.mxu0 0
    %448 = vmatmul.mubr.bf16.gmra.mxu0 %v410
    %v449 = vpop.f32.mrf.mxu0
    %v450 = vadd.f32 0.0, %v449
    %v451 = vpop.f32.mrf.mxu0
    %v452 = vpop.f32.mrf.mxu0
    %v453 = vpop.f32.mrf.mxu0
    %454 = vdwg.mxu0
    %v455 = vpack.c.bf16 %v450, %v402
    %456 = vrot.lane.b32.xlu0 %v229, 120
    %v457 = vpop.permute.xlu0 %456
    %458 = vrot.lane.b32.xlu0 %v229, 88
    %v459 = vpop.permute.xlu0 %458
    %v461 = vsel %vm238, %v457, 0
    %v464 = vsel %vm238, %v459, 0
    %466 = vmatprep.subr.bf16.mxu0 0
    %467 = vmatpush1.bf16.xpose.msra.mxu0 0
    %468 = vmatprep.subr.bf16.mxu0 0
    %469 = vmatpush1.bf16.xpose.msra.mxu0 0
    %470 = vmatprep.subr.bf16.mxu0 0
    %471 = vmatpush1.bf16.xpose.msra.mxu0 0
    %472 = vmatprep.subr.bf16.mxu0 0
    %473 = vmatpush1.bf16.xpose.msra.mxu0 0
    %474 = vmatprep.subr.bf16.mxu0 0
    %475 = vmatpush1.bf16.xpose.msra.mxu0 0
    %476 = vmatprep.subr.bf16.mxu0 0
    %477 = vmatpush1.bf16.xpose.msra.mxu0 0
    %478 = vmatprep.subr.bf16.mxu0 0
    %479 = vmatpush1.bf16.xpose.msra.mxu0 0
    %480 = vmatprep.subr.bf16.mxu0 0
    %481 = vmatpush1.bf16.xpose.msra.mxu0 %v464
    %482 = vmatprep.subr.bf16.mxu0 0
    %483 = vmatpush2.bf16.xpose.msra.mxu0 0
    %484 = vmatprep.subr.bf16.mxu0 0
    %485 = vmatpush2.bf16.xpose.msra.mxu0 0
    %486 = vmatprep.subr.bf16.mxu0 0
    %487 = vmatpush2.bf16.xpose.msra.mxu0 0
    %488 = vmatprep.subr.bf16.mxu0 0
    %489 = vmatpush2.bf16.xpose.msra.mxu0 0
    %490 = vmatprep.subr.bf16.mxu0 0
    %491 = vmatpush2.bf16.xpose.msra.mxu0 0
    %492 = vmatprep.subr.bf16.mxu0 0
    %493 = vmatpush2.bf16.xpose.msra.mxu0 0
    %494 = vmatprep.subr.bf16.mxu0 0
    %495 = vmatpush2.bf16.xpose.msra.mxu0 0
    %496 = vmatprep.subr.bf16.mxu0 0
    %497 = vmatpush2.bf16.xpose.msra.mxu0 0
    %498 = vmatprep.mubr.bf16.mxu0 0
    %499 = vmatmul.mubr.bf16.gmra.mxu0 %v461
    %v500 = vpop.f32.mrf.mxu0
    %v501 = vadd.f32 %v103, %v500
    %v502 = vpop.f32.mrf.mxu0
    %v503 = vpop.f32.mrf.mxu0
    %v504 = vpop.f32.mrf.mxu0
    %505 = vdwg.mxu0
    %506 = vrot.lane.b32.xlu0 %v230, 120
    %v507 = vpop.permute.xlu0 %506
    %508 = vrot.lane.b32.xlu0 %v230, 88
    %v509 = vpop.permute.xlu0 %508
    %v511 = vsel %vm238, %v507, 0
    %v514 = vsel %vm238, %v509, 0
    %516 = vmatprep.subr.bf16.mxu0 0
    %517 = vmatpush1.bf16.xpose.msra.mxu0 0
    %518 = vmatprep.subr.bf16.mxu0 0
    %519 = vmatpush1.bf16.xpose.msra.mxu0 0
    %520 = vmatprep.subr.bf16.mxu0 0
    %521 = vmatpush1.bf16.xpose.msra.mxu0 0
    %522 = vmatprep.subr.bf16.mxu0 0
    %523 = vmatpush1.bf16.xpose.msra.mxu0 0
    %524 = vmatprep.subr.bf16.mxu0 0
    %525 = vmatpush1.bf16.xpose.msra.mxu0 0
    %526 = vmatprep.subr.bf16.mxu0 0
    %527 = vmatpush1.bf16.xpose.msra.mxu0 0
    %528 = vmatprep.subr.bf16.mxu0 0
    %529 = vmatpush1.bf16.xpose.msra.mxu0 0
    %530 = vmatprep.subr.bf16.mxu0 0
    %531 = vmatpush1.bf16.xpose.msra.mxu0 %v514
    %532 = vmatprep.subr.bf16.mxu0 0
    %533 = vmatpush2.bf16.xpose.msra.mxu0 0
    %534 = vmatprep.subr.bf16.mxu0 0
    %535 = vmatpush2.bf16.xpose.msra.mxu0 0
    %536 = vmatprep.subr.bf16.mxu0 0
    %537 = vmatpush2.bf16.xpose.msra.mxu0 0
    %538 = vmatprep.subr.bf16.mxu0 0
    %539 = vmatpush2.bf16.xpose.msra.mxu0 0
    %540 = vmatprep.subr.bf16.mxu0 0
    %541 = vmatpush2.bf16.xpose.msra.mxu0 0
    %542 = vmatprep.subr.bf16.mxu0 0
    %543 = vmatpush2.bf16.xpose.msra.mxu0 0
    %544 = vmatprep.subr.bf16.mxu0 0
    %545 = vmatpush2.bf16.xpose.msra.mxu0 0
    %546 = vmatprep.subr.bf16.mxu0 0
    %547 = vmatpush2.bf16.xpose.msra.mxu0 0
    %548 = vmatprep.mubr.bf16.mxu0 0
    %549 = vmatmul.mubr.bf16.gmra.mxu0 %v511
    %v550 = vpop.f32.mrf.mxu0
    %v551 = vadd.f32 %v107, %v550
    %v552 = vpop.f32.mrf.mxu0
    %v553 = vpop.f32.mrf.mxu0
    %v554 = vpop.f32.mrf.mxu0
    %555 = vdwg.mxu0
    %v556 = vsel %vm238, %v501, -inf
    %557 = vmax.xlane.f32.xlu0 %v556
    %v558 = vpop.xlane.xlu0 %557
    %v559 = vsel %vm238, %v551, -inf
    %560 = vmax.xlane.f32.xlu0 %v559
    %v561 = vpop.xlane.xlu0 %560
    %v562 = vsub.f32 %v501, %v558
    %v563 = vsub.f32 %v551, %v561
    %v564 = vmul.f32 %v562, 1.442695
    %v565 = vpow.pop %v564
    %v566 = vmul.f32 %v563, 1.442695
    %v567 = vpow.pop %v566
    %v568 = vsel %vm238, %v565, 0.0
    %569 = vadd.xlane.f32.xlu0 %v568
    %v570 = vpop.xlane.xlu0 %569
    %v571 = vsel %vm238, %v567, 0.0
    %572 = vadd.xlane.f32.xlu0 %v571
    %v573 = vpop.xlane.xlu0 %572
    %v574 = vrcp.pop %v570
    %v575 = vrcp.pop %v573
    %v576 = vmul.f32 %v565, %v574
    %v577 = vmul.f32 %v567, %v575
    %v578 = vpack.c.bf16 %v576, %v576
    %v579 = vpack.c.bf16 %v577, %v577
    %580 = vrot.lane.b32.xlu0 %v229, 56
    %v581 = vpop.permute.xlu0 %580
    %v583 = vsel %vm238, %v578, 0
    %v586 = vsel %vm363, %v581, 0
    %588 = vmatprep.subr.bf16.mxu0 0
    %589 = vmatpush1.bf16.msra.mxu0 0
    %590 = vmatprep.subr.bf16.mxu0 0
    %591 = vmatpush1.bf16.msra.mxu0 0
    %592 = vmatprep.subr.bf16.mxu0 0
    %593 = vmatpush1.bf16.msra.mxu0 0
    %594 = vmatprep.subr.bf16.mxu0 0
    %595 = vmatpush1.bf16.msra.mxu0 0
    %596 = vmatprep.subr.bf16.mxu0 0
    %597 = vmatpush1.bf16.msra.mxu0 0
    %598 = vmatprep.subr.bf16.mxu0 0
    %599 = vmatpush1.bf16.msra.mxu0 0
    %600 = vmatprep.subr.bf16.mxu0 0
    %601 = vmatpush1.bf16.msra.mxu0 0
    %602 = vmatprep.subr.bf16.mxu0 0
    %603 = vmatpush1.bf16.msra.mxu0 %v586
    %604 = vmatprep.subr.bf16.mxu0 0
    %605 = vmatpush2.bf16.msra.mxu0 0
    %606 = vmatprep.subr.bf16.mxu0 0
    %607 = vmatpush2.bf16.msra.mxu0 0
    %608 = vmatprep.subr.bf16.mxu0 0
    %609 = vmatpush2.bf16.msra.mxu0 0
    %610 = vmatprep.subr.bf16.mxu0 0
    %611 = vmatpush2.bf16.msra.mxu0 0
    %612 = vmatprep.subr.bf16.mxu0 0
    %613 = vmatpush2.bf16.msra.mxu0 0
    %614 = vmatprep.subr.bf16.mxu0 0
    %615 = vmatpush2.bf16.msra.mxu0 0
    %616 = vmatprep.subr.bf16.mxu0 0
    %617 = vmatpush2.bf16.msra.mxu0 0
    %618 = vmatprep.subr.bf16.mxu0 0
    %619 = vmatpush2.bf16.msra.mxu0 0
    %620 = vmatprep.mubr.bf16.mxu0 0
    %621 = vmatmul.mubr.bf16.gmra.mxu0 %v583
    %v622 = vpop.f32.mrf.mxu0
    %v623 = vadd.f32 0.0, %v622
    %v624 = vpop.f32.mrf.mxu0
    %v625 = vpop.f32.mrf.mxu0
    %v626 = vpop.f32.mrf.mxu0
    %627 = vdwg.mxu0
    %628 = vrot.lane.b32.xlu0 %v230, 56
    %v629 = vpop.permute.xlu0 %628
    %v631 = vsel %vm238, %v579, 0
    %v634 = vsel %vm363, %v629, 0
    %636 = vmatprep.subr.bf16.mxu0 0
    %637 = vmatpush1.bf16.msra.mxu0 0
    %638 = vmatprep.subr.bf16.mxu0 0
    %639 = vmatpush1.bf16.msra.mxu0 0
    %640 = vmatprep.subr.bf16.mxu0 0
    %641 = vmatpush1.bf16.msra.mxu0 0
    %642 = vmatprep.subr.bf16.mxu0 0
    %643 = vmatpush1.bf16.msra.mxu0 0
    %644 = vmatprep.subr.bf16.mxu0 0
    %645 = vmatpush1.bf16.msra.mxu0 0
    %646 = vmatprep.subr.bf16.mxu0 0
    %647 = vmatpush1.bf16.msra.mxu0 0
    %648 = vmatprep.subr.bf16.mxu0 0
    %649 = vmatpush1.bf16.msra.mxu0 0
    %650 = vmatprep.subr.bf16.mxu0 0
    %651 = vmatpush1.bf16.msra.mxu0 %v634
    %652 = vmatprep.subr.bf16.mxu0 0
    %653 = vmatpush2.bf16.msra.mxu0 0
    %654 = vmatprep.subr.bf16.mxu0 0
    %655 = vmatpush2.bf16.msra.mxu0 0
    %656 = vmatprep.subr.bf16.mxu0 0
    %657 = vmatpush2.bf16.msra.mxu0 0
    %658 = vmatprep.subr.bf16.mxu0 0
    %659 = vmatpush2.bf16.msra.mxu0 0
    %660 = vmatprep.subr.bf16.mxu0 0
    %661 = vmatpush2.bf16.msra.mxu0 0
    %662 = vmatprep.subr.bf16.mxu0 0
    %663 = vmatpush2.bf16.msra.mxu0 0
    %664 = vmatprep.subr.bf16.mxu0 0
    %665 = vmatpush2.bf16.msra.mxu0 0
    %666 = vmatprep.subr.bf16.mxu0 0
    %667 = vmatpush2.bf16.msra.mxu0 0
    %668 = vmatprep.mubr.bf16.mxu0 0
    %669 = vmatmul.mubr.bf16.gmra.mxu0 %v631
    %v670 = vpop.f32.mrf.mxu0
    %v671 = vadd.f32 0.0, %v670
    %v672 = vpop.f32.mrf.mxu0
    %v673 = vpop.f32.mrf.mxu0
    %v674 = vpop.f32.mrf.mxu0
    %675 = vdwg.mxu0
    %v676 = vpack.c.bf16 %v671, %v623
    %v678 = vsel %vm238, %v676, 0
    %v681 = vsel %vm363, %v232, 0
    %683 = vmatprep.subr.bf16.mxu0 0
    %684 = vmatpush1.bf16.msra.mxu0 0
    %685 = vmatprep.subr.bf16.mxu0 0
    %686 = vmatpush1.bf16.msra.mxu0 0
    %687 = vmatprep.subr.bf16.mxu0 0
    %688 = vmatpush1.bf16.msra.mxu0 0
    %689 = vmatprep.subr.bf16.mxu0 0
    %690 = vmatpush1.bf16.msra.mxu0 0
    %691 = vmatprep.subr.bf16.mxu0 0
    %692 = vmatpush1.bf16.msra.mxu0 0
    %693 = vmatprep.subr.bf16.mxu0 0
    %694 = vmatpush1.bf16.msra.mxu0 0
    %695 = vmatprep.subr.bf16.mxu0 0
    %696 = vmatpush1.bf16.msra.mxu0 0
    %697 = vmatprep.subr.bf16.mxu0 0
    %698 = vmatpush1.bf16.msra.mxu0 %v681
    %699 = vmatprep.subr.bf16.mxu0 0
    %700 = vmatpush2.bf16.msra.mxu0 0
    %701 = vmatprep.subr.bf16.mxu0 0
    %702 = vmatpush2.bf16.msra.mxu0 0
    %703 = vmatprep.subr.bf16.mxu0 0
    %704 = vmatpush2.bf16.msra.mxu0 0
    %705 = vmatprep.subr.bf16.mxu0 0
    %706 = vmatpush2.bf16.msra.mxu0 0
    %707 = vmatprep.subr.bf16.mxu0 0
    %708 = vmatpush2.bf16.msra.mxu0 0
    %709 = vmatprep.subr.bf16.mxu0 0
    %710 = vmatpush2.bf16.msra.mxu0 0
    %711 = vmatprep.subr.bf16.mxu0 0
    %712 = vmatpush2.bf16.msra.mxu0 0
    %713 = vmatprep.subr.bf16.mxu0 0
    %714 = vmatpush2.bf16.msra.mxu0 0
    %715 = vmatprep.mubr.bf16.mxu0 0
    %716 = vmatmul.mubr.bf16.gmra.mxu0 %v678
    %v717 = vpop.f32.mrf.mxu0
    %v718 = vadd.f32 0.0, %v717
    %v719 = vpop.f32.mrf.mxu0
    %v720 = vpop.f32.mrf.mxu0
    %v721 = vadd.f32 0.0, %v720
    %v722 = vpop.f32.mrf.mxu0
    %723 = vdwg.mxu0
    %v725 = vsel %vm238, %v455, 0
    %v728 = vsel %vm363, %v231, 0
    %730 = vmatprep.subr.bf16.mxu0 0
    %731 = vmatpush1.bf16.msra.mxu0 0
    %732 = vmatprep.subr.bf16.mxu0 0
    %733 = vmatpush1.bf16.msra.mxu0 0
    %734 = vmatprep.subr.bf16.mxu0 0
    %735 = vmatpush1.bf16.msra.mxu0 0
    %736 = vmatprep.subr.bf16.mxu0 0
    %737 = vmatpush1.bf16.msra.mxu0 0
    %738 = vmatprep.subr.bf16.mxu0 0
    %739 = vmatpush1.bf16.msra.mxu0 0
    %740 = vmatprep.subr.bf16.mxu0 0
    %741 = vmatpush1.bf16.msra.mxu0 0
    %742 = vmatprep.subr.bf16.mxu0 0
    %743 = vmatpush1.bf16.msra.mxu0 0
    %744 = vmatprep.subr.bf16.mxu0 0
    %745 = vmatpush1.bf16.msra.mxu0 %v728
    %746 = vmatprep.subr.bf16.mxu0 0
    %747 = vmatpush2.bf16.msra.mxu0 0
    %748 = vmatprep.subr.bf16.mxu0 0
    %749 = vmatpush2.bf16.msra.mxu0 0
    %750 = vmatprep.subr.bf16.mxu0 0
    %751 = vmatpush2.bf16.msra.mxu0 0
    %752 = vmatprep.subr.bf16.mxu0 0
    %753 = vmatpush2.bf16.msra.mxu0 0
    %754 = vmatprep.subr.bf16.mxu0 0
    %755 = vmatpush2.bf16.msra.mxu0 0
    %756 = vmatprep.subr.bf16.mxu0 0
    %757 = vmatpush2.bf16.msra.mxu0 0
    %758 = vmatprep.subr.bf16.mxu0 0
    %759 = vmatpush2.bf16.msra.mxu0 0
    %760 = vmatprep.subr.bf16.mxu0 0
    %761 = vmatpush2.bf16.msra.mxu0 0
    %762 = vmatprep.mubr.bf16.mxu0 0
    %763 = vmatmul.mubr.bf16.gmra.mxu0 %v725
    %v764 = vpop.f32.mrf.mxu0
    %v765 = vadd.f32 %v718, %v764
    %v766 = vpop.f32.mrf.mxu0
    %v767 = vpop.f32.mrf.mxu0
    %v768 = vadd.f32 %v721, %v767
    %v769 = vpop.f32.mrf.mxu0
    %770 = vdwg.mxu0
    %771 = vrot.lane.b32.xlu0 %v229, 112
    %v772 = vpop.permute.xlu0 %771
    %773 = vrot.lane.b32.xlu0 %v229, 80
    %v774 = vpop.permute.xlu0 %773
    %v776 = vsel %vm238, %v772, 0
    %v779 = vsel %vm238, %v774, 0
    %781 = vmatprep.subr.bf16.mxu0 0
    %782 = vmatpush1.bf16.xpose.msra.mxu0 0
    %783 = vmatprep.subr.bf16.mxu0 0
    %784 = vmatpush1.bf16.xpose.msra.mxu0 0
    %785 = vmatprep.subr.bf16.mxu0 0
    %786 = vmatpush1.bf16.xpose.msra.mxu0 0
    %787 = vmatprep.subr.bf16.mxu0 0
    %788 = vmatpush1.bf16.xpose.msra.mxu0 0
    %789 = vmatprep.subr.bf16.mxu0 0
    %790 = vmatpush1.bf16.xpose.msra.mxu0 0
    %791 = vmatprep.subr.bf16.mxu0 0
    %792 = vmatpush1.bf16.xpose.msra.mxu0 0
    %793 = vmatprep.subr.bf16.mxu0 0
    %794 = vmatpush1.bf16.xpose.msra.mxu0 0
    %795 = vmatprep.subr.bf16.mxu0 0
    %796 = vmatpush1.bf16.xpose.msra.mxu0 %v779
    %797 = vmatprep.subr.bf16.mxu0 0
    %798 = vmatpush2.bf16.xpose.msra.mxu0 0
    %799 = vmatprep.subr.bf16.mxu0 0
    %800 = vmatpush2.bf16.xpose.msra.mxu0 0
    %801 = vmatprep.subr.bf16.mxu0 0
    %802 = vmatpush2.bf16.xpose.msra.mxu0 0
    %803 = vmatprep.subr.bf16.mxu0 0
    %804 = vmatpush2.bf16.xpose.msra.mxu0 0
    %805 = vmatprep.subr.bf16.mxu0 0
    %806 = vmatpush2.bf16.xpose.msra.mxu0 0
    %807 = vmatprep.subr.bf16.mxu0 0
    %808 = vmatpush2.bf16.xpose.msra.mxu0 0
    %809 = vmatprep.subr.bf16.mxu0 0
    %810 = vmatpush2.bf16.xpose.msra.mxu0 0
    %811 = vmatprep.subr.bf16.mxu0 0
    %812 = vmatpush2.bf16.xpose.msra.mxu0 0
    %813 = vmatprep.mubr.bf16.mxu0 0
    %814 = vmatmul.mubr.bf16.gmra.mxu0 %v776
    %v815 = vpop.f32.mrf.mxu0
    %v816 = vadd.f32 %v103, %v815
    %v817 = vpop.f32.mrf.mxu0
    %v818 = vpop.f32.mrf.mxu0
    %v819 = vpop.f32.mrf.mxu0
    %820 = vdwg.mxu0
    %821 = vrot.lane.b32.xlu0 %v230, 112
    %v822 = vpop.permute.xlu0 %821
    %823 = vrot.lane.b32.xlu0 %v230, 80
    %v824 = vpop.permute.xlu0 %823
    %v826 = vsel %vm238, %v822, 0
    %v829 = vsel %vm238, %v824, 0
    %831 = vmatprep.subr.bf16.mxu0 0
    %832 = vmatpush1.bf16.xpose.msra.mxu0 0
    %833 = vmatprep.subr.bf16.mxu0 0
    %834 = vmatpush1.bf16.xpose.msra.mxu0 0
    %835 = vmatprep.subr.bf16.mxu0 0
    %836 = vmatpush1.bf16.xpose.msra.mxu0 0
    %837 = vmatprep.subr.bf16.mxu0 0
    %838 = vmatpush1.bf16.xpose.msra.mxu0 0
    %839 = vmatprep.subr.bf16.mxu0 0
    %840 = vmatpush1.bf16.xpose.msra.mxu0 0
    %841 = vmatprep.subr.bf16.mxu0 0
    %842 = vmatpush1.bf16.xpose.msra.mxu0 0
    %843 = vmatprep.subr.bf16.mxu0 0
    %844 = vmatpush1.bf16.xpose.msra.mxu0 0
    %845 = vmatprep.subr.bf16.mxu0 0
    %846 = vmatpush1.bf16.xpose.msra.mxu0 %v829
    %847 = vmatprep.subr.bf16.mxu0 0
    %848 = vmatpush2.bf16.xpose.msra.mxu0 0
    %849 = vmatprep.subr.bf16.mxu0 0
    %850 = vmatpush2.bf16.xpose.msra.mxu0 0
    %851 = vmatprep.subr.bf16.mxu0 0
    %852 = vmatpush2.bf16.xpose.msra.mxu0 0
    %853 = vmatprep.subr.bf16.mxu0 0
    %854 = vmatpush2.bf16.xpose.msra.mxu0 0
    %855 = vmatprep.subr.bf16.mxu0 0
    %856 = vmatpush2.bf16.xpose.msra.mxu0 0
    %857 = vmatprep.subr.bf16.mxu0 0
    %858 = vmatpush2.bf16.xpose.msra.mxu0 0
    %859 = vmatprep.subr.bf16.mxu0 0
    %860 = vmatpush2.bf16.xpose.msra.mxu0 0
    %861 = vmatprep.subr.bf16.mxu0 0
    %862 = vmatpush2.bf16.xpose.msra.mxu0 0
    %863 = vmatprep.mubr.bf16.mxu0 0
    %864 = vmatmul.mubr.bf16.gmra.mxu0 %v826
    %v865 = vpop.f32.mrf.mxu0
    %v866 = vadd.f32 %v107, %v865
    %v867 = vpop.f32.mrf.mxu0
    %v868 = vpop.f32.mrf.mxu0
    %v869 = vpop.f32.mrf.mxu0
    %870 = vdwg.mxu0
    %v871 = vsel %vm238, %v816, -inf
    %872 = vmax.xlane.f32.xlu0 %v871
    %v873 = vpop.xlane.xlu0 %872
    %v874 = vsel %vm238, %v866, -inf
    %875 = vmax.xlane.f32.xlu0 %v874
    %v876 = vpop.xlane.xlu0 %875
    %v877 = vsub.f32 %v816, %v873
    %v878 = vsub.f32 %v866, %v876
    %v879 = vmul.f32 %v877, 1.442695
    %v880 = vpow.pop %v879
    %v881 = vmul.f32 %v878, 1.442695
    %v882 = vpow.pop %v881
    %v883 = vsel %vm238, %v880, 0.0
    %884 = vadd.xlane.f32.xlu0 %v883
    %v885 = vpop.xlane.xlu0 %884
    %v886 = vsel %vm238, %v882, 0.0
    %887 = vadd.xlane.f32.xlu0 %v886
    %v888 = vpop.xlane.xlu0 %887
    %v889 = vrcp.pop %v885
    %v890 = vrcp.pop %v888
    %v891 = vmul.f32 %v880, %v889
    %v892 = vmul.f32 %v882, %v890
    %v893 = vpack.c.bf16 %v891, %v891
    %v894 = vpack.c.bf16 %v892, %v892
    %895 = vrot.lane.b32.xlu0 %v229, 48
    %v896 = vpop.permute.xlu0 %895
    %v898 = vsel %vm238, %v893, 0
    %v901 = vsel %vm363, %v896, 0
    %903 = vmatprep.subr.bf16.mxu0 0
    %904 = vmatpush1.bf16.msra.mxu0 0
    %905 = vmatprep.subr.bf16.mxu0 0
    %906 = vmatpush1.bf16.msra.mxu0 0
    %907 = vmatprep.subr.bf16.mxu0 0
    %908 = vmatpush1.bf16.msra.mxu0 0
    %909 = vmatprep.subr.bf16.mxu0 0
    %910 = vmatpush1.bf16.msra.mxu0 0
    %911 = vmatprep.subr.bf16.mxu0 0
    %912 = vmatpush1.bf16.msra.mxu0 0
    %913 = vmatprep.subr.bf16.mxu0 0
    %914 = vmatpush1.bf16.msra.mxu0 0
    %915 = vmatprep.subr.bf16.mxu0 0
    %916 = vmatpush1.bf16.msra.mxu0 0
    %917 = vmatprep.subr.bf16.mxu0 0
    %918 = vmatpush1.bf16.msra.mxu0 %v901
    %919 = vmatprep.subr.bf16.mxu0 0
    %920 = vmatpush2.bf16.msra.mxu0 0
    %921 = vmatprep.subr.bf16.mxu0 0
    %922 = vmatpush2.bf16.msra.mxu0 0
    %923 = vmatprep.subr.bf16.mxu0 0
    %924 = vmatpush2.bf16.msra.mxu0 0
    %925 = vmatprep.subr.bf16.mxu0 0
    %926 = vmatpush2.bf16.msra.mxu0 0
    %927 = vmatprep.subr.bf16.mxu0 0
    %928 = vmatpush2.bf16.msra.mxu0 0
    %929 = vmatprep.subr.bf16.mxu0 0
    %930 = vmatpush2.bf16.msra.mxu0 0
    %931 = vmatprep.subr.bf16.mxu0 0
    %932 = vmatpush2.bf16.msra.mxu0 0
    %933 = vmatprep.subr.bf16.mxu0 0
    %934 = vmatpush2.bf16.msra.mxu0 0
    %935 = vmatprep.mubr.bf16.mxu0 0
    %936 = vmatmul.mubr.bf16.gmra.mxu0 %v898
    %v937 = vpop.f32.mrf.mxu0
    %v938 = vadd.f32 0.0, %v937
    %v939 = vpop.f32.mrf.mxu0
    %v940 = vpop.f32.mrf.mxu0
    %v941 = vpop.f32.mrf.mxu0
    %942 = vdwg.mxu0
    %943 = vrot.lane.b32.xlu0 %v230, 48
    %v944 = vpop.permute.xlu0 %943
    %v946 = vsel %vm238, %v894, 0
    %v949 = vsel %vm363, %v944, 0
    %951 = vmatprep.subr.bf16.mxu0 0
    %952 = vmatpush1.bf16.msra.mxu0 0
    %953 = vmatprep.subr.bf16.mxu0 0
    %954 = vmatpush1.bf16.msra.mxu0 0
    %955 = vmatprep.subr.bf16.mxu0 0
    %956 = vmatpush1.bf16.msra.mxu0 0
    %957 = vmatprep.subr.bf16.mxu0 0
    %958 = vmatpush1.bf16.msra.mxu0 0
    %959 = vmatprep.subr.bf16.mxu0 0
    %960 = vmatpush1.bf16.msra.mxu0 0
    %961 = vmatprep.subr.bf16.mxu0 0
    %962 = vmatpush1.bf16.msra.mxu0 0
    %963 = vmatprep.subr.bf16.mxu0 0
    %964 = vmatpush1.bf16.msra.mxu0 0
    %965 = vmatprep.subr.bf16.mxu0 0
    %966 = vmatpush1.bf16.msra.mxu0 %v949
    %967 = vmatprep.subr.bf16.mxu0 0
    %968 = vmatpush2.bf16.msra.mxu0 0
    %969 = vmatprep.subr.bf16.mxu0 0
    %970 = vmatpush2.bf16.msra.mxu0 0
    %971 = vmatprep.subr.bf16.mxu0 0
    %972 = vmatpush2.bf16.msra.mxu0 0
    %973 = vmatprep.subr.bf16.mxu0 0
    %974 = vmatpush2.bf16.msra.mxu0 0
    %975 = vmatprep.subr.bf16.mxu0 0
    %976 = vmatpush2.bf16.msra.mxu0 0
    %977 = vmatprep.subr.bf16.mxu0 0
    %978 = vmatpush2.bf16.msra.mxu0 0
    %979 = vmatprep.subr.bf16.mxu0 0
    %980 = vmatpush2.bf16.msra.mxu0 0
    %981 = vmatprep.subr.bf16.mxu0 0
    %982 = vmatpush2.bf16.msra.mxu0 0
    %983 = vmatprep.mubr.bf16.mxu0 0
    %984 = vmatmul.mubr.bf16.gmra.mxu0 %v946
    %v985 = vpop.f32.mrf.mxu0
    %v986 = vadd.f32 0.0, %v985
    %v987 = vpop.f32.mrf.mxu0
    %v988 = vpop.f32.mrf.mxu0
    %v989 = vpop.f32.mrf.mxu0
    %990 = vdwg.mxu0
    %v991 = vpack.c.bf16 %v986, %v938
    %v993 = vsel %vm238, %v991, 0
    %v996 = vsel %vm363, %v233, 0
    %998 = vmatprep.subr.bf16.mxu0 0
    %999 = vmatpush1.bf16.msra.mxu0 0
    %1000 = vmatprep.subr.bf16.mxu0 0
    %1001 = vmatpush1.bf16.msra.mxu0 0
    %1002 = vmatprep.subr.bf16.mxu0 0
    %1003 = vmatpush1.bf16.msra.mxu0 0
    %1004 = vmatprep.subr.bf16.mxu0 0
    %1005 = vmatpush1.bf16.msra.mxu0 0
    %1006 = vmatprep.subr.bf16.mxu0 0
    %1007 = vmatpush1.bf16.msra.mxu0 0
    %1008 = vmatprep.subr.bf16.mxu0 0
    %1009 = vmatpush1.bf16.msra.mxu0 0
    %1010 = vmatprep.subr.bf16.mxu0 0
    %1011 = vmatpush1.bf16.msra.mxu0 0
    %1012 = vmatprep.subr.bf16.mxu0 0
    %1013 = vmatpush1.bf16.msra.mxu0 %v996
    %1014 = vmatprep.subr.bf16.mxu0 0
    %1015 = vmatpush2.bf16.msra.mxu0 0
    %1016 = vmatprep.subr.bf16.mxu0 0
    %1017 = vmatpush2.bf16.msra.mxu0 0
    %1018 = vmatprep.subr.bf16.mxu0 0
    %1019 = vmatpush2.bf16.msra.mxu0 0
    %1020 = vmatprep.subr.bf16.mxu0 0
    %1021 = vmatpush2.bf16.msra.mxu0 0
    %1022 = vmatprep.subr.bf16.mxu0 0
    %1023 = vmatpush2.bf16.msra.mxu0 0
    %1024 = vmatprep.subr.bf16.mxu0 0
    %1025 = vmatpush2.bf16.msra.mxu0 0
    %1026 = vmatprep.subr.bf16.mxu0 0
    %1027 = vmatpush2.bf16.msra.mxu0 0
    %1028 = vmatprep.subr.bf16.mxu0 0
    %1029 = vmatpush2.bf16.msra.mxu0 0
    %1030 = vmatprep.mubr.bf16.mxu0 0
    %1031 = vmatmul.mubr.bf16.gmra.mxu0 %v993
    %v1032 = vpop.f32.mrf.mxu0
    %v1033 = vadd.f32 0.0, %v1032
    %v1034 = vpop.f32.mrf.mxu0
    %v1035 = vpop.f32.mrf.mxu0
    %v1036 = vadd.f32 0.0, %v1035
    %v1037 = vpop.f32.mrf.mxu0
    %1038 = vdwg.mxu0
    %v1039 = vadd.f32 %v765, %v1033
    %v1040 = vadd.f32 %v768, %v1036
    %1041 = vrot.lane.b32.xlu0 %v229, 104
    %v1042 = vpop.permute.xlu0 %1041
    %1043 = vrot.lane.b32.xlu0 %v229, 72
    %v1044 = vpop.permute.xlu0 %1043
    %v1046 = vsel %vm238, %v1042, 0
    %v1049 = vsel %vm238, %v1044, 0
    %1051 = vmatprep.subr.bf16.mxu0 0
    %1052 = vmatpush1.bf16.xpose.msra.mxu0 0
    %1053 = vmatprep.subr.bf16.mxu0 0
    %1054 = vmatpush1.bf16.xpose.msra.mxu0 0
    %1055 = vmatprep.subr.bf16.mxu0 0
    %1056 = vmatpush1.bf16.xpose.msra.mxu0 0
    %1057 = vmatprep.subr.bf16.mxu0 0
    %1058 = vmatpush1.bf16.xpose.msra.mxu0 0
    %1059 = vmatprep.subr.bf16.mxu0 0
    %1060 = vmatpush1.bf16.xpose.msra.mxu0 0
    %1061 = vmatprep.subr.bf16.mxu0 0
    %1062 = vmatpush1.bf16.xpose.msra.mxu0 0
    %1063 = vmatprep.subr.bf16.mxu0 0
    %1064 = vmatpush1.bf16.xpose.msra.mxu0 0
    %1065 = vmatprep.subr.bf16.mxu0 0
    %1066 = vmatpush1.bf16.xpose.msra.mxu0 %v1049
    %1067 = vmatprep.subr.bf16.mxu0 0
    %1068 = vmatpush2.bf16.xpose.msra.mxu0 0
    %1069 = vmatprep.subr.bf16.mxu0 0
    %1070 = vmatpush2.bf16.xpose.msra.mxu0 0
    %1071 = vmatprep.subr.bf16.mxu0 0
    %1072 = vmatpush2.bf16.xpose.msra.mxu0 0
    %1073 = vmatprep.subr.bf16.mxu0 0
    %1074 = vmatpush2.bf16.xpose.msra.mxu0 0
    %1075 = vmatprep.subr.bf16.mxu0 0
    %1076 = vmatpush2.bf16.xpose.msra.mxu0 0
    %1077 = vmatprep.subr.bf16.mxu0 0
    %1078 = vmatpush2.bf16.xpose.msra.mxu0 0
    %1079 = vmatprep.subr.bf16.mxu0 0
    %1080 = vmatpush2.bf16.xpose.msra.mxu0 0
    %1081 = vmatprep.subr.bf16.mxu0 0
    %1082 = vmatpush2.bf16.xpose.msra.mxu0 0
    %1083 = vmatprep.mubr.bf16.mxu0 0
    %1084 = vmatmul.mubr.bf16.gmra.mxu0 %v1046
    %v1085 = vpop.f32.mrf.mxu0
    %v1086 = vadd.f32 %v103, %v1085
    %v1087 = vpop.f32.mrf.mxu0
    %v1088 = vpop.f32.mrf.mxu0
    %v1089 = vpop.f32.mrf.mxu0
    %1090 = vdwg.mxu0
    %1091 = vrot.lane.b32.xlu0 %v230, 104
    %v1092 = vpop.permute.xlu0 %1091
    %1093 = vrot.lane.b32.xlu0 %v230, 72
    %v1094 = vpop.permute.xlu0 %1093
    %v1096 = vsel %vm238, %v1092, 0
    %v1099 = vsel %vm238, %v1094, 0
    %1101 = vmatprep.subr.bf16.mxu0 0
    %1102 = vmatpush1.bf16.xpose.msra.mxu0 0
    %1103 = vmatprep.subr.bf16.mxu0 0
    %1104 = vmatpush1.bf16.xpose.msra.mxu0 0
    %1105 = vmatprep.subr.bf16.mxu0 0
    %1106 = vmatpush1.bf16.xpose.msra.mxu0 0
    %1107 = vmatprep.subr.bf16.mxu0 0
    %1108 = vmatpush1.bf16.xpose.msra.mxu0 0
    %1109 = vmatprep.subr.bf16.mxu0 0
    %1110 = vmatpush1.bf16.xpose.msra.mxu0 0
    %1111 = vmatprep.subr.bf16.mxu0 0
    %1112 = vmatpush1.bf16.xpose.msra.mxu0 0
    %1113 = vmatprep.subr.bf16.mxu0 0
    %1114 = vmatpush1.bf16.xpose.msra.mxu0 0
    %1115 = vmatprep.subr.bf16.mxu0 0
    %1116 = vmatpush1.bf16.xpose.msra.mxu0 %v1099
    %1117 = vmatprep.subr.bf16.mxu0 0
    %1118 = vmatpush2.bf16.xpose.msra.mxu0 0
    %1119 = vmatprep.subr.bf16.mxu0 0
    %1120 = vmatpush2.bf16.xpose.msra.mxu0 0
    %1121 = vmatprep.subr.bf16.mxu0 0
    %1122 = vmatpush2.bf16.xpose.msra.mxu0 0
    %1123 = vmatprep.subr.bf16.mxu0 0
    %1124 = vmatpush2.bf16.xpose.msra.mxu0 0
    %1125 = vmatprep.subr.bf16.mxu0 0
    %1126 = vmatpush2.bf16.xpose.msra.mxu0 0
    %1127 = vmatprep.subr.bf16.mxu0 0
    %1128 = vmatpush2.bf16.xpose.msra.mxu0 0
    %1129 = vmatprep.subr.bf16.mxu0 0
    %1130 = vmatpush2.bf16.xpose.msra.mxu0 0
    %1131 = vmatprep.subr.bf16.mxu0 0
    %1132 = vmatpush2.bf16.xpose.msra.mxu0 0
    %1133 = vmatprep.mubr.bf16.mxu0 0
    %1134 = vmatmul.mubr.bf16.gmra.mxu0 %v1096
    %v1135 = vpop.f32.mrf.mxu0
    %v1136 = vadd.f32 %v107, %v1135
    %v1137 = vpop.f32.mrf.mxu0
    %v1138 = vpop.f32.mrf.mxu0
    %v1139 = vpop.f32.mrf.mxu0
    %1140 = vdwg.mxu0
    %v1141 = vsel %vm238, %v1086, -inf
    %1142 = vmax.xlane.f32.xlu0 %v1141
    %v1143 = vpop.xlane.xlu0 %1142
    %v1144 = vsel %vm238, %v1136, -inf
    %1145 = vmax.xlane.f32.xlu0 %v1144
    %v1146 = vpop.xlane.xlu0 %1145
    %v1147 = vsub.f32 %v1086, %v1143
    %v1148 = vsub.f32 %v1136, %v1146
    %v1149 = vmul.f32 %v1147, 1.442695
    %v1150 = vpow.pop %v1149
    %v1151 = vmul.f32 %v1148, 1.442695
    %v1152 = vpow.pop %v1151
    %v1153 = vsel %vm238, %v1150, 0.0
    %1154 = vadd.xlane.f32.xlu0 %v1153
    %v1155 = vpop.xlane.xlu0 %1154
    %v1156 = vsel %vm238, %v1152, 0.0
    %1157 = vadd.xlane.f32.xlu0 %v1156
    %v1158 = vpop.xlane.xlu0 %1157
    %v1159 = vrcp.pop %v1155
    %v1160 = vrcp.pop %v1158
    %v1161 = vmul.f32 %v1150, %v1159
    %v1162 = vmul.f32 %v1152, %v1160
    %v1163 = vpack.c.bf16 %v1161, %v1161
    %v1164 = vpack.c.bf16 %v1162, %v1162
    %1165 = vrot.lane.b32.xlu0 %v229, 40
    %v1166 = vpop.permute.xlu0 %1165
    %v1168 = vsel %vm238, %v1163, 0
    %v1171 = vsel %vm363, %v1166, 0
    %1173 = vmatprep.subr.bf16.mxu0 0
    %1174 = vmatpush1.bf16.msra.mxu0 0
    %1175 = vmatprep.subr.bf16.mxu0 0
    %1176 = vmatpush1.bf16.msra.mxu0 0
    %1177 = vmatprep.subr.bf16.mxu0 0
    %1178 = vmatpush1.bf16.msra.mxu0 0
    %1179 = vmatprep.subr.bf16.mxu0 0
    %1180 = vmatpush1.bf16.msra.mxu0 0
    %1181 = vmatprep.subr.bf16.mxu0 0
    %1182 = vmatpush1.bf16.msra.mxu0 0
    %1183 = vmatprep.subr.bf16.mxu0 0
    %1184 = vmatpush1.bf16.msra.mxu0 0
    %1185 = vmatprep.subr.bf16.mxu0 0
    %1186 = vmatpush1.bf16.msra.mxu0 0
    %1187 = vmatprep.subr.bf16.mxu0 0
    %1188 = vmatpush1.bf16.msra.mxu0 %v1171
    %1189 = vmatprep.subr.bf16.mxu0 0
    %1190 = vmatpush2.bf16.msra.mxu0 0
    %1191 = vmatprep.subr.bf16.mxu0 0
    %1192 = vmatpush2.bf16.msra.mxu0 0
    %1193 = vmatprep.subr.bf16.mxu0 0
    %1194 = vmatpush2.bf16.msra.mxu0 0
    %1195 = vmatprep.subr.bf16.mxu0 0
    %1196 = vmatpush2.bf16.msra.mxu0 0
    %1197 = vmatprep.subr.bf16.mxu0 0
    %1198 = vmatpush2.bf16.msra.mxu0 0
    %1199 = vmatprep.subr.bf16.mxu0 0
    %1200 = vmatpush2.bf16.msra.mxu0 0
    %1201 = vmatprep.subr.bf16.mxu0 0
    %1202 = vmatpush2.bf16.msra.mxu0 0
    %1203 = vmatprep.subr.bf16.mxu0 0
    %1204 = vmatpush2.bf16.msra.mxu0 0
    %1205 = vmatprep.mubr.bf16.mxu0 0
    %1206 = vmatmul.mubr.bf16.gmra.mxu0 %v1168
    %v1207 = vpop.f32.mrf.mxu0
    %v1208 = vadd.f32 0.0, %v1207
    %v1209 = vpop.f32.mrf.mxu0
    %v1210 = vpop.f32.mrf.mxu0
    %v1211 = vpop.f32.mrf.mxu0
    %1212 = vdwg.mxu0
    %1213 = vrot.lane.b32.xlu0 %v230, 40
    %v1214 = vpop.permute.xlu0 %1213
    %v1216 = vsel %vm238, %v1164, 0
    %v1219 = vsel %vm363, %v1214, 0
    %1221 = vmatprep.subr.bf16.mxu0 0
    %1222 = vmatpush1.bf16.msra.mxu0 0
    %1223 = vmatprep.subr.bf16.mxu0 0
    %1224 = vmatpush1.bf16.msra.mxu0 0
    %1225 = vmatprep.subr.bf16.mxu0 0
    %1226 = vmatpush1.bf16.msra.mxu0 0
    %1227 = vmatprep.subr.bf16.mxu0 0
    %1228 = vmatpush1.bf16.msra.mxu0 0
    %1229 = vmatprep.subr.bf16.mxu0 0
    %1230 = vmatpush1.bf16.msra.mxu0 0
    %1231 = vmatprep.subr.bf16.mxu0 0
    %1232 = vmatpush1.bf16.msra.mxu0 0
    %1233 = vmatprep.subr.bf16.mxu0 0
    %1234 = vmatpush1.bf16.msra.mxu0 0
    %1235 = vmatprep.subr.bf16.mxu0 0
    %1236 = vmatpush1.bf16.msra.mxu0 %v1219
    %1237 = vmatprep.subr.bf16.mxu0 0
    %1238 = vmatpush2.bf16.msra.mxu0 0
    %1239 = vmatprep.subr.bf16.mxu0 0
    %1240 = vmatpush2.bf16.msra.mxu0 0
    %1241 = vmatprep.subr.bf16.mxu0 0
    %1242 = vmatpush2.bf16.msra.mxu0 0
    %1243 = vmatprep.subr.bf16.mxu0 0
    %1244 = vmatpush2.bf16.msra.mxu0 0
    %1245 = vmatprep.subr.bf16.mxu0 0
    %1246 = vmatpush2.bf16.msra.mxu0 0
    %1247 = vmatprep.subr.bf16.mxu0 0
    %1248 = vmatpush2.bf16.msra.mxu0 0
    %1249 = vmatprep.subr.bf16.mxu0 0
    %1250 = vmatpush2.bf16.msra.mxu0 0
    %1251 = vmatprep.subr.bf16.mxu0 0
    %1252 = vmatpush2.bf16.msra.mxu0 0
    %1253 = vmatprep.mubr.bf16.mxu0 0
    %1254 = vmatmul.mubr.bf16.gmra.mxu0 %v1216
    %v1255 = vpop.f32.mrf.mxu0
    %v1256 = vadd.f32 0.0, %v1255
    %v1257 = vpop.f32.mrf.mxu0
    %v1258 = vpop.f32.mrf.mxu0
    %v1259 = vpop.f32.mrf.mxu0
    %1260 = vdwg.mxu0
    %v1261 = vpack.c.bf16 %v1256, %v1208
    %v1263 = vsel %vm238, %v1261, 0
    %v1266 = vsel %vm363, %v234, 0
    %1268 = vmatprep.subr.bf16.mxu0 0
    %1269 = vmatpush1.bf16.msra.mxu0 0
    %1270 = vmatprep.subr.bf16.mxu0 0
    %1271 = vmatpush1.bf16.msra.mxu0 0
    %1272 = vmatprep.subr.bf16.mxu0 0
    %1273 = vmatpush1.bf16.msra.mxu0 0
    %1274 = vmatprep.subr.bf16.mxu0 0
    %1275 = vmatpush1.bf16.msra.mxu0 0
    %1276 = vmatprep.subr.bf16.mxu0 0
    %1277 = vmatpush1.bf16.msra.mxu0 0
    %1278 = vmatprep.subr.bf16.mxu0 0
    %1279 = vmatpush1.bf16.msra.mxu0 0
    %1280 = vmatprep.subr.bf16.mxu0 0
    %1281 = vmatpush1.bf16.msra.mxu0 0
    %1282 = vmatprep.subr.bf16.mxu0 0
    %1283 = vmatpush1.bf16.msra.mxu0 %v1266
    %1284 = vmatprep.subr.bf16.mxu0 0
    %1285 = vmatpush2.bf16.msra.mxu0 0
    %1286 = vmatprep.subr.bf16.mxu0 0
    %1287 = vmatpush2.bf16.msra.mxu0 0
    %1288 = vmatprep.subr.bf16.mxu0 0
    %1289 = vmatpush2.bf16.msra.mxu0 0
    %1290 = vmatprep.subr.bf16.mxu0 0
    %1291 = vmatpush2.bf16.msra.mxu0 0
    %1292 = vmatprep.subr.bf16.mxu0 0
    %1293 = vmatpush2.bf16.msra.mxu0 0
    %1294 = vmatprep.subr.bf16.mxu0 0
    %1295 = vmatpush2.bf16.msra.mxu0 0
    %1296 = vmatprep.subr.bf16.mxu0 0
    %1297 = vmatpush2.bf16.msra.mxu0 0
    %1298 = vmatprep.subr.bf16.mxu0 0
    %1299 = vmatpush2.bf16.msra.mxu0 0
    %1300 = vmatprep.mubr.bf16.mxu0 0
    %1301 = vmatmul.mubr.bf16.gmra.mxu0 %v1263
    %v1302 = vpop.f32.mrf.mxu0
    %v1303 = vadd.f32 0.0, %v1302
    %v1304 = vpop.f32.mrf.mxu0
    %v1305 = vpop.f32.mrf.mxu0
    %v1306 = vadd.f32 0.0, %v1305
    %v1307 = vpop.f32.mrf.mxu0
    %1308 = vdwg.mxu0
    %v1309 = vadd.f32 %v1039, %v1303
    %v1310 = vadd.f32 %v1040, %v1306
    %v1311 = vld [vmem:[%s6] sm:$0x1]
    %v1313 = vlaneseq
    %v1314 = vshrl.u32 %v1313, 7
    %v1315 = vsub.s32 0, %v1314
    %v1316 = vrot.slane %v1311, %v1315
    %v1318 = vadd.f32 %v1309, %v1316
    %v1319 = vadd.f32 %v1310, %v1316
    %v1320 = vadd.f32 %v158, %v1318
    %v1321 = vadd.f32 %v159, %v1319
    %v1322 = vld [vmem:[%s7] sm:$0x1]
    %v1323 = vld [vmem:[%s8] sm:$0x1]
    %v1324 = vsel %vm184, %v1320, 0.0
    %1325 = vadd.xlane.f32.xlu0 %v1324
    %v1326 = vpop.xlane.xlu0 %1325
    %v1327 = vsel %vm184, %v1321, 0.0
    %1328 = vadd.xlane.f32.xlu0 %v1327
    %v1329 = vpop.xlane.xlu0 %1328
    %v1330 = vrcp.pop 32.0
    %v1331 = vmul.f32 %v1326, %v1330
    %v1332 = vmul.f32 %v1329, %v1330
    %v1333 = vsub.f32 %v1320, %v1331
    %v1334 = vsub.f32 %v1321, %v1332
    %v1335 = vmul.f32 %v1333, %v1333
    %v1336 = vmul.f32 %v1334, %v1334
    %v1337 = vsel %vm184, %v1335, 0.0
    %1338 = vadd.xlane.f32.xlu0 %v1337
    %v1339 = vpop.xlane.xlu0 %1338
    %v1340 = vsel %vm184, %v1336, 0.0
    %1341 = vadd.xlane.f32.xlu0 %v1340
    %v1342 = vpop.xlane.xlu0 %1341
    %v1343 = vmul.f32 %v1339, %v1330
    %v1344 = vmul.f32 %v1342, %v1330
    %v1345 = vadd.f32 %v1343, 1e-12
    %v1346 = vadd.f32 %v1344, 1e-12
    %v1347 = vrsqrt.pop %v1345
    %v1348 = vrsqrt.pop %v1346
    %v1349 = vmul.f32 %v1333, %v1347
    %v1350 = vmul.f32 %v1334, %v1348
    %v1352 = vlaneseq
    %v1353 = vshrl.u32 %v1352, 7
    %v1354 = vsub.s32 0, %v1353
    %v1355 = vrot.slane %v1322, %v1354
    %v1357 = vmul.f32 %v1349, %v1355
    %v1358 = vmul.f32 %v1350, %v1355
    %v1360 = vlaneseq
    %v1361 = vshrl.u32 %v1360, 7
    %v1362 = vsub.s32 0, %v1361
    %v1363 = vrot.slane %v1323, %v1362
    %v1365 = vadd.f32 %v1357, %v1363
    %v1366 = vadd.f32 %v1358, %v1363
    %v1367 = vpack.c.bf16 %v1366, %v1365
    %v1368 = vld [vmem:[%s9] sm:$0xf]
    %v1369 = vld [vmem:[%s9 + $0x4] sm:$0xf]
    %v1370 = vld [vmem:[%s9 + $0x8] sm:$0xf]
    %v1371 = vld [vmem:[%s9 + $0xc] sm:$0xf]
    %v1372 = vld [vmem:[%s10] sm:$0x1]
    %v1374 = vlaneseq
    %v1375 = vshrl.u32 %v1374, 7
    %v1376 = vsub.s32 0, %v1375
    %v1377 = vrot.slane %v1372, %v1376
    %v1383 = vunpack.c.l.b16 %v1368
    %v1384 = vunpack.c.l.b16 %v1369
    %v1385 = vunpack.c.l.b16 %v1370
    %v1386 = vunpack.c.l.b16 %v1371
    %v1387 = vpack.c.b16 %v1384, %v1383
    %v1388 = vpack.c.b16 %v1386, %v1385
    %v1392 = vsel %vm184, %v1367, 0
    %1394 = vmatprep.subr.bf16.mxu0 0
    %1395 = vmatpush1.bf16.msra.mxu0 0
    %1396 = vmatprep.subr.bf16.mxu0 0
    %1397 = vmatpush1.bf16.msra.mxu0 0
    %1398 = vmatprep.subr.bf16.mxu0 0
    %1399 = vmatpush1.bf16.msra.mxu0 0
    %1400 = vmatprep.subr.bf16.mxu0 0
    %1401 = vmatpush1.bf16.msra.mxu0 0
    %1402 = vmatprep.subr.bf16.mxu0 0
    %1403 = vmatpush1.bf16.msra.mxu0 0
    %1404 = vmatprep.subr.bf16.mxu0 0
    %1405 = vmatpush1.bf16.msra.mxu0 0
    %1406 = vmatprep.subr.bf16.mxu0 0
    %1407 = vmatpush1.bf16.msra.mxu0 %v1388
    %1408 = vmatprep.subr.bf16.mxu0 0
    %1409 = vmatpush1.bf16.msra.mxu0 %v1387
    %1410 = vmatprep.subr.bf16.mxu0 0
    %1411 = vmatpush2.bf16.msra.mxu0 0
    %1412 = vmatprep.subr.bf16.mxu0 0
    %1413 = vmatpush2.bf16.msra.mxu0 0
    %1414 = vmatprep.subr.bf16.mxu0 0
    %1415 = vmatpush2.bf16.msra.mxu0 0
    %1416 = vmatprep.subr.bf16.mxu0 0
    %1417 = vmatpush2.bf16.msra.mxu0 0
    %1418 = vmatprep.subr.bf16.mxu0 0
    %1419 = vmatpush2.bf16.msra.mxu0 0
    %1420 = vmatprep.subr.bf16.mxu0 0
    %1421 = vmatpush2.bf16.msra.mxu0 0
    %1422 = vmatprep.subr.bf16.mxu0 0
    %1423 = vmatpush2.bf16.msra.mxu0 0
    %1424 = vmatprep.subr.bf16.mxu0 0
    %1425 = vmatpush2.bf16.msra.mxu0 0
    %1426 = vmatprep.mubr.bf16.mxu0 0
    %1427 = vmatmul.mubr.bf16.gmra.mxu0 %v1392
    %v1428 = vpop.f32.mrf.mxu0
    %v1429 = vadd.f32 %v1377, %v1428
    %v1430 = vpop.f32.mrf.mxu0
    %v1431 = vpop.f32.mrf.mxu0
    %v1432 = vadd.f32 %v1377, %v1431
    %v1433 = vpop.f32.mrf.mxu0
    %1434 = vdwg.mxu0
    %v1435 = vmul.f32 %v1429, 0.5
    %v1436 = vmul.f32 %v1432, 0.5
    %v1437 = vmul.f32 %v1429, 0.044715
    %v1438 = vmul.f32 %v1432, 0.044715
    %v1439 = vmul.f32 %v1437, %v1429
    %v1440 = vmul.f32 %v1438, %v1432
    %v1441 = vmul.f32 %v1439, %v1429
    %v1442 = vmul.f32 %v1440, %v1432
    %v1443 = vadd.f32 %v1429, %v1441
    %v1444 = vadd.f32 %v1432, %v1442
    %v1445 = vmul.f32 %v1443, 0.7978846
    %v1446 = vmul.f32 %v1444, 0.7978846
    %v1447 = vtanh.pop %v1445
    %v1448 = vtanh.pop %v1446
    %v1449 = vadd.f32 %v1447, 1.0
    %v1450 = vadd.f32 %v1448, 1.0
    %v1451 = vmul.f32 %v1435, %v1449
    %v1452 = vmul.f32 %v1436, %v1450
    %v1453 = vpack.c.bf16 %v1452, %v1451
    %v1454 = vld [vmem:[%s11] sm:$0xf]
    %v1455 = vld [vmem:[%s11 + $0x4] sm:$0xf]
    %v1456 = vld [vmem:[%s11 + $0x8] sm:$0xf]
    %v1457 = vld [vmem:[%s11 + $0xc] sm:$0xf]
    %v1458 = vld [vmem:[%s11 + $0x10] sm:$0xf]
    %v1459 = vld [vmem:[%s11 + $0x14] sm:$0xf]
    %v1460 = vld [vmem:[%s11 + $0x18] sm:$0xf]
    %v1461 = vld [vmem:[%s11 + $0x1c] sm:$0xf]
    %v1462 = vld [vmem:[#allocation4] sm:$0x1]
    %v1464 = vlaneseq
    %v1465 = vshrl.u32 %v1464, 7
    %v1466 = vsub.s32 0, %v1465
    %v1467 = vrot.slane %v1462, %v1466
    %v1477 = vunpack.c.l.b16 %v1454
    %v1478 = vunpack.c.l.b16 %v1455
    %v1479 = vunpack.c.l.b16 %v1456
    %v1480 = vunpack.c.l.b16 %v1457
    %v1481 = vunpack.c.l.b16 %v1458
    %v1482 = vunpack.c.l.b16 %v1459
    %v1483 = vunpack.c.l.b16 %v1460
    %v1484 = vunpack.c.l.b16 %v1461
    %v1485 = vpack.c.b16 %v1478, %v1477
    %v1486 = vpack.c.b16 %v1480, %v1479
    %v1487 = vpack.c.b16 %v1482, %v1481
    %v1488 = vpack.c.b16 %v1484, %v1483
    %vm1493 = vcmask 523264
    %v1495 = vsel %vm1493, %v1453, 0
    %1497 = vmatprep.subr.bf16.mxu0 0
    %1498 = vmatpush1.bf16.msra.mxu0 0
    %1499 = vmatprep.subr.bf16.mxu0 0
    %1500 = vmatpush1.bf16.msra.mxu0 0
    %1501 = vmatprep.subr.bf16.mxu0 0
    %1502 = vmatpush1.bf16.msra.mxu0 0
    %1503 = vmatprep.subr.bf16.mxu0 0
    %1504 = vmatpush1.bf16.msra.mxu0 0
    %1505 = vmatprep.subr.bf16.mxu0 0
    %1506 = vmatpush1.bf16.msra.mxu0 %v1488
    %1507 = vmatprep.subr.bf16.mxu0 0
    %1508 = vmatpush1.bf16.msra.mxu0 %v1487
    %1509 = vmatprep.subr.bf16.mxu0 0
    %1510 = vmatpush1.bf16.msra.mxu0 %v1486
    %1511 = vmatprep.subr.bf16.mxu0 0
    %1512 = vmatpush1.bf16.msra.mxu0 %v1485
    %1513 = vmatprep.subr.bf16.mxu0 0
    %1514 = vmatpush2.bf16.msra.mxu0 0
    %1515 = vmatprep.subr.bf16.mxu0 0
    %1516 = vmatpush2.bf16.msra.mxu0 0
    %1517 = vmatprep.subr.bf16.mxu0 0
    %1518 = vmatpush2.bf16.msra.mxu0 0
    %1519 = vmatprep.subr.bf16.mxu0 0
    %1520 = vmatpush2.bf16.msra.mxu0 0
    %1521 = vmatprep.subr.bf16.mxu0 0
    %1522 = vmatpush2.bf16.msra.mxu0 0
    %1523 = vmatprep.subr.bf16.mxu0 0
    %1524 = vmatpush2.bf16.msra.mxu0 0
    %1525 = vmatprep.subr.bf16.mxu0 0
    %1526 = vmatpush2.bf16.msra.mxu0 0
    %1527 = vmatprep.subr.bf16.mxu0 0
    %1528 = vmatpush2.bf16.msra.mxu0 0
    %1529 = vmatprep.mubr.bf16.mxu0 0
    %1530 = vmatmul.mubr.bf16.gmra.mxu0 %v1495
    %v1531 = vpop.f32.mrf.mxu0
    %v1532 = vadd.f32 %v1467, %v1531
    %v1533 = vpop.f32.mrf.mxu0
    %v1534 = vpop.f32.mrf.mxu0
    %v1535 = vadd.f32 %v1467, %v1534
    %v1536 = vpop.f32.mrf.mxu0
    %1537 = vdwg.mxu0
    %v1538 = vadd.f32 %v1365, %v1532
    %v1539 = vadd.f32 %v1366, %v1535
    %v1540 = vld [vmem:[#allocation6] sm:$0x1]
    %v1541 = vld [vmem:[%s14] sm:$0x1]
    %v1542 = vsel %vm184, %v1538, 0.0
    %1543 = vadd.xlane.f32.xlu0 %v1542
    %v1544 = vpop.xlane.xlu0 %1543
    %v1545 = vsel %vm184, %v1539, 0.0
    %1546 = vadd.xlane.f32.xlu0 %v1545
    %v1547 = vpop.xlane.xlu0 %1546
    %v1548 = vmul.f32 %v1544, %v1330
    %v1549 = vmul.f32 %v1547, %v1330
    %v1550 = vsub.f32 %v1538, %v1548
    %v1551 = vsub.f32 %v1539, %v1549
    %v1552 = vmul.f32 %v1550, %v1550
    %v1553 = vmul.f32 %v1551, %v1551
    %v1554 = vsel %vm184, %v1552, 0.0
    %1555 = vadd.xlane.f32.xlu0 %v1554
    %v1556 = vpop.xlane.xlu0 %1555
    %v1557 = vsel %vm184, %v1553, 0.0
    %1558 = vadd.xlane.f32.xlu0 %v1557
    %v1559 = vpop.xlane.xlu0 %1558
    %v1560 = vmul.f32 %v1556, %v1330
    %v1561 = vmul.f32 %v1559, %v1330
    %v1562 = vadd.f32 %v1560, 1e-12
    %v1563 = vadd.f32 %v1561, 1e-12
    %v1564 = vrsqrt.pop %v1562
    %v1565 = vrsqrt.pop %v1563
    %v1566 = vmul.f32 %v1550, %v1564
    %v1567 = vmul.f32 %v1551, %v1565
    %v1569 = vlaneseq
    %v1570 = vshrl.u32 %v1569, 7
    %v1571 = vsub.s32 0, %v1570
    %v1572 = vrot.slane %v1540, %v1571
    %v1574 = vmul.f32 %v1566, %v1572
    %v1575 = vmul.f32 %v1567, %v1572
    %v1577 = vlaneseq
    %v1578 = vshrl.u32 %v1577, 7
    %v1579 = vsub.s32 0, %v1578
    %v1580 = vrot.slane %v1541, %v1579
    %v1582 = vadd.f32 %v1574, %v1580
    %v1583 = vadd.f32 %v1575, %v1580
    %v1584 = vpack.c.bf16 %v1583, %v1582
    %s1585 = scalar_lea.vmem %s3, 16
    %v1586 = vld [vmem:[%s1585] sm:$0xf]
    %v1587 = vld [vmem:[%s1585 + $0x4] sm:$0xf]
    %v1588 = vld [vmem:[%s1585 + $0x8] sm:$0xf]
    %v1589 = vld [vmem:[%s1585 + $0xc] sm:$0xf]
    %s1590 = scalar_lea.vmem %s4, 1
    %v1591 = vld [vmem:[%s1590] sm:$0x1]
    %v1593 = vlaneseq
    %v1594 = vshrl.u32 %v1593, 7
    %v1595 = vsub.s32 0, %v1594
    %v1596 = vrot.slane %v1591, %v1595
    %v1602 = vunpack.c.l.b16 %v1586
    %v1603 = vunpack.c.l.b16 %v1587
    %v1604 = vunpack.c.l.b16 %v1588
    %v1605 = vunpack.c.l.b16 %v1589
    %v1606 = vpack.c.b16 %v1603, %v1602
    %v1607 = vpack.c.b16 %v1605, %v1604
    %v1611 = vsel %vm184, %v1584, 0
    %1613 = vmatprep.subr.bf16.mxu0 0
    %1614 = vmatpush1.bf16.msra.mxu0 0
    %1615 = vmatprep.subr.bf16.mxu0 0
    %1616 = vmatpush1.bf16.msra.mxu0 0
    %1617 = vmatprep.subr.bf16.mxu0 0
    %1618 = vmatpush1.bf16.msra.mxu0 0
    %1619 = vmatprep.subr.bf16.mxu0 0
    %1620 = vmatpush1.bf16.msra.mxu0 0
    %1621 = vmatprep.subr.bf16.mxu0 0
    %1622 = vmatpush1.bf16.msra.mxu0 0
    %1623 = vmatprep.subr.bf16.mxu0 0
    %1624 = vmatpush1.bf16.msra.mxu0 0
    %1625 = vmatprep.subr.bf16.mxu0 0
    %1626 = vmatpush1.bf16.msra.mxu0 %v1607
    %1627 = vmatprep.subr.bf16.mxu0 0
    %1628 = vmatpush1.bf16.msra.mxu0 %v1606
    %1629 = vmatprep.subr.bf16.mxu0 0
    %1630 = vmatpush2.bf16.msra.mxu0 0
    %1631 = vmatprep.subr.bf16.mxu0 0
    %1632 = vmatpush2.bf16.msra.mxu0 0
    %1633 = vmatprep.subr.bf16.mxu0 0
    %1634 = vmatpush2.bf16.msra.mxu0 0
    %1635 = vmatprep.subr.bf16.mxu0 0
    %1636 = vmatpush2.bf16.msra.mxu0 0
    %1637 = vmatprep.subr.bf16.mxu0 0
    %1638 = vmatpush2.bf16.msra.mxu0 0
    %1639 = vmatprep.subr.bf16.mxu0 0
    %1640 = vmatpush2.bf16.msra.mxu0 0
    %1641 = vmatprep.subr.bf16.mxu0 0
    %1642 = vmatpush2.bf16.msra.mxu0 0
    %1643 = vmatprep.subr.bf16.mxu0 0
    %1644 = vmatpush2.bf16.msra.mxu0 0
    %1645 = vmatprep.mubr.bf16.mxu0 0
    %1646 = vmatmul.mubr.bf16.gmra.mxu0 %v1611
    %v1647 = vpop.f32.mrf.mxu0
    %v1648 = vadd.f32 %v1596, %v1647
    %v1649 = vpop.f32.mrf.mxu0
    %v1650 = vpop.f32.mrf.mxu0
    %v1651 = vadd.f32 %v1596, %v1650
    %v1652 = vpop.f32.mrf.mxu0
    %1653 = vdwg.mxu0
    %v1654 = vpack.c.bf16 %v1648, %v1648
    %v1655 = vpack.c.bf16 %v1651, %v1651
    %s1656 = scalar_lea.vmem %s5, 16
    %v1657 = vld [vmem:[%s1656] sm:$0xf]
    %v1658 = vld [vmem:[%s1656 + $0x4] sm:$0xf]
    %v1659 = vld [vmem:[%s1656 + $0x8] sm:$0xf]
    %v1660 = vld [vmem:[%s1656 + $0xc] sm:$0xf]
    %1662 = vrot.lane.b32.xlu0 %v1654, 96
    %v1663 = vpop.permute.xlu0 %1662
    %v1665 = vsel %vm238, %v1654, 0
    %v1668 = vsel %vm238, %v1663, 0
    %1670 = vmatprep.subr.bf16.mxu0 0
    %1671 = vmatpush1.bf16.xpose.msra.mxu0 0
    %1672 = vmatprep.subr.bf16.mxu0 0
    %1673 = vmatpush1.bf16.xpose.msra.mxu0 0
    %1674 = vmatprep.subr.bf16.mxu0 0
    %1675 = vmatpush1.bf16.xpose.msra.mxu0 0
    %1676 = vmatprep.subr.bf16.mxu0 0
    %1677 = vmatpush1.bf16.xpose.msra.mxu0 0
    %1678 = vmatprep.subr.bf16.mxu0 0
    %1679 = vmatpush1.bf16.xpose.msra.mxu0 0
    %1680 = vmatprep.subr.bf16.mxu0 0
    %1681 = vmatpush1.bf16.xpose.msra.mxu0 0
    %1682 = vmatprep.subr.bf16.mxu0 0
    %1683 = vmatpush1.bf16.xpose.msra.mxu0 0
    %1684 = vmatprep.subr.bf16.mxu0 0
    %1685 = vmatpush1.bf16.xpose.msra.mxu0 %v1668
    %1686 = vmatprep.subr.bf16.mxu0 0
    %1687 = vmatpush2.bf16.xpose.msra.mxu0 0
    %1688 = vmatprep.subr.bf16.mxu0 0
    %1689 = vmatpush2.bf16.xpose.msra.mxu0 0
    %1690 = vmatprep.subr.bf16.mxu0 0
    %1691 = vmatpush2.bf16.xpose.msra.mxu0 0
    %1692 = vmatprep.subr.bf16.mxu0 0
    %1693 = vmatpush2.bf16.xpose.msra.mxu0 0
    %1694 = vmatprep.subr.bf16.mxu0 0
    %1695 = vmatpush2.bf16.xpose.msra.mxu0 0
    %1696 = vmatprep.subr.bf16.mxu0 0
    %1697 = vmatpush2.bf16.xpose.msra.mxu0 0
    %1698 = vmatprep.subr.bf16.mxu0 0
    %1699 = vmatpush2.bf16.xpose.msra.mxu0 0
    %1700 = vmatprep.subr.bf16.mxu0 0
    %1701 = vmatpush2.bf16.xpose.msra.mxu0 0
    %1702 = vmatprep.mubr.bf16.mxu0 0
    %1703 = vmatmul.mubr.bf16.gmra.mxu0 %v1665
    %v1704 = vpop.f32.mrf.mxu0
    %v1705 = vadd.f32 %v103, %v1704
    %v1706 = vpop.f32.mrf.mxu0
    %v1707 = vpop.f32.mrf.mxu0
    %v1708 = vpop.f32.mrf.mxu0
    %1709 = vdwg.mxu0
    %1711 = vrot.lane.b32.xlu0 %v1655, 96
    %v1712 = vpop.permute.xlu0 %1711
    %v1714 = vsel %vm238, %v1655, 0
    %v1717 = vsel %vm238, %v1712, 0
    %1719 = vmatprep.subr.bf16.mxu0 0
    %1720 = vmatpush1.bf16.xpose.msra.mxu0 0
    %1721 = vmatprep.subr.bf16.mxu0 0
    %1722 = vmatpush1.bf16.xpose.msra.mxu0 0
    %1723 = vmatprep.subr.bf16.mxu0 0
    %1724 = vmatpush1.bf16.xpose.msra.mxu0 0
    %1725 = vmatprep.subr.bf16.mxu0 0
    %1726 = vmatpush1.bf16.xpose.msra.mxu0 0
    %1727 = vmatprep.subr.bf16.mxu0 0
    %1728 = vmatpush1.bf16.xpose.msra.mxu0 0
    %1729 = vmatprep.subr.bf16.mxu0 0
    %1730 = vmatpush1.bf16.xpose.msra.mxu0 0
    %1731 = vmatprep.subr.bf16.mxu0 0
    %1732 = vmatpush1.bf16.xpose.msra.mxu0 0
    %1733 = vmatprep.subr.bf16.mxu0 0
    %1734 = vmatpush1.bf16.xpose.msra.mxu0 %v1717
    %1735 = vmatprep.subr.bf16.mxu0 0
    %1736 = vmatpush2.bf16.xpose.msra.mxu0 0
    %1737 = vmatprep.subr.bf16.mxu0 0
    %1738 = vmatpush2.bf16.xpose.msra.mxu0 0
    %1739 = vmatprep.subr.bf16.mxu0 0
    %1740 = vmatpush2.bf16.xpose.msra.mxu0 0
    %1741 = vmatprep.subr.bf16.mxu0 0
    %1742 = vmatpush2.bf16.xpose.msra.mxu0 0
    %1743 = vmatprep.subr.bf16.mxu0 0
    %1744 = vmatpush2.bf16.xpose.msra.mxu0 0
    %1745 = vmatprep.subr.bf16.mxu0 0
    %1746 = vmatpush2.bf16.xpose.msra.mxu0 0
    %1747 = vmatprep.subr.bf16.mxu0 0
    %1748 = vmatpush2.bf16.xpose.msra.mxu0 0
    %1749 = vmatprep.subr.bf16.mxu0 0
    %1750 = vmatpush2.bf16.xpose.msra.mxu0 0
    %1751 = vmatprep.mubr.bf16.mxu0 0
    %1752 = vmatmul.mubr.bf16.gmra.mxu0 %v1714
    %v1753 = vpop.f32.mrf.mxu0
    %v1754 = vadd.f32 %v107, %v1753
    %v1755 = vpop.f32.mrf.mxu0
    %v1756 = vpop.f32.mrf.mxu0
    %v1757 = vpop.f32.mrf.mxu0
    %1758 = vdwg.mxu0
    %v1759 = vsel %vm238, %v1705, -inf
    %1760 = vmax.xlane.f32.xlu0 %v1759
    %v1761 = vpop.xlane.xlu0 %1760
    %v1762 = vsel %vm238, %v1754, -inf
    %1763 = vmax.xlane.f32.xlu0 %v1762
    %v1764 = vpop.xlane.xlu0 %1763
    %v1765 = vsub.f32 %v1705, %v1761
    %v1766 = vsub.f32 %v1754, %v1764
    %v1767 = vmul.f32 %v1765, 1.442695
    %v1768 = vpow.pop %v1767
    %v1769 = vmul.f32 %v1766, 1.442695
    %v1770 = vpow.pop %v1769
    %v1771 = vsel %vm238, %v1768, 0.0
    %1772 = vadd.xlane.f32.xlu0 %v1771
    %v1773 = vpop.xlane.xlu0 %1772
    %v1774 = vsel %vm238, %v1770, 0.0
    %1775 = vadd.xlane.f32.xlu0 %v1774
    %v1776 = vpop.xlane.xlu0 %1775
    %v1777 = vrcp.pop %v1773
    %v1778 = vrcp.pop %v1776
    %v1779 = vmul.f32 %v1768, %v1777
    %v1780 = vmul.f32 %v1770, %v1778
    %v1781 = vpack.c.bf16 %v1779, %v1779
    %v1782 = vpack.c.bf16 %v1780, %v1780
    %1783 = vrot.lane.b32.xlu0 %v1654, 64
    %v1784 = vpop.permute.xlu0 %1783
    %v1786 = vsel %vm238, %v1781, 0
    %v1789 = vsel %vm363, %v1784, 0
    %1791 = vmatprep.subr.bf16.mxu0 0
    %1792 = vmatpush1.bf16.msra.mxu0 0
    %1793 = vmatprep.subr.bf16.mxu0 0
    %1794 = vmatpush1.bf16.msra.mxu0 0
    %1795 = vmatprep.subr.bf16.mxu0 0
    %1796 = vmatpush1.bf16.msra.mxu0 0
    %1797 = vmatprep.subr.bf16.mxu0 0
    %1798 = vmatpush1.bf16.msra.mxu0 0
    %1799 = vmatprep.subr.bf16.mxu0 0
    %1800 = vmatpush1.bf16.msra.mxu0 0
    %1801 = vmatprep.subr.bf16.mxu0 0
    %1802 = vmatpush1.bf16.msra.mxu0 0
    %1803 = vmatprep.subr.bf16.mxu0 0
    %1804 = vmatpush1.bf16.msra.mxu0 0
    %1805 = vmatprep.subr.bf16.mxu0 0
    %1806 = vmatpush1.bf16.msra.mxu0 %v1789
    %1807 = vmatprep.subr.bf16.mxu0 0
    %1808 = vmatpush2.bf16.msra.mxu0 0
    %1809 = vmatprep.subr.bf16.mxu0 0
    %1810 = vmatpush2.bf16.msra.mxu0 0
    %1811 = vmatprep.subr.bf16.mxu0 0
    %1812 = vmatpush2.bf16.msra.mxu0 0
    %1813 = vmatprep.subr.bf16.mxu0 0
    %1814 = vmatpush2.bf16.msra.mxu0 0
    %1815 = vmatprep.subr.bf16.mxu0 0
    %1816 = vmatpush2.bf16.msra.mxu0 0
    %1817 = vmatprep.subr.bf16.mxu0 0
    %1818 = vmatpush2.bf16.msra.mxu0 0
    %1819 = vmatprep.subr.bf16.mxu0 0
    %1820 = vmatpush2.bf16.msra.mxu0 0
    %1821 = vmatprep.subr.bf16.mxu0 0
    %1822 = vmatpush2.bf16.msra.mxu0 0
    %1823 = vmatprep.mubr.bf16.mxu0 0
    %1824 = vmatmul.mubr.bf16.gmra.mxu0 %v1786
    %v1825 = vpop.f32.mrf.mxu0
    %v1826 = vadd.f32 0.0, %v1825
    %v1827 = vpop.f32.mrf.mxu0
    %v1828 = vpop.f32.mrf.mxu0
    %v1829 = vpop.f32.mrf.mxu0
    %1830 = vdwg.mxu0
    %1831 = vrot.lane.b32.xlu0 %v1655, 64
    %v1832 = vpop.permute.xlu0 %1831
    %v1834 = vsel %vm238, %v1782, 0
    %v1837 = vsel %vm363, %v1832, 0
    %1839 = vmatprep.subr.bf16.mxu0 0
    %1840 = vmatpush1.bf16.msra.mxu0 0
    %1841 = vmatprep.subr.bf16.mxu0 0
    %1842 = vmatpush1.bf16.msra.mxu0 0
    %1843 = vmatprep.subr.bf16.mxu0 0
    %1844 = vmatpush1.bf16.msra.mxu0 0
    %1845 = vmatprep.subr.bf16.mxu0 0
    %1846 = vmatpush1.bf16.msra.mxu0 0
    %1847 = vmatprep.subr.bf16.mxu0 0
    %1848 = vmatpush1.bf16.msra.mxu0 0
    %1849 = vmatprep.subr.bf16.mxu0 0
    %1850 = vmatpush1.bf16.msra.mxu0 0
    %1851 = vmatprep.subr.bf16.mxu0 0
    %1852 = vmatpush1.bf16.msra.mxu0 0
    %1853 = vmatprep.subr.bf16.mxu0 0
    %1854 = vmatpush1.bf16.msra.mxu0 %v1837
    %1855 = vmatprep.subr.bf16.mxu0 0
    %1856 = vmatpush2.bf16.msra.mxu0 0
    %1857 = vmatprep.subr.bf16.mxu0 0
    %1858 = vmatpush2.bf16.msra.mxu0 0
    %1859 = vmatprep.subr.bf16.mxu0 0
    %1860 = vmatpush2.bf16.msra.mxu0 0
    %1861 = vmatprep.subr.bf16.mxu0 0
    %1862 = vmatpush2.bf16.msra.mxu0 0
    %1863 = vmatprep.subr.bf16.mxu0 0
    %1864 = vmatpush2.bf16.msra.mxu0 0
    %1865 = vmatprep.subr.bf16.mxu0 0
    %1866 = vmatpush2.bf16.msra.mxu0 0
    %1867 = vmatprep.subr.bf16.mxu0 0
    %1868 = vmatpush2.bf16.msra.mxu0 0
    %1869 = vmatprep.subr.bf16.mxu0 0
    %1870 = vmatpush2.bf16.msra.mxu0 0
    %1871 = vmatprep.mubr.bf16.mxu0 0
    %1872 = vmatmul.mubr.bf16.gmra.mxu0 %v1834
    %v1873 = vpop.f32.mrf.mxu0
    %v1874 = vadd.f32 0.0, %v1873
    %v1875 = vpop.f32.mrf.mxu0
    %v1876 = vpop.f32.mrf.mxu0
    %v1877 = vpop.f32.mrf.mxu0
    %1878 = vdwg.mxu0
    %v1879 = vpack.c.bf16 %v1874, %v1826
    %1880 = vrot.lane.b32.xlu0 %v1654, 120
    %v1881 = vpop.permute.xlu0 %1880
    %1882 = vrot.lane.b32.xlu0 %v1654, 88
    %v1883 = vpop.permute.xlu0 %1882
    %v1885 = vsel %vm238, %v1881, 0
    %v1888 = vsel %vm238, %v1883, 0
    %1890 = vmatprep.subr.bf16.mxu0 0
    %1891 = vmatpush1.bf16.xpose.msra.mxu0 0
    %1892 = vmatprep.subr.bf16.mxu0 0
    %1893 = vmatpush1.bf16.xpose.msra.mxu0 0
    %1894 = vmatprep.subr.bf16.mxu0 0
    %1895 = vmatpush1.bf16.xpose.msra.mxu0 0
    %1896 = vmatprep.subr.bf16.mxu0 0
    %1897 = vmatpush1.bf16.xpose.msra.mxu0 0
    %1898 = vmatprep.subr.bf16.mxu0 0
    %1899 = vmatpush1.bf16.xpose.msra.mxu0 0
    %1900 = vmatprep.subr.bf16.mxu0 0
    %1901 = vmatpush1.bf16.xpose.msra.mxu0 0
    %1902 = vmatprep.subr.bf16.mxu0 0
    %1903 = vmatpush1.bf16.xpose.msra.mxu0 0
    %1904 = vmatprep.subr.bf16.mxu0 0
    %1905 = vmatpush1.bf16.xpose.msra.mxu0 %v1888
    %1906 = vmatprep.subr.bf16.mxu0 0
    %1907 = vmatpush2.bf16.xpose.msra.mxu0 0
    %1908 = vmatprep.subr.bf16.mxu0 0
    %1909 = vmatpush2.bf16.xpose.msra.mxu0 0
    %1910 = vmatprep.subr.bf16.mxu0 0
    %1911 = vmatpush2.bf16.xpose.msra.mxu0 0
    %1912 = vmatprep.subr.bf16.mxu0 0
    %1913 = vmatpush2.bf16.xpose.msra.mxu0 0
    %1914 = vmatprep.subr.bf16.mxu0 0
    %1915 = vmatpush2.bf16.xpose.msra.mxu0 0
    %1916 = vmatprep.subr.bf16.mxu0 0
    %1917 = vmatpush2.bf16.xpose.msra.mxu0 0
    %1918 = vmatprep.subr.bf16.mxu0 0
    %1919 = vmatpush2.bf16.xpose.msra.mxu0 0
    %1920 = vmatprep.subr.bf16.mxu0 0
    %1921 = vmatpush2.bf16.xpose.msra.mxu0 0
    %1922 = vmatprep.mubr.bf16.mxu0 0
    %1923 = vmatmul.mubr.bf16.gmra.mxu0 %v1885
    %v1924 = vpop.f32.mrf.mxu0
    %v1925 = vadd.f32 %v103, %v1924
    %v1926 = vpop.f32.mrf.mxu0
    %v1927 = vpop.f32.mrf.mxu0
    %v1928 = vpop.f32.mrf.mxu0
    %1929 = vdwg.mxu0
    %1930 = vrot.lane.b32.xlu0 %v1655, 120
    %v1931 = vpop.permute.xlu0 %1930
    %1932 = vrot.lane.b32.xlu0 %v1655, 88
    %v1933 = vpop.permute.xlu0 %1932
    %v1935 = vsel %vm238, %v1931, 0
    %v1938 = vsel %vm238, %v1933, 0
    %1940 = vmatprep.subr.bf16.mxu0 0
    %1941 = vmatpush1.bf16.xpose.msra.mxu0 0
    %1942 = vmatprep.subr.bf16.mxu0 0
    %1943 = vmatpush1.bf16.xpose.msra.mxu0 0
    %1944 = vmatprep.subr.bf16.mxu0 0
    %1945 = vmatpush1.bf16.xpose.msra.mxu0 0
    %1946 = vmatprep.subr.bf16.mxu0 0
    %1947 = vmatpush1.bf16.xpose.msra.mxu0 0
    %1948 = vmatprep.subr.bf16.mxu0 0
    %1949 = vmatpush1.bf16.xpose.msra.mxu0 0
    %1950 = vmatprep.subr.bf16.mxu0 0
    %1951 = vmatpush1.bf16.xpose.msra.mxu0 0
    %1952 = vmatprep.subr.bf16.mxu0 0
    %1953 = vmatpush1.bf16.xpose.msra.mxu0 0
    %1954 = vmatprep.subr.bf16.mxu0 0
    %1955 = vmatpush1.bf16.xpose.msra.mxu0 %v1938
    %1956 = vmatprep.subr.bf16.mxu0 0
    %1957 = vmatpush2.bf16.xpose.msra.mxu0 0
    %1958 = vmatprep.subr.bf16.mxu0 0
    %1959 = vmatpush2.bf16.xpose.msra.mxu0 0
    %1960 = vmatprep.subr.bf16.mxu0 0
    %1961 = vmatpush2.bf16.xpose.msra.mxu0 0
    %1962 = vmatprep.subr.bf16.mxu0 0
    %1963 = vmatpush2.bf16.xpose.msra.mxu0 0
    %1964 = vmatprep.subr.bf16.mxu0 0
    %1965 = vmatpush2.bf16.xpose.msra.mxu0 0
    %1966 = vmatprep.subr.bf16.mxu0 0
    %1967 = vmatpush2.bf16.xpose.msra.mxu0 0
    %1968 = vmatprep.subr.bf16.mxu0 0
    %1969 = vmatpush2.bf16.xpose.msra.mxu0 0
    %1970 = vmatprep.subr.bf16.mxu0 0
    %1971 = vmatpush2.bf16.xpose.msra.mxu0 0
    %1972 = vmatprep.mubr.bf16.mxu0 0
    %1973 = vmatmul.mubr.bf16.gmra.mxu0 %v1935
    %v1974 = vpop.f32.mrf.mxu0
    %v1975 = vadd.f32 %v107, %v1974
    %v1976 = vpop.f32.mrf.mxu0
    %v1977 = vpop.f32.mrf.mxu0
    %v1978 = vpop.f32.mrf.mxu0
    %1979 = vdwg.mxu0
    %v1980 = vsel %vm238, %v1925, -inf
    %1981 = vmax.xlane.f32.xlu0 %v1980
    %v1982 = vpop.xlane.xlu0 %1981
    %v1983 = vsel %vm238, %v1975, -inf
    %1984 = vmax.xlane.f32.xlu0 %v1983
    %v1985 = vpop.xlane.xlu0 %1984
    %v1986 = vsub.f32 %v1925, %v1982
    %v1987 = vsub.f32 %v1975, %v1985
    %v1988 = vmul.f32 %v1986, 1.442695
    %v1989 = vpow.pop %v1988
    %v1990 = vmul.f32 %v1987, 1.442695
    %v1991 = vpow.pop %v1990
    %v1992 = vsel %vm238, %v1989, 0.0
    %1993 = vadd.xlane.f32.xlu0 %v1992
    %v1994 = vpop.xlane.xlu0 %1993
    %v1995 = vsel %vm238, %v1991, 0.0
    %1996 = vadd.xlane.f32.xlu0 %v1995
    %v1997 = vpop.xlane.xlu0 %1996
    %v1998 = vrcp.pop %v1994
    %v1999 = vrcp.pop %v1997
    %v2000 = vmul.f32 %v1989, %v1998
    %v2001 = vmul.f32 %v1991, %v1999
    %v2002 = vpack.c.bf16 %v2000, %v2000
    %v2003 = vpack.c.bf16 %v2001, %v2001
    %2004 = vrot.lane.b32.xlu0 %v1654, 56
    %v2005 = vpop.permute.xlu0 %2004
    %v2007 = vsel %vm238, %v2002, 0
    %v2010 = vsel %vm363, %v2005, 0
    %2012 = vmatprep.subr.bf16.mxu0 0
    %2013 = vmatpush1.bf16.msra.mxu0 0
    %2014 = vmatprep.subr.bf16.mxu0 0
    %2015 = vmatpush1.bf16.msra.mxu0 0
    %2016 = vmatprep.subr.bf16.mxu0 0
    %2017 = vmatpush1.bf16.msra.mxu0 0
    %2018 = vmatprep.subr.bf16.mxu0 0
    %2019 = vmatpush1.bf16.msra.mxu0 0
    %2020 = vmatprep.subr.bf16.mxu0 0
    %2021 = vmatpush1.bf16.msra.mxu0 0
    %2022 = vmatprep.subr.bf16.mxu0 0
    %2023 = vmatpush1.bf16.msra.mxu0 0
    %2024 = vmatprep.subr.bf16.mxu0 0
    %2025 = vmatpush1.bf16.msra.mxu0 0
    %2026 = vmatprep.subr.bf16.mxu0 0
    %2027 = vmatpush1.bf16.msra.mxu0 %v2010
    %2028 = vmatprep.subr.bf16.mxu0 0
    %2029 = vmatpush2.bf16.msra.mxu0 0
    %2030 = vmatprep.subr.bf16.mxu0 0
    %2031 = vmatpush2.bf16.msra.mxu0 0
    %2032 = vmatprep.subr.bf16.mxu0 0
    %2033 = vmatpush2.bf16.msra.mxu0 0
    %2034 = vmatprep.subr.bf16.mxu0 0
    %2035 = vmatpush2.bf16.msra.mxu0 0
    %2036 = vmatprep.subr.bf16.mxu0 0
    %2037 = vmatpush2.bf16.msra.mxu0 0
    %2038 = vmatprep.subr.bf16.mxu0 0
    %2039 = vmatpush2.bf16.msra.mxu0 0
    %2040 = vmatprep.subr.bf16.mxu0 0
    %2041 = vmatpush2.bf16.msra.mxu0 0
    %2042 = vmatprep.subr.bf16.mxu0 0
    %2043 = vmatpush2.bf16.msra.mxu0 0
    %2044 = vmatprep.mubr.bf16.mxu0 0
    %2045 = vmatmul.mubr.bf16.gmra.mxu0 %v2007
    %v2046 = vpop.f32.mrf.mxu0
    %v2047 = vadd.f32 0.0, %v2046
    %v2048 = vpop.f32.mrf.mxu0
    %v2049 = vpop.f32.mrf.mxu0
    %v2050 = vpop.f32.mrf.mxu0
    %2051 = vdwg.mxu0
    %2052 = vrot.lane.b32.xlu0 %v1655, 56
    %v2053 = vpop.permute.xlu0 %2052
    %v2055 = vsel %vm238, %v2003, 0
    %v2058 = vsel %vm363, %v2053, 0
    %2060 = vmatprep.subr.bf16.mxu0 0
    %2061 = vmatpush1.bf16.msra.mxu0 0
    %2062 = vmatprep.subr.bf16.mxu0 0
    %2063 = vmatpush1.bf16.msra.mxu0 0
    %2064 = vmatprep.subr.bf16.mxu0 0
    %2065 = vmatpush1.bf16.msra.mxu0 0
    %2066 = vmatprep.subr.bf16.mxu0 0
    %2067 = vmatpush1.bf16.msra.mxu0 0
    %2068 = vmatprep.subr.bf16.mxu0 0
    %2069 = vmatpush1.bf16.msra.mxu0 0
    %2070 = vmatprep.subr.bf16.mxu0 0
    %2071 = vmatpush1.bf16.msra.mxu0 0
    %2072 = vmatprep.subr.bf16.mxu0 0
    %2073 = vmatpush1.bf16.msra.mxu0 0
    %2074 = vmatprep.subr.bf16.mxu0 0
    %2075 = vmatpush1.bf16.msra.mxu0 %v2058
    %2076 = vmatprep.subr.bf16.mxu0 0
    %2077 = vmatpush2.bf16.msra.mxu0 0
    %2078 = vmatprep.subr.bf16.mxu0 0
    %2079 = vmatpush2.bf16.msra.mxu0 0
    %2080 = vmatprep.subr.bf16.mxu0 0
    %2081 = vmatpush2.bf16.msra.mxu0 0
    %2082 = vmatprep.subr.bf16.mxu0 0
    %2083 = vmatpush2.bf16.msra.mxu0 0
    %2084 = vmatprep.subr.bf16.mxu0 0
    %2085 = vmatpush2.bf16.msra.mxu0 0
    %2086 = vmatprep.subr.bf16.mxu0 0
    %2087 = vmatpush2.bf16.msra.mxu0 0
    %2088 = vmatprep.subr.bf16.mxu0 0
    %2089 = vmatpush2.bf16.msra.mxu0 0
    %2090 = vmatprep.subr.bf16.mxu0 0
    %2091 = vmatpush2.bf16.msra.mxu0 0
    %2092 = vmatprep.mubr.bf16.mxu0 0
    %2093 = vmatmul.mubr.bf16.gmra.mxu0 %v2055
    %v2094 = vpop.f32.mrf.mxu0
    %v2095 = vadd.f32 0.0, %v2094
    %v2096 = vpop.f32.mrf.mxu0
    %v2097 = vpop.f32.mrf.mxu0
    %v2098 = vpop.f32.mrf.mxu0
    %2099 = vdwg.mxu0
    %v2100 = vpack.c.bf16 %v2095, %v2047
    %v2102 = vsel %vm238, %v2100, 0
    %v2105 = vsel %vm363, %v1658, 0
    %2107 = vmatprep.subr.bf16.mxu0 0
    %2108 = vmatpush1.bf16.msra.mxu0 0
    %2109 = vmatprep.subr.bf16.mxu0 0
    %2110 = vmatpush1.bf16.msra.mxu0 0
    %2111 = vmatprep.subr.bf16.mxu0 0
    %2112 = vmatpush1.bf16.msra.mxu0 0
    %2113 = vmatprep.subr.bf16.mxu0 0
    %2114 = vmatpush1.bf16.msra.mxu0 0
    %2115 = vmatprep.subr.bf16.mxu0 0
    %2116 = vmatpush1.bf16.msra.mxu0 0
    %2117 = vmatprep.subr.bf16.mxu0 0
    %2118 = vmatpush1.bf16.msra.mxu0 0
    %2119 = vmatprep.subr.bf16.mxu0 0
    %2120 = vmatpush1.bf16.msra.mxu0 0
    %2121 = vmatprep.subr.bf16.mxu0 0
    %2122 = vmatpush1.bf16.msra.mxu0 %v2105
    %2123 = vmatprep.subr.bf16.mxu0 0
    %2124 = vmatpush2.bf16.msra.mxu0 0
    %2125 = vmatprep.subr.bf16.mxu0 0
    %2126 = vmatpush2.bf16.msra.mxu0 0
    %2127 = vmatprep.subr.bf16.mxu0 0
    %2128 = vmatpush2.bf16.msra.mxu0 0
    %2129 = vmatprep.subr.bf16.mxu0 0
    %2130 = vmatpush2.bf16.msra.mxu0 0
    %2131 = vmatprep.subr.bf16.mxu0 0
    %2132 = vmatpush2.bf16.msra.mxu0 0
    %2133 = vmatprep.subr.bf16.mxu0 0
    %2134 = vmatpush2.bf16.msra.mxu0 0
    %2135 = vmatprep.subr.bf16.mxu0 0
    %2136 = vmatpush2.bf16.msra.mxu0 0
    %2137 = vmatprep.subr.bf16.mxu0 0
    %2138 = vmatpush2.bf16.msra.mxu0 0
    %2139 = vmatprep.mubr.bf16.mxu0 0
    %2140 = vmatmul.mubr.bf16.gmra.mxu0 %v2102
    %v2141 = vpop.f32.mrf.mxu0
    %v2142 = vadd.f32 0.0, %v2141
    %v2143 = vpop.f32.mrf.mxu0
    %v2144 = vpop.f32.mrf.mxu0
    %v2145 = vadd.f32 0.0, %v2144
    %v2146 = vpop.f32.mrf.mxu0
    %2147 = vdwg.mxu0
    %v2149 = vsel %vm238, %v1879, 0
    %v2152 = vsel %vm363, %v1657, 0
    %2154 = vmatprep.subr.bf16.mxu0 0
    %2155 = vmatpush1.bf16.msra.mxu0 0
    %2156 = vmatprep.subr.bf16.mxu0 0
    %2157 = vmatpush1.bf16.msra.mxu0 0
    %2158 = vmatprep.subr.bf16.mxu0 0
    %2159 = vmatpush1.bf16.msra.mxu0 0
    %2160 = vmatprep.subr.bf16.mxu0 0
    %2161 = vmatpush1.bf16.msra.mxu0 0
    %2162 = vmatprep.subr.bf16.mxu0 0
    %2163 = vmatpush1.bf16.msra.mxu0 0
    %2164 = vmatprep.subr.bf16.mxu0 0
    %2165 = vmatpush1.bf16.msra.mxu0 0
    %2166 = vmatprep.subr.bf16.mxu0 0
    %2167 = vmatpush1.bf16.msra.mxu0 0
    %2168 = vmatprep.subr.bf16.mxu0 0
    %2169 = vmatpush1.bf16.msra.mxu0 %v2152
    %2170 = vmatprep.subr.bf16.mxu0 0
    %2171 = vmatpush2.bf16.msra.mxu0 0
    %2172 = vmatprep.subr.bf16.mxu0 0
    %2173 = vmatpush2.bf16.msra.mxu0 0
    %2174 = vmatprep.subr.bf16.mxu0 0
    %2175 = vmatpush2.bf16.msra.mxu0 0
    %2176 = vmatprep.subr.bf16.mxu0 0
    %2177 = vmatpush2.bf16.msra.mxu0 0
    %2178 = vmatprep.subr.bf16.mxu0 0
    %2179 = vmatpush2.bf16.msra.mxu0 0
    %2180 = vmatprep.subr.bf16.mxu0 0
    %2181 = vmatpush2.bf16.msra.mxu0 0
    %2182 = vmatprep.subr.bf16.mxu0 0
    %2183 = vmatpush2.bf16.msra.mxu0 0
    %2184 = vmatprep.subr.bf16.mxu0 0
    %2185 = vmatpush2.bf16.msra.mxu0 0
    %2186 = vmatprep.mubr.bf16.mxu0 0
    %2187 = vmatmul.mubr.bf16.gmra.mxu0 %v2149
    %v2188 = vpop.f32.mrf.mxu0
    %v2189 = vadd.f32 %v2142, %v2188
    %v2190 = vpop.f32.mrf.mxu0
    %v2191 = vpop.f32.mrf.mxu0
    %v2192 = vadd.f32 %v2145, %v2191
    %v2193 = vpop.f32.mrf.mxu0
    %2194 = vdwg.mxu0
    %2195 = vrot.lane.b32.xlu0 %v1654, 112
    %v2196 = vpop.permute.xlu0 %2195
    %2197 = vrot.lane.b32.xlu0 %v1654, 80
    %v2198 = vpop.permute.xlu0 %2197
    %v2200 = vsel %vm238, %v2196, 0
    %v2203 = vsel %vm238, %v2198, 0
    %2205 = vmatprep.subr.bf16.mxu0 0
    %2206 = vmatpush1.bf16.xpose.msra.mxu0 0
    %2207 = vmatprep.subr.bf16.mxu0 0
    %2208 = vmatpush1.bf16.xpose.msra.mxu0 0
    %2209 = vmatprep.subr.bf16.mxu0 0
    %2210 = vmatpush1.bf16.xpose.msra.mxu0 0
    %2211 = vmatprep.subr.bf16.mxu0 0
    %2212 = vmatpush1.bf16.xpose.msra.mxu0 0
    %2213 = vmatprep.subr.bf16.mxu0 0
    %2214 = vmatpush1.bf16.xpose.msra.mxu0 0
    %2215 = vmatprep.subr.bf16.mxu0 0
    %2216 = vmatpush1.bf16.xpose.msra.mxu0 0
    %2217 = vmatprep.subr.bf16.mxu0 0
    %2218 = vmatpush1.bf16.xpose.msra.mxu0 0
    %2219 = vmatprep.subr.bf16.mxu0 0
    %2220 = vmatpush1.bf16.xpose.msra.mxu0 %v2203
    %2221 = vmatprep.subr.bf16.mxu0 0
    %2222 = vmatpush2.bf16.xpose.msra.mxu0 0
    %2223 = vmatprep.subr.bf16.mxu0 0
    %2224 = vmatpush2.bf16.xpose.msra.mxu0 0
    %2225 = vmatprep.subr.bf16.mxu0 0
    %2226 = vmatpush2.bf16.xpose.msra.mxu0 0
    %2227 = vmatprep.subr.bf16.mxu0 0
    %2228 = vmatpush2.bf16.xpose.msra.mxu0 0
    %2229 = vmatprep.subr.bf16.mxu0 0
    %2230 = vmatpush2.bf16.xpose.msra.mxu0 0
    %2231 = vmatprep.subr.bf16.mxu0 0
    %2232 = vmatpush2.bf16.xpose.msra.mxu0 0
    %2233 = vmatprep.subr.bf16.mxu0 0
    %2234 = vmatpush2.bf16.xpose.msra.mxu0 0
    %2235 = vmatprep.subr.bf16.mxu0 0
    %2236 = vmatpush2.bf16.xpose.msra.mxu0 0
    %2237 = vmatprep.mubr.bf16.mxu0 0
    %2238 = vmatmul.mubr.bf16.gmra.mxu0 %v2200
    %v2239 = vpop.f32.mrf.mxu0
    %v2240 = vadd.f32 %v103, %v2239
    %v2241 = vpop.f32.mrf.mxu0
    %v2242 = vpop.f32.mrf.mxu0
    %v2243 = vpop.f32.mrf.mxu0
    %2244 = vdwg.mxu0
    %2245 = vrot.lane.b32.xlu0 %v1655, 112
    %v2246 = vpop.permute.xlu0 %2245
    %2247 = vrot.lane.b32.xlu0 %v1655, 80
    %v2248 = vpop.permute.xlu0 %2247
    %v2250 = vsel %vm238, %v2246, 0
    %v2253 = vsel %vm238, %v2248, 0
    %2255 = vmatprep.subr.bf16.mxu0 0
    %2256 = vmatpush1.bf16.xpose.msra.mxu0 0
    %2257 = vmatprep.subr.bf16.mxu0 0
    %2258 = vmatpush1.bf16.xpose.msra.mxu0 0
    %2259 = vmatprep.subr.bf16.mxu0 0
    %2260 = vmatpush1.bf16.xpose.msra.mxu0 0
    %2261 = vmatprep.subr.bf16.mxu0 0
    %2262 = vmatpush1.bf16.xpose.msra.mxu0 0
    %2263 = vmatprep.subr.bf16.mxu0 0
    %2264 = vmatpush1.bf16.xpose.msra.mxu0 0
    %2265 = vmatprep.subr.bf16.mxu0 0
    %2266 = vmatpush1.bf16.xpose.msra.mxu0 0
    %2267 = vmatprep.subr.bf16.mxu0 0
    %2268 = vmatpush1.bf16.xpose.msra.mxu0 0
    %2269 = vmatprep.subr.bf16.mxu0 0
    %2270 = vmatpush1.bf16.xpose.msra.mxu0 %v2253
    %2271 = vmatprep.subr.bf16.mxu0 0
    %2272 = vmatpush2.bf16.xpose.msra.mxu0 0
    %2273 = vmatprep.subr.bf16.mxu0 0
    %2274 = vmatpush2.bf16.xpose.msra.mxu0 0
    %2275 = vmatprep.subr.bf16.mxu0 0
    %2276 = vmatpush2.bf16.xpose.msra.mxu0 0
    %2277 = vmatprep.subr.bf16.mxu0 0
    %2278 = vmatpush2.bf16.xpose.msra.mxu0 0
    %2279 = vmatprep.subr.bf16.mxu0 0
    %2280 = vmatpush2.bf16.xpose.msra.mxu0 0
    %2281 = vmatprep.subr.bf16.mxu0 0
    %2282 = vmatpush2.bf16.xpose.msra.mxu0 0
    %2283 = vmatprep.subr.bf16.mxu0 0
    %2284 = vmatpush2.bf16.xpose.msra.mxu0 0
    %2285 = vmatprep.subr.bf16.mxu0 0
    %2286 = vmatpush2.bf16.xpose.msra.mxu0 0
    %2287 = vmatprep.mubr.bf16.mxu0 0
    %2288 = vmatmul.mubr.bf16.gmra.mxu0 %v2250
    %v2289 = vpop.f32.mrf.mxu0
    %v2290 = vadd.f32 %v107, %v2289
    %v2291 = vpop.f32.mrf.mxu0
    %v2292 = vpop.f32.mrf.mxu0
    %v2293 = vpop.f32.mrf.mxu0
    %2294 = vdwg.mxu0
    %v2295 = vsel %vm238, %v2240, -inf
    %2296 = vmax.xlane.f32.xlu0 %v2295
    %v2297 = vpop.xlane.xlu0 %2296
    %v2298 = vsel %vm238, %v2290, -inf
    %2299 = vmax.xlane.f32.xlu0 %v2298
    %v2300 = vpop.xlane.xlu0 %2299
    %v2301 = vsub.f32 %v2240, %v2297
    %v2302 = vsub.f32 %v2290, %v2300
    %v2303 = vmul.f32 %v2301, 1.442695
    %v2304 = vpow.pop %v2303
    %v2305 = vmul.f32 %v2302, 1.442695
    %v2306 = vpow.pop %v2305
    %v2307 = vsel %vm238, %v2304, 0.0
    %2308 = vadd.xlane.f32.xlu0 %v2307
    %v2309 = vpop.xlane.xlu0 %2308
    %v2310 = vsel %vm238, %v2306, 0.0
    %2311 = vadd.xlane.f32.xlu0 %v2310
    %v2312 = vpop.xlane.xlu0 %2311
    %v2313 = vrcp.pop %v2309
    %v2314 = vrcp.pop %v2312
    %v2315 = vmul.f32 %v2304, %v2313
    %v2316 = vmul.f32 %v2306, %v2314
    %v2317 = vpack.c.bf16 %v2315, %v2315
    %v2318 = vpack.c.bf16 %v2316, %v2316
    %2319 = vrot.lane.b32.xlu0 %v1654, 48
    %v2320 = vpop.permute.xlu0 %2319
    %v2322 = vsel %vm238, %v2317, 0
    %v2325 = vsel %vm363, %v2320, 0
    %2327 = vmatprep.subr.bf16.mxu0 0
    %2328 = vmatpush1.bf16.msra.mxu0 0
    %2329 = vmatprep.subr.bf16.mxu0 0
    %2330 = vmatpush1.bf16.msra.mxu0 0
    %2331 = vmatprep.subr.bf16.mxu0 0
    %2332 = vmatpush1.bf16.msra.mxu0 0
    %2333 = vmatprep.subr.bf16.mxu0 0
    %2334 = vmatpush1.bf16.msra.mxu0 0
    %2335 = vmatprep.subr.bf16.mxu0 0
    %2336 = vmatpush1.bf16.msra.mxu0 0
    %2337 = vmatprep.subr.bf16.mxu0 0
    %2338 = vmatpush1.bf16.msra.mxu0 0
    %2339 = vmatprep.subr.bf16.mxu0 0
    %2340 = vmatpush1.bf16.msra.mxu0 0
    %2341 = vmatprep.subr.bf16.mxu0 0
    %2342 = vmatpush1.bf16.msra.mxu0 %v2325
    %2343 = vmatprep.subr.bf16.mxu0 0
    %2344 = vmatpush2.bf16.msra.mxu0 0
    %2345 = vmatprep.subr.bf16.mxu0 0
    %2346 = vmatpush2.bf16.msra.mxu0 0
    %2347 = vmatprep.subr.bf16.mxu0 0
    %2348 = vmatpush2.bf16.msra.mxu0 0
    %2349 = vmatprep.subr.bf16.mxu0 0
    %2350 = vmatpush2.bf16.msra.mxu0 0
    %2351 = vmatprep.subr.bf16.mxu0 0
    %2352 = vmatpush2.bf16.msra.mxu0 0
    %2353 = vmatprep.subr.bf16.mxu0 0
    %2354 = vmatpush2.bf16.msra.mxu0 0
    %2355 = vmatprep.subr.bf16.mxu0 0
    %2356 = vmatpush2.bf16.msra.mxu0 0
    %2357 = vmatprep.subr.bf16.mxu0 0
    %2358 = vmatpush2.bf16.msra.mxu0 0
    %2359 = vmatprep.mubr.bf16.mxu0 0
    %2360 = vmatmul.mubr.bf16.gmra.mxu0 %v2322
    %v2361 = vpop.f32.mrf.mxu0
    %v2362 = vadd.f32 0.0, %v2361
    %v2363 = vpop.f32.mrf.mxu0
    %v2364 = vpop.f32.mrf.mxu0
    %v2365 = vpop.f32.mrf.mxu0
    %2366 = vdwg.mxu0
    %2367 = vrot.lane.b32.xlu0 %v1655, 48
    %v2368 = vpop.permute.xlu0 %2367
    %v2370 = vsel %vm238, %v2318, 0
    %v2373 = vsel %vm363, %v2368, 0
    %2375 = vmatprep.subr.bf16.mxu0 0
    %2376 = vmatpush1.bf16.msra.mxu0 0
    %2377 = vmatprep.subr.bf16.mxu0 0
    %2378 = vmatpush1.bf16.msra.mxu0 0
    %2379 = vmatprep.subr.bf16.mxu0 0
    %2380 = vmatpush1.bf16.msra.mxu0 0
    %2381 = vmatprep.subr.bf16.mxu0 0
    %2382 = vmatpush1.bf16.msra.mxu0 0
    %2383 = vmatprep.subr.bf16.mxu0 0
    %2384 = vmatpush1.bf16.msra.mxu0 0
    %2385 = vmatprep.subr.bf16.mxu0 0
    %2386 = vmatpush1.bf16.msra.mxu0 0
    %2387 = vmatprep.subr.bf16.mxu0 0
    %2388 = vmatpush1.bf16.msra.mxu0 0
    %2389 = vmatprep.subr.bf16.mxu0 0
    %2390 = vmatpush1.bf16.msra.mxu0 %v2373
    %2391 = vmatprep.subr.bf16.mxu0 0
    %2392 = vmatpush2.bf16.msra.mxu0 0
    %2393 = vmatprep.subr.bf16.mxu0 0
    %2394 = vmatpush2.bf16.msra.mxu0 0
    %2395 = vmatprep.subr.bf16.mxu0 0
    %2396 = vmatpush2.bf16.msra.mxu0 0
    %2397 = vmatprep.subr.bf16.mxu0 0
    %2398 = vmatpush2.bf16.msra.mxu0 0
    %2399 = vmatprep.subr.bf16.mxu0 0
    %2400 = vmatpush2.bf16.msra.mxu0 0
    %2401 = vmatprep.subr.bf16.mxu0 0
    %2402 = vmatpush2.bf16.msra.mxu0 0
    %2403 = vmatprep.subr.bf16.mxu0 0
    %2404 = vmatpush2.bf16.msra.mxu0 0
    %2405 = vmatprep.subr.bf16.mxu0 0
    %2406 = vmatpush2.bf16.msra.mxu0 0
    %2407 = vmatprep.mubr.bf16.mxu0 0
    %2408 = vmatmul.mubr.bf16.gmra.mxu0 %v2370
    %v2409 = vpop.f32.mrf.mxu0
    %v2410 = vadd.f32 0.0, %v2409
    %v2411 = vpop.f32.mrf.mxu0
    %v2412 = vpop.f32.mrf.mxu0
    %v2413 = vpop.f32.mrf.mxu0
    %2414 = vdwg.mxu0
    %v2415 = vpack.c.bf16 %v2410, %v2362
    %v2417 = vsel %vm238, %v2415, 0
    %v2420 = vsel %vm363, %v1659, 0
    %2422 = vmatprep.subr.bf16.mxu0 0
    %2423 = vmatpush1.bf16.msra.mxu0 0
    %2424 = vmatprep.subr.bf16.mxu0 0
    %2425 = vmatpush1.bf16.msra.mxu0 0
    %2426 = vmatprep.subr.bf16.mxu0 0
    %2427 = vmatpush1.bf16.msra.mxu0 0
    %2428 = vmatprep.subr.bf16.mxu0 0
    %2429 = vmatpush1.bf16.msra.mxu0 0
    %2430 = vmatprep.subr.bf16.mxu0 0
    %2431 = vmatpush1.bf16.msra.mxu0 0
    %2432 = vmatprep.subr.bf16.mxu0 0
    %2433 = vmatpush1.bf16.msra.mxu0 0
    %2434 = vmatprep.subr.bf16.mxu0 0
    %2435 = vmatpush1.bf16.msra.mxu0 0
    %2436 = vmatprep.subr.bf16.mxu0 0
    %2437 = vmatpush1.bf16.msra.mxu0 %v2420
    %2438 = vmatprep.subr.bf16.mxu0 0
    %2439 = vmatpush2.bf16.msra.mxu0 0
    %2440 = vmatprep.subr.bf16.mxu0 0
    %2441 = vmatpush2.bf16.msra.mxu0 0
    %2442 = vmatprep.subr.bf16.mxu0 0
    %2443 = vmatpush2.bf16.msra.mxu0 0
    %2444 = vmatprep.subr.bf16.mxu0 0
    %2445 = vmatpush2.bf16.msra.mxu0 0
    %2446 = vmatprep.subr.bf16.mxu0 0
    %2447 = vmatpush2.bf16.msra.mxu0 0
    %2448 = vmatprep.subr.bf16.mxu0 0
    %2449 = vmatpush2.bf16.msra.mxu0 0
    %2450 = vmatprep.subr.bf16.mxu0 0
    %2451 = vmatpush2.bf16.msra.mxu0 0
    %2452 = vmatprep.subr.bf16.mxu0 0
    %2453 = vmatpush2.bf16.msra.mxu0 0
    %2454 = vmatprep.mubr.bf16.mxu0 0
    %2455 = vmatmul.mubr.bf16.gmra.mxu0 %v2417
    %v2456 = vpop.f32.mrf.mxu0
    %v2457 = vadd.f32 0.0, %v2456
    %v2458 = vpop.f32.mrf.mxu0
    %v2459 = vpop.f32.mrf.mxu0
    %v2460 = vadd.f32 0.0, %v2459
    %v2461 = vpop.f32.mrf.mxu0
    %2462 = vdwg.mxu0
    %v2463 = vadd.f32 %v2189, %v2457
    %v2464 = vadd.f32 %v2192, %v2460
    %2465 = vrot.lane.b32.xlu0 %v1654, 104
    %v2466 = vpop.permute.xlu0 %2465
    %2467 = vrot.lane.b32.xlu0 %v1654, 72
    %v2468 = vpop.permute.xlu0 %2467
    %v2470 = vsel %vm238, %v2466, 0
    %v2473 = vsel %vm238, %v2468, 0
    %2475 = vmatprep.subr.bf16.mxu0 0
    %2476 = vmatpush1.bf16.xpose.msra.mxu0 0
    %2477 = vmatprep.subr.bf16.mxu0 0
    %2478 = vmatpush1.bf16.xpose.msra.mxu0 0
    %2479 = vmatprep.subr.bf16.mxu0 0
    %2480 = vmatpush1.bf16.xpose.msra.mxu0 0
    %2481 = vmatprep.subr.bf16.mxu0 0
    %2482 = vmatpush1.bf16.xpose.msra.mxu0 0
    %2483 = vmatprep.subr.bf16.mxu0 0
    %2484 = vmatpush1.bf16.xpose.msra.mxu0 0
    %2485 = vmatprep.subr.bf16.mxu0 0
    %2486 = vmatpush1.bf16.xpose.msra.mxu0 0
    %2487 = vmatprep.subr.bf16.mxu0 0
    %2488 = vmatpush1.bf16.xpose.msra.mxu0 0
    %2489 = vmatprep.subr.bf16.mxu0 0
    %2490 = vmatpush1.bf16.xpose.msra.mxu0 %v2473
    %2491 = vmatprep.subr.bf16.mxu0 0
    %2492 = vmatpush2.bf16.xpose.msra.mxu0 0
    %2493 = vmatprep.subr.bf16.mxu0 0
    %2494 = vmatpush2.bf16.xpose.msra.mxu0 0
    %2495 = vmatprep.subr.bf16.mxu0 0
    %2496 = vmatpush2.bf16.xpose.msra.mxu0 0
    %2497 = vmatprep.subr.bf16.mxu0 0
    %2498 = vmatpush2.bf16.xpose.msra.mxu0 0
    %2499 = vmatprep.subr.bf16.mxu0 0
    %2500 = vmatpush2.bf16.xpose.msra.mxu0 0
    %2501 = vmatprep.subr.bf16.mxu0 0
    %2502 = vmatpush2.bf16.xpose.msra.mxu0 0
    %2503 = vmatprep.subr.bf16.mxu0 0
    %2504 = vmatpush2.bf16.xpose.msra.mxu0 0
    %2505 = vmatprep.subr.bf16.mxu0 0
    %2506 = vmatpush2.bf16.xpose.msra.mxu0 0
    %2507 = vmatprep.mubr.bf16.mxu0 0
    %2508 = vmatmul.mubr.bf16.gmra.mxu0 %v2470
    %v2509 = vpop.f32.mrf.mxu0
    %v2510 = vadd.f32 %v103, %v2509
    %v2511 = vpop.f32.mrf.mxu0
    %v2512 = vpop.f32.mrf.mxu0
    %v2513 = vpop.f32.mrf.mxu0
    %2514 = vdwg.mxu0
    %2515 = vrot.lane.b32.xlu0 %v1655, 104
    %v2516 = vpop.permute.xlu0 %2515
    %2517 = vrot.lane.b32.xlu0 %v1655, 72
    %v2518 = vpop.permute.xlu0 %2517
    %v2520 = vsel %vm238, %v2516, 0
    %v2523 = vsel %vm238, %v2518, 0
    %2525 = vmatprep.subr.bf16.mxu0 0
    %2526 = vmatpush1.bf16.xpose.msra.mxu0 0
    %2527 = vmatprep.subr.bf16.mxu0 0
    %2528 = vmatpush1.bf16.xpose.msra.mxu0 0
    %2529 = vmatprep.subr.bf16.mxu0 0
    %2530 = vmatpush1.bf16.xpose.msra.mxu0 0
    %2531 = vmatprep.subr.bf16.mxu0 0
    %2532 = vmatpush1.bf16.xpose.msra.mxu0 0
    %2533 = vmatprep.subr.bf16.mxu0 0
    %2534 = vmatpush1.bf16.xpose.msra.mxu0 0
    %2535 = vmatprep.subr.bf16.mxu0 0
    %2536 = vmatpush1.bf16.xpose.msra.mxu0 0
    %2537 = vmatprep.subr.bf16.mxu0 0
    %2538 = vmatpush1.bf16.xpose.msra.mxu0 0
    %2539 = vmatprep.subr.bf16.mxu0 0
    %2540 = vmatpush1.bf16.xpose.msra.mxu0 %v2523
    %2541 = vmatprep.subr.bf16.mxu0 0
    %2542 = vmatpush2.bf16.xpose.msra.mxu0 0
    %2543 = vmatprep.subr.bf16.mxu0 0
    %2544 = vmatpush2.bf16.xpose.msra.mxu0 0
    %2545 = vmatprep.subr.bf16.mxu0 0
    %2546 = vmatpush2.bf16.xpose.msra.mxu0 0
    %2547 = vmatprep.subr.bf16.mxu0 0
    %2548 = vmatpush2.bf16.xpose.msra.mxu0 0
    %2549 = vmatprep.subr.bf16.mxu0 0
    %2550 = vmatpush2.bf16.xpose.msra.mxu0 0
    %2551 = vmatprep.subr.bf16.mxu0 0
    %2552 = vmatpush2.bf16.xpose.msra.mxu0 0
    %2553 = vmatprep.subr.bf16.mxu0 0
    %2554 = vmatpush2.bf16.xpose.msra.mxu0 0
    %2555 = vmatprep.subr.bf16.mxu0 0
    %2556 = vmatpush2.bf16.xpose.msra.mxu0 0
    %2557 = vmatprep.mubr.bf16.mxu0 0
    %2558 = vmatmul.mubr.bf16.gmra.mxu0 %v2520
    %v2559 = vpop.f32.mrf.mxu0
    %v2560 = vadd.f32 %v107, %v2559
    %v2561 = vpop.f32.mrf.mxu0
    %v2562 = vpop.f32.mrf.mxu0
    %v2563 = vpop.f32.mrf.mxu0
    %2564 = vdwg.mxu0
    %v2565 = vsel %vm238, %v2510, -inf
    %2566 = vmax.xlane.f32.xlu0 %v2565
    %v2567 = vpop.xlane.xlu0 %2566
    %v2568 = vsel %vm238, %v2560, -inf
    %2569 = vmax.xlane.f32.xlu0 %v2568
    %v2570 = vpop.xlane.xlu0 %2569
    %v2571 = vsub.f32 %v2510, %v2567
    %v2572 = vsub.f32 %v2560, %v2570
    %v2573 = vmul.f32 %v2571, 1.442695
    %v2574 = vpow.pop %v2573
    %v2575 = vmul.f32 %v2572, 1.442695
    %v2576 = vpow.pop %v2575
    %v2577 = vsel %vm238, %v2574, 0.0
    %2578 = vadd.xlane.f32.xlu0 %v2577
    %v2579 = vpop.xlane.xlu0 %2578
    %v2580 = vsel %vm238, %v2576, 0.0
    %2581 = vadd.xlane.f32.xlu0 %v2580
    %v2582 = vpop.xlane.xlu0 %2581
    %v2583 = vrcp.pop %v2579
    %v2584 = vrcp.pop %v2582
    %v2585 = vmul.f32 %v2574, %v2583
    %v2586 = vmul.f32 %v2576, %v2584
    %v2587 = vpack.c.bf16 %v2585, %v2585
    %v2588 = vpack.c.bf16 %v2586, %v2586
    %2589 = vrot.lane.b32.xlu0 %v1654, 40
    %v2590 = vpop.permute.xlu0 %2589
    %v2592 = vsel %vm238, %v2587, 0
    %v2595 = vsel %vm363, %v2590, 0
    %2597 = vmatprep.subr.bf16.mxu0 0
    %2598 = vmatpush1.bf16.msra.mxu0 0
    %2599 = vmatprep.subr.bf16.mxu0 0
    %2600 = vmatpush1.bf16.msra.mxu0 0
    %2601 = vmatprep.subr.bf16.mxu0 0
    %2602 = vmatpush1.bf16.msra.mxu0 0
    %2603 = vmatprep.subr.bf16.mxu0 0
    %2604 = vmatpush1.bf16.msra.mxu0 0
    %2605 = vmatprep.subr.bf16.mxu0 0
    %2606 = vmatpush1.bf16.msra.mxu0 0
    %2607 = vmatprep.subr.bf16.mxu0 0
    %2608 = vmatpush1.bf16.msra.mxu0 0
    %2609 = vmatprep.subr.bf16.mxu0 0
    %2610 = vmatpush1.bf16.msra.mxu0 0
    %2611 = vmatprep.subr.bf16.mxu0 0
    %2612 = vmatpush1.bf16.msra.mxu0 %v2595
    %2613 = vmatprep.subr.bf16.mxu0 0
    %2614 = vmatpush2.bf16.msra.mxu0 0
    %2615 = vmatprep.subr.bf16.mxu0 0
    %2616 = vmatpush2.bf16.msra.mxu0 0
    %2617 = vmatprep.subr.bf16.mxu0 0
    %2618 = vmatpush2.bf16.msra.mxu0 0
    %2619 = vmatprep.subr.bf16.mxu0 0
    %2620 = vmatpush2.bf16.msra.mxu0 0
    %2621 = vmatprep.subr.bf16.mxu0 0
    %2622 = vmatpush2.bf16.msra.mxu0 0
    %2623 = vmatprep.subr.bf16.mxu0 0
    %2624 = vmatpush2.bf16.msra.mxu0 0
    %2625 = vmatprep.subr.bf16.mxu0 0
    %2626 = vmatpush2.bf16.msra.mxu0 0
    %2627 = vmatprep.subr.bf16.mxu0 0
    %2628 = vmatpush2.bf16.msra.mxu0 0
    %2629 = vmatprep.mubr.bf16.mxu0 0
    %2630 = vmatmul.mubr.bf16.gmra.mxu0 %v2592
    %v2631 = vpop.f32.mrf.mxu0
    %v2632 = vadd.f32 0.0, %v2631
    %v2633 = vpop.f32.mrf.mxu0
    %v2634 = vpop.f32.mrf.mxu0
    %v2635 = vpop.f32.mrf.mxu0
    %2636 = vdwg.mxu0
    %2637 = vrot.lane.b32.xlu0 %v1655, 40
    %v2638 = vpop.permute.xlu0 %2637
    %v2640 = vsel %vm238, %v2588, 0
    %v2643 = vsel %vm363, %v2638, 0
    %2645 = vmatprep.subr.bf16.mxu0 0
    %2646 = vmatpush1.bf16.msra.mxu0 0
    %2647 = vmatprep.subr.bf16.mxu0 0
    %2648 = vmatpush1.bf16.msra.mxu0 0
    %2649 = vmatprep.subr.bf16.mxu0 0
    %2650 = vmatpush1.bf16.msra.mxu0 0
    %2651 = vmatprep.subr.bf16.mxu0 0
    %2652 = vmatpush1.bf16.msra.mxu0 0
    %2653 = vmatprep.subr.bf16.mxu0 0
    %2654 = vmatpush1.bf16.msra.mxu0 0
    %2655 = vmatprep.subr.bf16.mxu0 0
    %2656 = vmatpush1.bf16.msra.mxu0 0
    %2657 = vmatprep.subr.bf16.mxu0 0
    %2658 = vmatpush1.bf16.msra.mxu0 0
    %2659 = vmatprep.subr.bf16.mxu0 0
    %2660 = vmatpush1.bf16.msra.mxu0 %v2643
    %2661 = vmatprep.subr.bf16.mxu0 0
    %2662 = vmatpush2.bf16.msra.mxu0 0
    %2663 = vmatprep.subr.bf16.mxu0 0
    %2664 = vmatpush2.bf16.msra.mxu0 0
    %2665 = vmatprep.subr.bf16.mxu0 0
    %2666 = vmatpush2.bf16.msra.mxu0 0
    %2667 = vmatprep.subr.bf16.mxu0 0
    %2668 = vmatpush2.bf16.msra.mxu0 0
    %2669 = vmatprep.subr.bf16.mxu0 0
    %2670 = vmatpush2.bf16.msra.mxu0 0
    %2671 = vmatprep.subr.bf16.mxu0 0
    %2672 = vmatpush2.bf16.msra.mxu0 0
    %2673 = vmatprep.subr.bf16.mxu0 0
    %2674 = vmatpush2.bf16.msra.mxu0 0
    %2675 = vmatprep.subr.bf16.mxu0 0
    %2676 = vmatpush2.bf16.msra.mxu0 0
    %2677 = vmatprep.mubr.bf16.mxu0 0
    %2678 = vmatmul.mubr.bf16.gmra.mxu0 %v2640
    %v2679 = vpop.f32.mrf.mxu0
    %v2680 = vadd.f32 0.0, %v2679
    %v2681 = vpop.f32.mrf.mxu0
    %v2682 = vpop.f32.mrf.mxu0
    %v2683 = vpop.f32.mrf.mxu0
    %2684 = vdwg.mxu0
    %v2685 = vpack.c.bf16 %v2680, %v2632
    %v2687 = vsel %vm238, %v2685, 0
    %v2690 = vsel %vm363, %v1660, 0
    %2692 = vmatprep.subr.bf16.mxu0 0
    %2693 = vmatpush1.bf16.msra.mxu0 0
    %2694 = vmatprep.subr.bf16.mxu0 0
    %2695 = vmatpush1.bf16.msra.mxu0 0
    %2696 = vmatprep.subr.bf16.mxu0 0
    %2697 = vmatpush1.bf16.msra.mxu0 0
    %2698 = vmatprep.subr.bf16.mxu0 0
    %2699 = vmatpush1.bf16.msra.mxu0 0
    %2700 = vmatprep.subr.bf16.mxu0 0
    %2701 = vmatpush1.bf16.msra.mxu0 0
    %2702 = vmatprep.subr.bf16.mxu0 0
    %2703 = vmatpush1.bf16.msra.mxu0 0
    %2704 = vmatprep.subr.bf16.mxu0 0
    %2705 = vmatpush1.bf16.msra.mxu0 0
    %2706 = vmatprep.subr.bf16.mxu0 0
    %2707 = vmatpush1.bf16.msra.mxu0 %v2690
    %2708 = vmatprep.subr.bf16.mxu0 0
    %2709 = vmatpush2.bf16.msra.mxu0 0
    %2710 = vmatprep.subr.bf16.mxu0 0
    %2711 = vmatpush2.bf16.msra.mxu0 0
    %2712 = vmatprep.subr.bf16.mxu0 0
    %2713 = vmatpush2.bf16.msra.mxu0 0
    %2714 = vmatprep.subr.bf16.mxu0 0
    %2715 = vmatpush2.bf16.msra.mxu0 0
    %2716 = vmatprep.subr.bf16.mxu0 0
    %2717 = vmatpush2.bf16.msra.mxu0 0
    %2718 = vmatprep.subr.bf16.mxu0 0
    %2719 = vmatpush2.bf16.msra.mxu0 0
    %2720 = vmatprep.subr.bf16.mxu0 0
    %2721 = vmatpush2.bf16.msra.mxu0 0
    %2722 = vmatprep.subr.bf16.mxu0 0
    %2723 = vmatpush2.bf16.msra.mxu0 0
    %2724 = vmatprep.mubr.bf16.mxu0 0
    %2725 = vmatmul.mubr.bf16.gmra.mxu0 %v2687
    %v2726 = vpop.f32.mrf.mxu0
    %v2727 = vadd.f32 0.0, %v2726
    %v2728 = vpop.f32.mrf.mxu0
    %v2729 = vpop.f32.mrf.mxu0
    %v2730 = vadd.f32 0.0, %v2729
    %v2731 = vpop.f32.mrf.mxu0
    %2732 = vdwg.mxu0
    %v2733 = vadd.f32 %v2463, %v2727
    %v2734 = vadd.f32 %v2464, %v2730
    %s2735 = scalar_lea.vmem %s6, 1
    %v2736 = vld [vmem:[%s2735] sm:$0x1]
    %v2738 = vlaneseq
    %v2739 = vshrl.u32 %v2738, 7
    %v2740 = vsub.s32 0, %v2739
    %v2741 = vrot.slane %v2736, %v2740
    %v2743 = vadd.f32 %v2733, %v2741
    %v2744 = vadd.f32 %v2734, %v2741
    %v2745 = vadd.f32 %v1582, %v2743
    %v2746 = vadd.f32 %v1583, %v2744
    %s2747 = scalar_lea.vmem %s7, 1
    %v2748 = vld [vmem:[%s2747] sm:$0x1]
    %s2749 = scalar_lea.vmem %s8, 1
    %v2750 = vld [vmem:[%s2749] sm:$0x1]
    %v2751 = vsel %vm184, %v2745, 0.0
    %2752 = vadd.xlane.f32.xlu0 %v2751
    %v2753 = vpop.xlane.xlu0 %2752
    %v2754 = vsel %vm184, %v2746, 0.0
    %2755 = vadd.xlane.f32.xlu0 %v2754
    %v2756 = vpop.xlane.xlu0 %2755
    %v2757 = vmul.f32 %v2753, %v1330
    %v2758 = vmul.f32 %v2756, %v1330
    %v2759 = vsub.f32 %v2745, %v2757
    %v2760 = vsub.f32 %v2746, %v2758
    %v2761 = vmul.f32 %v2759, %v2759
    %v2762 = vmul.f32 %v2760, %v2760
    %v2763 = vsel %vm184, %v2761, 0.0
    %2764 = vadd.xlane.f32.xlu0 %v2763
    %v2765 = vpop.xlane.xlu0 %2764
    %v2766 = vsel %vm184, %v2762, 0.0
    %2767 = vadd.xlane.f32.xlu0 %v2766
    %v2768 = vpop.xlane.xlu0 %2767
    %v2769 = vmul.f32 %v2765, %v1330
    %v2770 = vmul.f32 %v2768, %v1330
    %v2771 = vadd.f32 %v2769, 1e-12
    %v2772 = vadd.f32 %v2770, 1e-12
    %v2773 = vrsqrt.pop %v2771
    %v2774 = vrsqrt.pop %v2772
    %v2775 = vmul.f32 %v2759, %v2773
    %v2776 = vmul.f32 %v2760, %v2774
    %v2778 = vlaneseq
    %v2779 = vshrl.u32 %v2778, 7
    %v2780 = vsub.s32 0, %v2779
    %v2781 = vrot.slane %v2748, %v2780
    %v2783 = vmul.f32 %v2775, %v2781
    %v2784 = vmul.f32 %v2776, %v2781
    %v2786 = vlaneseq
    %v2787 = vshrl.u32 %v2786, 7
    %v2788 = vsub.s32 0, %v2787
    %v2789 = vrot.slane %v2750, %v2788
    %v2791 = vadd.f32 %v2783, %v2789
    %v2792 = vadd.f32 %v2784, %v2789
    %v2793 = vpack.c.bf16 %v2792, %v2791
    %s2794 = scalar_lea.vmem %s9, 16
    %v2795 = vld [vmem:[%s2794] sm:$0xf]
    %v2796 = vld [vmem:[%s2794 + $0x4] sm:$0xf]
    %v2797 = vld [vmem:[%s2794 + $0x8] sm:$0xf]
    %v2798 = vld [vmem:[%s2794 + $0xc] sm:$0xf]
    %s2799 = scalar_lea.vmem %s10, 1
    %v2800 = vld [vmem:[%s2799] sm:$0x1]
    %v2802 = vlaneseq
    %v2803 = vshrl.u32 %v2802, 7
    %v2804 = vsub.s32 0, %v2803
    %v2805 = vrot.slane %v2800, %v2804
    %v2811 = vunpack.c.l.b16 %v2795
    %v2812 = vunpack.c.l.b16 %v2796
    %v2813 = vunpack.c.l.b16 %v2797
    %v2814 = vunpack.c.l.b16 %v2798
    %v2815 = vpack.c.b16 %v2812, %v2811
    %v2816 = vpack.c.b16 %v2814, %v2813
    %v2820 = vsel %vm184, %v2793, 0
    %2822 = vmatprep.subr.bf16.mxu0 0
    %2823 = vmatpush1.bf16.msra.mxu0 0
    %2824 = vmatprep.subr.bf16.mxu0 0
    %2825 = vmatpush1.bf16.msra.mxu0 0
    %2826 = vmatprep.subr.bf16.mxu0 0
    %2827 = vmatpush1.bf16.msra.mxu0 0
    %2828 = vmatprep.subr.bf16.mxu0 0
    %2829 = vmatpush1.bf16.msra.mxu0 0
    %2830 = vmatprep.subr.bf16.mxu0 0
    %2831 = vmatpush1.bf16.msra.mxu0 0
    %2832 = vmatprep.subr.bf16.mxu0 0
    %2833 = vmatpush1.bf16.msra.mxu0 0
    %2834 = vmatprep.subr.bf16.mxu0 0
    %2835 = vmatpush1.bf16.msra.mxu0 %v2816
    %2836 = vmatprep.subr.bf16.mxu0 0
    %2837 = vmatpush1.bf16.msra.mxu0 %v2815
    %2838 = vmatprep.subr.bf16.mxu0 0
    %2839 = vmatpush2.bf16.msra.mxu0 0
    %2840 = vmatprep.subr.bf16.mxu0 0
    %2841 = vmatpush2.bf16.msra.mxu0 0
    %2842 = vmatprep.subr.bf16.mxu0 0
    %2843 = vmatpush2.bf16.msra.mxu0 0
    %2844 = vmatprep.subr.bf16.mxu0 0
    %2845 = vmatpush2.bf16.msra.mxu0 0
    %2846 = vmatprep.subr.bf16.mxu0 0
    %2847 = vmatpush2.bf16.msra.mxu0 0
    %2848 = vmatprep.subr.bf16.mxu0 0
    %2849 = vmatpush2.bf16.msra.mxu0 0
    %2850 = vmatprep.subr.bf16.mxu0 0
    %2851 = vmatpush2.bf16.msra.mxu0 0
    %2852 = vmatprep.subr.bf16.mxu0 0
    %2853 = vmatpush2.bf16.msra.mxu0 0
    %2854 = vmatprep.mubr.bf16.mxu0 0
    %2855 = vmatmul.mubr.bf16.gmra.mxu0 %v2820
    %v2856 = vpop.f32.mrf.mxu0
    %v2857 = vadd.f32 %v2805, %v2856
    %v2858 = vpop.f32.mrf.mxu0
    %v2859 = vpop.f32.mrf.mxu0
    %v2860 = vadd.f32 %v2805, %v2859
    %v2861 = vpop.f32.mrf.mxu0
    %2862 = vdwg.mxu0
    %v2863 = vmul.f32 %v2857, 0.5
    %v2864 = vmul.f32 %v2860, 0.5
    %v2865 = vmul.f32 %v2857, 0.044715
    %v2866 = vmul.f32 %v2860, 0.044715
    %v2867 = vmul.f32 %v2865, %v2857
    %v2868 = vmul.f32 %v2866, %v2860
    %v2869 = vmul.f32 %v2867, %v2857
    %v2870 = vmul.f32 %v2868, %v2860
    %v2871 = vadd.f32 %v2857, %v2869
    %v2872 = vadd.f32 %v2860, %v2870
    %v2873 = vmul.f32 %v2871, 0.7978846
    %v2874 = vmul.f32 %v2872, 0.7978846
    %v2875 = vtanh.pop %v2873
    %v2876 = vtanh.pop %v2874
    %v2877 = vadd.f32 %v2875, 1.0
    %v2878 = vadd.f32 %v2876, 1.0
    %v2879 = vmul.f32 %v2863, %v2877
    %v2880 = vmul.f32 %v2864, %v2878
    %v2881 = vpack.c.bf16 %v2880, %v2879
    %s2882 = scalar_lea.vmem %s11, 32
    %v2883 = vld [vmem:[%s2882] sm:$0xf]
    %v2884 = vld [vmem:[%s2882 + $0x4] sm:$0xf]
    %v2885 = vld [vmem:[%s2882 + $0x8] sm:$0xf]
    %v2886 = vld [vmem:[%s2882 + $0xc] sm:$0xf]
    %v2887 = vld [vmem:[%s2882 + $0x10] sm:$0xf]
    %v2888 = vld [vmem:[%s2882 + $0x14] sm:$0xf]
    %v2889 = vld [vmem:[%s2882 + $0x18] sm:$0xf]
    %v2890 = vld [vmem:[%s2882 + $0x1c] sm:$0xf]
    %s2891 = scalar_lea.vmem [#allocation4], 1
    %v2892 = vld [vmem:[%s2891] sm:$0x1]
    %v2894 = vlaneseq
    %v2895 = vshrl.u32 %v2894, 7
    %v2896 = vsub.s32 0, %v2895
    %v2897 = vrot.slane %v2892, %v2896
    %v2907 = vunpack.c.l.b16 %v2883
    %v2908 = vunpack.c.l.b16 %v2884
    %v2909 = vunpack.c.l.b16 %v2885
    %v2910 = vunpack.c.l.b16 %v2886
    %v2911 = vunpack.c.l.b16 %v2887
    %v2912 = vunpack.c.l.b16 %v2888
    %v2913 = vunpack.c.l.b16 %v2889
    %v2914 = vunpack.c.l.b16 %v2890
    %v2915 = vpack.c.b16 %v2908, %v2907
    %v2916 = vpack.c.b16 %v2910, %v2909
    %v2917 = vpack.c.b16 %v2912, %v2911
    %v2918 = vpack.c.b16 %v2914, %v2913
    %v2924 = vsel %vm1493, %v2881, 0
    %2926 = vmatprep.subr.bf16.mxu0 0
    %2927 = vmatpush1.bf16.msra.mxu0 0
    %2928 = vmatprep.subr.bf16.mxu0 0
    %2929 = vmatpush1.bf16.msra.mxu0 0
    %2930 = vmatprep.subr.bf16.mxu0 0
    %2931 = vmatpush1.bf16.msra.mxu0 0
    %2932 = vmatprep.subr.bf16.mxu0 0
    %2933 = vmatpush1.bf16.msra.mxu0 0
    %2934 = vmatprep.subr.bf16.mxu0 0
    %2935 = vmatpush1.bf16.msra.mxu0 %v2918
    %2936 = vmatprep.subr.bf16.mxu0 0
    %2937 = vmatpush1.bf16.msra.mxu0 %v2917
    %2938 = vmatprep.subr.bf16.mxu0 0
    %2939 = vmatpush1.bf16.msra.mxu0 %v2916
    %2940 = vmatprep.subr.bf16.mxu0 0
    %2941 = vmatpush1.bf16.msra.mxu0 %v2915
    %2942 = vmatprep.subr.bf16.mxu0 0
    %2943 = vmatpush2.bf16.msra.mxu0 0
    %2944 = vmatprep.subr.bf16.mxu0 0
    %2945 = vmatpush2.bf16.msra.mxu0 0
    %2946 = vmatprep.subr.bf16.mxu0 0
    %2947 = vmatpush2.bf16.msra.mxu0 0
    %2948 = vmatprep.subr.bf16.mxu0 0
    %2949 = vmatpush2.bf16.msra.mxu0 0
    %2950 = vmatprep.subr.bf16.mxu0 0
    %2951 = vmatpush2.bf16.msra.mxu0 0
    %2952 = vmatprep.subr.bf16.mxu0 0
    %2953 = vmatpush2.bf16.msra.mxu0 0
    %2954 = vmatprep.subr.bf16.mxu0 0
    %2955 = vmatpush2.bf16.msra.mxu0 0
    %2956 = vmatprep.subr.bf16.mxu0 0
    %2957 = vmatpush2.bf16.msra.mxu0 0
    %2958 = vmatprep.mubr.bf16.mxu0 0
    %2959 = vmatmul.mubr.bf16.gmra.mxu0 %v2924
    %v2960 = vpop.f32.mrf.mxu0
    %v2961 = vadd.f32 %v2897, %v2960
    %v2962 = vpop.f32.mrf.mxu0
    %v2963 = vpop.f32.mrf.mxu0
    %v2964 = vadd.f32 %v2897, %v2963
    %v2965 = vpop.f32.mrf.mxu0
    %2966 = vdwg.mxu0
    %v2967 = vadd.f32 %v2791, %v2961
    %v2968 = vadd.f32 %v2792, %v2964
    %s2969 = scalar_lea.vmem [#allocation6], 1
    %v2970 = vld [vmem:[%s2969] sm:$0x1]
    %s2971 = scalar_lea.vmem %s14, 1
    %v2972 = vld [vmem:[%s2971] sm:$0x1]
    %v2973 = vsel %vm184, %v2967, 0.0
    %2974 = vadd.xlane.f32.xlu0 %v2973
    %v2975 = vpop.xlane.xlu0 %2974
    %v2976 = vsel %vm184, %v2968, 0.0
    %2977 = vadd.xlane.f32.xlu0 %v2976
    %v2978 = vpop.xlane.xlu0 %2977
    %v2979 = vmul.f32 %v2975, %v1330
    %v2980 = vmul.f32 %v2978, %v1330
    %v2981 = vsub.f32 %v2967, %v2979
    %v2982 = vsub.f32 %v2968, %v2980
    %v2983 = vmul.f32 %v2981, %v2981
    %v2984 = vmul.f32 %v2982, %v2982
    %v2985 = vsel %vm184, %v2983, 0.0
    %2986 = vadd.xlane.f32.xlu0 %v2985
    %v2987 = vpop.xlane.xlu0 %2986
    %v2988 = vsel %vm184, %v2984, 0.0
    %2989 = vadd.xlane.f32.xlu0 %v2988
    %v2990 = vpop.xlane.xlu0 %2989
    %v2991 = vmul.f32 %v2987, %v1330
    %v2992 = vmul.f32 %v2990, %v1330
    %v2993 = vadd.f32 %v2991, 1e-12
    %v2994 = vadd.f32 %v2992, 1e-12
    %v2995 = vrsqrt.pop %v2993
    %v2996 = vrsqrt.pop %v2994
    %v2997 = vmul.f32 %v2981, %v2995
    %v2998 = vmul.f32 %v2982, %v2996
    %v3000 = vlaneseq
    %v3001 = vshrl.u32 %v3000, 7
    %v3002 = vsub.s32 0, %v3001
    %v3003 = vrot.slane %v2970, %v3002
    %v3005 = vmul.f32 %v2997, %v3003
    %v3006 = vmul.f32 %v2998, %v3003
    %v3008 = vlaneseq
    %v3009 = vshrl.u32 %v3008, 7
    %v3010 = vsub.s32 0, %v3009
    %v3011 = vrot.slane %v2972, %v3010
    %v3013 = vadd.f32 %v3005, %v3011
    %v3014 = vadd.f32 %v3006, %v3011
    %v3016 = vsel %vm238, %v156, 0
    %3018 = vmatprep.subr.mxu0 0.0
    %3019 = vmatpush1.msra.mxu0 0.0
    %3020 = vmatprep.subr.mxu0 0.0
    %3021 = vmatpush1.msra.mxu0 0.0
    %3022 = vmatprep.subr.mxu0 0.0
    %3023 = vmatpush1.msra.mxu0 0.0
    %3024 = vmatprep.subr.mxu0 0.0
    %3025 = vmatpush1.msra.mxu0 0.0
    %3026 = vmatprep.subr.mxu0 0.0
    %3027 = vmatpush1.msra.mxu0 0.0
    %3028 = vmatprep.subr.mxu0 0.0
    %3029 = vmatpush1.msra.mxu0 0.0
    %3030 = vmatprep.subr.mxu0 0.0
    %3031 = vmatpush1.msra.mxu0 0.0
    %3032 = vmatprep.subr.mxu0 0.0
    %3033 = vmatpush1.msra.mxu0 0.0
    %3034 = vmatprep.subr.mxu0 0.0
    %3035 = vmatpush1.msra.mxu0 0.0
    %3036 = vmatprep.subr.mxu0 0.0
    %3037 = vmatpush1.msra.mxu0 0.0
    %3038 = vmatprep.subr.mxu0 0.0
    %3039 = vmatpush1.msra.mxu0 0.0
    %3040 = vmatprep.subr.mxu0 0.0
    %3041 = vmatpush1.msra.mxu0 0.0
    %3042 = vmatprep.subr.mxu0 0.0
    %3043 = vmatpush1.msra.mxu0 0.0
    %3044 = vmatprep.subr.mxu0 0.0
    %3045 = vmatpush1.msra.mxu0 0.0
    %3046 = vmatprep.subr.mxu0 0.0
    %3047 = vmatpush1.msra.mxu0 0.0
    %3048 = vmatprep.subr.mxu0 0.0
    %3049 = vmatpush1.msra.mxu0 %v3013
    %3050 = vmatprep.subr.mxu0 0.0
    %3051 = vmatpush2.msra.mxu0 0.0
    %3052 = vmatprep.subr.mxu0 0.0
    %3053 = vmatpush2.msra.mxu0 0.0
    %3054 = vmatprep.subr.mxu0 0.0
    %3055 = vmatpush2.msra.mxu0 0.0
    %3056 = vmatprep.subr.mxu0 0.0
    %3057 = vmatpush2.msra.mxu0 0.0
    %3058 = vmatprep.subr.mxu0 0.0
    %3059 = vmatpush2.msra.mxu0 0.0
    %3060 = vmatprep.subr.mxu0 0.0
    %3061 = vmatpush2.msra.mxu0 0.0
    %3062 = vmatprep.subr.mxu0 0.0
    %3063 = vmatpush2.msra.mxu0 0.0
    %3064 = vmatprep.subr.mxu0 0.0
    %3065 = vmatpush2.msra.mxu0 0.0
    %3066 = vmatprep.subr.mxu0 0.0
    %3067 = vmatpush2.msra.mxu0 0.0
    %3068 = vmatprep.subr.mxu0 0.0
    %3069 = vmatpush2.msra.mxu0 0.0
    %3070 = vmatprep.subr.mxu0 0.0
    %3071 = vmatpush2.msra.mxu0 0.0
    %3072 = vmatprep.subr.mxu0 0.0
    %3073 = vmatpush2.msra.mxu0 0.0
    %3074 = vmatprep.subr.mxu0 0.0
    %3075 = vmatpush2.msra.mxu0 0.0
    %3076 = vmatprep.subr.mxu0 0.0
    %3077 = vmatpush2.msra.mxu0 0.0
    %3078 = vmatprep.subr.mxu0 0.0
    %3079 = vmatpush2.msra.mxu0 0.0
    %3080 = vmatprep.subr.mxu0 0.0
    %3081 = vmatpush2.msra.mxu0 0.0
    %3082 = vmatprep.mubr.f32.mxu0 0.0
    %3083 = vmatmul.mubr.f32.gmra.mxu0 %v3016
    %v3084 = vpop.f32.mrf.mxu0
    %v3085 = vadd.f32 0.0, %v3084
    %v3086 = vpop.f32.mrf.mxu0
    %3087 = vdwg.mxu0
    %v3089 = vsel %vm238, %v157, 0
    %3091 = vmatprep.subr.mxu0 0.0
    %3092 = vmatpush1.msra.mxu0 0.0
    %3093 = vmatprep.subr.mxu0 0.0
    %3094 = vmatpush1.msra.mxu0 0.0
    %3095 = vmatprep.subr.mxu0 0.0
    %3096 = vmatpush1.msra.mxu0 0.0
    %3097 = vmatprep.subr.mxu0 0.0
    %3098 = vmatpush1.msra.mxu0 0.0
    %3099 = vmatprep.subr.mxu0 0.0
    %3100 = vmatpush1.msra.mxu0 0.0
    %3101 = vmatprep.subr.mxu0 0.0
    %3102 = vmatpush1.msra.mxu0 0.0
    %3103 = vmatprep.subr.mxu0 0.0
    %3104 = vmatpush1.msra.mxu0 0.0
    %3105 = vmatprep.subr.mxu0 0.0
    %3106 = vmatpush1.msra.mxu0 0.0
    %3107 = vmatprep.subr.mxu0 0.0
    %3108 = vmatpush1.msra.mxu0 0.0
    %3109 = vmatprep.subr.mxu0 0.0
    %3110 = vmatpush1.msra.mxu0 0.0
    %3111 = vmatprep.subr.mxu0 0.0
    %3112 = vmatpush1.msra.mxu0 0.0
    %3113 = vmatprep.subr.mxu0 0.0
    %3114 = vmatpush1.msra.mxu0 0.0
    %3115 = vmatprep.subr.mxu0 0.0
    %3116 = vmatpush1.msra.mxu0 0.0
    %3117 = vmatprep.subr.mxu0 0.0
    %3118 = vmatpush1.msra.mxu0 0.0
    %3119 = vmatprep.subr.mxu0 0.0
    %3120 = vmatpush1.msra.mxu0 0.0
    %3121 = vmatprep.subr.mxu0 0.0
    %3122 = vmatpush1.msra.mxu0 %v3014
    %3123 = vmatprep.subr.mxu0 0.0
    %3124 = vmatpush2.msra.mxu0 0.0
    %3125 = vmatprep.subr.mxu0 0.0
    %3126 = vmatpush2.msra.mxu0 0.0
    %3127 = vmatprep.subr.mxu0 0.0
    %3128 = vmatpush2.msra.mxu0 0.0
    %3129 = vmatprep.subr.mxu0 0.0
    %3130 = vmatpush2.msra.mxu0 0.0
    %3131 = vmatprep.subr.mxu0 0.0
    %3132 = vmatpush2.msra.mxu0 0.0
    %3133 = vmatprep.subr.mxu0 0.0
    %3134 = vmatpush2.msra.mxu0 0.0
    %3135 = vmatprep.subr.mxu0 0.0
    %3136 = vmatpush2.msra.mxu0 0.0
    %3137 = vmatprep.subr.mxu0 0.0
    %3138 = vmatpush2.msra.mxu0 0.0
    %3139 = vmatprep.subr.mxu0 0.0
    %3140 = vmatpush2.msra.mxu0 0.0
    %3141 = vmatprep.subr.mxu0 0.0
    %3142 = vmatpush2.msra.mxu0 0.0
    %3143 = vmatprep.subr.mxu0 0.0
    %3144 = vmatpush2.msra.mxu0 0.0
    %3145 = vmatprep.subr.mxu0 0.0
    %3146 = vmatpush2.msra.mxu0 0.0
    %3147 = vmatprep.subr.mxu0 0.0
    %3148 = vmatpush2.msra.mxu0 0.0
    %3149 = vmatprep.subr.mxu0 0.0
    %3150 = vmatpush2.msra.mxu0 0.0
    %3151 = vmatprep.subr.mxu0 0.0
    %3152 = vmatpush2.msra.mxu0 0.0
    %3153 = vmatprep.subr.mxu0 0.0
    %3154 = vmatpush2.msra.mxu0 0.0
    %3155 = vmatprep.mubr.f32.mxu0 0.0
    %3156 = vmatmul.mubr.f32.gmra.mxu0 %v3089
    %v3157 = vpop.f32.mrf.mxu0
    %v3158 = vadd.f32 0.0, %v3157
    %v3159 = vpop.f32.mrf.mxu0
    %3160 = vdwg.mxu0
    %3161 = vmatprep.subr.mxu0 0.0
    %3162 = vmatpush1.msra.mxu0 0.0
    %3163 = vmatprep.subr.mxu0 0.0
    %3164 = vmatpush1.msra.mxu0 0.0
    %3165 = vmatprep.subr.mxu0 0.0
    %3166 = vmatpush1.msra.mxu0 0.0
    %3167 = vmatprep.subr.mxu0 0.0
    %3168 = vmatpush1.msra.mxu0 0.0
    %3169 = vmatprep.subr.mxu0 0.0
    %3170 = vmatpush1.msra.mxu0 0.0
    %3171 = vmatprep.subr.mxu0 0.0
    %3172 = vmatpush1.msra.mxu0 0.0
    %3173 = vmatprep.subr.mxu0 0.0
    %3174 = vmatpush1.msra.mxu0 0.0
    %3175 = vmatprep.subr.mxu0 0.0
    %3176 = vmatpush1.msra.mxu0 0.0
    %3177 = vmatprep.subr.mxu0 0.0
    %3178 = vmatpush1.msra.mxu0 0.0
    %3179 = vmatprep.subr.mxu0 0.0
    %3180 = vmatpush1.msra.mxu0 0.0
    %3181 = vmatprep.subr.mxu0 0.0
    %3182 = vmatpush1.msra.mxu0 0.0
    %3183 = vmatprep.subr.mxu0 0.0
    %3184 = vmatpush1.msra.mxu0 0.0
    %3185 = vmatprep.subr.mxu0 0.0
    %3186 = vmatpush1.msra.mxu0 0.0
    %3187 = vmatprep.subr.mxu0 0.0
    %3188 = vmatpush1.msra.mxu0 0.0
    %3189 = vmatprep.subr.mxu0 0.0
    %3190 = vmatpush1.msra.mxu0 0.0
    %3191 = vmatprep.subr.mxu0 0.0
    %3192 = vmatpush1.msra.mxu0 %v1582
    %3193 = vmatprep.subr.mxu0 0.0
    %3194 = vmatpush2.msra.mxu0 0.0
    %3195 = vmatprep.subr.mxu0 0.0
    %3196 = vmatpush2.msra.mxu0 0.0
    %3197 = vmatprep.subr.mxu0 0.0
    %3198 = vmatpush2.msra.mxu0 0.0
    %3199 = vmatprep.subr.mxu0 0.0
    %3200 = vmatpush2.msra.mxu0 0.0
    %3201 = vmatprep.subr.mxu0 0.0
    %3202 = vmatpush2.msra.mxu0 0.0
    %3203 = vmatprep.subr.mxu0 0.0
    %3204 = vmatpush2.msra.mxu0 0.0
    %3205 = vmatprep.subr.mxu0 0.0
    %3206 = vmatpush2.msra.mxu0 0.0
    %3207 = vmatprep.subr.mxu0 0.0
    %3208 = vmatpush2.msra.mxu0 0.0
    %3209 = vmatprep.subr.mxu0 0.0
    %3210 = vmatpush2.msra.mxu0 0.0
    %3211 = vmatprep.subr.mxu0 0.0
    %3212 = vmatpush2.msra.mxu0 0.0
    %3213 = vmatprep.subr.mxu0 0.0
    %3214 = vmatpush2.msra.mxu0 0.0
    %3215 = vmatprep.subr.mxu0 0.0
    %3216 = vmatpush2.msra.mxu0 0.0
    %3217 = vmatprep.subr.mxu0 0.0
    %3218 = vmatpush2.msra.mxu0 0.0
    %3219 = vmatprep.subr.mxu0 0.0
    %3220 = vmatpush2.msra.mxu0 0.0
    %3221 = vmatprep.subr.mxu0 0.0
    %3222 = vmatpush2.msra.mxu0 0.0
    %3223 = vmatprep.subr.mxu0 0.0
    %3224 = vmatpush2.msra.mxu0 0.0
    %3225 = vmatprep.mubr.f32.mxu0 0.0
    %3226 = vmatmul.mubr.f32.gmra.mxu0 %v3016
    %v3227 = vpop.f32.mrf.mxu0
    %v3228 = vadd.f32 %v3085, %v3227
    %v3229 = vpop.f32.mrf.mxu0
    %3230 = vdwg.mxu0
    %3231 = vmatprep.subr.mxu0 0.0
    %3232 = vmatpush1.msra.mxu0 0.0
    %3233 = vmatprep.subr.mxu0 0.0
    %3234 = vmatpush1.msra.mxu0 0.0
    %3235 = vmatprep.subr.mxu0 0.0
    %3236 = vmatpush1.msra.mxu0 0.0
    %3237 = vmatprep.subr.mxu0 0.0
    %3238 = vmatpush1.msra.mxu0 0.0
    %3239 = vmatprep.subr.mxu0 0.0
    %3240 = vmatpush1.msra.mxu0 0.0
    %3241 = vmatprep.subr.mxu0 0.0
    %3242 = vmatpush1.msra.mxu0 0.0
    %3243 = vmatprep.subr.mxu0 0.0
    %3244 = vmatpush1.msra.mxu0 0.0
    %3245 = vmatprep.subr.mxu0 0.0
    %3246 = vmatpush1.msra.mxu0 0.0
    %3247 = vmatprep.subr.mxu0 0.0
    %3248 = vmatpush1.msra.mxu0 0.0
    %3249 = vmatprep.subr.mxu0 0.0
    %3250 = vmatpush1.msra.mxu0 0.0
    %3251 = vmatprep.subr.mxu0 0.0
    %3252 = vmatpush1.msra.mxu0 0.0
    %3253 = vmatprep.subr.mxu0 0.0
    %3254 = vmatpush1.msra.mxu0 0.0
    %3255 = vmatprep.subr.mxu0 0.0
    %3256 = vmatpush1.msra.mxu0 0.0
    %3257 = vmatprep.subr.mxu0 0.0
    %3258 = vmatpush1.msra.mxu0 0.0
    %3259 = vmatprep.subr.mxu0 0.0
    %3260 = vmatpush1.msra.mxu0 0.0
    %3261 = vmatprep.subr.mxu0 0.0
    %3262 = vmatpush1.msra.mxu0 %v1583
    %3263 = vmatprep.subr.mxu0 0.0
    %3264 = vmatpush2.msra.mxu0 0.0
    %3265 = vmatprep.subr.mxu0 0.0
    %3266 = vmatpush2.msra.mxu0 0.0
    %3267 = vmatprep.subr.mxu0 0.0
    %3268 = vmatpush2.msra.mxu0 0.0
    %3269 = vmatprep.subr.mxu0 0.0
    %3270 = vmatpush2.msra.mxu0 0.0
    %3271 = vmatprep.subr.mxu0 0.0
    %3272 = vmatpush2.msra.mxu0 0.0
    %3273 = vmatprep.subr.mxu0 0.0
    %3274 = vmatpush2.msra.mxu0 0.0
    %3275 = vmatprep.subr.mxu0 0.0
    %3276 = vmatpush2.msra.mxu0 0.0
    %3277 = vmatprep.subr.mxu0 0.0
    %3278 = vmatpush2.msra.mxu0 0.0
    %3279 = vmatprep.subr.mxu0 0.0
    %3280 = vmatpush2.msra.mxu0 0.0
    %3281 = vmatprep.subr.mxu0 0.0
    %3282 = vmatpush2.msra.mxu0 0.0
    %3283 = vmatprep.subr.mxu0 0.0
    %3284 = vmatpush2.msra.mxu0 0.0
    %3285 = vmatprep.subr.mxu0 0.0
    %3286 = vmatpush2.msra.mxu0 0.0
    %3287 = vmatprep.subr.mxu0 0.0
    %3288 = vmatpush2.msra.mxu0 0.0
    %3289 = vmatprep.subr.mxu0 0.0
    %3290 = vmatpush2.msra.mxu0 0.0
    %3291 = vmatprep.subr.mxu0 0.0
    %3292 = vmatpush2.msra.mxu0 0.0
    %3293 = vmatprep.subr.mxu0 0.0
    %3294 = vmatpush2.msra.mxu0 0.0
    %3295 = vmatprep.mubr.f32.mxu0 0.0
    %3296 = vmatmul.mubr.f32.gmra.mxu0 %v3089
    %v3297 = vpop.f32.mrf.mxu0
    %v3298 = vadd.f32 %v3158, %v3297
    %v3299 = vpop.f32.mrf.mxu0
    %3300 = vdwg.mxu0
    %v3301 = vpack.c.bf16 %v3014, %v3013
    %s3302 = scalar_lea.vmem %s3, 32
    %v3303 = vld [vmem:[%s3302] sm:$0xf]
    %v3304 = vld [vmem:[%s3302 + $0x4] sm:$0xf]
    %v3305 = vld [vmem:[%s3302 + $0x8] sm:$0xf]
    %v3306 = vld [vmem:[%s3302 + $0xc] sm:$0xf]
    %s3307 = scalar_lea.vmem %s4, 2
    %v3308 = vld [vmem:[%s3307] sm:$0x1]
    %v3310 = vlaneseq
    %v3311 = vshrl.u32 %v3310, 7
    %v3312 = vsub.s32 0, %v3311
    %v3313 = vrot.slane %v3308, %v3312
    %v3319 = vunpack.c.l.b16 %v3303
    %v3320 = vunpack.c.l.b16 %v3304
    %v3321 = vunpack.c.l.b16 %v3305
    %v3322 = vunpack.c.l.b16 %v3306
    %v3323 = vpack.c.b16 %v3320, %v3319
    %v3324 = vpack.c.b16 %v3322, %v3321
    %v3328 = vsel %vm184, %v3301, 0
    %3330 = vmatprep.subr.bf16.mxu0 0
    %3331 = vmatpush1.bf16.msra.mxu0 0
    %3332 = vmatprep.subr.bf16.mxu0 0
    %3333 = vmatpush1.bf16.msra.mxu0 0
    %3334 = vmatprep.subr.bf16.mxu0 0
    %3335 = vmatpush1.bf16.msra.mxu0 0
    %3336 = vmatprep.subr.bf16.mxu0 0
    %3337 = vmatpush1.bf16.msra.mxu0 0
    %3338 = vmatprep.subr.bf16.mxu0 0
    %3339 = vmatpush1.bf16.msra.mxu0 0
    %3340 = vmatprep.subr.bf16.mxu0 0
    %3341 = vmatpush1.bf16.msra.mxu0 0
    %3342 = vmatprep.subr.bf16.mxu0 0
    %3343 = vmatpush1.bf16.msra.mxu0 %v3324
    %3344 = vmatprep.subr.bf16.mxu0 0
    %3345 = vmatpush1.bf16.msra.mxu0 %v3323
    %3346 = vmatprep.subr.bf16.mxu0 0
    %3347 = vmatpush2.bf16.msra.mxu0 0
    %3348 = vmatprep.subr.bf16.mxu0 0
    %3349 = vmatpush2.bf16.msra.mxu0 0
    %3350 = vmatprep.subr.bf16.mxu0 0
    %3351 = vmatpush2.bf16.msra.mxu0 0
    %3352 = vmatprep.subr.bf16.mxu0 0
    %3353 = vmatpush2.bf16.msra.mxu0 0
    %3354 = vmatprep.subr.bf16.mxu0 0
    %3355 = vmatpush2.bf16.msra.mxu0 0
    %3356 = vmatprep.subr.bf16.mxu0 0
    %3357 = vmatpush2.bf16.msra.mxu0 0
    %3358 = vmatprep.subr.bf16.mxu0 0
    %3359 = vmatpush2.bf16.msra.mxu0 0
    %3360 = vmatprep.subr.bf16.mxu0 0
    %3361 = vmatpush2.bf16.msra.mxu0 0
    %3362 = vmatprep.mubr.bf16.mxu0 0
    %3363 = vmatmul.mubr.bf16.gmra.mxu0 %v3328
    %v3364 = vpop.f32.mrf.mxu0
    %v3365 = vadd.f32 %v3313, %v3364
    %v3366 = vpop.f32.mrf.mxu0
    %v3367 = vpop.f32.mrf.mxu0
    %v3368 = vadd.f32 %v3313, %v3367
    %v3369 = vpop.f32.mrf.mxu0
    %3370 = vdwg.mxu0
    %v3371 = vpack.c.bf16 %v3365, %v3365
    %v3372 = vpack.c.bf16 %v3368, %v3368
    %s3373 = scalar_lea.vmem %s5, 32
    %v3374 = vld [vmem:[%s3373] sm:$0xf]
    %v3375 = vld [vmem:[%s3373 + $0x4] sm:$0xf]
    %v3376 = vld [vmem:[%s3373 + $0x8] sm:$0xf]
    %v3377 = vld [vmem:[%s3373 + $0xc] sm:$0xf]
    %3379 = vrot.lane.b32.xlu0 %v3371, 96
    %v3380 = vpop.permute.xlu0 %3379
    %v3382 = vsel %vm238, %v3371, 0
    %v3385 = vsel %vm238, %v3380, 0
    %3387 = vmatprep.subr.bf16.mxu0 0
    %3388 = vmatpush1.bf16.xpose.msra.mxu0 0
    %3389 = vmatprep.subr.bf16.mxu0 0
    %3390 = vmatpush1.bf16.xpose.msra.mxu0 0
    %3391 = vmatprep.subr.bf16.mxu0 0
    %3392 = vmatpush1.bf16.xpose.msra.mxu0 0
    %3393 = vmatprep.subr.bf16.mxu0 0
    %3394 = vmatpush1.bf16.xpose.msra.mxu0 0
    %3395 = vmatprep.subr.bf16.mxu0 0
    %3396 = vmatpush1.bf16.xpose.msra.mxu0 0
    %3397 = vmatprep.subr.bf16.mxu0 0
    %3398 = vmatpush1.bf16.xpose.msra.mxu0 0
    %3399 = vmatprep.subr.bf16.mxu0 0
    %3400 = vmatpush1.bf16.xpose.msra.mxu0 0
    %3401 = vmatprep.subr.bf16.mxu0 0
    %3402 = vmatpush1.bf16.xpose.msra.mxu0 %v3385
    %3403 = vmatprep.subr.bf16.mxu0 0
    %3404 = vmatpush2.bf16.xpose.msra.mxu0 0
    %3405 = vmatprep.subr.bf16.mxu0 0
    %3406 = vmatpush2.bf16.xpose.msra.mxu0 0
    %3407 = vmatprep.subr.bf16.mxu0 0
    %3408 = vmatpush2.bf16.xpose.msra.mxu0 0
    %3409 = vmatprep.subr.bf16.mxu0 0
    %3410 = vmatpush2.bf16.xpose.msra.mxu0 0
    %3411 = vmatprep.subr.bf16.mxu0 0
    %3412 = vmatpush2.bf16.xpose.msra.mxu0 0
    %3413 = vmatprep.subr.bf16.mxu0 0
    %3414 = vmatpush2.bf16.xpose.msra.mxu0 0
    %3415 = vmatprep.subr.bf16.mxu0 0
    %3416 = vmatpush2.bf16.xpose.msra.mxu0 0
    %3417 = vmatprep.subr.bf16.mxu0 0
    %3418 = vmatpush2.bf16.xpose.msra.mxu0 0
    %3419 = vmatprep.mubr.bf16.mxu0 0
    %3420 = vmatmul.mubr.bf16.gmra.mxu0 %v3382
    %v3421 = vpop.f32.mrf.mxu0
    %v3422 = vadd.f32 %v103, %v3421
    %v3423 = vpop.f32.mrf.mxu0
    %v3424 = vpop.f32.mrf.mxu0
    %v3425 = vpop.f32.mrf.mxu0
    %3426 = vdwg.mxu0
    %3428 = vrot.lane.b32.xlu0 %v3372, 96
    %v3429 = vpop.permute.xlu0 %3428
    %v3431 = vsel %vm238, %v3372, 0
    %v3434 = vsel %vm238, %v3429, 0
    %3436 = vmatprep.subr.bf16.mxu0 0
    %3437 = vmatpush1.bf16.xpose.msra.mxu0 0
    %3438 = vmatprep.subr.bf16.mxu0 0
    %3439 = vmatpush1.bf16.xpose.msra.mxu0 0
    %3440 = vmatprep.subr.bf16.mxu0 0
    %3441 = vmatpush1.bf16.xpose.msra.mxu0 0
    %3442 = vmatprep.subr.bf16.mxu0 0
    %3443 = vmatpush1.bf16.xpose.msra.mxu0 0
    %3444 = vmatprep.subr.bf16.mxu0 0
    %3445 = vmatpush1.bf16.xpose.msra.mxu0 0
    %3446 = vmatprep.subr.bf16.mxu0 0
    %3447 = vmatpush1.bf16.xpose.msra.mxu0 0
    %3448 = vmatprep.subr.bf16.mxu0 0
    %3449 = vmatpush1.bf16.xpose.msra.mxu0 0
    %3450 = vmatprep.subr.bf16.mxu0 0
    %3451 = vmatpush1.bf16.xpose.msra.mxu0 %v3434
    %3452 = vmatprep.subr.bf16.mxu0 0
    %3453 = vmatpush2.bf16.xpose.msra.mxu0 0
    %3454 = vmatprep.subr.bf16.mxu0 0
    %3455 = vmatpush2.bf16.xpose.msra.mxu0 0
    %3456 = vmatprep.subr.bf16.mxu0 0
    %3457 = vmatpush2.bf16.xpose.msra.mxu0 0
    %3458 = vmatprep.subr.bf16.mxu0 0
    %3459 = vmatpush2.bf16.xpose.msra.mxu0 0
    %3460 = vmatprep.subr.bf16.mxu0 0
    %3461 = vmatpush2.bf16.xpose.msra.mxu0 0
    %3462 = vmatprep.subr.bf16.mxu0 0
    %3463 = vmatpush2.bf16.xpose.msra.mxu0 0
    %3464 = vmatprep.subr.bf16.mxu0 0
    %3465 = vmatpush2.bf16.xpose.msra.mxu0 0
    %3466 = vmatprep.subr.bf16.mxu0 0
    %3467 = vmatpush2.bf16.xpose.msra.mxu0 0
    %3468 = vmatprep.mubr.bf16.mxu0 0
    %3469 = vmatmul.mubr.bf16.gmra.mxu0 %v3431
    %v3470 = vpop.f32.mrf.mxu0
    %v3471 = vadd.f32 %v107, %v3470
    %v3472 = vpop.f32.mrf.mxu0
    %v3473 = vpop.f32.mrf.mxu0
    %v3474 = vpop.f32.mrf.mxu0
    %3475 = vdwg.mxu0
    %v3476 = vsel %vm238, %v3422, -inf
    %3477 = vmax.xlane.f32.xlu0 %v3476
    %v3478 = vpop.xlane.xlu0 %3477
    %v3479 = vsel %vm238, %v3471, -inf
    %3480 = vmax.xlane.f32.xlu0 %v3479
    %v3481 = vpop.xlane.xlu0 %3480
    %v3482 = vsub.f32 %v3422, %v3478
    %v3483 = vsub.f32 %v3471, %v3481
    %v3484 = vmul.f32 %v3482, 1.442695
    %v3485 = vpow.pop %v3484
    %v3486 = vmul.f32 %v3483, 1.442695
    %v3487 = vpow.pop %v3486
    %v3488 = vsel %vm238, %v3485, 0.0
    %3489 = vadd.xlane.f32.xlu0 %v3488
    %v3490 = vpop.xlane.xlu0 %3489
    %v3491 = vsel %vm238, %v3487, 0.0
    %3492 = vadd.xlane.f32.xlu0 %v3491
    %v3493 = vpop.xlane.xlu0 %3492
    %v3494 = vrcp.pop %v3490
    %v3495 = vrcp.pop %v3493
    %v3496 = vmul.f32 %v3485, %v3494
    %v3497 = vmul.f32 %v3487, %v3495
    %v3498 = vpack.c.bf16 %v3496, %v3496
    %v3499 = vpack.c.bf16 %v3497, %v3497
    %3500 = vrot.lane.b32.xlu0 %v3371, 64
    %v3501 = vpop.permute.xlu0 %3500
    %v3503 = vsel %vm238, %v3498, 0
    %v3506 = vsel %vm363, %v3501, 0
    %3508 = vmatprep.subr.bf16.mxu0 0
    %3509 = vmatpush1.bf16.msra.mxu0 0
    %3510 = vmatprep.subr.bf16.mxu0 0
    %3511 = vmatpush1.bf16.msra.mxu0 0
    %3512 = vmatprep.subr.bf16.mxu0 0
    %3513 = vmatpush1.bf16.msra.mxu0 0
    %3514 = vmatprep.subr.bf16.mxu0 0
    %3515 = vmatpush1.bf16.msra.mxu0 0
    %3516 = vmatprep.subr.bf16.mxu0 0
    %3517 = vmatpush1.bf16.msra.mxu0 0
    %3518 = vmatprep.subr.bf16.mxu0 0
    %3519 = vmatpush1.bf16.msra.mxu0 0
    %3520 = vmatprep.subr.bf16.mxu0 0
    %3521 = vmatpush1.bf16.msra.mxu0 0
    %3522 = vmatprep.subr.bf16.mxu0 0
    %3523 = vmatpush1.bf16.msra.mxu0 %v3506
    %3524 = vmatprep.subr.bf16.mxu0 0
    %3525 = vmatpush2.bf16.msra.mxu0 0
    %3526 = vmatprep.subr.bf16.mxu0 0
    %3527 = vmatpush2.bf16.msra.mxu0 0
    %3528 = vmatprep.subr.bf16.mxu0 0
    %3529 = vmatpush2.bf16.msra.mxu0 0
    %3530 = vmatprep.subr.bf16.mxu0 0
    %3531 = vmatpush2.bf16.msra.mxu0 0
    %3532 = vmatprep.subr.bf16.mxu0 0
    %3533 = vmatpush2.bf16.msra.mxu0 0
    %3534 = vmatprep.subr.bf16.mxu0 0
    %3535 = vmatpush2.bf16.msra.mxu0 0
    %3536 = vmatprep.subr.bf16.mxu0 0
    %3537 = vmatpush2.bf16.msra.mxu0 0
    %3538 = vmatprep.subr.bf16.mxu0 0
    %3539 = vmatpush2.bf16.msra.mxu0 0
    %3540 = vmatprep.mubr.bf16.mxu0 0
    %3541 = vmatmul.mubr.bf16.gmra.mxu0 %v3503
    %v3542 = vpop.f32.mrf.mxu0
    %v3543 = vadd.f32 0.0, %v3542
    %v3544 = vpop.f32.mrf.mxu0
    %v3545 = vpop.f32.mrf.mxu0
    %v3546 = vpop.f32.mrf.mxu0
    %3547 = vdwg.mxu0
    %3548 = vrot.lane.b32.xlu0 %v3372, 64
    %v3549 = vpop.permute.xlu0 %3548
    %v3551 = vsel %vm238, %v3499, 0
    %v3554 = vsel %vm363, %v3549, 0
    %3556 = vmatprep.subr.bf16.mxu0 0
    %3557 = vmatpush1.bf16.msra.mxu0 0
    %3558 = vmatprep.subr.bf16.mxu0 0
    %3559 = vmatpush1.bf16.msra.mxu0 0
    %3560 = vmatprep.subr.bf16.mxu0 0
    %3561 = vmatpush1.bf16.msra.mxu0 0
    %3562 = vmatprep.subr.bf16.mxu0 0
    %3563 = vmatpush1.bf16.msra.mxu0 0
    %3564 = vmatprep.subr.bf16.mxu0 0
    %3565 = vmatpush1.bf16.msra.mxu0 0
    %3566 = vmatprep.subr.bf16.mxu0 0
    %3567 = vmatpush1.bf16.msra.mxu0 0
    %3568 = vmatprep.subr.bf16.mxu0 0
    %3569 = vmatpush1.bf16.msra.mxu0 0
    %3570 = vmatprep.subr.bf16.mxu0 0
    %3571 = vmatpush1.bf16.msra.mxu0 %v3554
    %3572 = vmatprep.subr.bf16.mxu0 0
    %3573 = vmatpush2.bf16.msra.mxu0 0
    %3574 = vmatprep.subr.bf16.mxu0 0
    %3575 = vmatpush2.bf16.msra.mxu0 0
    %3576 = vmatprep.subr.bf16.mxu0 0
    %3577 = vmatpush2.bf16.msra.mxu0 0
    %3578 = vmatprep.subr.bf16.mxu0 0
    %3579 = vmatpush2.bf16.msra.mxu0 0
    %3580 = vmatprep.subr.bf16.mxu0 0
    %3581 = vmatpush2.bf16.msra.mxu0 0
    %3582 = vmatprep.subr.bf16.mxu0 0
    %3583 = vmatpush2.bf16.msra.mxu0 0
    %3584 = vmatprep.subr.bf16.mxu0 0
    %3585 = vmatpush2.bf16.msra.mxu0 0
    %3586 = vmatprep.subr.bf16.mxu0 0
    %3587 = vmatpush2.bf16.msra.mxu0 0
    %3588 = vmatprep.mubr.bf16.mxu0 0
    %3589 = vmatmul.mubr.bf16.gmra.mxu0 %v3551
    %v3590 = vpop.f32.mrf.mxu0
    %v3591 = vadd.f32 0.0, %v3590
    %v3592 = vpop.f32.mrf.mxu0
    %v3593 = vpop.f32.mrf.mxu0
    %v3594 = vpop.f32.mrf.mxu0
    %3595 = vdwg.mxu0
    %v3596 = vpack.c.bf16 %v3591, %v3543
    %3597 = vrot.lane.b32.xlu0 %v3371, 120
    %v3598 = vpop.permute.xlu0 %3597
    %3599 = vrot.lane.b32.xlu0 %v3371, 88
    %v3600 = vpop.permute.xlu0 %3599
    %v3602 = vsel %vm238, %v3598, 0
    %v3605 = vsel %vm238, %v3600, 0
    %3607 = vmatprep.subr.bf16.mxu0 0
    %3608 = vmatpush1.bf16.xpose.msra.mxu0 0
    %3609 = vmatprep.subr.bf16.mxu0 0
    %3610 = vmatpush1.bf16.xpose.msra.mxu0 0
    %3611 = vmatprep.subr.bf16.mxu0 0
    %3612 = vmatpush1.bf16.xpose.msra.mxu0 0
    %3613 = vmatprep.subr.bf16.mxu0 0
    %3614 = vmatpush1.bf16.xpose.msra.mxu0 0
    %3615 = vmatprep.subr.bf16.mxu0 0
    %3616 = vmatpush1.bf16.xpose.msra.mxu0 0
    %3617 = vmatprep.subr.bf16.mxu0 0
    %3618 = vmatpush1.bf16.xpose.msra.mxu0 0
    %3619 = vmatprep.subr.bf16.mxu0 0
    %3620 = vmatpush1.bf16.xpose.msra.mxu0 0
    %3621 = vmatprep.subr.bf16.mxu0 0
    %3622 = vmatpush1.bf16.xpose.msra.mxu0 %v3605
    %3623 = vmatprep.subr.bf16.mxu0 0
    %3624 = vmatpush2.bf16.xpose.msra.mxu0 0
    %3625 = vmatprep.subr.bf16.mxu0 0
    %3626 = vmatpush2.bf16.xpose.msra.mxu0 0
    %3627 = vmatprep.subr.bf16.mxu0 0
    %3628 = vmatpush2.bf16.xpose.msra.mxu0 0
    %3629 = vmatprep.subr.bf16.mxu0 0
    %3630 = vmatpush2.bf16.xpose.msra.mxu0 0
    %3631 = vmatprep.subr.bf16.mxu0 0
    %3632 = vmatpush2.bf16.xpose.msra.mxu0 0
    %3633 = vmatprep.subr.bf16.mxu0 0
    %3634 = vmatpush2.bf16.xpose.msra.mxu0 0
    %3635 = vmatprep.subr.bf16.mxu0 0
    %3636 = vmatpush2.bf16.xpose.msra.mxu0 0
    %3637 = vmatprep.subr.bf16.mxu0 0
    %3638 = vmatpush2.bf16.xpose.msra.mxu0 0
    %3639 = vmatprep.mubr.bf16.mxu0 0
    %3640 = vmatmul.mubr.bf16.gmra.mxu0 %v3602
    %v3641 = vpop.f32.mrf.mxu0
    %v3642 = vadd.f32 %v103, %v3641
    %v3643 = vpop.f32.mrf.mxu0
    %v3644 = vpop.f32.mrf.mxu0
    %v3645 = vpop.f32.mrf.mxu0
    %3646 = vdwg.mxu0
    %3647 = vrot.lane.b32.xlu0 %v3372, 120
    %v3648 = vpop.permute.xlu0 %3647
    %3649 = vrot.lane.b32.xlu0 %v3372, 88
    %v3650 = vpop.permute.xlu0 %3649
    %v3652 = vsel %vm238, %v3648, 0
    %v3655 = vsel %vm238, %v3650, 0
    %3657 = vmatprep.subr.bf16.mxu0 0
    %3658 = vmatpush1.bf16.xpose.msra.mxu0 0
    %3659 = vmatprep.subr.bf16.mxu0 0
    %3660 = vmatpush1.bf16.xpose.msra.mxu0 0
    %3661 = vmatprep.subr.bf16.mxu0 0
    %3662 = vmatpush1.bf16.xpose.msra.mxu0 0
    %3663 = vmatprep.subr.bf16.mxu0 0
    %3664 = vmatpush1.bf16.xpose.msra.mxu0 0
    %3665 = vmatprep.subr.bf16.mxu0 0
    %3666 = vmatpush1.bf16.xpose.msra.mxu0 0
    %3667 = vmatprep.subr.bf16.mxu0 0
    %3668 = vmatpush1.bf16.xpose.msra.mxu0 0
    %3669 = vmatprep.subr.bf16.mxu0 0
    %3670 = vmatpush1.bf16.xpose.msra.mxu0 0
    %3671 = vmatprep.subr.bf16.mxu0 0
    %3672 = vmatpush1.bf16.xpose.msra.mxu0 %v3655
    %3673 = vmatprep.subr.bf16.mxu0 0
    %3674 = vmatpush2.bf16.xpose.msra.mxu0 0
    %3675 = vmatprep.subr.bf16.mxu0 0
    %3676 = vmatpush2.bf16.xpose.msra.mxu0 0
    %3677 = vmatprep.subr.bf16.mxu0 0
    %3678 = vmatpush2.bf16.xpose.msra.mxu0 0
    %3679 = vmatprep.subr.bf16.mxu0 0
    %3680 = vmatpush2.bf16.xpose.msra.mxu0 0
    %3681 = vmatprep.subr.bf16.mxu0 0
    %3682 = vmatpush2.bf16.xpose.msra.mxu0 0
    %3683 = vmatprep.subr.bf16.mxu0 0
    %3684 = vmatpush2.bf16.xpose.msra.mxu0 0
    %3685 = vmatprep.subr.bf16.mxu0 0
    %3686 = vmatpush2.bf16.xpose.msra.mxu0 0
    %3687 = vmatprep.subr.bf16.mxu0 0
    %3688 = vmatpush2.bf16.xpose.msra.mxu0 0
    %3689 = vmatprep.mubr.bf16.mxu0 0
    %3690 = vmatmul.mubr.bf16.gmra.mxu0 %v3652
    %v3691 = vpop.f32.mrf.mxu0
    %v3692 = vadd.f32 %v107, %v3691
    %v3693 = vpop.f32.mrf.mxu0
    %v3694 = vpop.f32.mrf.mxu0
    %v3695 = vpop.f32.mrf.mxu0
    %3696 = vdwg.mxu0
    %v3697 = vsel %vm238, %v3642, -inf
    %3698 = vmax.xlane.f32.xlu0 %v3697
    %v3699 = vpop.xlane.xlu0 %3698
    %v3700 = vsel %vm238, %v3692, -inf
    %3701 = vmax.xlane.f32.xlu0 %v3700
    %v3702 = vpop.xlane.xlu0 %3701
    %v3703 = vsub.f32 %v3642, %v3699
    %v3704 = vsub.f32 %v3692, %v3702
    %v3705 = vmul.f32 %v3703, 1.442695
    %v3706 = vpow.pop %v3705
    %v3707 = vmul.f32 %v3704, 1.442695
    %v3708 = vpow.pop %v3707
    %v3709 = vsel %vm238, %v3706, 0.0
    %3710 = vadd.xlane.f32.xlu0 %v3709
    %v3711 = vpop.xlane.xlu0 %3710
    %v3712 = vsel %vm238, %v3708, 0.0
    %3713 = vadd.xlane.f32.xlu0 %v3712
    %v3714 = vpop.xlane.xlu0 %3713
    %v3715 = vrcp.pop %v3711
    %v3716 = vrcp.pop %v3714
    %v3717 = vmul.f32 %v3706, %v3715
    %v3718 = vmul.f32 %v3708, %v3716
    %v3719 = vpack.c.bf16 %v3717, %v3717
    %v3720 = vpack.c.bf16 %v3718, %v3718
    %3721 = vrot.lane.b32.xlu0 %v3371, 56
    %v3722 = vpop.permute.xlu0 %3721
    %v3724 = vsel %vm238, %v3719, 0
    %v3727 = vsel %vm363, %v3722, 0
    %3729 = vmatprep.subr.bf16.mxu0 0
    %3730 = vmatpush1.bf16.msra.mxu0 0
    %3731 = vmatprep.subr.bf16.mxu0 0
    %3732 = vmatpush1.bf16.msra.mxu0 0
    %3733 = vmatprep.subr.bf16.mxu0 0
    %3734 = vmatpush1.bf16.msra.mxu0 0
    %3735 = vmatprep.subr.bf16.mxu0 0
    %3736 = vmatpush1.bf16.msra.mxu0 0
    %3737 = vmatprep.subr.bf16.mxu0 0
    %3738 = vmatpush1.bf16.msra.mxu0 0
    %3739 = vmatprep.subr.bf16.mxu0 0
    %3740 = vmatpush1.bf16.msra.mxu0 0
    %3741 = vmatprep.subr.bf16.mxu0 0
    %3742 = vmatpush1.bf16.msra.mxu0 0
    %3743 = vmatprep.subr.bf16.mxu0 0
    %3744 = vmatpush1.bf16.msra.mxu0 %v3727
    %3745 = vmatprep.subr.bf16.mxu0 0
    %3746 = vmatpush2.bf16.msra.mxu0 0
    %3747 = vmatprep.subr.bf16.mxu0 0
    %3748 = vmatpush2.bf16.msra.mxu0 0
    %3749 = vmatprep.subr.bf16.mxu0 0
    %3750 = vmatpush2.bf16.msra.mxu0 0
    %3751 = vmatprep.subr.bf16.mxu0 0
    %3752 = vmatpush2.bf16.msra.mxu0 0
    %3753 = vmatprep.subr.bf16.mxu0 0
    %3754 = vmatpush2.bf16.msra.mxu0 0
    %3755 = vmatprep.subr.bf16.mxu0 0
    %3756 = vmatpush2.bf16.msra.mxu0 0
    %3757 = vmatprep.subr.bf16.mxu0 0
    %3758 = vmatpush2.bf16.msra.mxu0 0
    %3759 = vmatprep.subr.bf16.mxu0 0
    %3760 = vmatpush2.bf16.msra.mxu0 0
    %3761 = vmatprep.mubr.bf16.mxu0 0
    %3762 = vmatmul.mubr.bf16.gmra.mxu0 %v3724
    %v3763 = vpop.f32.mrf.mxu0
    %v3764 = vadd.f32 0.0, %v3763
    %v3765 = vpop.f32.mrf.mxu0
    %v3766 = vpop.f32.mrf.mxu0
    %v3767 = vpop.f32.mrf.mxu0
    %3768 = vdwg.mxu0
    %3769 = vrot.lane.b32.xlu0 %v3372, 56
    %v3770 = vpop.permute.xlu0 %3769
    %v3772 = vsel %vm238, %v3720, 0
    %v3775 = vsel %vm363, %v3770, 0
    %3777 = vmatprep.subr.bf16.mxu0 0
    %3778 = vmatpush1.bf16.msra.mxu0 0
    %3779 = vmatprep.subr.bf16.mxu0 0
    %3780 = vmatpush1.bf16.msra.mxu0 0
    %3781 = vmatprep.subr.bf16.mxu0 0
    %3782 = vmatpush1.bf16.msra.mxu0 0
    %3783 = vmatprep.subr.bf16.mxu0 0
    %3784 = vmatpush1.bf16.msra.mxu0 0
    %3785 = vmatprep.subr.bf16.mxu0 0
    %3786 = vmatpush1.bf16.msra.mxu0 0
    %3787 = vmatprep.subr.bf16.mxu0 0
    %3788 = vmatpush1.bf16.msra.mxu0 0
    %3789 = vmatprep.subr.bf16.mxu0 0
    %3790 = vmatpush1.bf16.msra.mxu0 0
    %3791 = vmatprep.subr.bf16.mxu0 0
    %3792 = vmatpush1.bf16.msra.mxu0 %v3775
    %3793 = vmatprep.subr.bf16.mxu0 0
    %3794 = vmatpush2.bf16.msra.mxu0 0
    %3795 = vmatprep.subr.bf16.mxu0 0
    %3796 = vmatpush2.bf16.msra.mxu0 0
    %3797 = vmatprep.subr.bf16.mxu0 0
    %3798 = vmatpush2.bf16.msra.mxu0 0
    %3799 = vmatprep.subr.bf16.mxu0 0
    %3800 = vmatpush2.bf16.msra.mxu0 0
    %3801 = vmatprep.subr.bf16.mxu0 0
    %3802 = vmatpush2.bf16.msra.mxu0 0
    %3803 = vmatprep.subr.bf16.mxu0 0
    %3804 = vmatpush2.bf16.msra.mxu0 0
    %3805 = vmatprep.subr.bf16.mxu0 0
    %3806 = vmatpush2.bf16.msra.mxu0 0
    %3807 = vmatprep.subr.bf16.mxu0 0
    %3808 = vmatpush2.bf16.msra.mxu0 0
    %3809 = vmatprep.mubr.bf16.mxu0 0
    %3810 = vmatmul.mubr.bf16.gmra.mxu0 %v3772
    %v3811 = vpop.f32.mrf.mxu0
    %v3812 = vadd.f32 0.0, %v3811
    %v3813 = vpop.f32.mrf.mxu0
    %v3814 = vpop.f32.mrf.mxu0
    %v3815 = vpop.f32.mrf.mxu0
    %3816 = vdwg.mxu0
    %v3817 = vpack.c.bf16 %v3812, %v3764
    %v3819 = vsel %vm238, %v3817, 0
    %v3822 = vsel %vm363, %v3375, 0
    %3824 = vmatprep.subr.bf16.mxu0 0
    %3825 = vmatpush1.bf16.msra.mxu0 0
    %3826 = vmatprep.subr.bf16.mxu0 0
    %3827 = vmatpush1.bf16.msra.mxu0 0
    %3828 = vmatprep.subr.bf16.mxu0 0
    %3829 = vmatpush1.bf16.msra.mxu0 0
    %3830 = vmatprep.subr.bf16.mxu0 0
    %3831 = vmatpush1.bf16.msra.mxu0 0
    %3832 = vmatprep.subr.bf16.mxu0 0
    %3833 = vmatpush1.bf16.msra.mxu0 0
    %3834 = vmatprep.subr.bf16.mxu0 0
    %3835 = vmatpush1.bf16.msra.mxu0 0
    %3836 = vmatprep.subr.bf16.mxu0 0
    %3837 = vmatpush1.bf16.msra.mxu0 0
    %3838 = vmatprep.subr.bf16.mxu0 0
    %3839 = vmatpush1.bf16.msra.mxu0 %v3822
    %3840 = vmatprep.subr.bf16.mxu0 0
    %3841 = vmatpush2.bf16.msra.mxu0 0
    %3842 = vmatprep.subr.bf16.mxu0 0
    %3843 = vmatpush2.bf16.msra.mxu0 0
    %3844 = vmatprep.subr.bf16.mxu0 0
    %3845 = vmatpush2.bf16.msra.mxu0 0
    %3846 = vmatprep.subr.bf16.mxu0 0
    %3847 = vmatpush2.bf16.msra.mxu0 0
    %3848 = vmatprep.subr.bf16.mxu0 0
    %3849 = vmatpush2.bf16.msra.mxu0 0
    %3850 = vmatprep.subr.bf16.mxu0 0
    %3851 = vmatpush2.bf16.msra.mxu0 0
    %3852 = vmatprep.subr.bf16.mxu0 0
    %3853 = vmatpush2.bf16.msra.mxu0 0
    %3854 = vmatprep.subr.bf16.mxu0 0
    %3855 = vmatpush2.bf16.msra.mxu0 0
    %3856 = vmatprep.mubr.bf16.mxu0 0
    %3857 = vmatmul.mubr.bf16.gmra.mxu0 %v3819
    %v3858 = vpop.f32.mrf.mxu0
    %v3859 = vadd.f32 0.0, %v3858
    %v3860 = vpop.f32.mrf.mxu0
    %v3861 = vpop.f32.mrf.mxu0
    %v3862 = vadd.f32 0.0, %v3861
    %v3863 = vpop.f32.mrf.mxu0
    %3864 = vdwg.mxu0
    %v3866 = vsel %vm238, %v3596, 0
    %v3869 = vsel %vm363, %v3374, 0
    %3871 = vmatprep.subr.bf16.mxu0 0
    %3872 = vmatpush1.bf16.msra.mxu0 0
    %3873 = vmatprep.subr.bf16.mxu0 0
    %3874 = vmatpush1.bf16.msra.mxu0 0
    %3875 = vmatprep.subr.bf16.mxu0 0
    %3876 = vmatpush1.bf16.msra.mxu0 0
    %3877 = vmatprep.subr.bf16.mxu0 0
    %3878 = vmatpush1.bf16.msra.mxu0 0
    %3879 = vmatprep.subr.bf16.mxu0 0
    %3880 = vmatpush1.bf16.msra.mxu0 0
    %3881 = vmatprep.subr.bf16.mxu0 0
    %3882 = vmatpush1.bf16.msra.mxu0 0
    %3883 = vmatprep.subr.bf16.mxu0 0
    %3884 = vmatpush1.bf16.msra.mxu0 0
    %3885 = vmatprep.subr.bf16.mxu0 0
    %3886 = vmatpush1.bf16.msra.mxu0 %v3869
    %3887 = vmatprep.subr.bf16.mxu0 0
    %3888 = vmatpush2.bf16.msra.mxu0 0
    %3889 = vmatprep.subr.bf16.mxu0 0
    %3890 = vmatpush2.bf16.msra.mxu0 0
    %3891 = vmatprep.subr.bf16.mxu0 0
    %3892 = vmatpush2.bf16.msra.mxu0 0
    %3893 = vmatprep.subr.bf16.mxu0 0
    %3894 = vmatpush2.bf16.msra.mxu0 0
    %3895 = vmatprep.subr.bf16.mxu0 0
    %3896 = vmatpush2.bf16.msra.mxu0 0
    %3897 = vmatprep.subr.bf16.mxu0 0
    %3898 = vmatpush2.bf16.msra.mxu0 0
    %3899 = vmatprep.subr.bf16.mxu0 0
    %3900 = vmatpush2.bf16.msra.mxu0 0
    %3901 = vmatprep.subr.bf16.mxu0 0
    %3902 = vmatpush2.bf16.msra.mxu0 0
    %3903 = vmatprep.mubr.bf16.mxu0 0
    %3904 = vmatmul.mubr.bf16.gmra.mxu0 %v3866
    %v3905 = vpop.f32.mrf.mxu0
    %v3906 = vadd.f32 %v3859, %v3905
    %v3907 = vpop.f32.mrf.mxu0
    %v3908 = vpop.f32.mrf.mxu0
    %v3909 = vadd.f32 %v3862, %v3908
    %v3910 = vpop.f32.mrf.mxu0
    %3911 = vdwg.mxu0
    %3912 = vrot.lane.b32.xlu0 %v3371, 112
    %v3913 = vpop.permute.xlu0 %3912
    %3914 = vrot.lane.b32.xlu0 %v3371, 80
    %v3915 = vpop.permute.xlu0 %3914
    %v3917 = vsel %vm238, %v3913, 0
    %v3920 = vsel %vm238, %v3915, 0
    %3922 = vmatprep.subr.bf16.mxu0 0
    %3923 = vmatpush1.bf16.xpose.msra.mxu0 0
    %3924 = vmatprep.subr.bf16.mxu0 0
    %3925 = vmatpush1.bf16.xpose.msra.mxu0 0
    %3926 = vmatprep.subr.bf16.mxu0 0
    %3927 = vmatpush1.bf16.xpose.msra.mxu0 0
    %3928 = vmatprep.subr.bf16.mxu0 0
    %3929 = vmatpush1.bf16.xpose.msra.mxu0 0
    %3930 = vmatprep.subr.bf16.mxu0 0
    %3931 = vmatpush1.bf16.xpose.msra.mxu0 0
    %3932 = vmatprep.subr.bf16.mxu0 0
    %3933 = vmatpush1.bf16.xpose.msra.mxu0 0
    %3934 = vmatprep.subr.bf16.mxu0 0
    %3935 = vmatpush1.bf16.xpose.msra.mxu0 0
    %3936 = vmatprep.subr.bf16.mxu0 0
    %3937 = vmatpush1.bf16.xpose.msra.mxu0 %v3920
    %3938 = vmatprep.subr.bf16.mxu0 0
    %3939 = vmatpush2.bf16.xpose.msra.mxu0 0
    %3940 = vmatprep.subr.bf16.mxu0 0
    %3941 = vmatpush2.bf16.xpose.msra.mxu0 0
    %3942 = vmatprep.subr.bf16.mxu0 0
    %3943 = vmatpush2.bf16.xpose.msra.mxu0 0
    %3944 = vmatprep.subr.bf16.mxu0 0
    %3945 = vmatpush2.bf16.xpose.msra.mxu0 0
    %3946 = vmatprep.subr.bf16.mxu0 0
    %3947 = vmatpush2.bf16.xpose.msra.mxu0 0
    %3948 = vmatprep.subr.bf16.mxu0 0
    %3949 = vmatpush2.bf16.xpose.msra.mxu0 0
    %3950 = vmatprep.subr.bf16.mxu0 0
    %3951 = vmatpush2.bf16.xpose.msra.mxu0 0
    %3952 = vmatprep.subr.bf16.mxu0 0
    %3953 = vmatpush2.bf16.xpose.msra.mxu0 0
    %3954 = vmatprep.mubr.bf16.mxu0 0
    %3955 = vmatmul.mubr.bf16.gmra.mxu0 %v3917
    %v3956 = vpop.f32.mrf.mxu0
    %v3957 = vadd.f32 %v103, %v3956
    %v3958 = vpop.f32.mrf.mxu0
    %v3959 = vpop.f32.mrf.mxu0
    %v3960 = vpop.f32.mrf.mxu0
    %3961 = vdwg.mxu0
    %3962 = vrot.lane.b32.xlu0 %v3372, 112
    %v3963 = vpop.permute.xlu0 %3962
    %3964 = vrot.lane.b32.xlu0 %v3372, 80
    %v3965 = vpop.permute.xlu0 %3964
    %v3967 = vsel %vm238, %v3963, 0
    %v3970 = vsel %vm238, %v3965, 0
    %3972 = vmatprep.subr.bf16.mxu0 0
    %3973 = vmatpush1.bf16.xpose.msra.mxu0 0
    %3974 = vmatprep.subr.bf16.mxu0 0
    %3975 = vmatpush1.bf16.xpose.msra.mxu0 0
    %3976 = vmatprep.subr.bf16.mxu0 0
    %3977 = vmatpush1.bf16.xpose.msra.mxu0 0
    %3978 = vmatprep.subr.bf16.mxu0 0
    %3979 = vmatpush1.bf16.xpose.msra.mxu0 0
    %3980 = vmatprep.subr.bf16.mxu0 0
    %3981 = vmatpush1.bf16.xpose.msra.mxu0 0
    %3982 = vmatprep.subr.bf16.mxu0 0
    %3983 = vmatpush1.bf16.xpose.msra.mxu0 0
    %3984 = vmatprep.subr.bf16.mxu0 0
    %3985 = vmatpush1.bf16.xpose.msra.mxu0 0
    %3986 = vmatprep.subr.bf16.mxu0 0
    %3987 = vmatpush1.bf16.xpose.msra.mxu0 %v3970
    %3988 = vmatprep.subr.bf16.mxu0 0
    %3989 = vmatpush2.bf16.xpose.msra.mxu0 0
    %3990 = vmatprep.subr.bf16.mxu0 0
    %3991 = vmatpush2.bf16.xpose.msra.mxu0 0
    %3992 = vmatprep.subr.bf16.mxu0 0
    %3993 = vmatpush2.bf16.xpose.msra.mxu0 0
    %3994 = vmatprep.subr.bf16.mxu0 0
    %3995 = vmatpush2.bf16.xpose.msra.mxu0 0
    %3996 = vmatprep.subr.bf16.mxu0 0
    %3997 = vmatpush2.bf16.xpose.msra.mxu0 0
    %3998 = vmatprep.subr.bf16.mxu0 0
    %3999 = vmatpush2.bf16.xpose.msra.mxu0 0
    %4000 = vmatprep.subr.bf16.mxu0 0
    %4001 = vmatpush2.bf16.xpose.msra.mxu0 0
    %4002 = vmatprep.subr.bf16.mxu0 0
    %4003 = vmatpush2.bf16.xpose.msra.mxu0 0
    %4004 = vmatprep.mubr.bf16.mxu0 0
    %4005 = vmatmul.mubr.bf16.gmra.mxu0 %v3967
    %v4006 = vpop.f32.mrf.mxu0
    %v4007 = vadd.f32 %v107, %v4006
    %v4008 = vpop.f32.mrf.mxu0
    %v4009 = vpop.f32.mrf.mxu0
    %v4010 = vpop.f32.mrf.mxu0
    %4011 = vdwg.mxu0
    %v4012 = vsel %vm238, %v3957, -inf
    %4013 = vmax.xlane.f32.xlu0 %v4012
    %v4014 = vpop.xlane.xlu0 %4013
    %v4015 = vsel %vm238, %v4007, -inf
    %4016 = vmax.xlane.f32.xlu0 %v4015
    %v4017 = vpop.xlane.xlu0 %4016
    %v4018 = vsub.f32 %v3957, %v4014
    %v4019 = vsub.f32 %v4007, %v4017
    %v4020 = vmul.f32 %v4018, 1.442695
    %v4021 = vpow.pop %v4020
    %v4022 = vmul.f32 %v4019, 1.442695
    %v4023 = vpow.pop %v4022
    %v4024 = vsel %vm238, %v4021, 0.0
    %4025 = vadd.xlane.f32.xlu0 %v4024
    %v4026 = vpop.xlane.xlu0 %4025
    %v4027 = vsel %vm238, %v4023, 0.0
    %4028 = vadd.xlane.f32.xlu0 %v4027
    %v4029 = vpop.xlane.xlu0 %4028
    %v4030 = vrcp.pop %v4026
    %v4031 = vrcp.pop %v4029
    %v4032 = vmul.f32 %v4021, %v4030
    %v4033 = vmul.f32 %v4023, %v4031
    %v4034 = vpack.c.bf16 %v4032, %v4032
    %v4035 = vpack.c.bf16 %v4033, %v4033
    %4036 = vrot.lane.b32.xlu0 %v3371, 48
    %v4037 = vpop.permute.xlu0 %4036
    %v4039 = vsel %vm238, %v4034, 0
    %v4042 = vsel %vm363, %v4037, 0
    %4044 = vmatprep.subr.bf16.mxu0 0
    %4045 = vmatpush1.bf16.msra.mxu0 0
    %4046 = vmatprep.subr.bf16.mxu0 0
    %4047 = vmatpush1.bf16.msra.mxu0 0
    %4048 = vmatprep.subr.bf16.mxu0 0
    %4049 = vmatpush1.bf16.msra.mxu0 0
    %4050 = vmatprep.subr.bf16.mxu0 0
    %4051 = vmatpush1.bf16.msra.mxu0 0
    %4052 = vmatprep.subr.bf16.mxu0 0
    %4053 = vmatpush1.bf16.msra.mxu0 0
    %4054 = vmatprep.subr.bf16.mxu0 0
    %4055 = vmatpush1.bf16.msra.mxu0 0
    %4056 = vmatprep.subr.bf16.mxu0 0
    %4057 = vmatpush1.bf16.msra.mxu0 0
    %4058 = vmatprep.subr.bf16.mxu0 0
    %4059 = vmatpush1.bf16.msra.mxu0 %v4042
    %4060 = vmatprep.subr.bf16.mxu0 0
    %4061 = vmatpush2.bf16.msra.mxu0 0
    %4062 = vmatprep.subr.bf16.mxu0 0
    %4063 = vmatpush2.bf16.msra.mxu0 0
    %4064 = vmatprep.subr.bf16.mxu0 0
    %4065 = vmatpush2.bf16.msra.mxu0 0
    %4066 = vmatprep.subr.bf16.mxu0 0
    %4067 = vmatpush2.bf16.msra.mxu0 0
    %4068 = vmatprep.subr.bf16.mxu0 0
    %4069 = vmatpush2.bf16.msra.mxu0 0
    %4070 = vmatprep.subr.bf16.mxu0 0
    %4071 = vmatpush2.bf16.msra.mxu0 0
    %4072 = vmatprep.subr.bf16.mxu0 0
    %4073 = vmatpush2.bf16.msra.mxu0 0
    %4074 = vmatprep.subr.bf16.mxu0 0
    %4075 = vmatpush2.bf16.msra.mxu0 0
    %4076 = vmatprep.mubr.bf16.mxu0 0
    %4077 = vmatmul.mubr.bf16.gmra.mxu0 %v4039
    %v4078 = vpop.f32.mrf.mxu0
    %v4079 = vadd.f32 0.0, %v4078
    %v4080 = vpop.f32.mrf.mxu0
    %v4081 = vpop.f32.mrf.mxu0
    %v4082 = vpop.f32.mrf.mxu0
    %4083 = vdwg.mxu0
    %4084 = vrot.lane.b32.xlu0 %v3372, 48
    %v4085 = vpop.permute.xlu0 %4084
    %v4087 = vsel %vm238, %v4035, 0
    %v4090 = vsel %vm363, %v4085, 0
    %4092 = vmatprep.subr.bf16.mxu0 0
    %4093 = vmatpush1.bf16.msra.mxu0 0
    %4094 = vmatprep.subr.bf16.mxu0 0
    %4095 = vmatpush1.bf16.msra.mxu0 0
    %4096 = vmatprep.subr.bf16.mxu0 0
    %4097 = vmatpush1.bf16.msra.mxu0 0
    %4098 = vmatprep.subr.bf16.mxu0 0
    %4099 = vmatpush1.bf16.msra.mxu0 0
    %4100 = vmatprep.subr.bf16.mxu0 0
    %4101 = vmatpush1.bf16.msra.mxu0 0
    %4102 = vmatprep.subr.bf16.mxu0 0
    %4103 = vmatpush1.bf16.msra.mxu0 0
    %4104 = vmatprep.subr.bf16.mxu0 0
    %4105 = vmatpush1.bf16.msra.mxu0 0
    %4106 = vmatprep.subr.bf16.mxu0 0
    %4107 = vmatpush1.bf16.msra.mxu0 %v4090
    %4108 = vmatprep.subr.bf16.mxu0 0
    %4109 = vmatpush2.bf16.msra.mxu0 0
    %4110 = vmatprep.subr.bf16.mxu0 0
    %4111 = vmatpush2.bf16.msra.mxu0 0
    %4112 = vmatprep.subr.bf16.mxu0 0
    %4113 = vmatpush2.bf16.msra.mxu0 0
    %4114 = vmatprep.subr.bf16.mxu0 0
    %4115 = vmatpush2.bf16.msra.mxu0 0
    %4116 = vmatprep.subr.bf16.mxu0 0
    %4117 = vmatpush2.bf16.msra.mxu0 0
    %4118 = vmatprep.subr.bf16.mxu0 0
    %4119 = vmatpush2.bf16.msra.mxu0 0
    %4120 = vmatprep.subr.bf16.mxu0 0
    %4121 = vmatpush2.bf16.msra.mxu0 0
    %4122 = vmatprep.subr.bf16.mxu0 0
    %4123 = vmatpush2.bf16.msra.mxu0 0
    %4124 = vmatprep.mubr.bf16.mxu0 0
    %4125 = vmatmul.mubr.bf16.gmra.mxu0 %v4087
    %v4126 = vpop.f32.mrf.mxu0
    %v4127 = vadd.f32 0.0, %v4126
    %v4128 = vpop.f32.mrf.mxu0
    %v4129 = vpop.f32.mrf.mxu0
    %v4130 = vpop.f32.mrf.mxu0
    %4131 = vdwg.mxu0
    %v4132 = vpack.c.bf16 %v4127, %v4079
    %v4134 = vsel %vm238, %v4132, 0
    %v4137 = vsel %vm363, %v3376, 0
    %4139 = vmatprep.subr.bf16.mxu0 0
    %4140 = vmatpush1.bf16.msra.mxu0 0
    %4141 = vmatprep.subr.bf16.mxu0 0
    %4142 = vmatpush1.bf16.msra.mxu0 0
    %4143 = vmatprep.subr.bf16.mxu0 0
    %4144 = vmatpush1.bf16.msra.mxu0 0
    %4145 = vmatprep.subr.bf16.mxu0 0
    %4146 = vmatpush1.bf16.msra.mxu0 0
    %4147 = vmatprep.subr.bf16.mxu0 0
    %4148 = vmatpush1.bf16.msra.mxu0 0
    %4149 = vmatprep.subr.bf16.mxu0 0
    %4150 = vmatpush1.bf16.msra.mxu0 0
    %4151 = vmatprep.subr.bf16.mxu0 0
    %4152 = vmatpush1.bf16.msra.mxu0 0
    %4153 = vmatprep.subr.bf16.mxu0 0
    %4154 = vmatpush1.bf16.msra.mxu0 %v4137
    %4155 = vmatprep.subr.bf16.mxu0 0
    %4156 = vmatpush2.bf16.msra.mxu0 0
    %4157 = vmatprep.subr.bf16.mxu0 0
    %4158 = vmatpush2.bf16.msra.mxu0 0
    %4159 = vmatprep.subr.bf16.mxu0 0
    %4160 = vmatpush2.bf16.msra.mxu0 0
    %4161 = vmatprep.subr.bf16.mxu0 0
    %4162 = vmatpush2.bf16.msra.mxu0 0
    %4163 = vmatprep.subr.bf16.mxu0 0
    %4164 = vmatpush2.bf16.msra.mxu0 0
    %4165 = vmatprep.subr.bf16.mxu0 0
    %4166 = vmatpush2.bf16.msra.mxu0 0
    %4167 = vmatprep.subr.bf16.mxu0 0
    %4168 = vmatpush2.bf16.msra.mxu0 0
    %4169 = vmatprep.subr.bf16.mxu0 0
    %4170 = vmatpush2.bf16.msra.mxu0 0
    %4171 = vmatprep.mubr.bf16.mxu0 0
    %4172 = vmatmul.mubr.bf16.gmra.mxu0 %v4134
    %v4173 = vpop.f32.mrf.mxu0
    %v4174 = vadd.f32 0.0, %v4173
    %v4175 = vpop.f32.mrf.mxu0
    %v4176 = vpop.f32.mrf.mxu0
    %v4177 = vadd.f32 0.0, %v4176
    %v4178 = vpop.f32.mrf.mxu0
    %4179 = vdwg.mxu0
    %v4180 = vadd.f32 %v3906, %v4174
    %v4181 = vadd.f32 %v3909, %v4177
    %4182 = vrot.lane.b32.xlu0 %v3371, 104
    %v4183 = vpop.permute.xlu0 %4182
    %4184 = vrot.lane.b32.xlu0 %v3371, 72
    %v4185 = vpop.permute.xlu0 %4184
    %v4187 = vsel %vm238, %v4183, 0
    %v4190 = vsel %vm238, %v4185, 0
    %4192 = vmatprep.subr.bf16.mxu0 0
    %4193 = vmatpush1.bf16.xpose.msra.mxu0 0
    %4194 = vmatprep.subr.bf16.mxu0 0
    %4195 = vmatpush1.bf16.xpose.msra.mxu0 0
    %4196 = vmatprep.subr.bf16.mxu0 0
    %4197 = vmatpush1.bf16.xpose.msra.mxu0 0
    %4198 = vmatprep.subr.bf16.mxu0 0
    %4199 = vmatpush1.bf16.xpose.msra.mxu0 0
    %4200 = vmatprep.subr.bf16.mxu0 0
    %4201 = vmatpush1.bf16.xpose.msra.mxu0 0
    %4202 = vmatprep.subr.bf16.mxu0 0
    %4203 = vmatpush1.bf16.xpose.msra.mxu0 0
    %4204 = vmatprep.subr.bf16.mxu0 0
    %4205 = vmatpush1.bf16.xpose.msra.mxu0 0
    %4206 = vmatprep.subr.bf16.mxu0 0
    %4207 = vmatpush1.bf16.xpose.msra.mxu0 %v4190
    %4208 = vmatprep.subr.bf16.mxu0 0
    %4209 = vmatpush2.bf16.xpose.msra.mxu0 0
    %4210 = vmatprep.subr.bf16.mxu0 0
    %4211 = vmatpush2.bf16.xpose.msra.mxu0 0
    %4212 = vmatprep.subr.bf16.mxu0 0
    %4213 = vmatpush2.bf16.xpose.msra.mxu0 0
    %4214 = vmatprep.subr.bf16.mxu0 0
    %4215 = vmatpush2.bf16.xpose.msra.mxu0 0
    %4216 = vmatprep.subr.bf16.mxu0 0
    %4217 = vmatpush2.bf16.xpose.msra.mxu0 0
    %4218 = vmatprep.subr.bf16.mxu0 0
    %4219 = vmatpush2.bf16.xpose.msra.mxu0 0
    %4220 = vmatprep.subr.bf16.mxu0 0
    %4221 = vmatpush2.bf16.xpose.msra.mxu0 0
    %4222 = vmatprep.subr.bf16.mxu0 0
    %4223 = vmatpush2.bf16.xpose.msra.mxu0 0
    %4224 = vmatprep.mubr.bf16.mxu0 0
    %4225 = vmatmul.mubr.bf16.gmra.mxu0 %v4187
    %v4226 = vpop.f32.mrf.mxu0
    %v4227 = vadd.f32 %v103, %v4226
    %v4228 = vpop.f32.mrf.mxu0
    %v4229 = vpop.f32.mrf.mxu0
    %v4230 = vpop.f32.mrf.mxu0
    %4231 = vdwg.mxu0
    %4232 = vrot.lane.b32.xlu0 %v3372, 104
    %v4233 = vpop.permute.xlu0 %4232
    %4234 = vrot.lane.b32.xlu0 %v3372, 72
    %v4235 = vpop.permute.xlu0 %4234
    %v4237 = vsel %vm238, %v4233, 0
    %v4240 = vsel %vm238, %v4235, 0
    %4242 = vmatprep.subr.bf16.mxu0 0
    %4243 = vmatpush1.bf16.xpose.msra.mxu0 0
    %4244 = vmatprep.subr.bf16.mxu0 0
    %4245 = vmatpush1.bf16.xpose.msra.mxu0 0
    %4246 = vmatprep.subr.bf16.mxu0 0
    %4247 = vmatpush1.bf16.xpose.msra.mxu0 0
    %4248 = vmatprep.subr.bf16.mxu0 0
    %4249 = vmatpush1.bf16.xpose.msra.mxu0 0
    %4250 = vmatprep.subr.bf16.mxu0 0
    %4251 = vmatpush1.bf16.xpose.msra.mxu0 0
    %4252 = vmatprep.subr.bf16.mxu0 0
    %4253 = vmatpush1.bf16.xpose.msra.mxu0 0
    %4254 = vmatprep.subr.bf16.mxu0 0
    %4255 = vmatpush1.bf16.xpose.msra.mxu0 0
    %4256 = vmatprep.subr.bf16.mxu0 0
    %4257 = vmatpush1.bf16.xpose.msra.mxu0 %v4240
    %4258 = vmatprep.subr.bf16.mxu0 0
    %4259 = vmatpush2.bf16.xpose.msra.mxu0 0
    %4260 = vmatprep.subr.bf16.mxu0 0
    %4261 = vmatpush2.bf16.xpose.msra.mxu0 0
    %4262 = vmatprep.subr.bf16.mxu0 0
    %4263 = vmatpush2.bf16.xpose.msra.mxu0 0
    %4264 = vmatprep.subr.bf16.mxu0 0
    %4265 = vmatpush2.bf16.xpose.msra.mxu0 0
    %4266 = vmatprep.subr.bf16.mxu0 0
    %4267 = vmatpush2.bf16.xpose.msra.mxu0 0
    %4268 = vmatprep.subr.bf16.mxu0 0
    %4269 = vmatpush2.bf16.xpose.msra.mxu0 0
    %4270 = vmatprep.subr.bf16.mxu0 0
    %4271 = vmatpush2.bf16.xpose.msra.mxu0 0
    %4272 = vmatprep.subr.bf16.mxu0 0
    %4273 = vmatpush2.bf16.xpose.msra.mxu0 0
    %4274 = vmatprep.mubr.bf16.mxu0 0
    %4275 = vmatmul.mubr.bf16.gmra.mxu0 %v4237
    %v4276 = vpop.f32.mrf.mxu0
    %v4277 = vadd.f32 %v107, %v4276
    %v4278 = vpop.f32.mrf.mxu0
    %v4279 = vpop.f32.mrf.mxu0
    %v4280 = vpop.f32.mrf.mxu0
    %4281 = vdwg.mxu0
    %v4282 = vsel %vm238, %v4227, -inf
    %4283 = vmax.xlane.f32.xlu0 %v4282
    %v4284 = vpop.xlane.xlu0 %4283
    %v4285 = vsel %vm238, %v4277, -inf
    %4286 = vmax.xlane.f32.xlu0 %v4285
    %v4287 = vpop.xlane.xlu0 %4286
    %v4288 = vsub.f32 %v4227, %v4284
    %v4289 = vsub.f32 %v4277, %v4287
    %v4290 = vmul.f32 %v4288, 1.442695
    %v4291 = vpow.pop %v4290
    %v4292 = vmul.f32 %v4289, 1.442695
    %v4293 = vpow.pop %v4292
    %v4294 = vsel %vm238, %v4291, 0.0
    %4295 = vadd.xlane.f32.xlu0 %v4294
    %v4296 = vpop.xlane.xlu0 %4295
    %v4297 = vsel %vm238, %v4293, 0.0
    %4298 = vadd.xlane.f32.xlu0 %v4297
    %v4299 = vpop.xlane.xlu0 %4298
    %v4300 = vrcp.pop %v4296
    %v4301 = vrcp.pop %v4299
    %v4302 = vmul.f32 %v4291, %v4300
    %v4303 = vmul.f32 %v4293, %v4301
    %v4304 = vpack.c.bf16 %v4302, %v4302
    %v4305 = vpack.c.bf16 %v4303, %v4303
    %4306 = vrot.lane.b32.xlu0 %v3371, 40
    %v4307 = vpop.permute.xlu0 %4306
    %v4309 = vsel %vm238, %v4304, 0
    %v4312 = vsel %vm363, %v4307, 0
    %4314 = vmatprep.subr.bf16.mxu0 0
    %4315 = vmatpush1.bf16.msra.mxu0 0
    %4316 = vmatprep.subr.bf16.mxu0 0
    %4317 = vmatpush1.bf16.msra.mxu0 0
    %4318 = vmatprep.subr.bf16.mxu0 0
    %4319 = vmatpush1.bf16.msra.mxu0 0
    %4320 = vmatprep.subr.bf16.mxu0 0
    %4321 = vmatpush1.bf16.msra.mxu0 0
    %4322 = vmatprep.subr.bf16.mxu0 0
    %4323 = vmatpush1.bf16.msra.mxu0 0
    %4324 = vmatprep.subr.bf16.mxu0 0
    %4325 = vmatpush1.bf16.msra.mxu0 0
    %4326 = vmatprep.subr.bf16.mxu0 0
    %4327 = vmatpush1.bf16.msra.mxu0 0
    %4328 = vmatprep.subr.bf16.mxu0 0
    %4329 = vmatpush1.bf16.msra.mxu0 %v4312
    %4330 = vmatprep.subr.bf16.mxu0 0
    %4331 = vmatpush2.bf16.msra.mxu0 0
    %4332 = vmatprep.subr.bf16.mxu0 0
    %4333 = vmatpush2.bf16.msra.mxu0 0
    %4334 = vmatprep.subr.bf16.mxu0 0
    %4335 = vmatpush2.bf16.msra.mxu0 0
    %4336 = vmatprep.subr.bf16.mxu0 0
    %4337 = vmatpush2.bf16.msra.mxu0 0
    %4338 = vmatprep.subr.bf16.mxu0 0
    %4339 = vmatpush2.bf16.msra.mxu0 0
    %4340 = vmatprep.subr.bf16.mxu0 0
    %4341 = vmatpush2.bf16.msra.mxu0 0
    %4342 = vmatprep.subr.bf16.mxu0 0
    %4343 = vmatpush2.bf16.msra.mxu0 0
    %4344 = vmatprep.subr.bf16.mxu0 0
    %4345 = vmatpush2.bf16.msra.mxu0 0
    %4346 = vmatprep.mubr.bf16.mxu0 0
    %4347 = vmatmul.mubr.bf16.gmra.mxu0 %v4309
    %v4348 = vpop.f32.mrf.mxu0
    %v4349 = vadd.f32 0.0, %v4348
    %v4350 = vpop.f32.mrf.mxu0
    %v4351 = vpop.f32.mrf.mxu0
    %v4352 = vpop.f32.mrf.mxu0
    %4353 = vdwg.mxu0
    %4354 = vrot.lane.b32.xlu0 %v3372, 40
    %v4355 = vpop.permute.xlu0 %4354
    %v4357 = vsel %vm238, %v4305, 0
    %v4360 = vsel %vm363, %v4355, 0
    %4362 = vmatprep.subr.bf16.mxu0 0
    %4363 = vmatpush1.bf16.msra.mxu0 0
    %4364 = vmatprep.subr.bf16.mxu0 0
    %4365 = vmatpush1.bf16.msra.mxu0 0
    %4366 = vmatprep.subr.bf16.mxu0 0
    %4367 = vmatpush1.bf16.msra.mxu0 0
    %4368 = vmatprep.subr.bf16.mxu0 0
    %4369 = vmatpush1.bf16.msra.mxu0 0
    %4370 = vmatprep.subr.bf16.mxu0 0
    %4371 = vmatpush1.bf16.msra.mxu0 0
    %4372 = vmatprep.subr.bf16.mxu0 0
    %4373 = vmatpush1.bf16.msra.mxu0 0
    %4374 = vmatprep.subr.bf16.mxu0 0
    %4375 = vmatpush1.bf16.msra.mxu0 0
    %4376 = vmatprep.subr.bf16.mxu0 0
    %4377 = vmatpush1.bf16.msra.mxu0 %v4360
    %4378 = vmatprep.subr.bf16.mxu0 0
    %4379 = vmatpush2.bf16.msra.mxu0 0
    %4380 = vmatprep.subr.bf16.mxu0 0
    %4381 = vmatpush2.bf16.msra.mxu0 0
    %4382 = vmatprep.subr.bf16.mxu0 0
    %4383 = vmatpush2.bf16.msra.mxu0 0
    %4384 = vmatprep.subr.bf16.mxu0 0
    %4385 = vmatpush2.bf16.msra.mxu0 0
    %4386 = vmatprep.subr.bf16.mxu0 0
    %4387 = vmatpush2.bf16.msra.mxu0 0
    %4388 = vmatprep.subr.bf16.mxu0 0
    %4389 = vmatpush2.bf16.msra.mxu0 0
    %4390 = vmatprep.subr.bf16.mxu0 0
    %4391 = vmatpush2.bf16.msra.mxu0 0
    %4392 = vmatprep.subr.bf16.mxu0 0
    %4393 = vmatpush2.bf16.msra.mxu0 0
    %4394 = vmatprep.mubr.bf16.mxu0 0
    %4395 = vmatmul.mubr.bf16.gmra.mxu0 %v4357
    %v4396 = vpop.f32.mrf.mxu0
    %v4397 = vadd.f32 0.0, %v4396
    %v4398 = vpop.f32.mrf.mxu0
    %v4399 = vpop.f32.mrf.mxu0
    %v4400 = vpop.f32.mrf.mxu0
    %4401 = vdwg.mxu0
    %v4402 = vpack.c.bf16 %v4397, %v4349
    %v4404 = vsel %vm238, %v4402, 0
    %v4407 = vsel %vm363, %v3377, 0
    %4409 = vmatprep.subr.bf16.mxu0 0
    %4410 = vmatpush1.bf16.msra.mxu0 0
    %4411 = vmatprep.subr.bf16.mxu0 0
    %4412 = vmatpush1.bf16.msra.mxu0 0
    %4413 = vmatprep.subr.bf16.mxu0 0
    %4414 = vmatpush1.bf16.msra.mxu0 0
    %4415 = vmatprep.subr.bf16.mxu0 0
    %4416 = vmatpush1.bf16.msra.mxu0 0
    %4417 = vmatprep.subr.bf16.mxu0 0
    %4418 = vmatpush1.bf16.msra.mxu0 0
    %4419 = vmatprep.subr.bf16.mxu0 0
    %4420 = vmatpush1.bf16.msra.mxu0 0
    %4421 = vmatprep.subr.bf16.mxu0 0
    %4422 = vmatpush1.bf16.msra.mxu0 0
    %4423 = vmatprep.subr.bf16.mxu0 0
    %4424 = vmatpush1.bf16.msra.mxu0 %v4407
    %4425 = vmatprep.subr.bf16.mxu0 0
    %4426 = vmatpush2.bf16.msra.mxu0 0
    %4427 = vmatprep.subr.bf16.mxu0 0
    %4428 = vmatpush2.bf16.msra.mxu0 0
    %4429 = vmatprep.subr.bf16.mxu0 0
    %4430 = vmatpush2.bf16.msra.mxu0 0
    %4431 = vmatprep.subr.bf16.mxu0 0
    %4432 = vmatpush2.bf16.msra.mxu0 0
    %4433 = vmatprep.subr.bf16.mxu0 0
    %4434 = vmatpush2.bf16.msra.mxu0 0
    %4435 = vmatprep.subr.bf16.mxu0 0
    %4436 = vmatpush2.bf16.msra.mxu0 0
    %4437 = vmatprep.subr.bf16.mxu0 0
    %4438 = vmatpush2.bf16.msra.mxu0 0
    %4439 = vmatprep.subr.bf16.mxu0 0
    %4440 = vmatpush2.bf16.msra.mxu0 0
    %4441 = vmatprep.mubr.bf16.mxu0 0
    %4442 = vmatmul.mubr.bf16.gmra.mxu0 %v4404
    %v4443 = vpop.f32.mrf.mxu0
    %v4444 = vadd.f32 0.0, %v4443
    %v4445 = vpop.f32.mrf.mxu0
    %v4446 = vpop.f32.mrf.mxu0
    %v4447 = vadd.f32 0.0, %v4446
    %v4448 = vpop.f32.mrf.mxu0
    %4449 = vdwg.mxu0
    %v4450 = vadd.f32 %v4180, %v4444
    %v4451 = vadd.f32 %v4181, %v4447
    %s4452 = scalar_lea.vmem %s6, 2
    %v4453 = vld [vmem:[%s4452] sm:$0x1]
    %v4455 = vlaneseq
    %v4456 = vshrl.u32 %v4455, 7
    %v4457 = vsub.s32 0, %v4456
    %v4458 = vrot.slane %v4453, %v4457
    %v4460 = vadd.f32 %v4450, %v4458
    %v4461 = vadd.f32 %v4451, %v4458
    %v4462 = vadd.f32 %v3013, %v4460
    %v4463 = vadd.f32 %v3014, %v4461
    %s4464 = scalar_lea.vmem %s7, 2
    %v4465 = vld [vmem:[%s4464] sm:$0x1]
    %s4466 = scalar_lea.vmem %s8, 2
    %v4467 = vld [vmem:[%s4466] sm:$0x1]
    %v4468 = vsel %vm184, %v4462, 0.0
    %4469 = vadd.xlane.f32.xlu0 %v4468
    %v4470 = vpop.xlane.xlu0 %4469
    %v4471 = vsel %vm184, %v4463, 0.0
    %4472 = vadd.xlane.f32.xlu0 %v4471
    %v4473 = vpop.xlane.xlu0 %4472
    %v4474 = vmul.f32 %v4470, %v1330
    %v4475 = vmul.f32 %v4473, %v1330
    %v4476 = vsub.f32 %v4462, %v4474
    %v4477 = vsub.f32 %v4463, %v4475
    %v4478 = vmul.f32 %v4476, %v4476
    %v4479 = vmul.f32 %v4477, %v4477
    %v4480 = vsel %vm184, %v4478, 0.0
    %4481 = vadd.xlane.f32.xlu0 %v4480
    %v4482 = vpop.xlane.xlu0 %4481
    %v4483 = vsel %vm184, %v4479, 0.0
    %4484 = vadd.xlane.f32.xlu0 %v4483
    %v4485 = vpop.xlane.xlu0 %4484
    %v4486 = vmul.f32 %v4482, %v1330
    %v4487 = vmul.f32 %v4485, %v1330
    %v4488 = vadd.f32 %v4486, 1e-12
    %v4489 = vadd.f32 %v4487, 1e-12
    %v4490 = vrsqrt.pop %v4488
    %v4491 = vrsqrt.pop %v4489
    %v4492 = vmul.f32 %v4476, %v4490
    %v4493 = vmul.f32 %v4477, %v4491
    %v4495 = vlaneseq
    %v4496 = vshrl.u32 %v4495, 7
    %v4497 = vsub.s32 0, %v4496
    %v4498 = vrot.slane %v4465, %v4497
    %v4500 = vmul.f32 %v4492, %v4498
    %v4501 = vmul.f32 %v4493, %v4498
    %v4503 = vlaneseq
    %v4504 = vshrl.u32 %v4503, 7
    %v4505 = vsub.s32 0, %v4504
    %v4506 = vrot.slane %v4467, %v4505
    %v4508 = vadd.f32 %v4500, %v4506
    %v4509 = vadd.f32 %v4501, %v4506
    %v4510 = vpack.c.bf16 %v4509, %v4508
    %s4511 = scalar_lea.vmem %s9, 32
    %v4512 = vld [vmem:[%s4511] sm:$0xf]
    %v4513 = vld [vmem:[%s4511 + $0x4] sm:$0xf]
    %v4514 = vld [vmem:[%s4511 + $0x8] sm:$0xf]
    %v4515 = vld [vmem:[%s4511 + $0xc] sm:$0xf]
    %s4516 = scalar_lea.vmem %s10, 2
    %v4517 = vld [vmem:[%s4516] sm:$0x1]
    %v4519 = vlaneseq
    %v4520 = vshrl.u32 %v4519, 7
    %v4521 = vsub.s32 0, %v4520
    %v4522 = vrot.slane %v4517, %v4521
    %v4528 = vunpack.c.l.b16 %v4512
    %v4529 = vunpack.c.l.b16 %v4513
    %v4530 = vunpack.c.l.b16 %v4514
    %v4531 = vunpack.c.l.b16 %v4515
    %v4532 = vpack.c.b16 %v4529, %v4528
    %v4533 = vpack.c.b16 %v4531, %v4530
    %v4537 = vsel %vm184, %v4510, 0
    %4539 = vmatprep.subr.bf16.mxu0 0
    %4540 = vmatpush1.bf16.msra.mxu0 0
    %4541 = vmatprep.subr.bf16.mxu0 0
    %4542 = vmatpush1.bf16.msra.mxu0 0
    %4543 = vmatprep.subr.bf16.mxu0 0
    %4544 = vmatpush1.bf16.msra.mxu0 0
    %4545 = vmatprep.subr.bf16.mxu0 0
    %4546 = vmatpush1.bf16.msra.mxu0 0
    %4547 = vmatprep.subr.bf16.mxu0 0
    %4548 = vmatpush1.bf16.msra.mxu0 0
    %4549 = vmatprep.subr.bf16.mxu0 0
    %4550 = vmatpush1.bf16.msra.mxu0 0
    %4551 = vmatprep.subr.bf16.mxu0 0
    %4552 = vmatpush1.bf16.msra.mxu0 %v4533
    %4553 = vmatprep.subr.bf16.mxu0 0
    %4554 = vmatpush1.bf16.msra.mxu0 %v4532
    %4555 = vmatprep.subr.bf16.mxu0 0
    %4556 = vmatpush2.bf16.msra.mxu0 0
    %4557 = vmatprep.subr.bf16.mxu0 0
    %4558 = vmatpush2.bf16.msra.mxu0 0
    %4559 = vmatprep.subr.bf16.mxu0 0
    %4560 = vmatpush2.bf16.msra.mxu0 0
    %4561 = vmatprep.subr.bf16.mxu0 0
    %4562 = vmatpush2.bf16.msra.mxu0 0
    %4563 = vmatprep.subr.bf16.mxu0 0
    %4564 = vmatpush2.bf16.msra.mxu0 0
    %4565 = vmatprep.subr.bf16.mxu0 0
    %4566 = vmatpush2.bf16.msra.mxu0 0
    %4567 = vmatprep.subr.bf16.mxu0 0
    %4568 = vmatpush2.bf16.msra.mxu0 0
    %4569 = vmatprep.subr.bf16.mxu0 0
    %4570 = vmatpush2.bf16.msra.mxu0 0
    %4571 = vmatprep.mubr.bf16.mxu0 0
    %4572 = vmatmul.mubr.bf16.gmra.mxu0 %v4537
    %v4573 = vpop.f32.mrf.mxu0
    %v4574 = vadd.f32 %v4522, %v4573
    %v4575 = vpop.f32.mrf.mxu0
    %v4576 = vpop.f32.mrf.mxu0
    %v4577 = vadd.f32 %v4522, %v4576
    %v4578 = vpop.f32.mrf.mxu0
    %4579 = vdwg.mxu0
    %v4580 = vmul.f32 %v4574, 0.5
    %v4581 = vmul.f32 %v4577, 0.5
    %v4582 = vmul.f32 %v4574, 0.044715
    %v4583 = vmul.f32 %v4577, 0.044715
    %v4584 = vmul.f32 %v4582, %v4574
    %v4585 = vmul.f32 %v4583, %v4577
    %v4586 = vmul.f32 %v4584, %v4574
    %v4587 = vmul.f32 %v4585, %v4577
    %v4588 = vadd.f32 %v4574, %v4586
    %v4589 = vadd.f32 %v4577, %v4587
    %v4590 = vmul.f32 %v4588, 0.7978846
    %v4591 = vmul.f32 %v4589, 0.7978846
    %v4592 = vtanh.pop %v4590
    %v4593 = vtanh.pop %v4591
    %v4594 = vadd.f32 %v4592, 1.0
    %v4595 = vadd.f32 %v4593, 1.0
    %v4596 = vmul.f32 %v4580, %v4594
    %v4597 = vmul.f32 %v4581, %v4595
    %v4598 = vpack.c.bf16 %v4597, %v4596
    %s4599 = scalar_lea.vmem %s11, 64
    %v4600 = vld [vmem:[%s4599] sm:$0xf]
    %v4601 = vld [vmem:[%s4599 + $0x4] sm:$0xf]
    %v4602 = vld [vmem:[%s4599 + $0x8] sm:$0xf]
    %v4603 = vld [vmem:[%s4599 + $0xc] sm:$0xf]
    %v4604 = vld [vmem:[%s4599 + $0x10] sm:$0xf]
    %v4605 = vld [vmem:[%s4599 + $0x14] sm:$0xf]
    %v4606 = vld [vmem:[%s4599 + $0x18] sm:$0xf]
    %v4607 = vld [vmem:[%s4599 + $0x1c] sm:$0xf]
    %s4608 = scalar_lea.vmem [#allocation4], 2
    %v4609 = vld [vmem:[%s4608] sm:$0x1]
    %v4611 = vlaneseq
    %v4612 = vshrl.u32 %v4611, 7
    %v4613 = vsub.s32 0, %v4612
    %v4614 = vrot.slane %v4609, %v4613
    %v4624 = vunpack.c.l.b16 %v4600
    %v4625 = vunpack.c.l.b16 %v4601
    %v4626 = vunpack.c.l.b16 %v4602
    %v4627 = vunpack.c.l.b16 %v4603
    %v4628 = vunpack.c.l.b16 %v4604
    %v4629 = vunpack.c.l.b16 %v4605
    %v4630 = vunpack.c.l.b16 %v4606
    %v4631 = vunpack.c.l.b16 %v4607
    %v4632 = vpack.c.b16 %v4625, %v4624
    %v4633 = vpack.c.b16 %v4627, %v4626
    %v4634 = vpack.c.b16 %v4629, %v4628
    %v4635 = vpack.c.b16 %v4631, %v4630
    %v4641 = vsel %vm1493, %v4598, 0
    %4643 = vmatprep.subr.bf16.mxu0 0
    %4644 = vmatpush1.bf16.msra.mxu0 0
    %4645 = vmatprep.subr.bf16.mxu0 0
    %4646 = vmatpush1.bf16.msra.mxu0 0
    %4647 = vmatprep.subr.bf16.mxu0 0
    %4648 = vmatpush1.bf16.msra.mxu0 0
    %4649 = vmatprep.subr.bf16.mxu0 0
    %4650 = vmatpush1.bf16.msra.mxu0 0
    %4651 = vmatprep.subr.bf16.mxu0 0
    %4652 = vmatpush1.bf16.msra.mxu0 %v4635
    %4653 = vmatprep.subr.bf16.mxu0 0
    %4654 = vmatpush1.bf16.msra.mxu0 %v4634
    %4655 = vmatprep.subr.bf16.mxu0 0
    %4656 = vmatpush1.bf16.msra.mxu0 %v4633
    %4657 = vmatprep.subr.bf16.mxu0 0
    %4658 = vmatpush1.bf16.msra.mxu0 %v4632
    %4659 = vmatprep.subr.bf16.mxu0 0
    %4660 = vmatpush2.bf16.msra.mxu0 0
    %4661 = vmatprep.subr.bf16.mxu0 0
    %4662 = vmatpush2.bf16.msra.mxu0 0
    %4663 = vmatprep.subr.bf16.mxu0 0
    %4664 = vmatpush2.bf16.msra.mxu0 0
    %4665 = vmatprep.subr.bf16.mxu0 0
    %4666 = vmatpush2.bf16.msra.mxu0 0
    %4667 = vmatprep.subr.bf16.mxu0 0
    %4668 = vmatpush2.bf16.msra.mxu0 0
    %4669 = vmatprep.subr.bf16.mxu0 0
    %4670 = vmatpush2.bf16.msra.mxu0 0
    %4671 = vmatprep.subr.bf16.mxu0 0
    %4672 = vmatpush2.bf16.msra.mxu0 0
    %4673 = vmatprep.subr.bf16.mxu0 0
    %4674 = vmatpush2.bf16.msra.mxu0 0
    %4675 = vmatprep.mubr.bf16.mxu0 0
    %4676 = vmatmul.mubr.bf16.gmra.mxu0 %v4641
    %v4677 = vpop.f32.mrf.mxu0
    %v4678 = vadd.f32 %v4614, %v4677
    %v4679 = vpop.f32.mrf.mxu0
    %v4680 = vpop.f32.mrf.mxu0
    %v4681 = vadd.f32 %v4614, %v4680
    %v4682 = vpop.f32.mrf.mxu0
    %4683 = vdwg.mxu0
    %v4684 = vadd.f32 %v4508, %v4678
    %v4685 = vadd.f32 %v4509, %v4681
    %s4686 = scalar_lea.vmem [#allocation6], 2
    %v4687 = vld [vmem:[%s4686] sm:$0x1]
    %s4688 = scalar_lea.vmem %s14, 2
    %v4689 = vld [vmem:[%s4688] sm:$0x1]
    %v4690 = vsel %vm184, %v4684, 0.0
    %4691 = vadd.xlane.f32.xlu0 %v4690
    %v4692 = vpop.xlane.xlu0 %4691
    %v4693 = vsel %vm184, %v4685, 0.0
    %4694 = vadd.xlane.f32.xlu0 %v4693
    %v4695 = vpop.xlane.xlu0 %4694
    %v4696 = vmul.f32 %v4692, %v1330
    %v4697 = vmul.f32 %v4695, %v1330
    %v4698 = vsub.f32 %v4684, %v4696
    %v4699 = vsub.f32 %v4685, %v4697
    %v4700 = vmul.f32 %v4698, %v4698
    %v4701 = vmul.f32 %v4699, %v4699
    %v4702 = vsel %vm184, %v4700, 0.0
    %4703 = vadd.xlane.f32.xlu0 %v4702
    %v4704 = vpop.xlane.xlu0 %4703
    %v4705 = vsel %vm184, %v4701, 0.0
    %4706 = vadd.xlane.f32.xlu0 %v4705
    %v4707 = vpop.xlane.xlu0 %4706
    %v4708 = vmul.f32 %v4704, %v1330
    %v4709 = vmul.f32 %v4707, %v1330
    %v4710 = vadd.f32 %v4708, 1e-12
    %v4711 = vadd.f32 %v4709, 1e-12
    %v4712 = vrsqrt.pop %v4710
    %v4713 = vrsqrt.pop %v4711
    %v4714 = vmul.f32 %v4698, %v4712
    %v4715 = vmul.f32 %v4699, %v4713
    %v4717 = vlaneseq
    %v4718 = vshrl.u32 %v4717, 7
    %v4719 = vsub.s32 0, %v4718
    %v4720 = vrot.slane %v4687, %v4719
    %v4722 = vmul.f32 %v4714, %v4720
    %v4723 = vmul.f32 %v4715, %v4720
    %v4725 = vlaneseq
    %v4726 = vshrl.u32 %v4725, 7
    %v4727 = vsub.s32 0, %v4726
    %v4728 = vrot.slane %v4689, %v4727
    %v4730 = vadd.f32 %v4722, %v4728
    %v4731 = vadd.f32 %v4723, %v4728
    %4732 = vmatprep.subr.mxu0 0.0
    %4733 = vmatpush1.msra.mxu0 0.0
    %4734 = vmatprep.subr.mxu0 0.0
    %4735 = vmatpush1.msra.mxu0 0.0
    %4736 = vmatprep.subr.mxu0 0.0
    %4737 = vmatpush1.msra.mxu0 0.0
    %4738 = vmatprep.subr.mxu0 0.0
    %4739 = vmatpush1.msra.mxu0 0.0
    %4740 = vmatprep.subr.mxu0 0.0
    %4741 = vmatpush1.msra.mxu0 0.0
    %4742 = vmatprep.subr.mxu0 0.0
    %4743 = vmatpush1.msra.mxu0 0.0
    %4744 = vmatprep.subr.mxu0 0.0
    %4745 = vmatpush1.msra.mxu0 0.0
    %4746 = vmatprep.subr.mxu0 0.0
    %4747 = vmatpush1.msra.mxu0 0.0
    %4748 = vmatprep.subr.mxu0 0.0
    %4749 = vmatpush1.msra.mxu0 0.0
    %4750 = vmatprep.subr.mxu0 0.0
    %4751 = vmatpush1.msra.mxu0 0.0
    %4752 = vmatprep.subr.mxu0 0.0
    %4753 = vmatpush1.msra.mxu0 0.0
    %4754 = vmatprep.subr.mxu0 0.0
    %4755 = vmatpush1.msra.mxu0 0.0
    %4756 = vmatprep.subr.mxu0 0.0
    %4757 = vmatpush1.msra.mxu0 0.0
    %4758 = vmatprep.subr.mxu0 0.0
    %4759 = vmatpush1.msra.mxu0 0.0
    %4760 = vmatprep.subr.mxu0 0.0
    %4761 = vmatpush1.msra.mxu0 0.0
    %4762 = vmatprep.subr.mxu0 0.0
    %4763 = vmatpush1.msra.mxu0 %v4730
    %4764 = vmatprep.subr.mxu0 0.0
    %4765 = vmatpush2.msra.mxu0 0.0
    %4766 = vmatprep.subr.mxu0 0.0
    %4767 = vmatpush2.msra.mxu0 0.0
    %4768 = vmatprep.subr.mxu0 0.0
    %4769 = vmatpush2.msra.mxu0 0.0
    %4770 = vmatprep.subr.mxu0 0.0
    %4771 = vmatpush2.msra.mxu0 0.0
    %4772 = vmatprep.subr.mxu0 0.0
    %4773 = vmatpush2.msra.mxu0 0.0
    %4774 = vmatprep.subr.mxu0 0.0
    %4775 = vmatpush2.msra.mxu0 0.0
    %4776 = vmatprep.subr.mxu0 0.0
    %4777 = vmatpush2.msra.mxu0 0.0
    %4778 = vmatprep.subr.mxu0 0.0
    %4779 = vmatpush2.msra.mxu0 0.0
    %4780 = vmatprep.subr.mxu0 0.0
    %4781 = vmatpush2.msra.mxu0 0.0
    %4782 = vmatprep.subr.mxu0 0.0
    %4783 = vmatpush2.msra.mxu0 0.0
    %4784 = vmatprep.subr.mxu0 0.0
    %4785 = vmatpush2.msra.mxu0 0.0
    %4786 = vmatprep.subr.mxu0 0.0
    %4787 = vmatpush2.msra.mxu0 0.0
    %4788 = vmatprep.subr.mxu0 0.0
    %4789 = vmatpush2.msra.mxu0 0.0
    %4790 = vmatprep.subr.mxu0 0.0
    %4791 = vmatpush2.msra.mxu0 0.0
    %4792 = vmatprep.subr.mxu0 0.0
    %4793 = vmatpush2.msra.mxu0 0.0
    %4794 = vmatprep.subr.mxu0 0.0
    %4795 = vmatpush2.msra.mxu0 0.0
    %4796 = vmatprep.mubr.f32.mxu0 0.0
    %4797 = vmatmul.mubr.f32.gmra.mxu0 %v3016
    %v4798 = vpop.f32.mrf.mxu0
    %v4799 = vadd.f32 0.0, %v4798
    %v4800 = vpop.f32.mrf.mxu0
    %4801 = vdwg.mxu0
    %4802 = vmatprep.subr.mxu0 0.0
    %4803 = vmatpush1.msra.mxu0 0.0
    %4804 = vmatprep.subr.mxu0 0.0
    %4805 = vmatpush1.msra.mxu0 0.0
    %4806 = vmatprep.subr.mxu0 0.0
    %4807 = vmatpush1.msra.mxu0 0.0
    %4808 = vmatprep.subr.mxu0 0.0
    %4809 = vmatpush1.msra.mxu0 0.0
    %4810 = vmatprep.subr.mxu0 0.0
    %4811 = vmatpush1.msra.mxu0 0.0
    %4812 = vmatprep.subr.mxu0 0.0
    %4813 = vmatpush1.msra.mxu0 0.0
    %4814 = vmatprep.subr.mxu0 0.0
    %4815 = vmatpush1.msra.mxu0 0.0
    %4816 = vmatprep.subr.mxu0 0.0
    %4817 = vmatpush1.msra.mxu0 0.0
    %4818 = vmatprep.subr.mxu0 0.0
    %4819 = vmatpush1.msra.mxu0 0.0
    %4820 = vmatprep.subr.mxu0 0.0
    %4821 = vmatpush1.msra.mxu0 0.0
    %4822 = vmatprep.subr.mxu0 0.0
    %4823 = vmatpush1.msra.mxu0 0.0
    %4824 = vmatprep.subr.mxu0 0.0
    %4825 = vmatpush1.msra.mxu0 0.0
    %4826 = vmatprep.subr.mxu0 0.0
    %4827 = vmatpush1.msra.mxu0 0.0
    %4828 = vmatprep.subr.mxu0 0.0
    %4829 = vmatpush1.msra.mxu0 0.0
    %4830 = vmatprep.subr.mxu0 0.0
    %4831 = vmatpush1.msra.mxu0 0.0
    %4832 = vmatprep.subr.mxu0 0.0
    %4833 = vmatpush1.msra.mxu0 %v4731
    %4834 = vmatprep.subr.mxu0 0.0
    %4835 = vmatpush2.msra.mxu0 0.0
    %4836 = vmatprep.subr.mxu0 0.0
    %4837 = vmatpush2.msra.mxu0 0.0
    %4838 = vmatprep.subr.mxu0 0.0
    %4839 = vmatpush2.msra.mxu0 0.0
    %4840 = vmatprep.subr.mxu0 0.0
    %4841 = vmatpush2.msra.mxu0 0.0
    %4842 = vmatprep.subr.mxu0 0.0
    %4843 = vmatpush2.msra.mxu0 0.0
    %4844 = vmatprep.subr.mxu0 0.0
    %4845 = vmatpush2.msra.mxu0 0.0
    %4846 = vmatprep.subr.mxu0 0.0
    %4847 = vmatpush2.msra.mxu0 0.0
    %4848 = vmatprep.subr.mxu0 0.0
    %4849 = vmatpush2.msra.mxu0 0.0
    %4850 = vmatprep.subr.mxu0 0.0
    %4851 = vmatpush2.msra.mxu0 0.0
    %4852 = vmatprep.subr.mxu0 0.0
    %4853 = vmatpush2.msra.mxu0 0.0
    %4854 = vmatprep.subr.mxu0 0.0
    %4855 = vmatpush2.msra.mxu0 0.0
    %4856 = vmatprep.subr.mxu0 0.0
    %4857 = vmatpush2.msra.mxu0 0.0
    %4858 = vmatprep.subr.mxu0 0.0
    %4859 = vmatpush2.msra.mxu0 0.0
    %4860 = vmatprep.subr.mxu0 0.0
    %4861 = vmatpush2.msra.mxu0 0.0
    %4862 = vmatprep.subr.mxu0 0.0
    %4863 = vmatpush2.msra.mxu0 0.0
    %4864 = vmatprep.subr.mxu0 0.0
    %4865 = vmatpush2.msra.mxu0 0.0
    %4866 = vmatprep.mubr.f32.mxu0 0.0
    %4867 = vmatmul.mubr.f32.gmra.mxu0 %v3089
    %v4868 = vpop.f32.mrf.mxu0
    %v4869 = vadd.f32 0.0, %v4868
    %v4870 = vpop.f32.mrf.mxu0
    %4871 = vdwg.mxu0
    %v4872 = vadd.f32 %v3228, %v4799
    %v4873 = vadd.f32 %v3298, %v4869
    %v4874 = vpack.c.bf16 %v4731, %v4730
    %s4875 = scalar_lea.vmem %s3, 48
    %v4876 = vld [vmem:[%s4875] sm:$0xf]
    %v4877 = vld [vmem:[%s4875 + $0x4] sm:$0xf]
    %v4878 = vld [vmem:[%s4875 + $0x8] sm:$0xf]
    %v4879 = vld [vmem:[%s4875 + $0xc] sm:$0xf]
    %s4880 = scalar_lea.vmem %s4, 3
    %v4881 = vld [vmem:[%s4880] sm:$0x1]
    %v4883 = vlaneseq
    %v4884 = vshrl.u32 %v4883, 7
    %v4885 = vsub.s32 0, %v4884
    %v4886 = vrot.slane %v4881, %v4885
    %v4892 = vunpack.c.l.b16 %v4876
    %v4893 = vunpack.c.l.b16 %v4877
    %v4894 = vunpack.c.l.b16 %v4878
    %v4895 = vunpack.c.l.b16 %v4879
    %v4896 = vpack.c.b16 %v4893, %v4892
    %v4897 = vpack.c.b16 %v4895, %v4894
    %v4901 = vsel %vm184, %v4874, 0
    %4903 = vmatprep.subr.bf16.mxu0 0
    %4904 = vmatpush1.bf16.msra.mxu0 0
    %4905 = vmatprep.subr.bf16.mxu0 0
    %4906 = vmatpush1.bf16.msra.mxu0 0
    %4907 = vmatprep.subr.bf16.mxu0 0
    %4908 = vmatpush1.bf16.msra.mxu0 0
    %4909 = vmatprep.subr.bf16.mxu0 0
    %4910 = vmatpush1.bf16.msra.mxu0 0
    %4911 = vmatprep.subr.bf16.mxu0 0
    %4912 = vmatpush1.bf16.msra.mxu0 0
    %4913 = vmatprep.subr.bf16.mxu0 0
    %4914 = vmatpush1.bf16.msra.mxu0 0
    %4915 = vmatprep.subr.bf16.mxu0 0
    %4916 = vmatpush1.bf16.msra.mxu0 %v4897
    %4917 = vmatprep.subr.bf16.mxu0 0
    %4918 = vmatpush1.bf16.msra.mxu0 %v4896
    %4919 = vmatprep.subr.bf16.mxu0 0
    %4920 = vmatpush2.bf16.msra.mxu0 0
    %4921 = vmatprep.subr.bf16.mxu0 0
    %4922 = vmatpush2.bf16.msra.mxu0 0
    %4923 = vmatprep.subr.bf16.mxu0 0
    %4924 = vmatpush2.bf16.msra.mxu0 0
    %4925 = vmatprep.subr.bf16.mxu0 0
    %4926 = vmatpush2.bf16.msra.mxu0 0
    %4927 = vmatprep.subr.bf16.mxu0 0
    %4928 = vmatpush2.bf16.msra.mxu0 0
    %4929 = vmatprep.subr.bf16.mxu0 0
    %4930 = vmatpush2.bf16.msra.mxu0 0
    %4931 = vmatprep.subr.bf16.mxu0 0
    %4932 = vmatpush2.bf16.msra.mxu0 0
    %4933 = vmatprep.subr.bf16.mxu0 0
    %4934 = vmatpush2.bf16.msra.mxu0 0
    %4935 = vmatprep.mubr.bf16.mxu0 0
    %4936 = vmatmul.mubr.bf16.gmra.mxu0 %v4901
    %v4937 = vpop.f32.mrf.mxu0
    %v4938 = vadd.f32 %v4886, %v4937
    %v4939 = vpop.f32.mrf.mxu0
    %v4940 = vpop.f32.mrf.mxu0
    %v4941 = vadd.f32 %v4886, %v4940
    %v4942 = vpop.f32.mrf.mxu0
    %4943 = vdwg.mxu0
    %v4944 = vpack.c.bf16 %v4938, %v4938
    %v4945 = vpack.c.bf16 %v4941, %v4941
    %s4946 = scalar_lea.vmem %s5, 48
    %v4947 = vld [vmem:[%s4946] sm:$0xf]
    %v4948 = vld [vmem:[%s4946 + $0x4] sm:$0xf]
    %v4949 = vld [vmem:[%s4946 + $0x8] sm:$0xf]
    %v4950 = vld [vmem:[%s4946 + $0xc] sm:$0xf]
    %4952 = vrot.lane.b32.xlu0 %v4944, 96
    %v4953 = vpop.permute.xlu0 %4952
    %v4955 = vsel %vm238, %v4944, 0
    %v4958 = vsel %vm238, %v4953, 0
    %4960 = vmatprep.subr.bf16.mxu0 0
    %4961 = vmatpush1.bf16.xpose.msra.mxu0 0
    %4962 = vmatprep.subr.bf16.mxu0 0
    %4963 = vmatpush1.bf16.xpose.msra.mxu0 0
    %4964 = vmatprep.subr.bf16.mxu0 0
    %4965 = vmatpush1.bf16.xpose.msra.mxu0 0
    %4966 = vmatprep.subr.bf16.mxu0 0
    %4967 = vmatpush1.bf16.xpose.msra.mxu0 0
    %4968 = vmatprep.subr.bf16.mxu0 0
    %4969 = vmatpush1.bf16.xpose.msra.mxu0 0
    %4970 = vmatprep.subr.bf16.mxu0 0
    %4971 = vmatpush1.bf16.xpose.msra.mxu0 0
    %4972 = vmatprep.subr.bf16.mxu0 0
    %4973 = vmatpush1.bf16.xpose.msra.mxu0 0
    %4974 = vmatprep.subr.bf16.mxu0 0
    %4975 = vmatpush1.bf16.xpose.msra.mxu0 %v4958
    %4976 = vmatprep.subr.bf16.mxu0 0
    %4977 = vmatpush2.bf16.xpose.msra.mxu0 0
    %4978 = vmatprep.subr.bf16.mxu0 0
    %4979 = vmatpush2.bf16.xpose.msra.mxu0 0
    %4980 = vmatprep.subr.bf16.mxu0 0
    %4981 = vmatpush2.bf16.xpose.msra.mxu0 0
    %4982 = vmatprep.subr.bf16.mxu0 0
    %4983 = vmatpush2.bf16.xpose.msra.mxu0 0
    %4984 = vmatprep.subr.bf16.mxu0 0
    %4985 = vmatpush2.bf16.xpose.msra.mxu0 0
    %4986 = vmatprep.subr.bf16.mxu0 0
    %4987 = vmatpush2.bf16.xpose.msra.mxu0 0
    %4988 = vmatprep.subr.bf16.mxu0 0
    %4989 = vmatpush2.bf16.xpose.msra.mxu0 0
    %4990 = vmatprep.subr.bf16.mxu0 0
    %4991 = vmatpush2.bf16.xpose.msra.mxu0 0
    %4992 = vmatprep.mubr.bf16.mxu0 0
    %4993 = vmatmul.mubr.bf16.gmra.mxu0 %v4955
    %v4994 = vpop.f32.mrf.mxu0
    %v4995 = vadd.f32 %v103, %v4994
    %v4996 = vpop.f32.mrf.mxu0
    %v4997 = vpop.f32.mrf.mxu0
    %v4998 = vpop.f32.mrf.mxu0
    %4999 = vdwg.mxu0
    %5001 = vrot.lane.b32.xlu0 %v4945, 96
    %v5002 = vpop.permute.xlu0 %5001
    %v5004 = vsel %vm238, %v4945, 0
    %v5007 = vsel %vm238, %v5002, 0
    %5009 = vmatprep.subr.bf16.mxu0 0
    %5010 = vmatpush1.bf16.xpose.msra.mxu0 0
    %5011 = vmatprep.subr.bf16.mxu0 0
    %5012 = vmatpush1.bf16.xpose.msra.mxu0 0
    %5013 = vmatprep.subr.bf16.mxu0 0
    %5014 = vmatpush1.bf16.xpose.msra.mxu0 0
    %5015 = vmatprep.subr.bf16.mxu0 0
    %5016 = vmatpush1.bf16.xpose.msra.mxu0 0
    %5017 = vmatprep.subr.bf16.mxu0 0
    %5018 = vmatpush1.bf16.xpose.msra.mxu0 0
    %5019 = vmatprep.subr.bf16.mxu0 0
    %5020 = vmatpush1.bf16.xpose.msra.mxu0 0
    %5021 = vmatprep.subr.bf16.mxu0 0
    %5022 = vmatpush1.bf16.xpose.msra.mxu0 0
    %5023 = vmatprep.subr.bf16.mxu0 0
    %5024 = vmatpush1.bf16.xpose.msra.mxu0 %v5007
    %5025 = vmatprep.subr.bf16.mxu0 0
    %5026 = vmatpush2.bf16.xpose.msra.mxu0 0
    %5027 = vmatprep.subr.bf16.mxu0 0
    %5028 = vmatpush2.bf16.xpose.msra.mxu0 0
    %5029 = vmatprep.subr.bf16.mxu0 0
    %5030 = vmatpush2.bf16.xpose.msra.mxu0 0
    %5031 = vmatprep.subr.bf16.mxu0 0
    %5032 = vmatpush2.bf16.xpose.msra.mxu0 0
    %5033 = vmatprep.subr.bf16.mxu0 0
    %5034 = vmatpush2.bf16.xpose.msra.mxu0 0
    %5035 = vmatprep.subr.bf16.mxu0 0
    %5036 = vmatpush2.bf16.xpose.msra.mxu0 0
    %5037 = vmatprep.subr.bf16.mxu0 0
    %5038 = vmatpush2.bf16.xpose.msra.mxu0 0
    %5039 = vmatprep.subr.bf16.mxu0 0
    %5040 = vmatpush2.bf16.xpose.msra.mxu0 0
    %5041 = vmatprep.mubr.bf16.mxu0 0
    %5042 = vmatmul.mubr.bf16.gmra.mxu0 %v5004
    %v5043 = vpop.f32.mrf.mxu0
    %v5044 = vadd.f32 %v107, %v5043
    %v5045 = vpop.f32.mrf.mxu0
    %v5046 = vpop.f32.mrf.mxu0
    %v5047 = vpop.f32.mrf.mxu0
    %5048 = vdwg.mxu0
    %v5049 = vsel %vm238, %v4995, -inf
    %5050 = vmax.xlane.f32.xlu0 %v5049
    %v5051 = vpop.xlane.xlu0 %5050
    %v5052 = vsel %vm238, %v5044, -inf
    %5053 = vmax.xlane.f32.xlu0 %v5052
    %v5054 = vpop.xlane.xlu0 %5053
    %v5055 = vsub.f32 %v4995, %v5051
    %v5056 = vsub.f32 %v5044, %v5054
    %v5057 = vmul.f32 %v5055, 1.442695
    %v5058 = vpow.pop %v5057
    %v5059 = vmul.f32 %v5056, 1.442695
    %v5060 = vpow.pop %v5059
    %v5061 = vsel %vm238, %v5058, 0.0
    %5062 = vadd.xlane.f32.xlu0 %v5061
    %v5063 = vpop.xlane.xlu0 %5062
    %v5064 = vsel %vm238, %v5060, 0.0
    %5065 = vadd.xlane.f32.xlu0 %v5064
    %v5066 = vpop.xlane.xlu0 %5065
    %v5067 = vrcp.pop %v5063
    %v5068 = vrcp.pop %v5066
    %v5069 = vmul.f32 %v5058, %v5067
    %v5070 = vmul.f32 %v5060, %v5068
    %v5071 = vpack.c.bf16 %v5069, %v5069
    %v5072 = vpack.c.bf16 %v5070, %v5070
    %5073 = vrot.lane.b32.xlu0 %v4944, 64
    %v5074 = vpop.permute.xlu0 %5073
    %v5076 = vsel %vm238, %v5071, 0
    %v5079 = vsel %vm363, %v5074, 0
    %5081 = vmatprep.subr.bf16.mxu0 0
    %5082 = vmatpush1.bf16.msra.mxu0 0
    %5083 = vmatprep.subr.bf16.mxu0 0
    %5084 = vmatpush1.bf16.msra.mxu0 0
    %5085 = vmatprep.subr.bf16.mxu0 0
    %5086 = vmatpush1.bf16.msra.mxu0 0
    %5087 = vmatprep.subr.bf16.mxu0 0
    %5088 = vmatpush1.bf16.msra.mxu0 0
    %5089 = vmatprep.subr.bf16.mxu0 0
    %5090 = vmatpush1.bf16.msra.mxu0 0
    %5091 = vmatprep.subr.bf16.mxu0 0
    %5092 = vmatpush1.bf16.msra.mxu0 0
    %5093 = vmatprep.subr.bf16.mxu0 0
    %5094 = vmatpush1.bf16.msra.mxu0 0
    %5095 = vmatprep.subr.bf16.mxu0 0
    %5096 = vmatpush1.bf16.msra.mxu0 %v5079
    %5097 = vmatprep.subr.bf16.mxu0 0
    %5098 = vmatpush2.bf16.msra.mxu0 0
    %5099 = vmatprep.subr.bf16.mxu0 0
    %5100 = vmatpush2.bf16.msra.mxu0 0
    %5101 = vmatprep.subr.bf16.mxu0 0
    %5102 = vmatpush2.bf16.msra.mxu0 0
    %5103 = vmatprep.subr.bf16.mxu0 0
    %5104 = vmatpush2.bf16.msra.mxu0 0
    %5105 = vmatprep.subr.bf16.mxu0 0
    %5106 = vmatpush2.bf16.msra.mxu0 0
    %5107 = vmatprep.subr.bf16.mxu0 0
    %5108 = vmatpush2.bf16.msra.mxu0 0
    %5109 = vmatprep.subr.bf16.mxu0 0
    %5110 = vmatpush2.bf16.msra.mxu0 0
    %5111 = vmatprep.subr.bf16.mxu0 0
    %5112 = vmatpush2.bf16.msra.mxu0 0
    %5113 = vmatprep.mubr.bf16.mxu0 0
    %5114 = vmatmul.mubr.bf16.gmra.mxu0 %v5076
    %v5115 = vpop.f32.mrf.mxu0
    %v5116 = vadd.f32 0.0, %v5115
    %v5117 = vpop.f32.mrf.mxu0
    %v5118 = vpop.f32.mrf.mxu0
    %v5119 = vpop.f32.mrf.mxu0
    %5120 = vdwg.mxu0
    %5121 = vrot.lane.b32.xlu0 %v4945, 64
    %v5122 = vpop.permute.xlu0 %5121
    %v5124 = vsel %vm238, %v5072, 0
    %v5127 = vsel %vm363, %v5122, 0
    %5129 = vmatprep.subr.bf16.mxu0 0
    %5130 = vmatpush1.bf16.msra.mxu0 0
    %5131 = vmatprep.subr.bf16.mxu0 0
    %5132 = vmatpush1.bf16.msra.mxu0 0
    %5133 = vmatprep.subr.bf16.mxu0 0
    %5134 = vmatpush1.bf16.msra.mxu0 0
    %5135 = vmatprep.subr.bf16.mxu0 0
    %5136 = vmatpush1.bf16.msra.mxu0 0
    %5137 = vmatprep.subr.bf16.mxu0 0
    %5138 = vmatpush1.bf16.msra.mxu0 0
    %5139 = vmatprep.subr.bf16.mxu0 0
    %5140 = vmatpush1.bf16.msra.mxu0 0
    %5141 = vmatprep.subr.bf16.mxu0 0
    %5142 = vmatpush1.bf16.msra.mxu0 0
    %5143 = vmatprep.subr.bf16.mxu0 0
    %5144 = vmatpush1.bf16.msra.mxu0 %v5127
    %5145 = vmatprep.subr.bf16.mxu0 0
    %5146 = vmatpush2.bf16.msra.mxu0 0
    %5147 = vmatprep.subr.bf16.mxu0 0
    %5148 = vmatpush2.bf16.msra.mxu0 0
    %5149 = vmatprep.subr.bf16.mxu0 0
    %5150 = vmatpush2.bf16.msra.mxu0 0
    %5151 = vmatprep.subr.bf16.mxu0 0
    %5152 = vmatpush2.bf16.msra.mxu0 0
    %5153 = vmatprep.subr.bf16.mxu0 0
    %5154 = vmatpush2.bf16.msra.mxu0 0
    %5155 = vmatprep.subr.bf16.mxu0 0
    %5156 = vmatpush2.bf16.msra.mxu0 0
    %5157 = vmatprep.subr.bf16.mxu0 0
    %5158 = vmatpush2.bf16.msra.mxu0 0
    %5159 = vmatprep.subr.bf16.mxu0 0
    %5160 = vmatpush2.bf16.msra.mxu0 0
    %5161 = vmatprep.mubr.bf16.mxu0 0
    %5162 = vmatmul.mubr.bf16.gmra.mxu0 %v5124
    %v5163 = vpop.f32.mrf.mxu0
    %v5164 = vadd.f32 0.0, %v5163
    %v5165 = vpop.f32.mrf.mxu0
    %v5166 = vpop.f32.mrf.mxu0
    %v5167 = vpop.f32.mrf.mxu0
    %5168 = vdwg.mxu0
    %v5169 = vpack.c.bf16 %v5164, %v5116
    %5170 = vrot.lane.b32.xlu0 %v4944, 120
    %v5171 = vpop.permute.xlu0 %5170
    %5172 = vrot.lane.b32.xlu0 %v4944, 88
    %v5173 = vpop.permute.xlu0 %5172
    %v5175 = vsel %vm238, %v5171, 0
    %v5178 = vsel %vm238, %v5173, 0
    %5180 = vmatprep.subr.bf16.mxu0 0
    %5181 = vmatpush1.bf16.xpose.msra.mxu0 0
    %5182 = vmatprep.subr.bf16.mxu0 0
    %5183 = vmatpush1.bf16.xpose.msra.mxu0 0
    %5184 = vmatprep.subr.bf16.mxu0 0
    %5185 = vmatpush1.bf16.xpose.msra.mxu0 0
    %5186 = vmatprep.subr.bf16.mxu0 0
    %5187 = vmatpush1.bf16.xpose.msra.mxu0 0
    %5188 = vmatprep.subr.bf16.mxu0 0
    %5189 = vmatpush1.bf16.xpose.msra.mxu0 0
    %5190 = vmatprep.subr.bf16.mxu0 0
    %5191 = vmatpush1.bf16.xpose.msra.mxu0 0
    %5192 = vmatprep.subr.bf16.mxu0 0
    %5193 = vmatpush1.bf16.xpose.msra.mxu0 0
    %5194 = vmatprep.subr.bf16.mxu0 0
    %5195 = vmatpush1.bf16.xpose.msra.mxu0 %v5178
    %5196 = vmatprep.subr.bf16.mxu0 0
    %5197 = vmatpush2.bf16.xpose.msra.mxu0 0
    %5198 = vmatprep.subr.bf16.mxu0 0
    %5199 = vmatpush2.bf16.xpose.msra.mxu0 0
    %5200 = vmatprep.subr.bf16.mxu0 0
    %5201 = vmatpush2.bf16.xpose.msra.mxu0 0
    %5202 = vmatprep.subr.bf16.mxu0 0
    %5203 = vmatpush2.bf16.xpose.msra.mxu0 0
    %5204 = vmatprep.subr.bf16.mxu0 0
    %5205 = vmatpush2.bf16.xpose.msra.mxu0 0
    %5206 = vmatprep.subr.bf16.mxu0 0
    %5207 = vmatpush2.bf16.xpose.msra.mxu0 0
    %5208 = vmatprep.subr.bf16.mxu0 0
    %5209 = vmatpush2.bf16.xpose.msra.mxu0 0
    %5210 = vmatprep.subr.bf16.mxu0 0
    %5211 = vmatpush2.bf16.xpose.msra.mxu0 0
    %5212 = vmatprep.mubr.bf16.mxu0 0
    %5213 = vmatmul.mubr.bf16.gmra.mxu0 %v5175
    %v5214 = vpop.f32.mrf.mxu0
    %v5215 = vadd.f32 %v103, %v5214
    %v5216 = vpop.f32.mrf.mxu0
    %v5217 = vpop.f32.mrf.mxu0
    %v5218 = vpop.f32.mrf.mxu0
    %5219 = vdwg.mxu0
    %5220 = vrot.lane.b32.xlu0 %v4945, 120
    %v5221 = vpop.permute.xlu0 %5220
    %5222 = vrot.lane.b32.xlu0 %v4945, 88
    %v5223 = vpop.permute.xlu0 %5222
    %v5225 = vsel %vm238, %v5221, 0
    %v5228 = vsel %vm238, %v5223, 0
    %5230 = vmatprep.subr.bf16.mxu0 0
    %5231 = vmatpush1.bf16.xpose.msra.mxu0 0
    %5232 = vmatprep.subr.bf16.mxu0 0
    %5233 = vmatpush1.bf16.xpose.msra.mxu0 0
    %5234 = vmatprep.subr.bf16.mxu0 0
    %5235 = vmatpush1.bf16.xpose.msra.mxu0 0
    %5236 = vmatprep.subr.bf16.mxu0 0
    %5237 = vmatpush1.bf16.xpose.msra.mxu0 0
    %5238 = vmatprep.subr.bf16.mxu0 0
    %5239 = vmatpush1.bf16.xpose.msra.mxu0 0
    %5240 = vmatprep.subr.bf16.mxu0 0
    %5241 = vmatpush1.bf16.xpose.msra.mxu0 0
    %5242 = vmatprep.subr.bf16.mxu0 0
    %5243 = vmatpush1.bf16.xpose.msra.mxu0 0
    %5244 = vmatprep.subr.bf16.mxu0 0
    %5245 = vmatpush1.bf16.xpose.msra.mxu0 %v5228
    %5246 = vmatprep.subr.bf16.mxu0 0
    %5247 = vmatpush2.bf16.xpose.msra.mxu0 0
    %5248 = vmatprep.subr.bf16.mxu0 0
    %5249 = vmatpush2.bf16.xpose.msra.mxu0 0
    %5250 = vmatprep.subr.bf16.mxu0 0
    %5251 = vmatpush2.bf16.xpose.msra.mxu0 0
    %5252 = vmatprep.subr.bf16.mxu0 0
    %5253 = vmatpush2.bf16.xpose.msra.mxu0 0
    %5254 = vmatprep.subr.bf16.mxu0 0
    %5255 = vmatpush2.bf16.xpose.msra.mxu0 0
    %5256 = vmatprep.subr.bf16.mxu0 0
    %5257 = vmatpush2.bf16.xpose.msra.mxu0 0
    %5258 = vmatprep.subr.bf16.mxu0 0
    %5259 = vmatpush2.bf16.xpose.msra.mxu0 0
    %5260 = vmatprep.subr.bf16.mxu0 0
    %5261 = vmatpush2.bf16.xpose.msra.mxu0 0
    %5262 = vmatprep.mubr.bf16.mxu0 0
    %5263 = vmatmul.mubr.bf16.gmra.mxu0 %v5225
    %v5264 = vpop.f32.mrf.mxu0
    %v5265 = vadd.f32 %v107, %v5264
    %v5266 = vpop.f32.mrf.mxu0
    %v5267 = vpop.f32.mrf.mxu0
    %v5268 = vpop.f32.mrf.mxu0
    %5269 = vdwg.mxu0
    %v5270 = vsel %vm238, %v5215, -inf
    %5271 = vmax.xlane.f32.xlu0 %v5270
    %v5272 = vpop.xlane.xlu0 %5271
    %v5273 = vsel %vm238, %v5265, -inf
    %5274 = vmax.xlane.f32.xlu0 %v5273
    %v5275 = vpop.xlane.xlu0 %5274
    %v5276 = vsub.f32 %v5215, %v5272
    %v5277 = vsub.f32 %v5265, %v5275
    %v5278 = vmul.f32 %v5276, 1.442695
    %v5279 = vpow.pop %v5278
    %v5280 = vmul.f32 %v5277, 1.442695
    %v5281 = vpow.pop %v5280
    %v5282 = vsel %vm238, %v5279, 0.0
    %5283 = vadd.xlane.f32.xlu0 %v5282
    %v5284 = vpop.xlane.xlu0 %5283
    %v5285 = vsel %vm238, %v5281, 0.0
    %5286 = vadd.xlane.f32.xlu0 %v5285
    %v5287 = vpop.xlane.xlu0 %5286
    %v5288 = vrcp.pop %v5284
    %v5289 = vrcp.pop %v5287
    %v5290 = vmul.f32 %v5279, %v5288
    %v5291 = vmul.f32 %v5281, %v5289
    %v5292 = vpack.c.bf16 %v5290, %v5290
    %v5293 = vpack.c.bf16 %v5291, %v5291
    %5294 = vrot.lane.b32.xlu0 %v4944, 56
    %v5295 = vpop.permute.xlu0 %5294
    %v5297 = vsel %vm238, %v5292, 0
    %v5300 = vsel %vm363, %v5295, 0
    %5302 = vmatprep.subr.bf16.mxu0 0
    %5303 = vmatpush1.bf16.msra.mxu0 0
    %5304 = vmatprep.subr.bf16.mxu0 0
    %5305 = vmatpush1.bf16.msra.mxu0 0
    %5306 = vmatprep.subr.bf16.mxu0 0
    %5307 = vmatpush1.bf16.msra.mxu0 0
    %5308 = vmatprep.subr.bf16.mxu0 0
    %5309 = vmatpush1.bf16.msra.mxu0 0
    %5310 = vmatprep.subr.bf16.mxu0 0
    %5311 = vmatpush1.bf16.msra.mxu0 0
    %5312 = vmatprep.subr.bf16.mxu0 0
    %5313 = vmatpush1.bf16.msra.mxu0 0
    %5314 = vmatprep.subr.bf16.mxu0 0
    %5315 = vmatpush1.bf16.msra.mxu0 0
    %5316 = vmatprep.subr.bf16.mxu0 0
    %5317 = vmatpush1.bf16.msra.mxu0 %v5300
    %5318 = vmatprep.subr.bf16.mxu0 0
    %5319 = vmatpush2.bf16.msra.mxu0 0
    %5320 = vmatprep.subr.bf16.mxu0 0
    %5321 = vmatpush2.bf16.msra.mxu0 0
    %5322 = vmatprep.subr.bf16.mxu0 0
    %5323 = vmatpush2.bf16.msra.mxu0 0
    %5324 = vmatprep.subr.bf16.mxu0 0
    %5325 = vmatpush2.bf16.msra.mxu0 0
    %5326 = vmatprep.subr.bf16.mxu0 0
    %5327 = vmatpush2.bf16.msra.mxu0 0
    %5328 = vmatprep.subr.bf16.mxu0 0
    %5329 = vmatpush2.bf16.msra.mxu0 0
    %5330 = vmatprep.subr.bf16.mxu0 0
    %5331 = vmatpush2.bf16.msra.mxu0 0
    %5332 = vmatprep.subr.bf16.mxu0 0
    %5333 = vmatpush2.bf16.msra.mxu0 0
    %5334 = vmatprep.mubr.bf16.mxu0 0
    %5335 = vmatmul.mubr.bf16.gmra.mxu0 %v5297
    %v5336 = vpop.f32.mrf.mxu0
    %v5337 = vadd.f32 0.0, %v5336
    %v5338 = vpop.f32.mrf.mxu0
    %v5339 = vpop.f32.mrf.mxu0
    %v5340 = vpop.f32.mrf.mxu0
    %5341 = vdwg.mxu0
    %5342 = vrot.lane.b32.xlu0 %v4945, 56
    %v5343 = vpop.permute.xlu0 %5342
    %v5345 = vsel %vm238, %v5293, 0
    %v5348 = vsel %vm363, %v5343, 0
    %5350 = vmatprep.subr.bf16.mxu0 0
    %5351 = vmatpush1.bf16.msra.mxu0 0
    %5352 = vmatprep.subr.bf16.mxu0 0
    %5353 = vmatpush1.bf16.msra.mxu0 0
    %5354 = vmatprep.subr.bf16.mxu0 0
    %5355 = vmatpush1.bf16.msra.mxu0 0
    %5356 = vmatprep.subr.bf16.mxu0 0
    %5357 = vmatpush1.bf16.msra.mxu0 0
    %5358 = vmatprep.subr.bf16.mxu0 0
    %5359 = vmatpush1.bf16.msra.mxu0 0
    %5360 = vmatprep.subr.bf16.mxu0 0
    %5361 = vmatpush1.bf16.msra.mxu0 0
    %5362 = vmatprep.subr.bf16.mxu0 0
    %5363 = vmatpush1.bf16.msra.mxu0 0
    %5364 = vmatprep.subr.bf16.mxu0 0
    %5365 = vmatpush1.bf16.msra.mxu0 %v5348
    %5366 = vmatprep.subr.bf16.mxu0 0
    %5367 = vmatpush2.bf16.msra.mxu0 0
    %5368 = vmatprep.subr.bf16.mxu0 0
    %5369 = vmatpush2.bf16.msra.mxu0 0
    %5370 = vmatprep.subr.bf16.mxu0 0
    %5371 = vmatpush2.bf16.msra.mxu0 0
    %5372 = vmatprep.subr.bf16.mxu0 0
    %5373 = vmatpush2.bf16.msra.mxu0 0
    %5374 = vmatprep.subr.bf16.mxu0 0
    %5375 = vmatpush2.bf16.msra.mxu0 0
    %5376 = vmatprep.subr.bf16.mxu0 0
    %5377 = vmatpush2.bf16.msra.mxu0 0
    %5378 = vmatprep.subr.bf16.mxu0 0
    %5379 = vmatpush2.bf16.msra.mxu0 0
    %5380 = vmatprep.subr.bf16.mxu0 0
    %5381 = vmatpush2.bf16.msra.mxu0 0
    %5382 = vmatprep.mubr.bf16.mxu0 0
    %5383 = vmatmul.mubr.bf16.gmra.mxu0 %v5345
    %v5384 = vpop.f32.mrf.mxu0
    %v5385 = vadd.f32 0.0, %v5384
    %v5386 = vpop.f32.mrf.mxu0
    %v5387 = vpop.f32.mrf.mxu0
    %v5388 = vpop.f32.mrf.mxu0
    %5389 = vdwg.mxu0
    %v5390 = vpack.c.bf16 %v5385, %v5337
    %v5392 = vsel %vm238, %v5390, 0
    %v5395 = vsel %vm363, %v4948, 0
    %5397 = vmatprep.subr.bf16.mxu0 0
    %5398 = vmatpush1.bf16.msra.mxu0 0
    %5399 = vmatprep.subr.bf16.mxu0 0
    %5400 = vmatpush1.bf16.msra.mxu0 0
    %5401 = vmatprep.subr.bf16.mxu0 0
    %5402 = vmatpush1.bf16.msra.mxu0 0
    %5403 = vmatprep.subr.bf16.mxu0 0
    %5404 = vmatpush1.bf16.msra.mxu0 0
    %5405 = vmatprep.subr.bf16.mxu0 0
    %5406 = vmatpush1.bf16.msra.mxu0 0
    %5407 = vmatprep.subr.bf16.mxu0 0
    %5408 = vmatpush1.bf16.msra.mxu0 0
    %5409 = vmatprep.subr.bf16.mxu0 0
    %5410 = vmatpush1.bf16.msra.mxu0 0
    %5411 = vmatprep.subr.bf16.mxu0 0
    %5412 = vmatpush1.bf16.msra.mxu0 %v5395
    %5413 = vmatprep.subr.bf16.mxu0 0
    %5414 = vmatpush2.bf16.msra.mxu0 0
    %5415 = vmatprep.subr.bf16.mxu0 0
    %5416 = vmatpush2.bf16.msra.mxu0 0
    %5417 = vmatprep.subr.bf16.mxu0 0
    %5418 = vmatpush2.bf16.msra.mxu0 0
    %5419 = vmatprep.subr.bf16.mxu0 0
    %5420 = vmatpush2.bf16.msra.mxu0 0
    %5421 = vmatprep.subr.bf16.mxu0 0
    %5422 = vmatpush2.bf16.msra.mxu0 0
    %5423 = vmatprep.subr.bf16.mxu0 0
    %5424 = vmatpush2.bf16.msra.mxu0 0
    %5425 = vmatprep.subr.bf16.mxu0 0
    %5426 = vmatpush2.bf16.msra.mxu0 0
    %5427 = vmatprep.subr.bf16.mxu0 0
    %5428 = vmatpush2.bf16.msra.mxu0 0
    %5429 = vmatprep.mubr.bf16.mxu0 0
    %5430 = vmatmul.mubr.bf16.gmra.mxu0 %v5392
    %v5431 = vpop.f32.mrf.mxu0
    %v5432 = vadd.f32 0.0, %v5431
    %v5433 = vpop.f32.mrf.mxu0
    %v5434 = vpop.f32.mrf.mxu0
    %v5435 = vadd.f32 0.0, %v5434
    %v5436 = vpop.f32.mrf.mxu0
    %5437 = vdwg.mxu0
    %v5439 = vsel %vm238, %v5169, 0
    %v5442 = vsel %vm363, %v4947, 0
    %5444 = vmatprep.subr.bf16.mxu0 0
    %5445 = vmatpush1.bf16.msra.mxu0 0
    %5446 = vmatprep.subr.bf16.mxu0 0
    %5447 = vmatpush1.bf16.msra.mxu0 0
    %5448 = vmatprep.subr.bf16.mxu0 0
    %5449 = vmatpush1.bf16.msra.mxu0 0
    %5450 = vmatprep.subr.bf16.mxu0 0
    %5451 = vmatpush1.bf16.msra.mxu0 0
    %5452 = vmatprep.subr.bf16.mxu0 0
    %5453 = vmatpush1.bf16.msra.mxu0 0
    %5454 = vmatprep.subr.bf16.mxu0 0
    %5455 = vmatpush1.bf16.msra.mxu0 0
    %5456 = vmatprep.subr.bf16.mxu0 0
    %5457 = vmatpush1.bf16.msra.mxu0 0
    %5458 = vmatprep.subr.bf16.mxu0 0
    %5459 = vmatpush1.bf16.msra.mxu0 %v5442
    %5460 = vmatprep.subr.bf16.mxu0 0
    %5461 = vmatpush2.bf16.msra.mxu0 0
    %5462 = vmatprep.subr.bf16.mxu0 0
    %5463 = vmatpush2.bf16.msra.mxu0 0
    %5464 = vmatprep.subr.bf16.mxu0 0
    %5465 = vmatpush2.bf16.msra.mxu0 0
    %5466 = vmatprep.subr.bf16.mxu0 0
    %5467 = vmatpush2.bf16.msra.mxu0 0
    %5468 = vmatprep.subr.bf16.mxu0 0
    %5469 = vmatpush2.bf16.msra.mxu0 0
    %5470 = vmatprep.subr.bf16.mxu0 0
    %5471 = vmatpush2.bf16.msra.mxu0 0
    %5472 = vmatprep.subr.bf16.mxu0 0
    %5473 = vmatpush2.bf16.msra.mxu0 0
    %5474 = vmatprep.subr.bf16.mxu0 0
    %5475 = vmatpush2.bf16.msra.mxu0 0
    %5476 = vmatprep.mubr.bf16.mxu0 0
    %5477 = vmatmul.mubr.bf16.gmra.mxu0 %v5439
    %v5478 = vpop.f32.mrf.mxu0
    %v5479 = vadd.f32 %v5432, %v5478
    %v5480 = vpop.f32.mrf.mxu0
    %v5481 = vpop.f32.mrf.mxu0
    %v5482 = vadd.f32 %v5435, %v5481
    %v5483 = vpop.f32.mrf.mxu0
    %5484 = vdwg.mxu0
    %5485 = vrot.lane.b32.xlu0 %v4944, 112
    %v5486 = vpop.permute.xlu0 %5485
    %5487 = vrot.lane.b32.xlu0 %v4944, 80
    %v5488 = vpop.permute.xlu0 %5487
    %v5490 = vsel %vm238, %v5486, 0
    %v5493 = vsel %vm238, %v5488, 0
    %5495 = vmatprep.subr.bf16.mxu0 0
    %5496 = vmatpush1.bf16.xpose.msra.mxu0 0
    %5497 = vmatprep.subr.bf16.mxu0 0
    %5498 = vmatpush1.bf16.xpose.msra.mxu0 0
    %5499 = vmatprep.subr.bf16.mxu0 0
    %5500 = vmatpush1.bf16.xpose.msra.mxu0 0
    %5501 = vmatprep.subr.bf16.mxu0 0
    %5502 = vmatpush1.bf16.xpose.msra.mxu0 0
    %5503 = vmatprep.subr.bf16.mxu0 0
    %5504 = vmatpush1.bf16.xpose.msra.mxu0 0
    %5505 = vmatprep.subr.bf16.mxu0 0
    %5506 = vmatpush1.bf16.xpose.msra.mxu0 0
    %5507 = vmatprep.subr.bf16.mxu0 0
    %5508 = vmatpush1.bf16.xpose.msra.mxu0 0
    %5509 = vmatprep.subr.bf16.mxu0 0
    %5510 = vmatpush1.bf16.xpose.msra.mxu0 %v5493
    %5511 = vmatprep.subr.bf16.mxu0 0
    %5512 = vmatpush2.bf16.xpose.msra.mxu0 0
    %5513 = vmatprep.subr.bf16.mxu0 0
    %5514 = vmatpush2.bf16.xpose.msra.mxu0 0
    %5515 = vmatprep.subr.bf16.mxu0 0
    %5516 = vmatpush2.bf16.xpose.msra.mxu0 0
    %5517 = vmatprep.subr.bf16.mxu0 0
    %5518 = vmatpush2.bf16.xpose.msra.mxu0 0
    %5519 = vmatprep.subr.bf16.mxu0 0
    %5520 = vmatpush2.bf16.xpose.msra.mxu0 0
    %5521 = vmatprep.subr.bf16.mxu0 0
    %5522 = vmatpush2.bf16.xpose.msra.mxu0 0
    %5523 = vmatprep.subr.bf16.mxu0 0
    %5524 = vmatpush2.bf16.xpose.msra.mxu0 0
    %5525 = vmatprep.subr.bf16.mxu0 0
    %5526 = vmatpush2.bf16.xpose.msra.mxu0 0
    %5527 = vmatprep.mubr.bf16.mxu0 0
    %5528 = vmatmul.mubr.bf16.gmra.mxu0 %v5490
    %v5529 = vpop.f32.mrf.mxu0
    %v5530 = vadd.f32 %v103, %v5529
    %v5531 = vpop.f32.mrf.mxu0
    %v5532 = vpop.f32.mrf.mxu0
    %v5533 = vpop.f32.mrf.mxu0
    %5534 = vdwg.mxu0
    %5535 = vrot.lane.b32.xlu0 %v4945, 112
    %v5536 = vpop.permute.xlu0 %5535
    %5537 = vrot.lane.b32.xlu0 %v4945, 80
    %v5538 = vpop.permute.xlu0 %5537
    %v5540 = vsel %vm238, %v5536, 0
    %v5543 = vsel %vm238, %v5538, 0
    %5545 = vmatprep.subr.bf16.mxu0 0
    %5546 = vmatpush1.bf16.xpose.msra.mxu0 0
    %5547 = vmatprep.subr.bf16.mxu0 0
    %5548 = vmatpush1.bf16.xpose.msra.mxu0 0
    %5549 = vmatprep.subr.bf16.mxu0 0
    %5550 = vmatpush1.bf16.xpose.msra.mxu0 0
    %5551 = vmatprep.subr.bf16.mxu0 0
    %5552 = vmatpush1.bf16.xpose.msra.mxu0 0
    %5553 = vmatprep.subr.bf16.mxu0 0
    %5554 = vmatpush1.bf16.xpose.msra.mxu0 0
    %5555 = vmatprep.subr.bf16.mxu0 0
    %5556 = vmatpush1.bf16.xpose.msra.mxu0 0
    %5557 = vmatprep.subr.bf16.mxu0 0
    %5558 = vmatpush1.bf16.xpose.msra.mxu0 0
    %5559 = vmatprep.subr.bf16.mxu0 0
    %5560 = vmatpush1.bf16.xpose.msra.mxu0 %v5543
    %5561 = vmatprep.subr.bf16.mxu0 0
    %5562 = vmatpush2.bf16.xpose.msra.mxu0 0
    %5563 = vmatprep.subr.bf16.mxu0 0
    %5564 = vmatpush2.bf16.xpose.msra.mxu0 0
    %5565 = vmatprep.subr.bf16.mxu0 0
    %5566 = vmatpush2.bf16.xpose.msra.mxu0 0
    %5567 = vmatprep.subr.bf16.mxu0 0
    %5568 = vmatpush2.bf16.xpose.msra.mxu0 0
    %5569 = vmatprep.subr.bf16.mxu0 0
    %5570 = vmatpush2.bf16.xpose.msra.mxu0 0
    %5571 = vmatprep.subr.bf16.mxu0 0
    %5572 = vmatpush2.bf16.xpose.msra.mxu0 0
    %5573 = vmatprep.subr.bf16.mxu0 0
    %5574 = vmatpush2.bf16.xpose.msra.mxu0 0
    %5575 = vmatprep.subr.bf16.mxu0 0
    %5576 = vmatpush2.bf16.xpose.msra.mxu0 0
    %5577 = vmatprep.mubr.bf16.mxu0 0
    %5578 = vmatmul.mubr.bf16.gmra.mxu0 %v5540
    %v5579 = vpop.f32.mrf.mxu0
    %v5580 = vadd.f32 %v107, %v5579
    %v5581 = vpop.f32.mrf.mxu0
    %v5582 = vpop.f32.mrf.mxu0
    %v5583 = vpop.f32.mrf.mxu0
    %5584 = vdwg.mxu0
    %v5585 = vsel %vm238, %v5530, -inf
    %5586 = vmax.xlane.f32.xlu0 %v5585
    %v5587 = vpop.xlane.xlu0 %5586
    %v5588 = vsel %vm238, %v5580, -inf
    %5589 = vmax.xlane.f32.xlu0 %v5588
    %v5590 = vpop.xlane.xlu0 %5589
    %v5591 = vsub.f32 %v5530, %v5587
    %v5592 = vsub.f32 %v5580, %v5590
    %v5593 = vmul.f32 %v5591, 1.442695
    %v5594 = vpow.pop %v5593
    %v5595 = vmul.f32 %v5592, 1.442695
    %v5596 = vpow.pop %v5595
    %v5597 = vsel %vm238, %v5594, 0.0
    %5598 = vadd.xlane.f32.xlu0 %v5597
    %v5599 = vpop.xlane.xlu0 %5598
    %v5600 = vsel %vm238, %v5596, 0.0
    %5601 = vadd.xlane.f32.xlu0 %v5600
    %v5602 = vpop.xlane.xlu0 %5601
    %v5603 = vrcp.pop %v5599
    %v5604 = vrcp.pop %v5602
    %v5605 = vmul.f32 %v5594, %v5603
    %v5606 = vmul.f32 %v5596, %v5604
    %v5607 = vpack.c.bf16 %v5605, %v5605
    %v5608 = vpack.c.bf16 %v5606, %v5606
    %5609 = vrot.lane.b32.xlu0 %v4944, 48
    %v5610 = vpop.permute.xlu0 %5609
    %v5612 = vsel %vm238, %v5607, 0
    %v5615 = vsel %vm363, %v5610, 0
    %5617 = vmatprep.subr.bf16.mxu0 0
    %5618 = vmatpush1.bf16.msra.mxu0 0
    %5619 = vmatprep.subr.bf16.mxu0 0
    %5620 = vmatpush1.bf16.msra.mxu0 0
    %5621 = vmatprep.subr.bf16.mxu0 0
    %5622 = vmatpush1.bf16.msra.mxu0 0
    %5623 = vmatprep.subr.bf16.mxu0 0
    %5624 = vmatpush1.bf16.msra.mxu0 0
    %5625 = vmatprep.subr.bf16.mxu0 0
    %5626 = vmatpush1.bf16.msra.mxu0 0
    %5627 = vmatprep.subr.bf16.mxu0 0
    %5628 = vmatpush1.bf16.msra.mxu0 0
    %5629 = vmatprep.subr.bf16.mxu0 0
    %5630 = vmatpush1.bf16.msra.mxu0 0
    %5631 = vmatprep.subr.bf16.mxu0 0
    %5632 = vmatpush1.bf16.msra.mxu0 %v5615
    %5633 = vmatprep.subr.bf16.mxu0 0
    %5634 = vmatpush2.bf16.msra.mxu0 0
    %5635 = vmatprep.subr.bf16.mxu0 0
    %5636 = vmatpush2.bf16.msra.mxu0 0
    %5637 = vmatprep.subr.bf16.mxu0 0
    %5638 = vmatpush2.bf16.msra.mxu0 0
    %5639 = vmatprep.subr.bf16.mxu0 0
    %5640 = vmatpush2.bf16.msra.mxu0 0
    %5641 = vmatprep.subr.bf16.mxu0 0
    %5642 = vmatpush2.bf16.msra.mxu0 0
    %5643 = vmatprep.subr.bf16.mxu0 0
    %5644 = vmatpush2.bf16.msra.mxu0 0
    %5645 = vmatprep.subr.bf16.mxu0 0
    %5646 = vmatpush2.bf16.msra.mxu0 0
    %5647 = vmatprep.subr.bf16.mxu0 0
    %5648 = vmatpush2.bf16.msra.mxu0 0
    %5649 = vmatprep.mubr.bf16.mxu0 0
    %5650 = vmatmul.mubr.bf16.gmra.mxu0 %v5612
    %v5651 = vpop.f32.mrf.mxu0
    %v5652 = vadd.f32 0.0, %v5651
    %v5653 = vpop.f32.mrf.mxu0
    %v5654 = vpop.f32.mrf.mxu0
    %v5655 = vpop.f32.mrf.mxu0
    %5656 = vdwg.mxu0
    %5657 = vrot.lane.b32.xlu0 %v4945, 48
    %v5658 = vpop.permute.xlu0 %5657
    %v5660 = vsel %vm238, %v5608, 0
    %v5663 = vsel %vm363, %v5658, 0
    %5665 = vmatprep.subr.bf16.mxu0 0
    %5666 = vmatpush1.bf16.msra.mxu0 0
    %5667 = vmatprep.subr.bf16.mxu0 0
    %5668 = vmatpush1.bf16.msra.mxu0 0
    %5669 = vmatprep.subr.bf16.mxu0 0
    %5670 = vmatpush1.bf16.msra.mxu0 0
    %5671 = vmatprep.subr.bf16.mxu0 0
    %5672 = vmatpush1.bf16.msra.mxu0 0
    %5673 = vmatprep.subr.bf16.mxu0 0
    %5674 = vmatpush1.bf16.msra.mxu0 0
    %5675 = vmatprep.subr.bf16.mxu0 0
    %5676 = vmatpush1.bf16.msra.mxu0 0
    %5677 = vmatprep.subr.bf16.mxu0 0
    %5678 = vmatpush1.bf16.msra.mxu0 0
    %5679 = vmatprep.subr.bf16.mxu0 0
    %5680 = vmatpush1.bf16.msra.mxu0 %v5663
    %5681 = vmatprep.subr.bf16.mxu0 0
    %5682 = vmatpush2.bf16.msra.mxu0 0
    %5683 = vmatprep.subr.bf16.mxu0 0
    %5684 = vmatpush2.bf16.msra.mxu0 0
    %5685 = vmatprep.subr.bf16.mxu0 0
    %5686 = vmatpush2.bf16.msra.mxu0 0
    %5687 = vmatprep.subr.bf16.mxu0 0
    %5688 = vmatpush2.bf16.msra.mxu0 0
    %5689 = vmatprep.subr.bf16.mxu0 0
    %5690 = vmatpush2.bf16.msra.mxu0 0
    %5691 = vmatprep.subr.bf16.mxu0 0
    %5692 = vmatpush2.bf16.msra.mxu0 0
    %5693 = vmatprep.subr.bf16.mxu0 0
    %5694 = vmatpush2.bf16.msra.mxu0 0
    %5695 = vmatprep.subr.bf16.mxu0 0
    %5696 = vmatpush2.bf16.msra.mxu0 0
    %5697 = vmatprep.mubr.bf16.mxu0 0
    %5698 = vmatmul.mubr.bf16.gmra.mxu0 %v5660
    %v5699 = vpop.f32.mrf.mxu0
    %v5700 = vadd.f32 0.0, %v5699
    %v5701 = vpop.f32.mrf.mxu0
    %v5702 = vpop.f32.mrf.mxu0
    %v5703 = vpop.f32.mrf.mxu0
    %5704 = vdwg.mxu0
    %v5705 = vpack.c.bf16 %v5700, %v5652
    %v5707 = vsel %vm238, %v5705, 0
    %v5710 = vsel %vm363, %v4949, 0
    %5712 = vmatprep.subr.bf16.mxu0 0
    %5713 = vmatpush1.bf16.msra.mxu0 0
    %5714 = vmatprep.subr.bf16.mxu0 0
    %5715 = vmatpush1.bf16.msra.mxu0 0
    %5716 = vmatprep.subr.bf16.mxu0 0
    %5717 = vmatpush1.bf16.msra.mxu0 0
    %5718 = vmatprep.subr.bf16.mxu0 0
    %5719 = vmatpush1.bf16.msra.mxu0 0
    %5720 = vmatprep.subr.bf16.mxu0 0
    %5721 = vmatpush1.bf16.msra.mxu0 0
    %5722 = vmatprep.subr.bf16.mxu0 0
    %5723 = vmatpush1.bf16.msra.mxu0 0
    %5724 = vmatprep.subr.bf16.mxu0 0
    %5725 = vmatpush1.bf16.msra.mxu0 0
    %5726 = vmatprep.subr.bf16.mxu0 0
    %5727 = vmatpush1.bf16.msra.mxu0 %v5710
    %5728 = vmatprep.subr.bf16.mxu0 0
    %5729 = vmatpush2.bf16.msra.mxu0 0
    %5730 = vmatprep.subr.bf16.mxu0 0
    %5731 = vmatpush2.bf16.msra.mxu0 0
    %5732 = vmatprep.subr.bf16.mxu0 0
    %5733 = vmatpush2.bf16.msra.mxu0 0
    %5734 = vmatprep.subr.bf16.mxu0 0
    %5735 = vmatpush2.bf16.msra.mxu0 0
    %5736 = vmatprep.subr.bf16.mxu0 0
    %5737 = vmatpush2.bf16.msra.mxu0 0
    %5738 = vmatprep.subr.bf16.mxu0 0
    %5739 = vmatpush2.bf16.msra.mxu0 0
    %5740 = vmatprep.subr.bf16.mxu0 0
    %5741 = vmatpush2.bf16.msra.mxu0 0
    %5742 = vmatprep.subr.bf16.mxu0 0
    %5743 = vmatpush2.bf16.msra.mxu0 0
    %5744 = vmatprep.mubr.bf16.mxu0 0
    %5745 = vmatmul.mubr.bf16.gmra.mxu0 %v5707
    %v5746 = vpop.f32.mrf.mxu0
    %v5747 = vadd.f32 0.0, %v5746
    %v5748 = vpop.f32.mrf.mxu0
    %v5749 = vpop.f32.mrf.mxu0
    %v5750 = vadd.f32 0.0, %v5749
    %v5751 = vpop.f32.mrf.mxu0
    %5752 = vdwg.mxu0
    %v5753 = vadd.f32 %v5479, %v5747
    %v5754 = vadd.f32 %v5482, %v5750
    %5755 = vrot.lane.b32.xlu0 %v4944, 104
    %v5756 = vpop.permute.xlu0 %5755
    %5757 = vrot.lane.b32.xlu0 %v4944, 72
    %v5758 = vpop.permute.xlu0 %5757
    %v5760 = vsel %vm238, %v5756, 0
    %v5763 = vsel %vm238, %v5758, 0
    %5765 = vmatprep.subr.bf16.mxu0 0
    %5766 = vmatpush1.bf16.xpose.msra.mxu0 0
    %5767 = vmatprep.subr.bf16.mxu0 0
    %5768 = vmatpush1.bf16.xpose.msra.mxu0 0
    %5769 = vmatprep.subr.bf16.mxu0 0
    %5770 = vmatpush1.bf16.xpose.msra.mxu0 0
    %5771 = vmatprep.subr.bf16.mxu0 0
    %5772 = vmatpush1.bf16.xpose.msra.mxu0 0
    %5773 = vmatprep.subr.bf16.mxu0 0
    %5774 = vmatpush1.bf16.xpose.msra.mxu0 0
    %5775 = vmatprep.subr.bf16.mxu0 0
    %5776 = vmatpush1.bf16.xpose.msra.mxu0 0
    %5777 = vmatprep.subr.bf16.mxu0 0
    %5778 = vmatpush1.bf16.xpose.msra.mxu0 0
    %5779 = vmatprep.subr.bf16.mxu0 0
    %5780 = vmatpush1.bf16.xpose.msra.mxu0 %v5763
    %5781 = vmatprep.subr.bf16.mxu0 0
    %5782 = vmatpush2.bf16.xpose.msra.mxu0 0
    %5783 = vmatprep.subr.bf16.mxu0 0
    %5784 = vmatpush2.bf16.xpose.msra.mxu0 0
    %5785 = vmatprep.subr.bf16.mxu0 0
    %5786 = vmatpush2.bf16.xpose.msra.mxu0 0
    %5787 = vmatprep.subr.bf16.mxu0 0
    %5788 = vmatpush2.bf16.xpose.msra.mxu0 0
    %5789 = vmatprep.subr.bf16.mxu0 0
    %5790 = vmatpush2.bf16.xpose.msra.mxu0 0
    %5791 = vmatprep.subr.bf16.mxu0 0
    %5792 = vmatpush2.bf16.xpose.msra.mxu0 0
    %5793 = vmatprep.subr.bf16.mxu0 0
    %5794 = vmatpush2.bf16.xpose.msra.mxu0 0
    %5795 = vmatprep.subr.bf16.mxu0 0
    %5796 = vmatpush2.bf16.xpose.msra.mxu0 0
    %5797 = vmatprep.mubr.bf16.mxu0 0
    %5798 = vmatmul.mubr.bf16.gmra.mxu0 %v5760
    %v5799 = vpop.f32.mrf.mxu0
    %v5800 = vadd.f32 %v103, %v5799
    %v5801 = vpop.f32.mrf.mxu0
    %v5802 = vpop.f32.mrf.mxu0
    %v5803 = vpop.f32.mrf.mxu0
    %5804 = vdwg.mxu0
    %5805 = vrot.lane.b32.xlu0 %v4945, 104
    %v5806 = vpop.permute.xlu0 %5805
    %5807 = vrot.lane.b32.xlu0 %v4945, 72
    %v5808 = vpop.permute.xlu0 %5807
    %v5810 = vsel %vm238, %v5806, 0
    %v5813 = vsel %vm238, %v5808, 0
    %5815 = vmatprep.subr.bf16.mxu0 0
    %5816 = vmatpush1.bf16.xpose.msra.mxu0 0
    %5817 = vmatprep.subr.bf16.mxu0 0
    %5818 = vmatpush1.bf16.xpose.msra.mxu0 0
    %5819 = vmatprep.subr.bf16.mxu0 0
    %5820 = vmatpush1.bf16.xpose.msra.mxu0 0
    %5821 = vmatprep.subr.bf16.mxu0 0
    %5822 = vmatpush1.bf16.xpose.msra.mxu0 0
    %5823 = vmatprep.subr.bf16.mxu0 0
    %5824 = vmatpush1.bf16.xpose.msra.mxu0 0
    %5825 = vmatprep.subr.bf16.mxu0 0
    %5826 = vmatpush1.bf16.xpose.msra.mxu0 0
    %5827 = vmatprep.subr.bf16.mxu0 0
    %5828 = vmatpush1.bf16.xpose.msra.mxu0 0
    %5829 = vmatprep.subr.bf16.mxu0 0
    %5830 = vmatpush1.bf16.xpose.msra.mxu0 %v5813
    %5831 = vmatprep.subr.bf16.mxu0 0
    %5832 = vmatpush2.bf16.xpose.msra.mxu0 0
    %5833 = vmatprep.subr.bf16.mxu0 0
    %5834 = vmatpush2.bf16.xpose.msra.mxu0 0
    %5835 = vmatprep.subr.bf16.mxu0 0
    %5836 = vmatpush2.bf16.xpose.msra.mxu0 0
    %5837 = vmatprep.subr.bf16.mxu0 0
    %5838 = vmatpush2.bf16.xpose.msra.mxu0 0
    %5839 = vmatprep.subr.bf16.mxu0 0
    %5840 = vmatpush2.bf16.xpose.msra.mxu0 0
    %5841 = vmatprep.subr.bf16.mxu0 0
    %5842 = vmatpush2.bf16.xpose.msra.mxu0 0
    %5843 = vmatprep.subr.bf16.mxu0 0
    %5844 = vmatpush2.bf16.xpose.msra.mxu0 0
    %5845 = vmatprep.subr.bf16.mxu0 0
    %5846 = vmatpush2.bf16.xpose.msra.mxu0 0
    %5847 = vmatprep.mubr.bf16.mxu0 0
    %5848 = vmatmul.mubr.bf16.gmra.mxu0 %v5810
    %v5849 = vpop.f32.mrf.mxu0
    %v5850 = vadd.f32 %v107, %v5849
    %v5851 = vpop.f32.mrf.mxu0
    %v5852 = vpop.f32.mrf.mxu0
    %v5853 = vpop.f32.mrf.mxu0
    %5854 = vdwg.mxu0
    %v5855 = vsel %vm238, %v5800, -inf
    %5856 = vmax.xlane.f32.xlu0 %v5855
    %v5857 = vpop.xlane.xlu0 %5856
    %v5858 = vsel %vm238, %v5850, -inf
    %5859 = vmax.xlane.f32.xlu0 %v5858
    %v5860 = vpop.xlane.xlu0 %5859
    %v5861 = vsub.f32 %v5800, %v5857
    %v5862 = vsub.f32 %v5850, %v5860
    %v5863 = vmul.f32 %v5861, 1.442695
    %v5864 = vpow.pop %v5863
    %v5865 = vmul.f32 %v5862, 1.442695
    %v5866 = vpow.pop %v5865
    %v5867 = vsel %vm238, %v5864, 0.0
    %5868 = vadd.xlane.f32.xlu0 %v5867
    %v5869 = vpop.xlane.xlu0 %5868
    %v5870 = vsel %vm238, %v5866, 0.0
    %5871 = vadd.xlane.f32.xlu0 %v5870
    %v5872 = vpop.xlane.xlu0 %5871
    %v5873 = vrcp.pop %v5869
    %v5874 = vrcp.pop %v5872
    %v5875 = vmul.f32 %v5864, %v5873
    %v5876 = vmul.f32 %v5866, %v5874
    %v5877 = vpack.c.bf16 %v5875, %v5875
    %v5878 = vpack.c.bf16 %v5876, %v5876
    %5879 = vrot.lane.b32.xlu0 %v4944, 40
    %v5880 = vpop.permute.xlu0 %5879
    %v5882 = vsel %vm238, %v5877, 0
    %v5885 = vsel %vm363, %v5880, 0
    %5887 = vmatprep.subr.bf16.mxu0 0
    %5888 = vmatpush1.bf16.msra.mxu0 0
    %5889 = vmatprep.subr.bf16.mxu0 0
    %5890 = vmatpush1.bf16.msra.mxu0 0
    %5891 = vmatprep.subr.bf16.mxu0 0
    %5892 = vmatpush1.bf16.msra.mxu0 0
    %5893 = vmatprep.subr.bf16.mxu0 0
    %5894 = vmatpush1.bf16.msra.mxu0 0
    %5895 = vmatprep.subr.bf16.mxu0 0
    %5896 = vmatpush1.bf16.msra.mxu0 0
    %5897 = vmatprep.subr.bf16.mxu0 0
    %5898 = vmatpush1.bf16.msra.mxu0 0
    %5899 = vmatprep.subr.bf16.mxu0 0
    %5900 = vmatpush1.bf16.msra.mxu0 0
    %5901 = vmatprep.subr.bf16.mxu0 0
    %5902 = vmatpush1.bf16.msra.mxu0 %v5885
    %5903 = vmatprep.subr.bf16.mxu0 0
    %5904 = vmatpush2.bf16.msra.mxu0 0
    %5905 = vmatprep.subr.bf16.mxu0 0
    %5906 = vmatpush2.bf16.msra.mxu0 0
    %5907 = vmatprep.subr.bf16.mxu0 0
    %5908 = vmatpush2.bf16.msra.mxu0 0
    %5909 = vmatprep.subr.bf16.mxu0 0
    %5910 = vmatpush2.bf16.msra.mxu0 0
    %5911 = vmatprep.subr.bf16.mxu0 0
    %5912 = vmatpush2.bf16.msra.mxu0 0
    %5913 = vmatprep.subr.bf16.mxu0 0
    %5914 = vmatpush2.bf16.msra.mxu0 0
    %5915 = vmatprep.subr.bf16.mxu0 0
    %5916 = vmatpush2.bf16.msra.mxu0 0
    %5917 = vmatprep.subr.bf16.mxu0 0
    %5918 = vmatpush2.bf16.msra.mxu0 0
    %5919 = vmatprep.mubr.bf16.mxu0 0
    %5920 = vmatmul.mubr.bf16.gmra.mxu0 %v5882
    %v5921 = vpop.f32.mrf.mxu0
    %v5922 = vadd.f32 0.0, %v5921
    %v5923 = vpop.f32.mrf.mxu0
    %v5924 = vpop.f32.mrf.mxu0
    %v5925 = vpop.f32.mrf.mxu0
    %5926 = vdwg.mxu0
    %5927 = vrot.lane.b32.xlu0 %v4945, 40
    %v5928 = vpop.permute.xlu0 %5927
    %v5930 = vsel %vm238, %v5878, 0
    %v5933 = vsel %vm363, %v5928, 0
    %5935 = vmatprep.subr.bf16.mxu0 0
    %5936 = vmatpush1.bf16.msra.mxu0 0
    %5937 = vmatprep.subr.bf16.mxu0 0
    %5938 = vmatpush1.bf16.msra.mxu0 0
    %5939 = vmatprep.subr.bf16.mxu0 0
    %5940 = vmatpush1.bf16.msra.mxu0 0
    %5941 = vmatprep.subr.bf16.mxu0 0
    %5942 = vmatpush1.bf16.msra.mxu0 0
    %5943 = vmatprep.subr.bf16.mxu0 0
    %5944 = vmatpush1.bf16.msra.mxu0 0
    %5945 = vmatprep.subr.bf16.mxu0 0
    %5946 = vmatpush1.bf16.msra.mxu0 0
    %5947 = vmatprep.subr.bf16.mxu0 0
    %5948 = vmatpush1.bf16.msra.mxu0 0
    %5949 = vmatprep.subr.bf16.mxu0 0
    %5950 = vmatpush1.bf16.msra.mxu0 %v5933
    %5951 = vmatprep.subr.bf16.mxu0 0
    %5952 = vmatpush2.bf16.msra.mxu0 0
    %5953 = vmatprep.subr.bf16.mxu0 0
    %5954 = vmatpush2.bf16.msra.mxu0 0
    %5955 = vmatprep.subr.bf16.mxu0 0
    %5956 = vmatpush2.bf16.msra.mxu0 0
    %5957 = vmatprep.subr.bf16.mxu0 0
    %5958 = vmatpush2.bf16.msra.mxu0 0
    %5959 = vmatprep.subr.bf16.mxu0 0
    %5960 = vmatpush2.bf16.msra.mxu0 0
    %5961 = vmatprep.subr.bf16.mxu0 0
    %5962 = vmatpush2.bf16.msra.mxu0 0
    %5963 = vmatprep.subr.bf16.mxu0 0
    %5964 = vmatpush2.bf16.msra.mxu0 0
    %5965 = vmatprep.subr.bf16.mxu0 0
    %5966 = vmatpush2.bf16.msra.mxu0 0
    %5967 = vmatprep.mubr.bf16.mxu0 0
    %5968 = vmatmul.mubr.bf16.gmra.mxu0 %v5930
    %v5969 = vpop.f32.mrf.mxu0
    %v5970 = vadd.f32 0.0, %v5969
    %v5971 = vpop.f32.mrf.mxu0
    %v5972 = vpop.f32.mrf.mxu0
    %v5973 = vpop.f32.mrf.mxu0
    %5974 = vdwg.mxu0
    %v5975 = vpack.c.bf16 %v5970, %v5922
    %v5977 = vsel %vm238, %v5975, 0
    %v5980 = vsel %vm363, %v4950, 0
    %5982 = vmatprep.subr.bf16.mxu0 0
    %5983 = vmatpush1.bf16.msra.mxu0 0
    %5984 = vmatprep.subr.bf16.mxu0 0
    %5985 = vmatpush1.bf16.msra.mxu0 0
    %5986 = vmatprep.subr.bf16.mxu0 0
    %5987 = vmatpush1.bf16.msra.mxu0 0
    %5988 = vmatprep.subr.bf16.mxu0 0
    %5989 = vmatpush1.bf16.msra.mxu0 0
    %5990 = vmatprep.subr.bf16.mxu0 0
    %5991 = vmatpush1.bf16.msra.mxu0 0
    %5992 = vmatprep.subr.bf16.mxu0 0
    %5993 = vmatpush1.bf16.msra.mxu0 0
    %5994 = vmatprep.subr.bf16.mxu0 0
    %5995 = vmatpush1.bf16.msra.mxu0 0
    %5996 = vmatprep.subr.bf16.mxu0 0
    %5997 = vmatpush1.bf16.msra.mxu0 %v5980
    %5998 = vmatprep.subr.bf16.mxu0 0
    %5999 = vmatpush2.bf16.msra.mxu0 0
    %6000 = vmatprep.subr.bf16.mxu0 0
    %6001 = vmatpush2.bf16.msra.mxu0 0
    %6002 = vmatprep.subr.bf16.mxu0 0
    %6003 = vmatpush2.bf16.msra.mxu0 0
    %6004 = vmatprep.subr.bf16.mxu0 0
    %6005 = vmatpush2.bf16.msra.mxu0 0
    %6006 = vmatprep.subr.bf16.mxu0 0
    %6007 = vmatpush2.bf16.msra.mxu0 0
    %6008 = vmatprep.subr.bf16.mxu0 0
    %6009 = vmatpush2.bf16.msra.mxu0 0
    %6010 = vmatprep.subr.bf16.mxu0 0
    %6011 = vmatpush2.bf16.msra.mxu0 0
    %6012 = vmatprep.subr.bf16.mxu0 0
    %6013 = vmatpush2.bf16.msra.mxu0 0
    %6014 = vmatprep.mubr.bf16.mxu0 0
    %6015 = vmatmul.mubr.bf16.gmra.mxu0 %v5977
    %v6016 = vpop.f32.mrf.mxu0
    %v6017 = vadd.f32 0.0, %v6016
    %v6018 = vpop.f32.mrf.mxu0
    %v6019 = vpop.f32.mrf.mxu0
    %v6020 = vadd.f32 0.0, %v6019
    %v6021 = vpop.f32.mrf.mxu0
    %6022 = vdwg.mxu0
    %v6023 = vadd.f32 %v5753, %v6017
    %v6024 = vadd.f32 %v5754, %v6020
    %s6025 = scalar_lea.vmem %s6, 3
    %v6026 = vld [vmem:[%s6025] sm:$0x1]
    %v6028 = vlaneseq
    %v6029 = vshrl.u32 %v6028, 7
    %v6030 = vsub.s32 0, %v6029
    %v6031 = vrot.slane %v6026, %v6030
    %v6033 = vadd.f32 %v6023, %v6031
    %v6034 = vadd.f32 %v6024, %v6031
    %v6035 = vadd.f32 %v4730, %v6033
    %v6036 = vadd.f32 %v4731, %v6034
    %s6037 = scalar_lea.vmem %s7, 3
    %v6038 = vld [vmem:[%s6037] sm:$0x1]
    %s6039 = scalar_lea.vmem %s8, 3
    %v6040 = vld [vmem:[%s6039] sm:$0x1]
    %v6041 = vsel %vm184, %v6035, 0.0
    %6042 = vadd.xlane.f32.xlu0 %v6041
    %v6043 = vpop.xlane.xlu0 %6042
    %v6044 = vsel %vm184, %v6036, 0.0
    %6045 = vadd.xlane.f32.xlu0 %v6044
    %v6046 = vpop.xlane.xlu0 %6045
    %v6047 = vmul.f32 %v6043, %v1330
    %v6048 = vmul.f32 %v6046, %v1330
    %v6049 = vsub.f32 %v6035, %v6047
    %v6050 = vsub.f32 %v6036, %v6048
    %v6051 = vmul.f32 %v6049, %v6049
    %v6052 = vmul.f32 %v6050, %v6050
    %v6053 = vsel %vm184, %v6051, 0.0
    %6054 = vadd.xlane.f32.xlu0 %v6053
    %v6055 = vpop.xlane.xlu0 %6054
    %v6056 = vsel %vm184, %v6052, 0.0
    %6057 = vadd.xlane.f32.xlu0 %v6056
    %v6058 = vpop.xlane.xlu0 %6057
    %v6059 = vmul.f32 %v6055, %v1330
    %v6060 = vmul.f32 %v6058, %v1330
    %v6061 = vadd.f32 %v6059, 1e-12
    %v6062 = vadd.f32 %v6060, 1e-12
    %v6063 = vrsqrt.pop %v6061
    %v6064 = vrsqrt.pop %v6062
    %v6065 = vmul.f32 %v6049, %v6063
    %v6066 = vmul.f32 %v6050, %v6064
    %v6068 = vlaneseq
    %v6069 = vshrl.u32 %v6068, 7
    %v6070 = vsub.s32 0, %v6069
    %v6071 = vrot.slane %v6038, %v6070
    %v6073 = vmul.f32 %v6065, %v6071
    %v6074 = vmul.f32 %v6066, %v6071
    %v6076 = vlaneseq
    %v6077 = vshrl.u32 %v6076, 7
    %v6078 = vsub.s32 0, %v6077
    %v6079 = vrot.slane %v6040, %v6078
    %v6081 = vadd.f32 %v6073, %v6079
    %v6082 = vadd.f32 %v6074, %v6079
    %v6083 = vpack.c.bf16 %v6082, %v6081
    %s6084 = scalar_lea.vmem %s9, 48
    %v6085 = vld [vmem:[%s6084] sm:$0xf]
    %v6086 = vld [vmem:[%s6084 + $0x4] sm:$0xf]
    %v6087 = vld [vmem:[%s6084 + $0x8] sm:$0xf]
    %v6088 = vld [vmem:[%s6084 + $0xc] sm:$0xf]
    %s6089 = scalar_lea.vmem %s10, 3
    %v6090 = vld [vmem:[%s6089] sm:$0x1]
    %v6092 = vlaneseq
    %v6093 = vshrl.u32 %v6092, 7
    %v6094 = vsub.s32 0, %v6093
    %v6095 = vrot.slane %v6090, %v6094
    %v6101 = vunpack.c.l.b16 %v6085
    %v6102 = vunpack.c.l.b16 %v6086
    %v6103 = vunpack.c.l.b16 %v6087
    %v6104 = vunpack.c.l.b16 %v6088
    %v6105 = vpack.c.b16 %v6102, %v6101
    %v6106 = vpack.c.b16 %v6104, %v6103
    %v6110 = vsel %vm184, %v6083, 0
    %6112 = vmatprep.subr.bf16.mxu0 0
    %6113 = vmatpush1.bf16.msra.mxu0 0
    %6114 = vmatprep.subr.bf16.mxu0 0
    %6115 = vmatpush1.bf16.msra.mxu0 0
    %6116 = vmatprep.subr.bf16.mxu0 0
    %6117 = vmatpush1.bf16.msra.mxu0 0
    %6118 = vmatprep.subr.bf16.mxu0 0
    %6119 = vmatpush1.bf16.msra.mxu0 0
    %6120 = vmatprep.subr.bf16.mxu0 0
    %6121 = vmatpush1.bf16.msra.mxu0 0
    %6122 = vmatprep.subr.bf16.mxu0 0
    %6123 = vmatpush1.bf16.msra.mxu0 0
    %6124 = vmatprep.subr.bf16.mxu0 0
    %6125 = vmatpush1.bf16.msra.mxu0 %v6106
    %6126 = vmatprep.subr.bf16.mxu0 0
    %6127 = vmatpush1.bf16.msra.mxu0 %v6105
    %6128 = vmatprep.subr.bf16.mxu0 0
    %6129 = vmatpush2.bf16.msra.mxu0 0
    %6130 = vmatprep.subr.bf16.mxu0 0
    %6131 = vmatpush2.bf16.msra.mxu0 0
    %6132 = vmatprep.subr.bf16.mxu0 0
    %6133 = vmatpush2.bf16.msra.mxu0 0
    %6134 = vmatprep.subr.bf16.mxu0 0
    %6135 = vmatpush2.bf16.msra.mxu0 0
    %6136 = vmatprep.subr.bf16.mxu0 0
    %6137 = vmatpush2.bf16.msra.mxu0 0
    %6138 = vmatprep.subr.bf16.mxu0 0
    %6139 = vmatpush2.bf16.msra.mxu0 0
    %6140 = vmatprep.subr.bf16.mxu0 0
    %6141 = vmatpush2.bf16.msra.mxu0 0
    %6142 = vmatprep.subr.bf16.mxu0 0
    %6143 = vmatpush2.bf16.msra.mxu0 0
    %6144 = vmatprep.mubr.bf16.mxu0 0
    %6145 = vmatmul.mubr.bf16.gmra.mxu0 %v6110
    %v6146 = vpop.f32.mrf.mxu0
    %v6147 = vadd.f32 %v6095, %v6146
    %v6148 = vpop.f32.mrf.mxu0
    %v6149 = vpop.f32.mrf.mxu0
    %v6150 = vadd.f32 %v6095, %v6149
    %v6151 = vpop.f32.mrf.mxu0
    %6152 = vdwg.mxu0
    %v6153 = vmul.f32 %v6147, 0.5
    %v6154 = vmul.f32 %v6150, 0.5
    %v6155 = vmul.f32 %v6147, 0.044715
    %v6156 = vmul.f32 %v6150, 0.044715
    %v6157 = vmul.f32 %v6155, %v6147
    %v6158 = vmul.f32 %v6156, %v6150
    %v6159 = vmul.f32 %v6157, %v6147
    %v6160 = vmul.f32 %v6158, %v6150
    %v6161 = vadd.f32 %v6147, %v6159
    %v6162 = vadd.f32 %v6150, %v6160
    %v6163 = vmul.f32 %v6161, 0.7978846
    %v6164 = vmul.f32 %v6162, 0.7978846
    %v6165 = vtanh.pop %v6163
    %v6166 = vtanh.pop %v6164
    %v6167 = vadd.f32 %v6165, 1.0
    %v6168 = vadd.f32 %v6166, 1.0
    %v6169 = vmul.f32 %v6153, %v6167
    %v6170 = vmul.f32 %v6154, %v6168
    %v6171 = vpack.c.bf16 %v6170, %v6169
    %s6172 = scalar_lea.vmem %s11, 96
    %v6173 = vld [vmem:[%s6172] sm:$0xf]
    %v6174 = vld [vmem:[%s6172 + $0x4] sm:$0xf]
    %v6175 = vld [vmem:[%s6172 + $0x8] sm:$0xf]
    %v6176 = vld [vmem:[%s6172 + $0xc] sm:$0xf]
    %v6177 = vld [vmem:[%s6172 + $0x10] sm:$0xf]
    %v6178 = vld [vmem:[%s6172 + $0x14] sm:$0xf]
    %v6179 = vld [vmem:[%s6172 + $0x18] sm:$0xf]
    %v6180 = vld [vmem:[%s6172 + $0x1c] sm:$0xf]
    %s6181 = scalar_lea.vmem [#allocation4], 3
    %v6182 = vld [vmem:[%s6181] sm:$0x1]
    %v6184 = vlaneseq
    %v6185 = vshrl.u32 %v6184, 7
    %v6186 = vsub.s32 0, %v6185
    %v6187 = vrot.slane %v6182, %v6186
    %v6197 = vunpack.c.l.b16 %v6173
    %v6198 = vunpack.c.l.b16 %v6174
    %v6199 = vunpack.c.l.b16 %v6175
    %v6200 = vunpack.c.l.b16 %v6176
    %v6201 = vunpack.c.l.b16 %v6177
    %v6202 = vunpack.c.l.b16 %v6178
    %v6203 = vunpack.c.l.b16 %v6179
    %v6204 = vunpack.c.l.b16 %v6180
    %v6205 = vpack.c.b16 %v6198, %v6197
    %v6206 = vpack.c.b16 %v6200, %v6199
    %v6207 = vpack.c.b16 %v6202, %v6201
    %v6208 = vpack.c.b16 %v6204, %v6203
    %v6214 = vsel %vm1493, %v6171, 0
    %6216 = vmatprep.subr.bf16.mxu0 0
    %6217 = vmatpush1.bf16.msra.mxu0 0
    %6218 = vmatprep.subr.bf16.mxu0 0
    %6219 = vmatpush1.bf16.msra.mxu0 0
    %6220 = vmatprep.subr.bf16.mxu0 0
    %6221 = vmatpush1.bf16.msra.mxu0 0
    %6222 = vmatprep.subr.bf16.mxu0 0
    %6223 = vmatpush1.bf16.msra.mxu0 0
    %6224 = vmatprep.subr.bf16.mxu0 0
    %6225 = vmatpush1.bf16.msra.mxu0 %v6208
    %6226 = vmatprep.subr.bf16.mxu0 0
    %6227 = vmatpush1.bf16.msra.mxu0 %v6207
    %6228 = vmatprep.subr.bf16.mxu0 0
    %6229 = vmatpush1.bf16.msra.mxu0 %v6206
    %6230 = vmatprep.subr.bf16.mxu0 0
    %6231 = vmatpush1.bf16.msra.mxu0 %v6205
    %6232 = vmatprep.subr.bf16.mxu0 0
    %6233 = vmatpush2.bf16.msra.mxu0 0
    %6234 = vmatprep.subr.bf16.mxu0 0
    %6235 = vmatpush2.bf16.msra.mxu0 0
    %6236 = vmatprep.subr.bf16.mxu0 0
    %6237 = vmatpush2.bf16.msra.mxu0 0
    %6238 = vmatprep.subr.bf16.mxu0 0
    %6239 = vmatpush2.bf16.msra.mxu0 0
    %6240 = vmatprep.subr.bf16.mxu0 0
    %6241 = vmatpush2.bf16.msra.mxu0 0
    %6242 = vmatprep.subr.bf16.mxu0 0
    %6243 = vmatpush2.bf16.msra.mxu0 0
    %6244 = vmatprep.subr.bf16.mxu0 0
    %6245 = vmatpush2.bf16.msra.mxu0 0
    %6246 = vmatprep.subr.bf16.mxu0 0
    %6247 = vmatpush2.bf16.msra.mxu0 0
    %6248 = vmatprep.mubr.bf16.mxu0 0
    %6249 = vmatmul.mubr.bf16.gmra.mxu0 %v6214
    %v6250 = vpop.f32.mrf.mxu0
    %v6251 = vadd.f32 %v6187, %v6250
    %v6252 = vpop.f32.mrf.mxu0
    %v6253 = vpop.f32.mrf.mxu0
    %v6254 = vadd.f32 %v6187, %v6253
    %v6255 = vpop.f32.mrf.mxu0
    %6256 = vdwg.mxu0
    %v6257 = vadd.f32 %v6081, %v6251
    %v6258 = vadd.f32 %v6082, %v6254
    %s6259 = scalar_lea.vmem [#allocation6], 3
    %v6260 = vld [vmem:[%s6259] sm:$0x1]
    %s6261 = scalar_lea.vmem %s14, 3
    %v6262 = vld [vmem:[%s6261] sm:$0x1]
    %v6263 = vsel %vm184, %v6257, 0.0
    %6264 = vadd.xlane.f32.xlu0 %v6263
    %v6265 = vpop.xlane.xlu0 %6264
    %v6266 = vsel %vm184, %v6258, 0.0
    %6267 = vadd.xlane.f32.xlu0 %v6266
    %v6268 = vpop.xlane.xlu0 %6267
    %v6269 = vmul.f32 %v6265, %v1330
    %v6270 = vmul.f32 %v6268, %v1330
    %v6271 = vsub.f32 %v6257, %v6269
    %v6272 = vsub.f32 %v6258, %v6270
    %v6273 = vmul.f32 %v6271, %v6271
    %v6274 = vmul.f32 %v6272, %v6272
    %v6275 = vsel %vm184, %v6273, 0.0
    %6276 = vadd.xlane.f32.xlu0 %v6275
    %v6277 = vpop.xlane.xlu0 %6276
    %v6278 = vsel %vm184, %v6274, 0.0
    %6279 = vadd.xlane.f32.xlu0 %v6278
    %v6280 = vpop.xlane.xlu0 %6279
    %v6281 = vmul.f32 %v6277, %v1330
    %v6282 = vmul.f32 %v6280, %v1330
    %v6283 = vadd.f32 %v6281, 1e-12
    %v6284 = vadd.f32 %v6282, 1e-12
    %v6285 = vrsqrt.pop %v6283
    %v6286 = vrsqrt.pop %v6284
    %v6287 = vmul.f32 %v6271, %v6285
    %v6288 = vmul.f32 %v6272, %v6286
    %v6290 = vlaneseq
    %v6291 = vshrl.u32 %v6290, 7
    %v6292 = vsub.s32 0, %v6291
    %v6293 = vrot.slane %v6260, %v6292
    %v6295 = vmul.f32 %v6287, %v6293
    %v6296 = vmul.f32 %v6288, %v6293
    %v6298 = vlaneseq
    %v6299 = vshrl.u32 %v6298, 7
    %v6300 = vsub.s32 0, %v6299
    %v6301 = vrot.slane %v6262, %v6300
    %v6303 = vadd.f32 %v6295, %v6301
    %v6304 = vadd.f32 %v6296, %v6301
    %6305 = vmatprep.subr.mxu0 0.0
    %6306 = vmatpush1.msra.mxu0 0.0
    %6307 = vmatprep.subr.mxu0 0.0
    %6308 = vmatpush1.msra.mxu0 0.0
    %6309 = vmatprep.subr.mxu0 0.0
    %6310 = vmatpush1.msra.mxu0 0.0
    %6311 = vmatprep.subr.mxu0 0.0
    %6312 = vmatpush1.msra.mxu0 0.0
    %6313 = vmatprep.subr.mxu0 0.0
    %6314 = vmatpush1.msra.mxu0 0.0
    %6315 = vmatprep.subr.mxu0 0.0
    %6316 = vmatpush1.msra.mxu0 0.0
    %6317 = vmatprep.subr.mxu0 0.0
    %6318 = vmatpush1.msra.mxu0 0.0
    %6319 = vmatprep.subr.mxu0 0.0
    %6320 = vmatpush1.msra.mxu0 0.0
    %6321 = vmatprep.subr.mxu0 0.0
    %6322 = vmatpush1.msra.mxu0 0.0
    %6323 = vmatprep.subr.mxu0 0.0
    %6324 = vmatpush1.msra.mxu0 0.0
    %6325 = vmatprep.subr.mxu0 0.0
    %6326 = vmatpush1.msra.mxu0 0.0
    %6327 = vmatprep.subr.mxu0 0.0
    %6328 = vmatpush1.msra.mxu0 0.0
    %6329 = vmatprep.subr.mxu0 0.0
    %6330 = vmatpush1.msra.mxu0 0.0
    %6331 = vmatprep.subr.mxu0 0.0
    %6332 = vmatpush1.msra.mxu0 0.0
    %6333 = vmatprep.subr.mxu0 0.0
    %6334 = vmatpush1.msra.mxu0 0.0
    %6335 = vmatprep.subr.mxu0 0.0
    %6336 = vmatpush1.msra.mxu0 %v6303
    %6337 = vmatprep.subr.mxu0 0.0
    %6338 = vmatpush2.msra.mxu0 0.0
    %6339 = vmatprep.subr.mxu0 0.0
    %6340 = vmatpush2.msra.mxu0 0.0
    %6341 = vmatprep.subr.mxu0 0.0
    %6342 = vmatpush2.msra.mxu0 0.0
    %6343 = vmatprep.subr.mxu0 0.0
    %6344 = vmatpush2.msra.mxu0 0.0
    %6345 = vmatprep.subr.mxu0 0.0
    %6346 = vmatpush2.msra.mxu0 0.0
    %6347 = vmatprep.subr.mxu0 0.0
    %6348 = vmatpush2.msra.mxu0 0.0
    %6349 = vmatprep.subr.mxu0 0.0
    %6350 = vmatpush2.msra.mxu0 0.0
    %6351 = vmatprep.subr.mxu0 0.0
    %6352 = vmatpush2.msra.mxu0 0.0
    %6353 = vmatprep.subr.mxu0 0.0
    %6354 = vmatpush2.msra.mxu0 0.0
    %6355 = vmatprep.subr.mxu0 0.0
    %6356 = vmatpush2.msra.mxu0 0.0
    %6357 = vmatprep.subr.mxu0 0.0
    %6358 = vmatpush2.msra.mxu0 0.0
    %6359 = vmatprep.subr.mxu0 0.0
    %6360 = vmatpush2.msra.mxu0 0.0
    %6361 = vmatprep.subr.mxu0 0.0
    %6362 = vmatpush2.msra.mxu0 0.0
    %6363 = vmatprep.subr.mxu0 0.0
    %6364 = vmatpush2.msra.mxu0 0.0
    %6365 = vmatprep.subr.mxu0 0.0
    %6366 = vmatpush2.msra.mxu0 0.0
    %6367 = vmatprep.subr.mxu0 0.0
    %6368 = vmatpush2.msra.mxu0 0.0
    %6369 = vmatprep.mubr.f32.mxu0 0.0
    %6370 = vmatmul.mubr.f32.gmra.mxu0 %v3016
    %v6371 = vpop.f32.mrf.mxu0
    %v6372 = vadd.f32 0.0, %v6371
    %v6373 = vpop.f32.mrf.mxu0
    %6374 = vdwg.mxu0
    %6375 = vmatprep.subr.mxu0 0.0
    %6376 = vmatpush1.msra.mxu0 0.0
    %6377 = vmatprep.subr.mxu0 0.0
    %6378 = vmatpush1.msra.mxu0 0.0
    %6379 = vmatprep.subr.mxu0 0.0
    %6380 = vmatpush1.msra.mxu0 0.0
    %6381 = vmatprep.subr.mxu0 0.0
    %6382 = vmatpush1.msra.mxu0 0.0
    %6383 = vmatprep.subr.mxu0 0.0
    %6384 = vmatpush1.msra.mxu0 0.0
    %6385 = vmatprep.subr.mxu0 0.0
    %6386 = vmatpush1.msra.mxu0 0.0
    %6387 = vmatprep.subr.mxu0 0.0
    %6388 = vmatpush1.msra.mxu0 0.0
    %6389 = vmatprep.subr.mxu0 0.0
    %6390 = vmatpush1.msra.mxu0 0.0
    %6391 = vmatprep.subr.mxu0 0.0
    %6392 = vmatpush1.msra.mxu0 0.0
    %6393 = vmatprep.subr.mxu0 0.0
    %6394 = vmatpush1.msra.mxu0 0.0
    %6395 = vmatprep.subr.mxu0 0.0
    %6396 = vmatpush1.msra.mxu0 0.0
    %6397 = vmatprep.subr.mxu0 0.0
    %6398 = vmatpush1.msra.mxu0 0.0
    %6399 = vmatprep.subr.mxu0 0.0
    %6400 = vmatpush1.msra.mxu0 0.0
    %6401 = vmatprep.subr.mxu0 0.0
    %6402 = vmatpush1.msra.mxu0 0.0
    %6403 = vmatprep.subr.mxu0 0.0
    %6404 = vmatpush1.msra.mxu0 0.0
    %6405 = vmatprep.subr.mxu0 0.0
    %6406 = vmatpush1.msra.mxu0 %v6304
    %6407 = vmatprep.subr.mxu0 0.0
    %6408 = vmatpush2.msra.mxu0 0.0
    %6409 = vmatprep.subr.mxu0 0.0
    %6410 = vmatpush2.msra.mxu0 0.0
    %6411 = vmatprep.subr.mxu0 0.0
    %6412 = vmatpush2.msra.mxu0 0.0
    %6413 = vmatprep.subr.mxu0 0.0
    %6414 = vmatpush2.msra.mxu0 0.0
    %6415 = vmatprep.subr.mxu0 0.0
    %6416 = vmatpush2.msra.mxu0 0.0
    %6417 = vmatprep.subr.mxu0 0.0
    %6418 = vmatpush2.msra.mxu0 0.0
    %6419 = vmatprep.subr.mxu0 0.0
    %6420 = vmatpush2.msra.mxu0 0.0
    %6421 = vmatprep.subr.mxu0 0.0
    %6422 = vmatpush2.msra.mxu0 0.0
    %6423 = vmatprep.subr.mxu0 0.0
    %6424 = vmatpush2.msra.mxu0 0.0
    %6425 = vmatprep.subr.mxu0 0.0
    %6426 = vmatpush2.msra.mxu0 0.0
    %6427 = vmatprep.subr.mxu0 0.0
    %6428 = vmatpush2.msra.mxu0 0.0
    %6429 = vmatprep.subr.mxu0 0.0
    %6430 = vmatpush2.msra.mxu0 0.0
    %6431 = vmatprep.subr.mxu0 0.0
    %6432 = vmatpush2.msra.mxu0 0.0
    %6433 = vmatprep.subr.mxu0 0.0
    %6434 = vmatpush2.msra.mxu0 0.0
    %6435 = vmatprep.subr.mxu0 0.0
    %6436 = vmatpush2.msra.mxu0 0.0
    %6437 = vmatprep.subr.mxu0 0.0
    %6438 = vmatpush2.msra.mxu0 0.0
    %6439 = vmatprep.mubr.f32.mxu0 0.0
    %6440 = vmatmul.mubr.f32.gmra.mxu0 %v3089
    %v6441 = vpop.f32.mrf.mxu0
    %v6442 = vadd.f32 0.0, %v6441
    %v6443 = vpop.f32.mrf.mxu0
    %6444 = vdwg.mxu0
    %v6445 = vadd.f32 %v4872, %v6372
    %v6446 = vadd.f32 %v4873, %v6442
    %vm6447 = vcmask 258048
    %6448 = vst.msk [vmem:[%s15] sm:$0x1f] %vm6447, %v6445
    %6449 = vst.msk [vmem:[%s15 + $0x8] sm:$0x1f] %vm6447, %v6446
    // Predicated region
    $region74: #{tpu_custom_call.1} parent=1 // pred_check
      _
    $region75: #{tpu_custom_call.1} parent=1 // pred_check_branch
      %6451 = sbr.rel (0) target = $region77
    $region76: #{tpu_custom_call.1} parent=1 // pred_region
      _
    $region77: #{tpu_custom_call.1} parent=1 // pred_fallthru
      _
    // Predicated region
    $region78: #{tpu_custom_call.1} parent=1 // pred_check
      _
    $region79: #{tpu_custom_call.1} parent=1 // pred_check_branch
      %6453 = sbr.rel (0) target = $region81
    $region80: #{tpu_custom_call.1} parent=1 // pred_region
      _
    $region81: #{tpu_custom_call.1} parent=1 // pred_fallthru
      _
    %6454 = vsyncpa [#allocation3], 1
    %6455 = vsyncpa [#allocation5], 1

</llo_original>
